<compile_context>
chip_gen: v7x
topology: tpu7x:2x2x1
jax: 0.10.0
libtpu: 0.0.40
codegen_flags: <defaults>
</compile_context>

<pallas_src>
import functools

import numpy as np
import jax
import jax.numpy as jnp
from jax import lax
from jax.experimental import pallas as pl
from jax.experimental.pallas import tpu as pltpu

LANE = 128


def _round_up(n, m):
    return ((n + m - 1) // m) * m


# ------------------------------ fused kernel ----------------------------------

def _danet_kernel(x_ref, mq_ref, nk_ref,
                  w5_ref, s5_ref, b5_ref,
                  wqkv_ref, bqkv_ref,
                  w51_ref, s51_ref, b51_ref,
                  w52_ref, s52_ref, b52_ref,
                  w8_ref, b8_ref, g_ref,
                  o_ref, pad_ref,
                  *, H, W, c_pad, qk_pad, c_real):
    """Whole DANetHead forward for one image, everything resident in VMEM.

    Spatial layout: "padded-flat" rows r = h*(W+2) + w.  Rows with w >= W are
    garbage (they wrap across image rows) and are masked by mq/nk.
    """
    Wp = W + 2
    n = H * Wp                                     # rows in padded-flat layout
    mq = mq_ref[...]                               # (n, 1) f32: 1 valid / 0 pad

    # ---- conv5a + conv5c: 9 shifted sub-matmuls (in-kernel im2col) ----------
    acc = jnp.zeros((n, 2 * c_pad), jnp.float32)
    for t in range(9):
        kh, kw = divmod(t, 3)
        tap = x_ref[pl.ds(kh * Wp + kw, n), :]     # (n, cin_pad) bf16
        acc = acc + jnp.dot(tap, w5_ref[t], preferred_element_type=jnp.float32)
    f = jnp.maximum(acc * s5_ref[...] + b5_ref[...], 0.0) * mq   # folded BN+ReLU
    f1 = f[:, :c_pad]                              # conv5a output -> PAM
    f2 = f[:, c_pad:]                              # conv5c output -> CAM

    # ------------------------------ PAM --------------------------------------
    qkv = jnp.dot(f1.astype(jnp.bfloat16), wqkv_ref[...],
                  preferred_element_type=jnp.float32) + bqkv_ref[...]
    q = qkv[:, :qk_pad].astype(jnp.bfloat16)
    k = qkv[:, qk_pad:2 * qk_pad].astype(jnp.bfloat16)
    v = qkv[:, 2 * qk_pad:].astype(jnp.bfloat16)
    energy = lax.dot_general(q, k, (((1,), (1,)), ((), ())),
                             preferred_element_type=jnp.float32)   # (n, n)
    energy = energy + nk_ref[...]                  # -1e30 on garbage key columns
    energy = energy - jnp.max(energy, axis=-1, keepdims=True)
    p = jnp.exp(energy)
    attn = p * pl.reciprocal(jnp.sum(p, axis=-1, keepdims=True), approx=True)
    pam_out = jnp.dot(attn.astype(jnp.bfloat16), v,
                      preferred_element_type=jnp.float32)
    sa = (g_ref[0, 0] * pam_out + f1) * mq         # re-zero garbage rows

    # ------------------------------ CAM --------------------------------------
    # softmax(rowmax(E) - E) == softmax(-E); padded channel columns are masked
    # so normalization matches the unpadded computation.
    f2b = f2.astype(jnp.bfloat16)
    e = lax.dot_general(f2b, f2b, (((0,), (0,)), ((), ())),
                        preferred_element_type=jnp.float32)        # (c_pad, c_pad)
    s = -e
    col = lax.broadcasted_iota(jnp.int32, s.shape, 1)
    s = jnp.where(col < c_real, s, -1e30)
    s = s - jnp.max(s, axis=-1, keepdims=True)
    pe = jnp.exp(s)
    cattn = pe * pl.reciprocal(jnp.sum(pe, axis=-1, keepdims=True), approx=True)
    cam_out = lax.dot_general(f2b, cattn.astype(jnp.bfloat16),
                              (((1,), (1,)), ((), ())),
                              preferred_element_type=jnp.float32)   # (n, c_pad)
    sc = (g_ref[0, 1] * cam_out + f2) * mq

    # ---- re-pad sa/sc in VMEM scratch and run conv51 / conv52 ---------------
    # Shifting the (masked) padded-flat rows by Wp+1 re-creates the zero-padded
    # image layout for the next 3x3 conv without touching HBM.
    pad_ref[...] = jnp.zeros_like(pad_ref)
    pad_ref[pl.ds(Wp + 1, n), pl.ds(0, c_pad)] = sa.astype(jnp.bfloat16)
    pad_ref[pl.ds(Wp + 1, n), pl.ds(c_pad, c_pad)] = sc.astype(jnp.bfloat16)

    a51 = jnp.zeros((n, c_pad), jnp.float32)
    a52 = jnp.zeros((n, c_pad), jnp.float32)
    for t in range(9):
        kh, kw = divmod(t, 3)
        tap = pad_ref[pl.ds(kh * Wp + kw, n), :]   # (n, 2*c_pad) bf16
        a51 = a51 + jnp.dot(tap[:, :c_pad], w51_ref[t],
                            preferred_element_type=jnp.float32)
        a52 = a52 + jnp.dot(tap[:, c_pad:], w52_ref[t],
                            preferred_element_type=jnp.float32)
    sa_conv = jnp.maximum(a51 * s51_ref[...] + b51_ref[...], 0.0)
    sc_conv = jnp.maximum(a52 * s52_ref[...] + b52_ref[...], 0.0)
    feat_sum = (sa_conv + sc_conv).astype(jnp.bfloat16)

    # ---- conv8 (1x1, with bias) ----------------------------------------------
    y = jnp.dot(feat_sum, w8_ref[...], preferred_element_type=jnp.float32) \
        + b8_ref[...]
    o_ref[...] = y.astype(o_ref.dtype)


# ---------------------------- pallas_call wrapper ------------------------------

def _danet_call(xp, mq, nk, packed, dims, H, W):
    B, hp_wp, cin_p = xp.shape
    c_p, qk_p, cout_p = dims["c_pad"], dims["qk_pad"], dims["cout_pad"]
    Wp = W + 2
    n = H * Wp

    kern = functools.partial(_danet_kernel, H=H, W=W, c_pad=c_p, qk_pad=qk_p,
                             c_real=dims["inter"])

    flops = 2 * B * (9 * n * cin_p * 2 * c_p            # conv5a + conv5c
                     + n * c_p * (2 * qk_p + c_p)       # qkv projection
                     + n * n * (qk_p + c_p)             # energy + PAM apply
                     + 2 * n * c_p * c_p                # CAM gram + apply
                     + 18 * n * c_p * c_p               # conv51 + conv52
                     + n * c_p * cout_p)                # conv8
    weight_bytes = sum(int(v.size) * v.dtype.itemsize for v in packed.values())
    bytes_accessed = (int(xp.size) * 2 + int(mq.size + nk.size) * 4
                      + weight_bytes + B * n * cout_p * 2)
    cost = pl.CostEstimate(flops=flops,
                           transcendentals=B * (n * n + c_p * c_p),
                           bytes_accessed=bytes_accessed)

    return pl.pallas_call(
        kern,
        out_shape=jax.ShapeDtypeStruct((B, n, cout_p), jnp.bfloat16),
        grid=(B,),
        in_specs=[
            pl.BlockSpec((None, hp_wp, cin_p), lambda b: (b, 0, 0)),   # x (padded-flat)
            pl.BlockSpec((n, 1), lambda b: (0, 0)),                    # row-valid mask
            pl.BlockSpec((1, n), lambda b: (0, 0)),                    # key -inf mask
            pl.BlockSpec((9, cin_p, 2 * c_p), lambda b: (0, 0, 0)),    # w5 (a|c)
            pl.BlockSpec((1, 2 * c_p), lambda b: (0, 0)),              # s5
            pl.BlockSpec((1, 2 * c_p), lambda b: (0, 0)),              # b5
            pl.BlockSpec((c_p, 2 * qk_p + c_p), lambda b: (0, 0)),     # wqkv
            pl.BlockSpec((1, 2 * qk_p + c_p), lambda b: (0, 0)),       # bqkv
            pl.BlockSpec((9, c_p, c_p), lambda b: (0, 0, 0)),          # w51
            pl.BlockSpec((1, c_p), lambda b: (0, 0)),                  # s51
            pl.BlockSpec((1, c_p), lambda b: (0, 0)),                  # b51
            pl.BlockSpec((9, c_p, c_p), lambda b: (0, 0, 0)),          # w52
            pl.BlockSpec((1, c_p), lambda b: (0, 0)),                  # s52
            pl.BlockSpec((1, c_p), lambda b: (0, 0)),                  # b52
            pl.BlockSpec((c_p, cout_p), lambda b: (0, 0)),             # w8
            pl.BlockSpec((1, cout_p), lambda b: (0, 0)),               # b8
            pl.BlockSpec(memory_space=pltpu.MemorySpace.SMEM),         # gammas (1,2)
        ],
        out_specs=pl.BlockSpec((None, n, cout_p), lambda b: (b, 0, 0)),
        scratch_shapes=[pltpu.VMEM((hp_wp, 2 * c_p), jnp.bfloat16)],
        compiler_params=pltpu.CompilerParams(
            dimension_semantics=("parallel",),
            vmem_limit_bytes=48 * 1024 * 1024),
        cost_estimate=cost,
    )(xp, mq, nk,
      packed["w5"], packed["s5"], packed["b5"],
      packed["wqkv"], packed["bqkv"],
      packed["w51"], packed["s51"], packed["b51"],
      packed["w52"], packed["s52"], packed["b52"],
      packed["w8"], packed["b8"], packed["gammas"])


# ----------------------------------- glue --------------------------------------

def init_params(key, in_channels, out_channels):
    inter = in_channels // 4
    cq = max(inter // 8, 1)
    cin_p = _round_up(in_channels, LANE)
    c_p = _round_up(inter, LANE)
    qk_p = _round_up(cq, LANE)
    cout_p = _round_up(out_channels, LANE)
    ks = jax.random.split(key, 12)

    def conv3x3_raw(k, cin, cout):
        k1, k2, k3, k4, k5 = jax.random.split(k, 5)
        w = jax.random.normal(k1, (9, cin, cout), jnp.float32) * 0.1
        g = jax.random.uniform(k2, (cout,), jnp.float32, 0.8, 1.2)
        beta = jax.random.normal(k3, (cout,), jnp.float32) * 0.1
        mean = jax.random.normal(k4, (cout,), jnp.float32) * 0.1
        var = jax.random.uniform(k5, (cout,), jnp.float32, 0.5, 1.5)
        scale = g / jnp.sqrt(var + 1e-5)            # BatchNorm (eval) folded
        bias = beta - mean * scale
        return dict(w=w, scale=scale, bias=bias)

    raw = dict(
        conv5a=conv3x3_raw(ks[0], in_channels, inter),
        conv5c=conv3x3_raw(ks[1], in_channels, inter),
        conv51=conv3x3_raw(ks[2], inter, inter),
        conv52=conv3x3_raw(ks[3], inter, inter),
        wq=jax.random.normal(ks[4], (inter, cq), jnp.float32) * 0.2,
        bq=jax.random.normal(ks[5], (cq,), jnp.float32) * 0.1,
        wk=jax.random.normal(ks[6], (inter, cq), jnp.float32) * 0.2,
        bk=jax.random.normal(ks[7], (cq,), jnp.float32) * 0.1,
        wv=jax.random.normal(ks[8], (inter, inter), jnp.float32) * 0.2,
        bv=jax.random.normal(ks[9], (inter,), jnp.float32) * 0.1,
        gamma_pam=jnp.float32(0.5),
        gamma_cam=jnp.float32(0.5),
        w8=jax.random.normal(ks[10], (inter, out_channels), jnp.float32) * 0.2,
        b8=jax.random.normal(ks[11], (out_channels,), jnp.float32) * 0.1,
    )

    def pad_conv(p, cin, cin_pad, cout, cout_pad):
        # Padded input-channel rows stay zero (required so CAM's padded-channel
        # leakage into sc_feat is inert in conv51/conv52).
        w = jnp.zeros((9, cin_pad, cout_pad), jnp.float32)
        w = w.at[:, :cin, :cout].set(p["w"])
        s = jnp.zeros((1, cout_pad), jnp.float32).at[0, :cout].set(p["scale"])
        b = jnp.zeros((1, cout_pad), jnp.float32).at[0, :cout].set(p["bias"])
        return w, s, b

    w5a, s5a, b5a = pad_conv(raw["conv5a"], in_channels, cin_p, inter, c_p)
    w5c, s5c, b5c = pad_conv(raw["conv5c"], in_channels, cin_p, inter, c_p)
    w51, s51, b51 = pad_conv(raw["conv51"], inter, c_p, inter, c_p)
    w52, s52, b52 = pad_conv(raw["conv52"], inter, c_p, inter, c_p)

    wqkv = jnp.zeros((c_p, 2 * qk_p + c_p), jnp.float32)
    wqkv = wqkv.at[:inter, :cq].set(raw["wq"])
    wqkv = wqkv.at[:inter, qk_p:qk_p + cq].set(raw["wk"])
    wqkv = wqkv.at[:inter, 2 * qk_p:2 * qk_p + inter].set(raw["wv"])
    bqkv = jnp.zeros((1, 2 * qk_p + c_p), jnp.float32)
    bqkv = bqkv.at[0, :cq].set(raw["bq"])
    bqkv = bqkv.at[0, qk_p:qk_p + cq].set(raw["bk"])
    bqkv = bqkv.at[0, 2 * qk_p:2 * qk_p + inter].set(raw["bv"])

    w8 = jnp.zeros((c_p, cout_p), jnp.float32).at[:inter, :out_channels].set(raw["w8"])
    b8 = jnp.zeros((1, cout_p), jnp.float32).at[0, :out_channels].set(raw["b8"])

    packed = dict(
        w5=jnp.concatenate([w5a, w5c], axis=2).astype(jnp.bfloat16),
        s5=jnp.concatenate([s5a, s5c], axis=1),
        b5=jnp.concatenate([b5a, b5c], axis=1),
        wqkv=wqkv.astype(jnp.bfloat16), bqkv=bqkv,
        w51=w51.astype(jnp.bfloat16), s51=s51, b51=b51,
        w52=w52.astype(jnp.bfloat16), s52=s52, b52=b52,
        w8=w8.astype(jnp.bfloat16), b8=b8,
        gammas=jnp.array([[raw["gamma_pam"], raw["gamma_cam"]]], jnp.float32),
    )
    dims = dict(inter=inter, cq=cq, cin_pad=cin_p, c_pad=c_p, qk_pad=qk_p,
                cout_pad=cout_p, cout=out_channels)
    return raw, packed, dims


def danet_head(x_nchw, packed, dims):
    B, Cin, H, W = x_nchw.shape
    Hp, Wp = H + 2, W + 2
    cin_p = dims["cin_pad"]
    n = H * Wp
    hp_wp = _round_up(Hp * Wp + 2, 8)       # room for the (2,2) tap of garbage rows

    # NHWC, halo + channel pad, flatten spatial to "padded-flat" rows (read once).
    x = jnp.transpose(x_nchw, (0, 2, 3, 1))
    x = jnp.pad(x, ((0, 0), (1, 1), (1, 1), (0, cin_p - Cin)))
    x = x.reshape(B, Hp * Wp, cin_p)
    x = jnp.pad(x, ((0, 0), (0, hp_wp - Hp * Wp), (0, 0))).astype(jnp.bfloat16)

    w_idx = np.arange(n) % Wp
    valid = w_idx < W
    mq = jnp.asarray(valid.astype(np.float32).reshape(n, 1))
    nk = jnp.asarray(np.where(valid, 0.0, -1e30).astype(np.float32).reshape(1, n))

    y = _danet_call(x, mq, nk, packed, dims, H, W)      # (B, H*Wp, cout_pad) bf16
    Cout = dims["cout"]
    y = y.reshape(B, H, Wp, dims["cout_pad"])[:, :, :W, :Cout].astype(jnp.float32)
    return jnp.transpose(y, (0, 3, 1, 2))               # NCHW out


# ------------------------ pure-JAX reference (for checking) --------------------
# Mirrors the kernel's precision policy (bf16 matmul operands, f32 accumulation)
# so the comparison checks kernel mechanics (layout / padding / taps / masking).

def _extract_taps_ref(x_bnc, H, W):
    B, HW, C = x_bnc.shape
    x = x_bnc.reshape(B, H, W, C)
    xp = jnp.pad(x, ((0, 0), (1, 1), (1, 1), (0, 0)))
    taps = [xp[:, kh:kh + H, kw:kw + W, :].reshape(B, HW, C)
            for kh in range(3) for kw in range(3)]
    return jnp.concatenate(taps, axis=-1)


def _conv_bn_relu_ref(x_bnc, p, H, W):
    taps = _extract_taps_ref(x_bnc, H, W).astype(jnp.bfloat16)
    w = p["w"].reshape(-1, p["w"].shape[-1]).astype(jnp.bfloat16)
    y = jnp.einsum('bnk,kd->bnd', taps, w, preferred_element_type=jnp.float32)
    return jnp.maximum(y * p["scale"] + p["bias"], 0.0)


def _pam_ref(x, raw):
    xb = x.astype(jnp.bfloat16)
    q = jnp.einsum('bnc,cd->bnd', xb, raw["wq"].astype(jnp.bfloat16),
                   preferred_element_type=jnp.float32) + raw["bq"]
    k = jnp.einsum('bnc,cd->bnd', xb, raw["wk"].astype(jnp.bfloat16),
                   preferred_element_type=jnp.float32) + raw["bk"]
    v = jnp.einsum('bnc,cd->bnd', xb, raw["wv"].astype(jnp.bfloat16),
                   preferred_element_type=jnp.float32) + raw["bv"]
    energy = jnp.einsum('bic,bjc->bij', q.astype(jnp.bfloat16),
                        k.astype(jnp.bfloat16), preferred_element_type=jnp.float32)
    attn = jax.nn.softmax(energy, axis=-1)
    out = jnp.einsum('bij,bjc->bic', attn.astype(jnp.bfloat16),
                     v.astype(jnp.bfloat16), preferred_element_type=jnp.float32)
    return raw["gamma_pam"] * out + x


def _cam_ref(x, gamma):
    xb = x.astype(jnp.bfloat16)
    energy = jnp.einsum('bnc,bnd->bcd', xb, xb, preferred_element_type=jnp.float32)
    energy_new = jnp.max(energy, -1, keepdims=True) - energy
    attn = jax.nn.softmax(energy_new, -1)
    out = jnp.einsum('bcd,bnd->bnc', attn.astype(jnp.bfloat16), xb,
                     preferred_element_type=jnp.float32)
    return gamma * out + x


def danet_head_ref(x_nchw, raw):
    B, Cin, H, W = x_nchw.shape
    x = jnp.transpose(x_nchw, (0, 2, 3, 1)).reshape(B, H * W, Cin)
    feat1 = _conv_bn_relu_ref(x, raw["conv5a"], H, W)
    sa_feat = _pam_ref(feat1, raw)
    sa_conv = _conv_bn_relu_ref(sa_feat, raw["conv51"], H, W)
    feat2 = _conv_bn_relu_ref(x, raw["conv5c"], H, W)
    sc_feat = _cam_ref(feat2, raw["gamma_cam"])
    sc_conv = _conv_bn_relu_ref(sc_feat, raw["conv52"], H, W)
    feat_sum = (sa_conv + sc_conv).astype(jnp.bfloat16)
    y = jnp.einsum('bnc,cd->bnd', feat_sum, raw["w8"].astype(jnp.bfloat16),
                   preferred_element_type=jnp.float32) + raw["b8"]
    Cout = y.shape[-1]
    return jnp.transpose(y.reshape(B, H, W, Cout), (0, 3, 1, 2))


# ----------------------------------- main ---------------------------------------

if __name__ == "__main__":
    key = jax.random.PRNGKey(0)
    kx, kp = jax.random.split(key)
    B, Cin, H, W = 2, 64, 8, 8          # in_channels=64 -> inter=16, q/k dim=2
    Cout = 8
    x = jax.random.normal(kx, (B, Cin, H, W), jnp.float32)
    raw, packed, dims = init_params(kp, Cin, Cout)

    y = jax.block_until_ready(danet_head(x, packed, dims))
    y_ref = jax.block_until_ready(danet_head_ref(x, raw))

    assert y.shape == (B, Cout, H, W), y.shape
    np.testing.assert_allclose(np.asarray(y), np.asarray(y_ref),
                               rtol=2e-2, atol=2e-2)
    print("KERNEL_OK")
</pallas_src>

<mosaic_0001>
module attributes {stable_mosaic.version = 11 : i64} {
  func.func @_danet_kernel(%arg0: i32, %arg1: memref<1x104x128xbf16, #tpu.memory_space<vmem>>, %arg2: memref<80x1xf32, #tpu.memory_space<vmem>>, %arg3: memref<1x80xf32, #tpu.memory_space<vmem>>, %arg4: memref<9x128x256xbf16, #tpu.memory_space<vmem>>, %arg5: memref<1x256xf32, #tpu.memory_space<vmem>>, %arg6: memref<1x256xf32, #tpu.memory_space<vmem>>, %arg7: memref<128x384xbf16, #tpu.memory_space<vmem>>, %arg8: memref<1x384xf32, #tpu.memory_space<vmem>>, %arg9: memref<9x128x128xbf16, #tpu.memory_space<vmem>>, %arg10: memref<1x128xf32, #tpu.memory_space<vmem>>, %arg11: memref<1x128xf32, #tpu.memory_space<vmem>>, %arg12: memref<9x128x128xbf16, #tpu.memory_space<vmem>>, %arg13: memref<1x128xf32, #tpu.memory_space<vmem>>, %arg14: memref<1x128xf32, #tpu.memory_space<vmem>>, %arg15: memref<128x128xbf16, #tpu.memory_space<vmem>>, %arg16: memref<1x128xf32, #tpu.memory_space<vmem>>, %arg17: memref<1x2xf32, #tpu.memory_space<smem>>, %arg18: memref<1x80x128xbf16, #tpu.memory_space<vmem>>, %arg19: memref<104x256xbf16, #tpu.memory_space<vmem>>) attributes {dimension_semantics = [#tpu.dimension_semantics<parallel>], iteration_bounds = array<i64: 2>, scalar_prefetch = 0 : i64, scratch_operands = 1 : i64, tpu.core_type = #tpu.core_type<tc>, window_params = [{transform_indices = @transform_0, window_bounds = array<i64: 1, 104, 128>}, {pipeline_mode = #tpu.pipeline_mode<synchronous>, transform_indices = @transform_1, window_bounds = array<i64: 80, 1>}, {pipeline_mode = #tpu.pipeline_mode<synchronous>, transform_indices = @transform_2, window_bounds = array<i64: 1, 80>}, {pipeline_mode = #tpu.pipeline_mode<synchronous>, transform_indices = @transform_3, window_bounds = array<i64: 9, 128, 256>}, {pipeline_mode = #tpu.pipeline_mode<synchronous>, transform_indices = @transform_4, window_bounds = array<i64: 1, 256>}, {pipeline_mode = #tpu.pipeline_mode<synchronous>, transform_indices = @transform_5, window_bounds = array<i64: 1, 256>}, {pipeline_mode = #tpu.pipeline_mode<synchronous>, transform_indices = @transform_6, window_bounds = array<i64: 128, 384>}, {pipeline_mode = #tpu.pipeline_mode<synchronous>, transform_indices = @transform_7, window_bounds = array<i64: 1, 384>}, {pipeline_mode = #tpu.pipeline_mode<synchronous>, transform_indices = @transform_8, window_bounds = array<i64: 9, 128, 128>}, {pipeline_mode = #tpu.pipeline_mode<synchronous>, transform_indices = @transform_9, window_bounds = array<i64: 1, 128>}, {pipeline_mode = #tpu.pipeline_mode<synchronous>, transform_indices = @transform_10, window_bounds = array<i64: 1, 128>}, {pipeline_mode = #tpu.pipeline_mode<synchronous>, transform_indices = @transform_11, window_bounds = array<i64: 9, 128, 128>}, {pipeline_mode = #tpu.pipeline_mode<synchronous>, transform_indices = @transform_12, window_bounds = array<i64: 1, 128>}, {pipeline_mode = #tpu.pipeline_mode<synchronous>, transform_indices = @transform_13, window_bounds = array<i64: 1, 128>}, {pipeline_mode = #tpu.pipeline_mode<synchronous>, transform_indices = @transform_14, window_bounds = array<i64: 128, 128>}, {pipeline_mode = #tpu.pipeline_mode<synchronous>, transform_indices = @transform_15, window_bounds = array<i64: 1, 128>}, {transform_indices = @transform_16, window_bounds = array<i64: 1, 2>}, {transform_indices = @transform_17, window_bounds = array<i64: 1, 80, 128>}]} {
    %c0 = arith.constant 0 : index
    %c0_0 = arith.constant 0 : index
    %0 = vector.load %arg2[%c0, %c0_0] : memref<80x1xf32, #tpu.memory_space<vmem>>, vector<80x1xf32>
    %cst = arith.constant 0.000000e+00 : f32
    %1 = vector.broadcast %cst : f32 to vector<80x256xf32>
    %c0_1 = arith.constant 0 : index
    %c0_2 = arith.constant 0 : index
    %c0_3 = arith.constant 0 : index
    %2 = vector.load %arg1[%c0_1, %c0_2, %c0_3] : memref<1x104x128xbf16, #tpu.memory_space<vmem>>, vector<1x80x128xbf16>
    %3 = vector.shape_cast %2 : vector<1x80x128xbf16> to vector<80x128xbf16>
    %c0_4 = arith.constant 0 : index
    %c0_5 = arith.constant 0 : index
    %c0_6 = arith.constant 0 : index
    %4 = vector.load %arg4[%c0_4, %c0_5, %c0_6] : memref<9x128x256xbf16, #tpu.memory_space<vmem>>, vector<1x128x256xbf16>
    %5 = vector.shape_cast %4 : vector<1x128x256xbf16> to vector<128x256xbf16>
    %cst_7 = arith.constant dense<0.000000e+00> : vector<80x256xf32>
    %6 = tpu.matmul %3, %5, %cst_7 {dimension_numbers = #tpu.dot_dimension_numbers<[1], [0], [0], [1], [0, 0, 1, 1], [], []>} : vector<80x128xbf16>, vector<128x256xbf16>, vector<80x256xf32> -> vector<80x256xf32>
    %7 = arith.addf %1, %6 : vector<80x256xf32>
    %c0_8 = arith.constant 0 : index
    %c1 = arith.constant 1 : index
    %c0_9 = arith.constant 0 : index
    %8 = vector.load %arg1[%c0_8, %c1, %c0_9] : memref<1x104x128xbf16, #tpu.memory_space<vmem>>, vector<1x80x128xbf16>
    %9 = vector.shape_cast %8 : vector<1x80x128xbf16> to vector<80x128xbf16>
    %c1_10 = arith.constant 1 : index
    %c0_11 = arith.constant 0 : index
    %c0_12 = arith.constant 0 : index
    %10 = vector.load %arg4[%c1_10, %c0_11, %c0_12] : memref<9x128x256xbf16, #tpu.memory_space<vmem>>, vector<1x128x256xbf16>
    %11 = vector.shape_cast %10 : vector<1x128x256xbf16> to vector<128x256xbf16>
    %cst_13 = arith.constant dense<0.000000e+00> : vector<80x256xf32>
    %12 = tpu.matmul %9, %11, %cst_13 {dimension_numbers = #tpu.dot_dimension_numbers<[1], [0], [0], [1], [0, 0, 1, 1], [], []>} : vector<80x128xbf16>, vector<128x256xbf16>, vector<80x256xf32> -> vector<80x256xf32>
    %13 = arith.addf %7, %12 : vector<80x256xf32>
    %c0_14 = arith.constant 0 : index
    %c2 = arith.constant 2 : index
    %c0_15 = arith.constant 0 : index
    %14 = vector.load %arg1[%c0_14, %c2, %c0_15] : memref<1x104x128xbf16, #tpu.memory_space<vmem>>, vector<1x80x128xbf16>
    %15 = vector.shape_cast %14 : vector<1x80x128xbf16> to vector<80x128xbf16>
    %c2_16 = arith.constant 2 : index
    %c0_17 = arith.constant 0 : index
    %c0_18 = arith.constant 0 : index
    %16 = vector.load %arg4[%c2_16, %c0_17, %c0_18] : memref<9x128x256xbf16, #tpu.memory_space<vmem>>, vector<1x128x256xbf16>
    %17 = vector.shape_cast %16 : vector<1x128x256xbf16> to vector<128x256xbf16>
    %cst_19 = arith.constant dense<0.000000e+00> : vector<80x256xf32>
    %18 = tpu.matmul %15, %17, %cst_19 {dimension_numbers = #tpu.dot_dimension_numbers<[1], [0], [0], [1], [0, 0, 1, 1], [], []>} : vector<80x128xbf16>, vector<128x256xbf16>, vector<80x256xf32> -> vector<80x256xf32>
    %19 = arith.addf %13, %18 : vector<80x256xf32>
    %c0_20 = arith.constant 0 : index
    %c10 = arith.constant 10 : index
    %c0_21 = arith.constant 0 : index
    %20 = vector.load %arg1[%c0_20, %c10, %c0_21] : memref<1x104x128xbf16, #tpu.memory_space<vmem>>, vector<1x80x128xbf16>
    %21 = vector.shape_cast %20 : vector<1x80x128xbf16> to vector<80x128xbf16>
    %c3 = arith.constant 3 : index
    %c0_22 = arith.constant 0 : index
    %c0_23 = arith.constant 0 : index
    %22 = vector.load %arg4[%c3, %c0_22, %c0_23] : memref<9x128x256xbf16, #tpu.memory_space<vmem>>, vector<1x128x256xbf16>
    %23 = vector.shape_cast %22 : vector<1x128x256xbf16> to vector<128x256xbf16>
    %cst_24 = arith.constant dense<0.000000e+00> : vector<80x256xf32>
    %24 = tpu.matmul %21, %23, %cst_24 {dimension_numbers = #tpu.dot_dimension_numbers<[1], [0], [0], [1], [0, 0, 1, 1], [], []>} : vector<80x128xbf16>, vector<128x256xbf16>, vector<80x256xf32> -> vector<80x256xf32>
    %25 = arith.addf %19, %24 : vector<80x256xf32>
    %c0_25 = arith.constant 0 : index
    %c11 = arith.constant 11 : index
    %c0_26 = arith.constant 0 : index
    %26 = vector.load %arg1[%c0_25, %c11, %c0_26] : memref<1x104x128xbf16, #tpu.memory_space<vmem>>, vector<1x80x128xbf16>
    %27 = vector.shape_cast %26 : vector<1x80x128xbf16> to vector<80x128xbf16>
    %c4 = arith.constant 4 : index
    %c0_27 = arith.constant 0 : index
    %c0_28 = arith.constant 0 : index
    %28 = vector.load %arg4[%c4, %c0_27, %c0_28] : memref<9x128x256xbf16, #tpu.memory_space<vmem>>, vector<1x128x256xbf16>
    %29 = vector.shape_cast %28 : vector<1x128x256xbf16> to vector<128x256xbf16>
    %cst_29 = arith.constant dense<0.000000e+00> : vector<80x256xf32>
    %30 = tpu.matmul %27, %29, %cst_29 {dimension_numbers = #tpu.dot_dimension_numbers<[1], [0], [0], [1], [0, 0, 1, 1], [], []>} : vector<80x128xbf16>, vector<128x256xbf16>, vector<80x256xf32> -> vector<80x256xf32>
    %31 = arith.addf %25, %30 : vector<80x256xf32>
    %c0_30 = arith.constant 0 : index
    %c12 = arith.constant 12 : index
    %c0_31 = arith.constant 0 : index
    %32 = vector.load %arg1[%c0_30, %c12, %c0_31] : memref<1x104x128xbf16, #tpu.memory_space<vmem>>, vector<1x80x128xbf16>
    %33 = vector.shape_cast %32 : vector<1x80x128xbf16> to vector<80x128xbf16>
    %c5 = arith.constant 5 : index
    %c0_32 = arith.constant 0 : index
    %c0_33 = arith.constant 0 : index
    %34 = vector.load %arg4[%c5, %c0_32, %c0_33] : memref<9x128x256xbf16, #tpu.memory_space<vmem>>, vector<1x128x256xbf16>
    %35 = vector.shape_cast %34 : vector<1x128x256xbf16> to vector<128x256xbf16>
    %cst_34 = arith.constant dense<0.000000e+00> : vector<80x256xf32>
    %36 = tpu.matmul %33, %35, %cst_34 {dimension_numbers = #tpu.dot_dimension_numbers<[1], [0], [0], [1], [0, 0, 1, 1], [], []>} : vector<80x128xbf16>, vector<128x256xbf16>, vector<80x256xf32> -> vector<80x256xf32>
    %37 = arith.addf %31, %36 : vector<80x256xf32>
    %c0_35 = arith.constant 0 : index
    %c20 = arith.constant 20 : index
    %c0_36 = arith.constant 0 : index
    %38 = vector.load %arg1[%c0_35, %c20, %c0_36] : memref<1x104x128xbf16, #tpu.memory_space<vmem>>, vector<1x80x128xbf16>
    %39 = vector.shape_cast %38 : vector<1x80x128xbf16> to vector<80x128xbf16>
    %c6 = arith.constant 6 : index
    %c0_37 = arith.constant 0 : index
    %c0_38 = arith.constant 0 : index
    %40 = vector.load %arg4[%c6, %c0_37, %c0_38] : memref<9x128x256xbf16, #tpu.memory_space<vmem>>, vector<1x128x256xbf16>
    %41 = vector.shape_cast %40 : vector<1x128x256xbf16> to vector<128x256xbf16>
    %cst_39 = arith.constant dense<0.000000e+00> : vector<80x256xf32>
    %42 = tpu.matmul %39, %41, %cst_39 {dimension_numbers = #tpu.dot_dimension_numbers<[1], [0], [0], [1], [0, 0, 1, 1], [], []>} : vector<80x128xbf16>, vector<128x256xbf16>, vector<80x256xf32> -> vector<80x256xf32>
    %43 = arith.addf %37, %42 : vector<80x256xf32>
    %c0_40 = arith.constant 0 : index
    %c21 = arith.constant 21 : index
    %c0_41 = arith.constant 0 : index
    %44 = vector.load %arg1[%c0_40, %c21, %c0_41] : memref<1x104x128xbf16, #tpu.memory_space<vmem>>, vector<1x80x128xbf16>
    %45 = vector.shape_cast %44 : vector<1x80x128xbf16> to vector<80x128xbf16>
    %c7 = arith.constant 7 : index
    %c0_42 = arith.constant 0 : index
    %c0_43 = arith.constant 0 : index
    %46 = vector.load %arg4[%c7, %c0_42, %c0_43] : memref<9x128x256xbf16, #tpu.memory_space<vmem>>, vector<1x128x256xbf16>
    %47 = vector.shape_cast %46 : vector<1x128x256xbf16> to vector<128x256xbf16>
    %cst_44 = arith.constant dense<0.000000e+00> : vector<80x256xf32>
    %48 = tpu.matmul %45, %47, %cst_44 {dimension_numbers = #tpu.dot_dimension_numbers<[1], [0], [0], [1], [0, 0, 1, 1], [], []>} : vector<80x128xbf16>, vector<128x256xbf16>, vector<80x256xf32> -> vector<80x256xf32>
    %49 = arith.addf %43, %48 : vector<80x256xf32>
    %c0_45 = arith.constant 0 : index
    %c22 = arith.constant 22 : index
    %c0_46 = arith.constant 0 : index
    %50 = vector.load %arg1[%c0_45, %c22, %c0_46] : memref<1x104x128xbf16, #tpu.memory_space<vmem>>, vector<1x80x128xbf16>
    %51 = vector.shape_cast %50 : vector<1x80x128xbf16> to vector<80x128xbf16>
    %c8 = arith.constant 8 : index
    %c0_47 = arith.constant 0 : index
    %c0_48 = arith.constant 0 : index
    %52 = vector.load %arg4[%c8, %c0_47, %c0_48] : memref<9x128x256xbf16, #tpu.memory_space<vmem>>, vector<1x128x256xbf16>
    %53 = vector.shape_cast %52 : vector<1x128x256xbf16> to vector<128x256xbf16>
    %cst_49 = arith.constant dense<0.000000e+00> : vector<80x256xf32>
    %54 = tpu.matmul %51, %53, %cst_49 {dimension_numbers = #tpu.dot_dimension_numbers<[1], [0], [0], [1], [0, 0, 1, 1], [], []>} : vector<80x128xbf16>, vector<128x256xbf16>, vector<80x256xf32> -> vector<80x256xf32>
    %55 = arith.addf %49, %54 : vector<80x256xf32>
    %c0_50 = arith.constant 0 : index
    %c0_51 = arith.constant 0 : index
    %56 = vector.load %arg5[%c0_50, %c0_51] : memref<1x256xf32, #tpu.memory_space<vmem>>, vector<1x256xf32>
    %57 = vector.broadcast %56 : vector<1x256xf32> to vector<80x256xf32>
    %58 = arith.mulf %55, %57 : vector<80x256xf32>
    %c0_52 = arith.constant 0 : index
    %c0_53 = arith.constant 0 : index
    %59 = vector.load %arg6[%c0_52, %c0_53] : memref<1x256xf32, #tpu.memory_space<vmem>>, vector<1x256xf32>
    %60 = vector.broadcast %59 : vector<1x256xf32> to vector<80x256xf32>
    %61 = arith.addf %58, %60 : vector<80x256xf32>
    %cst_54 = arith.constant 0.000000e+00 : f32
    %62 = vector.broadcast %cst_54 : f32 to vector<80x256xf32>
    %63 = arith.maximumf %61, %62 : vector<80x256xf32>
    %64 = vector.broadcast %0 : vector<80x1xf32> to vector<80x256xf32>
    %65 = arith.mulf %63, %64 : vector<80x256xf32>
    %66 = vector.extract_strided_slice %65 {offsets = [0, 0], sizes = [80, 128], strides = [1, 1]} : vector<80x256xf32> to vector<80x128xf32>
    %67 = vector.extract_strided_slice %65 {offsets = [0, 128], sizes = [80, 128], strides = [1, 1]} : vector<80x256xf32> to vector<80x128xf32>
    %68 = arith.truncf %66 : vector<80x128xf32> to vector<80x128xbf16>
    %c0_55 = arith.constant 0 : index
    %c0_56 = arith.constant 0 : index
    %69 = vector.load %arg7[%c0_55, %c0_56] : memref<128x384xbf16, #tpu.memory_space<vmem>>, vector<128x384xbf16>
    %cst_57 = arith.constant dense<0.000000e+00> : vector<80x384xf32>
    %70 = tpu.matmul %68, %69, %cst_57 {dimension_numbers = #tpu.dot_dimension_numbers<[1], [0], [0], [1], [0, 0, 1, 1], [], []>} : vector<80x128xbf16>, vector<128x384xbf16>, vector<80x384xf32> -> vector<80x384xf32>
    %c0_58 = arith.constant 0 : index
    %c0_59 = arith.constant 0 : index
    %71 = vector.load %arg8[%c0_58, %c0_59] : memref<1x384xf32, #tpu.memory_space<vmem>>, vector<1x384xf32>
    %72 = vector.broadcast %71 : vector<1x384xf32> to vector<80x384xf32>
    %73 = arith.addf %70, %72 : vector<80x384xf32>
    %74 = vector.extract_strided_slice %73 {offsets = [0, 0], sizes = [80, 128], strides = [1, 1]} : vector<80x384xf32> to vector<80x128xf32>
    %75 = arith.truncf %74 : vector<80x128xf32> to vector<80x128xbf16>
    %76 = vector.extract_strided_slice %73 {offsets = [0, 128], sizes = [80, 128], strides = [1, 1]} : vector<80x384xf32> to vector<80x128xf32>
    %77 = arith.truncf %76 : vector<80x128xf32> to vector<80x128xbf16>
    %78 = vector.extract_strided_slice %73 {offsets = [0, 256], sizes = [80, 128], strides = [1, 1]} : vector<80x384xf32> to vector<80x128xf32>
    %79 = arith.truncf %78 : vector<80x128xf32> to vector<80x128xbf16>
    %cst_60 = arith.constant dense<0.000000e+00> : vector<80x80xf32>
    %80 = tpu.matmul %75, %77, %cst_60 {dimension_numbers = #tpu.dot_dimension_numbers<[1], [1], [0], [0], [0, 0, 1, 0], [], []>} : vector<80x128xbf16>, vector<80x128xbf16>, vector<80x80xf32> -> vector<80x80xf32>
    %c0_61 = arith.constant 0 : index
    %c0_62 = arith.constant 0 : index
    %81 = vector.load %arg3[%c0_61, %c0_62] : memref<1x80xf32, #tpu.memory_space<vmem>>, vector<1x80xf32>
    %82 = vector.broadcast %81 : vector<1x80xf32> to vector<80x80xf32>
    %83 = arith.addf %80, %82 : vector<80x80xf32>
    %cst_63 = arith.constant dense<0xFF800000> : vector<80xf32>
    %84 = vector.multi_reduction <maximumf>, %83, %cst_63 [1] : vector<80x80xf32> to vector<80xf32>
    %85 = vector.shape_cast %84 : vector<80xf32> to vector<80x1xf32>
    %86 = vector.broadcast %85 : vector<80x1xf32> to vector<80x80xf32>
    %87 = arith.subf %83, %86 : vector<80x80xf32>
    %88 = math.exp %87 : vector<80x80xf32>
    %cst_64 = arith.constant dense<0.000000e+00> : vector<80xf32>
    %89 = vector.multi_reduction <add>, %88, %cst_64 [1] : vector<80x80xf32> to vector<80xf32>
    %90 = vector.shape_cast %89 : vector<80xf32> to vector<80x1xf32>
    %91 = tpu.reciprocal %90 {approx = true} : vector<80x1xf32> -> vector<80x1xf32>
    %92 = vector.broadcast %91 : vector<80x1xf32> to vector<80x80xf32>
    %93 = arith.mulf %88, %92 : vector<80x80xf32>
    %94 = arith.truncf %93 : vector<80x80xf32> to vector<80x80xbf16>
    %cst_65 = arith.constant dense<0.000000e+00> : vector<80x128xf32>
    %95 = tpu.matmul %94, %79, %cst_65 {dimension_numbers = #tpu.dot_dimension_numbers<[1], [0], [0], [1], [0, 0, 1, 1], [], []>} : vector<80x80xbf16>, vector<80x128xbf16>, vector<80x128xf32> -> vector<80x128xf32>
    %c0_66 = arith.constant 0 : index
    %c0_67 = arith.constant 0 : index
    %96 = memref.load %arg17[%c0_66, %c0_67] : memref<1x2xf32, #tpu.memory_space<smem>>
    %97 = vector.broadcast %96 : f32 to vector<80x128xf32>
    %98 = arith.mulf %97, %95 : vector<80x128xf32>
    %99 = arith.addf %98, %66 : vector<80x128xf32>
    %100 = vector.broadcast %0 : vector<80x1xf32> to vector<80x128xf32>
    %101 = arith.mulf %99, %100 : vector<80x128xf32>
    %102 = arith.truncf %67 : vector<80x128xf32> to vector<80x128xbf16>
    %cst_68 = arith.constant dense<0.000000e+00> : vector<128x128xf32>
    %103 = tpu.matmul %102, %102, %cst_68 {dimension_numbers = #tpu.dot_dimension_numbers<[0], [0], [1], [1], [0, 1, 1, 1], [], []>} : vector<80x128xbf16>, vector<80x128xbf16>, vector<128x128xf32> -> vector<128x128xf32>
    %cst_69 = arith.constant 0.000000e+00 : f32
    %104 = vector.broadcast %cst_69 : f32 to vector<128x128xf32>
    %105 = arith.subf %104, %103 : vector<128x128xf32>
    %106 = tpu.iota {dimensions = array<i32: 1>} : vector<128x128xi32>
    %c16_i32 = arith.constant 16 : i32
    %107 = vector.broadcast %c16_i32 : i32 to vector<128x128xi32>
    %108 = arith.cmpi slt, %106, %107 : vector<128x128xi32>
    %cst_70 = arith.constant -1.000000e+30 : f32
    %109 = vector.broadcast %cst_70 : f32 to vector<128x128xf32>
    %110 = arith.select %108, %105, %109 : vector<128x128xi1>, vector<128x128xf32>
    %cst_71 = arith.constant dense<0xFF800000> : vector<128xf32>
    %111 = vector.multi_reduction <maximumf>, %110, %cst_71 [1] : vector<128x128xf32> to vector<128xf32>
    %112 = vector.shape_cast %111 : vector<128xf32> to vector<128x1xf32>
    %113 = vector.broadcast %112 : vector<128x1xf32> to vector<128x128xf32>
    %114 = arith.subf %110, %113 : vector<128x128xf32>
    %115 = math.exp %114 : vector<128x128xf32>
    %cst_72 = arith.constant dense<0.000000e+00> : vector<128xf32>
    %116 = vector.multi_reduction <add>, %115, %cst_72 [1] : vector<128x128xf32> to vector<128xf32>
    %117 = vector.shape_cast %116 : vector<128xf32> to vector<128x1xf32>
    %118 = tpu.reciprocal %117 {approx = true} : vector<128x1xf32> -> vector<128x1xf32>
    %119 = vector.broadcast %118 : vector<128x1xf32> to vector<128x128xf32>
    %120 = arith.mulf %115, %119 : vector<128x128xf32>
    %121 = arith.truncf %120 : vector<128x128xf32> to vector<128x128xbf16>
    %cst_73 = arith.constant dense<0.000000e+00> : vector<80x128xf32>
    %122 = tpu.matmul %102, %121, %cst_73 {dimension_numbers = #tpu.dot_dimension_numbers<[1], [1], [0], [0], [0, 0, 1, 0], [], []>} : vector<80x128xbf16>, vector<128x128xbf16>, vector<80x128xf32> -> vector<80x128xf32>
    %c0_74 = arith.constant 0 : index
    %c1_75 = arith.constant 1 : index
    %123 = memref.load %arg17[%c0_74, %c1_75] : memref<1x2xf32, #tpu.memory_space<smem>>
    %124 = vector.broadcast %123 : f32 to vector<80x128xf32>
    %125 = arith.mulf %124, %122 : vector<80x128xf32>
    %126 = arith.addf %125, %67 : vector<80x128xf32>
    %127 = vector.broadcast %0 : vector<80x1xf32> to vector<80x128xf32>
    %128 = arith.mulf %126, %127 : vector<80x128xf32>
    %cst_76 = arith.constant 0.000000e+00 : bf16
    %129 = vector.broadcast %cst_76 : bf16 to vector<104x256xbf16>
    %c0_77 = arith.constant 0 : index
    %c0_78 = arith.constant 0 : index
    %130 = vector.load %arg19[%c0_77, %c0_78] : memref<104x256xbf16, #tpu.memory_space<vmem>>, vector<104x256xbf16>
    tpu.vector_store %arg19[%c0_77, %c0_78], %129 {strides = array<i32>} : memref<104x256xbf16, #tpu.memory_space<vmem>>, vector<104x256xbf16>,
    %131 = arith.truncf %101 : vector<80x128xf32> to vector<80x128xbf16>
    %c11_79 = arith.constant 11 : index
    %c0_80 = arith.constant 0 : index
    %132 = vector.load %arg19[%c11_79, %c0_80] : memref<104x256xbf16, #tpu.memory_space<vmem>>, vector<80x128xbf16>
    tpu.vector_store %arg19[%c11_79, %c0_80], %131 {strides = array<i32>} : memref<104x256xbf16, #tpu.memory_space<vmem>>, vector<80x128xbf16>,
    %133 = arith.truncf %128 : vector<80x128xf32> to vector<80x128xbf16>
    %c11_81 = arith.constant 11 : index
    %c128 = arith.constant 128 : index
    %134 = vector.load %arg19[%c11_81, %c128] : memref<104x256xbf16, #tpu.memory_space<vmem>>, vector<80x128xbf16>
    tpu.vector_store %arg19[%c11_81, %c128], %133 {strides = array<i32>} : memref<104x256xbf16, #tpu.memory_space<vmem>>, vector<80x128xbf16>,
    %cst_82 = arith.constant 0.000000e+00 : f32
    %135 = vector.broadcast %cst_82 : f32 to vector<80x128xf32>
    %cst_83 = arith.constant 0.000000e+00 : f32
    %136 = vector.broadcast %cst_83 : f32 to vector<80x128xf32>
    %c0_84 = arith.constant 0 : index
    %c0_85 = arith.constant 0 : index
    %137 = vector.load %arg19[%c0_84, %c0_85] : memref<104x256xbf16, #tpu.memory_space<vmem>>, vector<80x256xbf16>
    %138 = vector.extract_strided_slice %137 {offsets = [0, 0], sizes = [80, 128], strides = [1, 1]} : vector<80x256xbf16> to vector<80x128xbf16>
    %c0_86 = arith.constant 0 : index
    %c0_87 = arith.constant 0 : index
    %c0_88 = arith.constant 0 : index
    %139 = vector.load %arg9[%c0_86, %c0_87, %c0_88] : memref<9x128x128xbf16, #tpu.memory_space<vmem>>, vector<1x128x128xbf16>
    %140 = vector.shape_cast %139 : vector<1x128x128xbf16> to vector<128x128xbf16>
    %cst_89 = arith.constant dense<0.000000e+00> : vector<80x128xf32>
    %141 = tpu.matmul %138, %140, %cst_89 {dimension_numbers = #tpu.dot_dimension_numbers<[1], [0], [0], [1], [0, 0, 1, 1], [], []>} : vector<80x128xbf16>, vector<128x128xbf16>, vector<80x128xf32> -> vector<80x128xf32>
    %142 = arith.addf %135, %141 : vector<80x128xf32>
    %143 = vector.extract_strided_slice %137 {offsets = [0, 128], sizes = [80, 128], strides = [1, 1]} : vector<80x256xbf16> to vector<80x128xbf16>
    %c0_90 = arith.constant 0 : index
    %c0_91 = arith.constant 0 : index
    %c0_92 = arith.constant 0 : index
    %144 = vector.load %arg12[%c0_90, %c0_91, %c0_92] : memref<9x128x128xbf16, #tpu.memory_space<vmem>>, vector<1x128x128xbf16>
    %145 = vector.shape_cast %144 : vector<1x128x128xbf16> to vector<128x128xbf16>
    %cst_93 = arith.constant dense<0.000000e+00> : vector<80x128xf32>
    %146 = tpu.matmul %143, %145, %cst_93 {dimension_numbers = #tpu.dot_dimension_numbers<[1], [0], [0], [1], [0, 0, 1, 1], [], []>} : vector<80x128xbf16>, vector<128x128xbf16>, vector<80x128xf32> -> vector<80x128xf32>
    %147 = arith.addf %136, %146 : vector<80x128xf32>
    %c1_94 = arith.constant 1 : index
    %c0_95 = arith.constant 0 : index
    %148 = vector.load %arg19[%c1_94, %c0_95] : memref<104x256xbf16, #tpu.memory_space<vmem>>, vector<80x256xbf16>
    %149 = vector.extract_strided_slice %148 {offsets = [0, 0], sizes = [80, 128], strides = [1, 1]} : vector<80x256xbf16> to vector<80x128xbf16>
    %c1_96 = arith.constant 1 : index
    %c0_97 = arith.constant 0 : index
    %c0_98 = arith.constant 0 : index
    %150 = vector.load %arg9[%c1_96, %c0_97, %c0_98] : memref<9x128x128xbf16, #tpu.memory_space<vmem>>, vector<1x128x128xbf16>
    %151 = vector.shape_cast %150 : vector<1x128x128xbf16> to vector<128x128xbf16>
    %cst_99 = arith.constant dense<0.000000e+00> : vector<80x128xf32>
    %152 = tpu.matmul %149, %151, %cst_99 {dimension_numbers = #tpu.dot_dimension_numbers<[1], [0], [0], [1], [0, 0, 1, 1], [], []>} : vector<80x128xbf16>, vector<128x128xbf16>, vector<80x128xf32> -> vector<80x128xf32>
    %153 = arith.addf %142, %152 : vector<80x128xf32>
    %154 = vector.extract_strided_slice %148 {offsets = [0, 128], sizes = [80, 128], strides = [1, 1]} : vector<80x256xbf16> to vector<80x128xbf16>
    %c1_100 = arith.constant 1 : index
    %c0_101 = arith.constant 0 : index
    %c0_102 = arith.constant 0 : index
    %155 = vector.load %arg12[%c1_100, %c0_101, %c0_102] : memref<9x128x128xbf16, #tpu.memory_space<vmem>>, vector<1x128x128xbf16>
    %156 = vector.shape_cast %155 : vector<1x128x128xbf16> to vector<128x128xbf16>
    %cst_103 = arith.constant dense<0.000000e+00> : vector<80x128xf32>
    %157 = tpu.matmul %154, %156, %cst_103 {dimension_numbers = #tpu.dot_dimension_numbers<[1], [0], [0], [1], [0, 0, 1, 1], [], []>} : vector<80x128xbf16>, vector<128x128xbf16>, vector<80x128xf32> -> vector<80x128xf32>
    %158 = arith.addf %147, %157 : vector<80x128xf32>
    %c2_104 = arith.constant 2 : index
    %c0_105 = arith.constant 0 : index
    %159 = vector.load %arg19[%c2_104, %c0_105] : memref<104x256xbf16, #tpu.memory_space<vmem>>, vector<80x256xbf16>
    %160 = vector.extract_strided_slice %159 {offsets = [0, 0], sizes = [80, 128], strides = [1, 1]} : vector<80x256xbf16> to vector<80x128xbf16>
    %c2_106 = arith.constant 2 : index
    %c0_107 = arith.constant 0 : index
    %c0_108 = arith.constant 0 : index
    %161 = vector.load %arg9[%c2_106, %c0_107, %c0_108] : memref<9x128x128xbf16, #tpu.memory_space<vmem>>, vector<1x128x128xbf16>
    %162 = vector.shape_cast %161 : vector<1x128x128xbf16> to vector<128x128xbf16>
    %cst_109 = arith.constant dense<0.000000e+00> : vector<80x128xf32>
    %163 = tpu.matmul %160, %162, %cst_109 {dimension_numbers = #tpu.dot_dimension_numbers<[1], [0], [0], [1], [0, 0, 1, 1], [], []>} : vector<80x128xbf16>, vector<128x128xbf16>, vector<80x128xf32> -> vector<80x128xf32>
    %164 = arith.addf %153, %163 : vector<80x128xf32>
    %165 = vector.extract_strided_slice %159 {offsets = [0, 128], sizes = [80, 128], strides = [1, 1]} : vector<80x256xbf16> to vector<80x128xbf16>
    %c2_110 = arith.constant 2 : index
    %c0_111 = arith.constant 0 : index
    %c0_112 = arith.constant 0 : index
    %166 = vector.load %arg12[%c2_110, %c0_111, %c0_112] : memref<9x128x128xbf16, #tpu.memory_space<vmem>>, vector<1x128x128xbf16>
    %167 = vector.shape_cast %166 : vector<1x128x128xbf16> to vector<128x128xbf16>
    %cst_113 = arith.constant dense<0.000000e+00> : vector<80x128xf32>
    %168 = tpu.matmul %165, %167, %cst_113 {dimension_numbers = #tpu.dot_dimension_numbers<[1], [0], [0], [1], [0, 0, 1, 1], [], []>} : vector<80x128xbf16>, vector<128x128xbf16>, vector<80x128xf32> -> vector<80x128xf32>
    %169 = arith.addf %158, %168 : vector<80x128xf32>
    %c10_114 = arith.constant 10 : index
    %c0_115 = arith.constant 0 : index
    %170 = vector.load %arg19[%c10_114, %c0_115] : memref<104x256xbf16, #tpu.memory_space<vmem>>, vector<80x256xbf16>
    %171 = vector.extract_strided_slice %170 {offsets = [0, 0], sizes = [80, 128], strides = [1, 1]} : vector<80x256xbf16> to vector<80x128xbf16>
    %c3_116 = arith.constant 3 : index
    %c0_117 = arith.constant 0 : index
    %c0_118 = arith.constant 0 : index
    %172 = vector.load %arg9[%c3_116, %c0_117, %c0_118] : memref<9x128x128xbf16, #tpu.memory_space<vmem>>, vector<1x128x128xbf16>
    %173 = vector.shape_cast %172 : vector<1x128x128xbf16> to vector<128x128xbf16>
    %cst_119 = arith.constant dense<0.000000e+00> : vector<80x128xf32>
    %174 = tpu.matmul %171, %173, %cst_119 {dimension_numbers = #tpu.dot_dimension_numbers<[1], [0], [0], [1], [0, 0, 1, 1], [], []>} : vector<80x128xbf16>, vector<128x128xbf16>, vector<80x128xf32> -> vector<80x128xf32>
    %175 = arith.addf %164, %174 : vector<80x128xf32>
    %176 = vector.extract_strided_slice %170 {offsets = [0, 128], sizes = [80, 128], strides = [1, 1]} : vector<80x256xbf16> to vector<80x128xbf16>
    %c3_120 = arith.constant 3 : index
    %c0_121 = arith.constant 0 : index
    %c0_122 = arith.constant 0 : index
    %177 = vector.load %arg12[%c3_120, %c0_121, %c0_122] : memref<9x128x128xbf16, #tpu.memory_space<vmem>>, vector<1x128x128xbf16>
    %178 = vector.shape_cast %177 : vector<1x128x128xbf16> to vector<128x128xbf16>
    %cst_123 = arith.constant dense<0.000000e+00> : vector<80x128xf32>
    %179 = tpu.matmul %176, %178, %cst_123 {dimension_numbers = #tpu.dot_dimension_numbers<[1], [0], [0], [1], [0, 0, 1, 1], [], []>} : vector<80x128xbf16>, vector<128x128xbf16>, vector<80x128xf32> -> vector<80x128xf32>
    %180 = arith.addf %169, %179 : vector<80x128xf32>
    %c11_124 = arith.constant 11 : index
    %c0_125 = arith.constant 0 : index
    %181 = vector.load %arg19[%c11_124, %c0_125] : memref<104x256xbf16, #tpu.memory_space<vmem>>, vector<80x256xbf16>
    %182 = vector.extract_strided_slice %181 {offsets = [0, 0], sizes = [80, 128], strides = [1, 1]} : vector<80x256xbf16> to vector<80x128xbf16>
    %c4_126 = arith.constant 4 : index
    %c0_127 = arith.constant 0 : index
    %c0_128 = arith.constant 0 : index
    %183 = vector.load %arg9[%c4_126, %c0_127, %c0_128] : memref<9x128x128xbf16, #tpu.memory_space<vmem>>, vector<1x128x128xbf16>
    %184 = vector.shape_cast %183 : vector<1x128x128xbf16> to vector<128x128xbf16>
    %cst_129 = arith.constant dense<0.000000e+00> : vector<80x128xf32>
    %185 = tpu.matmul %182, %184, %cst_129 {dimension_numbers = #tpu.dot_dimension_numbers<[1], [0], [0], [1], [0, 0, 1, 1], [], []>} : vector<80x128xbf16>, vector<128x128xbf16>, vector<80x128xf32> -> vector<80x128xf32>
    %186 = arith.addf %175, %185 : vector<80x128xf32>
    %187 = vector.extract_strided_slice %181 {offsets = [0, 128], sizes = [80, 128], strides = [1, 1]} : vector<80x256xbf16> to vector<80x128xbf16>
    %c4_130 = arith.constant 4 : index
    %c0_131 = arith.constant 0 : index
    %c0_132 = arith.constant 0 : index
    %188 = vector.load %arg12[%c4_130, %c0_131, %c0_132] : memref<9x128x128xbf16, #tpu.memory_space<vmem>>, vector<1x128x128xbf16>
    %189 = vector.shape_cast %188 : vector<1x128x128xbf16> to vector<128x128xbf16>
    %cst_133 = arith.constant dense<0.000000e+00> : vector<80x128xf32>
    %190 = tpu.matmul %187, %189, %cst_133 {dimension_numbers = #tpu.dot_dimension_numbers<[1], [0], [0], [1], [0, 0, 1, 1], [], []>} : vector<80x128xbf16>, vector<128x128xbf16>, vector<80x128xf32> -> vector<80x128xf32>
    %191 = arith.addf %180, %190 : vector<80x128xf32>
    %c12_134 = arith.constant 12 : index
    %c0_135 = arith.constant 0 : index
    %192 = vector.load %arg19[%c12_134, %c0_135] : memref<104x256xbf16, #tpu.memory_space<vmem>>, vector<80x256xbf16>
    %193 = vector.extract_strided_slice %192 {offsets = [0, 0], sizes = [80, 128], strides = [1, 1]} : vector<80x256xbf16> to vector<80x128xbf16>
    %c5_136 = arith.constant 5 : index
    %c0_137 = arith.constant 0 : index
    %c0_138 = arith.constant 0 : index
    %194 = vector.load %arg9[%c5_136, %c0_137, %c0_138] : memref<9x128x128xbf16, #tpu.memory_space<vmem>>, vector<1x128x128xbf16>
    %195 = vector.shape_cast %194 : vector<1x128x128xbf16> to vector<128x128xbf16>
    %cst_139 = arith.constant dense<0.000000e+00> : vector<80x128xf32>
    %196 = tpu.matmul %193, %195, %cst_139 {dimension_numbers = #tpu.dot_dimension_numbers<[1], [0], [0], [1], [0, 0, 1, 1], [], []>} : vector<80x128xbf16>, vector<128x128xbf16>, vector<80x128xf32> -> vector<80x128xf32>
    %197 = arith.addf %186, %196 : vector<80x128xf32>
    %198 = vector.extract_strided_slice %192 {offsets = [0, 128], sizes = [80, 128], strides = [1, 1]} : vector<80x256xbf16> to vector<80x128xbf16>
    %c5_140 = arith.constant 5 : index
    %c0_141 = arith.constant 0 : index
    %c0_142 = arith.constant 0 : index
    %199 = vector.load %arg12[%c5_140, %c0_141, %c0_142] : memref<9x128x128xbf16, #tpu.memory_space<vmem>>, vector<1x128x128xbf16>
    %200 = vector.shape_cast %199 : vector<1x128x128xbf16> to vector<128x128xbf16>
    %cst_143 = arith.constant dense<0.000000e+00> : vector<80x128xf32>
    %201 = tpu.matmul %198, %200, %cst_143 {dimension_numbers = #tpu.dot_dimension_numbers<[1], [0], [0], [1], [0, 0, 1, 1], [], []>} : vector<80x128xbf16>, vector<128x128xbf16>, vector<80x128xf32> -> vector<80x128xf32>
    %202 = arith.addf %191, %201 : vector<80x128xf32>
    %c20_144 = arith.constant 20 : index
    %c0_145 = arith.constant 0 : index
    %203 = vector.load %arg19[%c20_144, %c0_145] : memref<104x256xbf16, #tpu.memory_space<vmem>>, vector<80x256xbf16>
    %204 = vector.extract_strided_slice %203 {offsets = [0, 0], sizes = [80, 128], strides = [1, 1]} : vector<80x256xbf16> to vector<80x128xbf16>
    %c6_146 = arith.constant 6 : index
    %c0_147 = arith.constant 0 : index
    %c0_148 = arith.constant 0 : index
    %205 = vector.load %arg9[%c6_146, %c0_147, %c0_148] : memref<9x128x128xbf16, #tpu.memory_space<vmem>>, vector<1x128x128xbf16>
    %206 = vector.shape_cast %205 : vector<1x128x128xbf16> to vector<128x128xbf16>
    %cst_149 = arith.constant dense<0.000000e+00> : vector<80x128xf32>
    %207 = tpu.matmul %204, %206, %cst_149 {dimension_numbers = #tpu.dot_dimension_numbers<[1], [0], [0], [1], [0, 0, 1, 1], [], []>} : vector<80x128xbf16>, vector<128x128xbf16>, vector<80x128xf32> -> vector<80x128xf32>
    %208 = arith.addf %197, %207 : vector<80x128xf32>
    %209 = vector.extract_strided_slice %203 {offsets = [0, 128], sizes = [80, 128], strides = [1, 1]} : vector<80x256xbf16> to vector<80x128xbf16>
    %c6_150 = arith.constant 6 : index
    %c0_151 = arith.constant 0 : index
    %c0_152 = arith.constant 0 : index
    %210 = vector.load %arg12[%c6_150, %c0_151, %c0_152] : memref<9x128x128xbf16, #tpu.memory_space<vmem>>, vector<1x128x128xbf16>
    %211 = vector.shape_cast %210 : vector<1x128x128xbf16> to vector<128x128xbf16>
    %cst_153 = arith.constant dense<0.000000e+00> : vector<80x128xf32>
    %212 = tpu.matmul %209, %211, %cst_153 {dimension_numbers = #tpu.dot_dimension_numbers<[1], [0], [0], [1], [0, 0, 1, 1], [], []>} : vector<80x128xbf16>, vector<128x128xbf16>, vector<80x128xf32> -> vector<80x128xf32>
    %213 = arith.addf %202, %212 : vector<80x128xf32>
    %c21_154 = arith.constant 21 : index
    %c0_155 = arith.constant 0 : index
    %214 = vector.load %arg19[%c21_154, %c0_155] : memref<104x256xbf16, #tpu.memory_space<vmem>>, vector<80x256xbf16>
    %215 = vector.extract_strided_slice %214 {offsets = [0, 0], sizes = [80, 128], strides = [1, 1]} : vector<80x256xbf16> to vector<80x128xbf16>
    %c7_156 = arith.constant 7 : index
    %c0_157 = arith.constant 0 : index
    %c0_158 = arith.constant 0 : index
    %216 = vector.load %arg9[%c7_156, %c0_157, %c0_158] : memref<9x128x128xbf16, #tpu.memory_space<vmem>>, vector<1x128x128xbf16>
    %217 = vector.shape_cast %216 : vector<1x128x128xbf16> to vector<128x128xbf16>
    %cst_159 = arith.constant dense<0.000000e+00> : vector<80x128xf32>
    %218 = tpu.matmul %215, %217, %cst_159 {dimension_numbers = #tpu.dot_dimension_numbers<[1], [0], [0], [1], [0, 0, 1, 1], [], []>} : vector<80x128xbf16>, vector<128x128xbf16>, vector<80x128xf32> -> vector<80x128xf32>
    %219 = arith.addf %208, %218 : vector<80x128xf32>
    %220 = vector.extract_strided_slice %214 {offsets = [0, 128], sizes = [80, 128], strides = [1, 1]} : vector<80x256xbf16> to vector<80x128xbf16>
    %c7_160 = arith.constant 7 : index
    %c0_161 = arith.constant 0 : index
    %c0_162 = arith.constant 0 : index
    %221 = vector.load %arg12[%c7_160, %c0_161, %c0_162] : memref<9x128x128xbf16, #tpu.memory_space<vmem>>, vector<1x128x128xbf16>
    %222 = vector.shape_cast %221 : vector<1x128x128xbf16> to vector<128x128xbf16>
    %cst_163 = arith.constant dense<0.000000e+00> : vector<80x128xf32>
    %223 = tpu.matmul %220, %222, %cst_163 {dimension_numbers = #tpu.dot_dimension_numbers<[1], [0], [0], [1], [0, 0, 1, 1], [], []>} : vector<80x128xbf16>, vector<128x128xbf16>, vector<80x128xf32> -> vector<80x128xf32>
    %224 = arith.addf %213, %223 : vector<80x128xf32>
    %c22_164 = arith.constant 22 : index
    %c0_165 = arith.constant 0 : index
    %225 = vector.load %arg19[%c22_164, %c0_165] : memref<104x256xbf16, #tpu.memory_space<vmem>>, vector<80x256xbf16>
    %226 = vector.extract_strided_slice %225 {offsets = [0, 0], sizes = [80, 128], strides = [1, 1]} : vector<80x256xbf16> to vector<80x128xbf16>
    %c8_166 = arith.constant 8 : index
    %c0_167 = arith.constant 0 : index
    %c0_168 = arith.constant 0 : index
    %227 = vector.load %arg9[%c8_166, %c0_167, %c0_168] : memref<9x128x128xbf16, #tpu.memory_space<vmem>>, vector<1x128x128xbf16>
    %228 = vector.shape_cast %227 : vector<1x128x128xbf16> to vector<128x128xbf16>
    %cst_169 = arith.constant dense<0.000000e+00> : vector<80x128xf32>
    %229 = tpu.matmul %226, %228, %cst_169 {dimension_numbers = #tpu.dot_dimension_numbers<[1], [0], [0], [1], [0, 0, 1, 1], [], []>} : vector<80x128xbf16>, vector<128x128xbf16>, vector<80x128xf32> -> vector<80x128xf32>
    %230 = arith.addf %219, %229 : vector<80x128xf32>
    %231 = vector.extract_strided_slice %225 {offsets = [0, 128], sizes = [80, 128], strides = [1, 1]} : vector<80x256xbf16> to vector<80x128xbf16>
    %c8_170 = arith.constant 8 : index
    %c0_171 = arith.constant 0 : index
    %c0_172 = arith.constant 0 : index
    %232 = vector.load %arg12[%c8_170, %c0_171, %c0_172] : memref<9x128x128xbf16, #tpu.memory_space<vmem>>, vector<1x128x128xbf16>
    %233 = vector.shape_cast %232 : vector<1x128x128xbf16> to vector<128x128xbf16>
    %cst_173 = arith.constant dense<0.000000e+00> : vector<80x128xf32>
    %234 = tpu.matmul %231, %233, %cst_173 {dimension_numbers = #tpu.dot_dimension_numbers<[1], [0], [0], [1], [0, 0, 1, 1], [], []>} : vector<80x128xbf16>, vector<128x128xbf16>, vector<80x128xf32> -> vector<80x128xf32>
    %235 = arith.addf %224, %234 : vector<80x128xf32>
    %c0_174 = arith.constant 0 : index
    %c0_175 = arith.constant 0 : index
    %236 = vector.load %arg10[%c0_174, %c0_175] : memref<1x128xf32, #tpu.memory_space<vmem>>, vector<1x128xf32>
    %237 = vector.broadcast %236 : vector<1x128xf32> to vector<80x128xf32>
    %238 = arith.mulf %230, %237 : vector<80x128xf32>
    %c0_176 = arith.constant 0 : index
    %c0_177 = arith.constant 0 : index
    %239 = vector.load %arg11[%c0_176, %c0_177] : memref<1x128xf32, #tpu.memory_space<vmem>>, vector<1x128xf32>
    %240 = vector.broadcast %239 : vector<1x128xf32> to vector<80x128xf32>
    %241 = arith.addf %238, %240 : vector<80x128xf32>
    %cst_178 = arith.constant 0.000000e+00 : f32
    %242 = vector.broadcast %cst_178 : f32 to vector<80x128xf32>
    %243 = arith.maximumf %241, %242 : vector<80x128xf32>
    %c0_179 = arith.constant 0 : index
    %c0_180 = arith.constant 0 : index
    %244 = vector.load %arg13[%c0_179, %c0_180] : memref<1x128xf32, #tpu.memory_space<vmem>>, vector<1x128xf32>
    %245 = vector.broadcast %244 : vector<1x128xf32> to vector<80x128xf32>
    %246 = arith.mulf %235, %245 : vector<80x128xf32>
    %c0_181 = arith.constant 0 : index
    %c0_182 = arith.constant 0 : index
    %247 = vector.load %arg14[%c0_181, %c0_182] : memref<1x128xf32, #tpu.memory_space<vmem>>, vector<1x128xf32>
    %248 = vector.broadcast %247 : vector<1x128xf32> to vector<80x128xf32>
    %249 = arith.addf %246, %248 : vector<80x128xf32>
    %cst_183 = arith.constant 0.000000e+00 : f32
    %250 = vector.broadcast %cst_183 : f32 to vector<80x128xf32>
    %251 = arith.maximumf %249, %250 : vector<80x128xf32>
    %252 = arith.addf %243, %251 : vector<80x128xf32>
    %253 = arith.truncf %252 : vector<80x128xf32> to vector<80x128xbf16>
    %c0_184 = arith.constant 0 : index
    %c0_185 = arith.constant 0 : index
    %254 = vector.load %arg15[%c0_184, %c0_185] : memref<128x128xbf16, #tpu.memory_space<vmem>>, vector<128x128xbf16>
    %cst_186 = arith.constant dense<0.000000e+00> : vector<80x128xf32>
    %255 = tpu.matmul %253, %254, %cst_186 {dimension_numbers = #tpu.dot_dimension_numbers<[1], [0], [0], [1], [0, 0, 1, 1], [], []>} : vector<80x128xbf16>, vector<128x128xbf16>, vector<80x128xf32> -> vector<80x128xf32>
    %c0_187 = arith.constant 0 : index
    %c0_188 = arith.constant 0 : index
    %256 = vector.load %arg16[%c0_187, %c0_188] : memref<1x128xf32, #tpu.memory_space<vmem>>, vector<1x128xf32>
    %257 = vector.broadcast %256 : vector<1x128xf32> to vector<80x128xf32>
    %258 = arith.addf %255, %257 : vector<80x128xf32>
    %259 = arith.truncf %258 : vector<80x128xf32> to vector<80x128xbf16>
    %c0_189 = arith.constant 0 : index
    %c0_190 = arith.constant 0 : index
    %c0_191 = arith.constant 0 : index
    %260 = vector.load %arg18[%c0_189, %c0_190, %c0_191] : memref<1x80x128xbf16, #tpu.memory_space<vmem>>, vector<1x80x128xbf16>
    %261 = vector.shape_cast %260 : vector<1x80x128xbf16> to vector<80x128xbf16>
    %262 = vector.shape_cast %259 : vector<80x128xbf16> to vector<1x80x128xbf16>
    tpu.vector_store %arg18[%c0_189, %c0_190, %c0_191], %262 {strides = array<i32>} : memref<1x80x128xbf16, #tpu.memory_space<vmem>>, vector<1x80x128xbf16>,
    return
  }
  func.func @transform_0(%arg0: i32) -> (i32, i32, i32) {
    %c0_i32 = arith.constant 0 : i32
    %c0_i32_0 = arith.constant 0 : i32
    %c0_i32_1 = arith.constant 0 : i32
    return %arg0, %c0_i32, %c0_i32_0 : i32, i32, i32
  }
  func.func @transform_1(%arg0: i32) -> (i32, i32) {
    %c0_i32 = arith.constant 0 : i32
    %c0_i32_0 = arith.constant 0 : i32
    %c0_i32_1 = arith.constant 0 : i32
    return %c0_i32, %c0_i32_0 : i32, i32
  }
  func.func @transform_2(%arg0: i32) -> (i32, i32) {
    %c0_i32 = arith.constant 0 : i32
    %c0_i32_0 = arith.constant 0 : i32
    %c0_i32_1 = arith.constant 0 : i32
    return %c0_i32, %c0_i32_0 : i32, i32
  }
  func.func @transform_3(%arg0: i32) -> (i32, i32, i32) {
    %c0_i32 = arith.constant 0 : i32
    %c0_i32_0 = arith.constant 0 : i32
    %c0_i32_1 = arith.constant 0 : i32
    %c0_i32_2 = arith.constant 0 : i32
    return %c0_i32, %c0_i32_0, %c0_i32_1 : i32, i32, i32
  }
  func.func @transform_4(%arg0: i32) -> (i32, i32) {
    %c0_i32 = arith.constant 0 : i32
    %c0_i32_0 = arith.constant 0 : i32
    %c0_i32_1 = arith.constant 0 : i32
    return %c0_i32, %c0_i32_0 : i32, i32
  }
  func.func @transform_5(%arg0: i32) -> (i32, i32) {
    %c0_i32 = arith.constant 0 : i32
    %c0_i32_0 = arith.constant 0 : i32
    %c0_i32_1 = arith.constant 0 : i32
    return %c0_i32, %c0_i32_0 : i32, i32
  }
  func.func @transform_6(%arg0: i32) -> (i32, i32) {
    %c0_i32 = arith.constant 0 : i32
    %c0_i32_0 = arith.constant 0 : i32
    %c0_i32_1 = arith.constant 0 : i32
    return %c0_i32, %c0_i32_0 : i32, i32
  }
  func.func @transform_7(%arg0: i32) -> (i32, i32) {
    %c0_i32 = arith.constant 0 : i32
    %c0_i32_0 = arith.constant 0 : i32
    %c0_i32_1 = arith.constant 0 : i32
    return %c0_i32, %c0_i32_0 : i32, i32
  }
  func.func @transform_8(%arg0: i32) -> (i32, i32, i32) {
    %c0_i32 = arith.constant 0 : i32
    %c0_i32_0 = arith.constant 0 : i32
    %c0_i32_1 = arith.constant 0 : i32
    %c0_i32_2 = arith.constant 0 : i32
    return %c0_i32, %c0_i32_0, %c0_i32_1 : i32, i32, i32
  }
  func.func @transform_9(%arg0: i32) -> (i32, i32) {
    %c0_i32 = arith.constant 0 : i32
    %c0_i32_0 = arith.constant 0 : i32
    %c0_i32_1 = arith.constant 0 : i32
    return %c0_i32, %c0_i32_0 : i32, i32
  }
  func.func @transform_10(%arg0: i32) -> (i32, i32) {
    %c0_i32 = arith.constant 0 : i32
    %c0_i32_0 = arith.constant 0 : i32
    %c0_i32_1 = arith.constant 0 : i32
    return %c0_i32, %c0_i32_0 : i32, i32
  }
  func.func @transform_11(%arg0: i32) -> (i32, i32, i32) {
    %c0_i32 = arith.constant 0 : i32
    %c0_i32_0 = arith.constant 0 : i32
    %c0_i32_1 = arith.constant 0 : i32
    %c0_i32_2 = arith.constant 0 : i32
    return %c0_i32, %c0_i32_0, %c0_i32_1 : i32, i32, i32
  }
  func.func @transform_12(%arg0: i32) -> (i32, i32) {
    %c0_i32 = arith.constant 0 : i32
    %c0_i32_0 = arith.constant 0 : i32
    %c0_i32_1 = arith.constant 0 : i32
    return %c0_i32, %c0_i32_0 : i32, i32
  }
  func.func @transform_13(%arg0: i32) -> (i32, i32) {
    %c0_i32 = arith.constant 0 : i32
    %c0_i32_0 = arith.constant 0 : i32
    %c0_i32_1 = arith.constant 0 : i32
    return %c0_i32, %c0_i32_0 : i32, i32
  }
  func.func @transform_14(%arg0: i32) -> (i32, i32) {
    %c0_i32 = arith.constant 0 : i32
    %c0_i32_0 = arith.constant 0 : i32
    %c0_i32_1 = arith.constant 0 : i32
    return %c0_i32, %c0_i32_0 : i32, i32
  }
  func.func @transform_15(%arg0: i32) -> (i32, i32) {
    %c0_i32 = arith.constant 0 : i32
    %c0_i32_0 = arith.constant 0 : i32
    %c0_i32_1 = arith.constant 0 : i32
    return %c0_i32, %c0_i32_0 : i32, i32
  }
  func.func @transform_16(%arg0: i32) -> (i32, i32) {
    %c0_i32 = arith.constant 0 : i32
    %c0_i32_0 = arith.constant 0 : i32
    %c0_i32_1 = arith.constant 0 : i32
    return %c0_i32, %c0_i32_0 : i32, i32
  }
  func.func @transform_17(%arg0: i32) -> (i32, i32, i32) {
    %c0_i32 = arith.constant 0 : i32
    %c0_i32_0 = arith.constant 0 : i32
    %c0_i32_1 = arith.constant 0 : i32
    return %arg0, %c0_i32, %c0_i32_0 : i32, i32, i32
  }
}

</mosaic_0001>

<llo_original>
// kernel: tpu_custom_call.1
$region0: #{tpu_custom_call.1}
  #allocation0 [shape = 'u32[]', space=smem, size = 0x4, offset = 0x4, fixed_abs, tag = 'smem constant byte address 0x4 - core index']
  #allocation1 [shape = 'u32[144,128]{1,0:T(1,128)}', space=vmem, size = 0x12000, scoped, tag = 'internal scratch']
  #allocation2 [shape = 'bf16[104,256]{1,0:T(8,128)(2,1)}', space=vmem, size = 0xd000, scoped, tag = 'scratch operand']
  %s0 = inlined_call_operand.hbm [shape: bf16[2,104,128], index: 0, kind: input, shape index: {}]
  %s1 = inlined_call_operand.vmem [shape: f32[80,1], index: 1, kind: input, shape index: {}]
  %s2 = inlined_call_operand.vmem [shape: f32[1,80], index: 2, kind: input, shape index: {}]
  %s3 = inlined_call_operand.hbm [shape: bf16[9,128,256], index: 3, kind: input, shape index: {}]
  %s4 = inlined_call_operand.vmem [shape: f32[1,256], index: 4, kind: input, shape index: {}]
  %s5 = inlined_call_operand.vmem [shape: f32[1,256], index: 5, kind: input, shape index: {}]
  %s6 = inlined_call_operand.hbm [shape: bf16[128,384], index: 6, kind: input, shape index: {}]
  %s7 = inlined_call_operand.vmem [shape: f32[1,384], index: 7, kind: input, shape index: {}]
  %s8 = inlined_call_operand.hbm [shape: bf16[9,128,128], index: 8, kind: input, shape index: {}]
  %s9 = inlined_call_operand.vmem [shape: f32[1,128], index: 9, kind: input, shape index: {}]
  %s10 = inlined_call_operand.vmem [shape: f32[1,128], index: 10, kind: input, shape index: {}]
  %s11 = inlined_call_operand.hbm [shape: bf16[9,128,128], index: 11, kind: input, shape index: {}]
  %s12 = inlined_call_operand.vmem [shape: f32[1,128], index: 12, kind: input, shape index: {}]
  %s13 = inlined_call_operand.vmem [shape: f32[1,128], index: 13, kind: input, shape index: {}]
  %s14 = inlined_call_operand.vmem [shape: bf16[128,128], index: 14, kind: input, shape index: {}]
  %s15 = inlined_call_operand.vmem [shape: f32[1,128], index: 15, kind: input, shape index: {}]
  %s16 = inlined_call_operand.vmem [shape: f32[1,2], index: 16, kind: input, shape index: {}]
  %s17 = inlined_call_operand.hbm [shape: bf16[2,80,128], index: 17, kind: output, shape index: {}]
  %s18 = sld [smem:[#allocation0]]
  $region125: #{tpu_custom_call.1} parent=0
    _
  %s20 = ssub.s32 1, %s18
  %s21 = scalar_select 0, %s20, %s18
  $region1: #{tpu_custom_call.1} parent=0
    #allocation3 [shape = 'u8[53248]{0}', space=vmem, size = 0xd000, scoped, tag = 'input window, operand 0']
    #allocation4 [shape = 's32[2]{0}', space=sflag, size = 0x8, scoped, tag = 'scoped memory for tpu_custom_call.1']
    #allocation5 [shape = 's32[2]{0}', space=sflag, size = 0x8, scoped, tag = 'scoped memory for tpu_custom_call.1']
    #allocation6 [shape = 's32[2]{0}', space=sflag, size = 0x8, scoped, tag = 'scoped memory for tpu_custom_call.1']
    #allocation7 [shape = 'u8[589824]{0}', space=vmem, size = 0x90000, scoped, tag = 'input window, operand 3, single buffered']
    #allocation8 [shape = 's32[1]{0}', space=sflag, size = 0x4, scoped, tag = 'scoped memory for tpu_custom_call.1']
    #allocation9 [shape = 'u8[98304]{0}', space=vmem, size = 0x18000, scoped, tag = 'input window, operand 6, single buffered']
    #allocation10 [shape = 'u8[294912]{0}', space=vmem, size = 0x48000, scoped, tag = 'input window, operand 8, single buffered']
    #allocation11 [shape = 's32[1]{0}', space=sflag, size = 0x4, scoped, tag = 'scoped memory for tpu_custom_call.1']
    #allocation12 [shape = 'u8[294912]{0}', space=vmem, size = 0x48000, scoped, tag = 'input window, operand 11, single buffered']
    #allocation13 [shape = 'u8[512]{0}', space=smem, size = 0x200, scoped, tag = 'input window, operand 16, single buffered']
    #allocation14 [shape = 'u8[40960]{0}', space=vmem, size = 0xa000, scoped, tag = 'output window, operand 0']
    %22 = vsyncpa [#allocation4], 0
    %s23 = scalar_lea.sflag [#allocation4], 1
    %24 = vsyncpa %s23, 0
    %25 = vsyncpa [#allocation8], 0
    %26 = vsyncpa [#allocation11], 0
    %27 = vsyncpa [#allocation6], 0
    %28 = vsyncpa [#allocation5], 0
    %s29 = scalar_lea.sflag [#allocation5], 1
    %30 = vsyncpa %s29, 0
    loop: start=0, step=1, limit=4
    $region2: #{tpu_custom_call.1} parent=1 // loop_pre_header
      _
    $region3: #{tpu_custom_call.1} parent=1 // loop_header
      %s32 = sphi 0, %s36
      %p33 = scmp.ge.s32.totalorder %s32, 4
      %s42 = sphi 0, %s44
      %s45 = sphi 0, %s42
      %s46 = sphi 0, %s45
      %s62 = sphi 0, %s46
      %s66 = sphi 0, %s66
      %s68 = sphi 0, %s66
      %s69 = sphi 0, %s68
      %s83 = sphi 0, %s69
      %s87 = sphi 0, %s87
      %s89 = sphi 0, %s87
      %s90 = sphi 0, %s89
      %s104 = sphi 0, %s90
      %s108 = sphi 0, %s108
      %s110 = sphi 0, %s108
      %s111 = sphi 0, %s110
      %s125 = sphi 0, %s111
      %s129 = sphi 0, %s129
      %s131 = sphi 0, %s129
      %s132 = sphi 0, %s131
      %s146 = sphi 0, %s132
      %s150 = sphi 0, %s150
      %s152 = sphi 0, %s150
      %s153 = sphi 0, %s152
      %s167 = sphi 0, %s153
      %s171 = sphi 0, %s171
      %s173 = sphi 0, %s171
      %s174 = sphi 0, %s173
      %s188 = sphi 0, %s174
      %s192 = sphi 0, %s192
      %s194 = sphi 0, %s192
      %s195 = sphi 0, %s194
      %s209 = sphi 0, %s195
      %s213 = sphi 0, %s213
      %s215 = sphi 0, %s213
      %s216 = sphi 0, %s215
      %s230 = sphi 0, %s216
      %s234 = sphi 0, %s234
      %s236 = sphi 0, %s234
      %s237 = sphi 0, %s236
      %s251 = sphi 0, %s237
      %s255 = sphi 0, %s255
      %s257 = sphi 0, %s255
      %s258 = sphi 0, %s257
      %s272 = sphi 0, %s258
      %s276 = sphi 0, %s276
      %s278 = sphi 0, %s276
      %s279 = sphi 0, %s278
      %s293 = sphi 0, %s279
      %s297 = sphi 0, %s297
      %s299 = sphi 0, %s297
      %s300 = sphi 0, %s299
      %s314 = sphi 0, %s300
      %s318 = sphi 0, %s318
      %s320 = sphi 0, %s318
      %s321 = sphi 0, %s320
      %s335 = sphi 0, %s321
      %s339 = sphi 0, %s339
      %s341 = sphi 0, %s339
      %s342 = sphi 0, %s341
      %s356 = sphi 0, %s342
      %s360 = sphi 0, %s360
      %s362 = sphi 0, %s360
      %s363 = sphi 0, %s362
      %s377 = sphi 0, %s363
      %s381 = sphi 0, %s381
      %s383 = sphi 0, %s381
      %s384 = sphi 0, %s383
      %s398 = sphi 0, %s384
      %s404 = sphi 0, %s406
      %s407 = sphi 0, %s404
      %s408 = sphi 0, %s407
      %s424 = sphi 0, %s408
    $region4: #{tpu_custom_call.1} parent=1 // loop_header_branch
      %35 = sbr.rel (%p33) target = $region8
    $region5: #{tpu_custom_call.1} parent=1 // loop_body
      %s37 = ssub.s32 %s32, 1
      %s38 = ssub.s32 %s32, 2
      %s39 = sadd.s32 %s32, 1
      %s40 = ssub.s32 %s32, %s39
      %p41 = scmp.eq.s32.totalorder %s40, 0
      %s43 = sadd.s32 %s42, 1
      %s44 = scalar_select %p41, %s42, %s43
      %p47 = pneg %p41
      %p48 = scmp.eq.s32.totalorder %s32, 1
      %p49 = por %p47, %p48
      %p50 = scmp.ne.s32.totalorder %s42, %s45
      %p51 = scmp.eq.s32.totalorder %s32, 0
      %p52 = por %p50, %p51
      %p53 = scmp.ne.s32.totalorder %s42, %s45
      %p54 = scmp.eq.s32.totalorder %s37, 1
      %p55 = por %p53, %p54
      %p56 = scmp.ne.s32.totalorder %s45, %s46
      %p57 = scmp.eq.s32.totalorder %s37, 0
      %p58 = por %p56, %p57
      %p59 = scmp.ne.s32.totalorder %s45, %s46
      %p60 = scmp.eq.s32.totalorder %s38, 1
      %p61 = por %p59, %p60
      %p63 = scmp.ne.s32.totalorder %s46, %s62
      %p64 = scmp.eq.s32.totalorder %s38, 0
      %p65 = por %p63, %p64
      %s67 = sadd.s32 %s66, 1
      %p70 = scmp.eq.s32.totalorder %s32, 1
      %p71 = scmp.ne.s32.totalorder %s66, %s68
      %p72 = scmp.eq.s32.totalorder %s32, 0
      %p73 = por %p71, %p72
      %p74 = scmp.ne.s32.totalorder %s66, %s68
      %p75 = scmp.eq.s32.totalorder %s37, 1
      %p76 = por %p74, %p75
      %p77 = scmp.ne.s32.totalorder %s68, %s69
      %p78 = scmp.eq.s32.totalorder %s37, 0
      %p79 = por %p77, %p78
      %p80 = scmp.ne.s32.totalorder %s68, %s69
      %p81 = scmp.eq.s32.totalorder %s38, 1
      %p82 = por %p80, %p81
      %p84 = scmp.ne.s32.totalorder %s69, %s83
      %p85 = scmp.eq.s32.totalorder %s38, 0
      %p86 = por %p84, %p85
      %s88 = sadd.s32 %s87, 1
      %p91 = scmp.eq.s32.totalorder %s32, 1
      %p92 = scmp.ne.s32.totalorder %s87, %s89
      %p93 = scmp.eq.s32.totalorder %s32, 0
      %p94 = por %p92, %p93
      %p95 = scmp.ne.s32.totalorder %s87, %s89
      %p96 = scmp.eq.s32.totalorder %s37, 1
      %p97 = por %p95, %p96
      %p98 = scmp.ne.s32.totalorder %s89, %s90
      %p99 = scmp.eq.s32.totalorder %s37, 0
      %p100 = por %p98, %p99
      %p101 = scmp.ne.s32.totalorder %s89, %s90
      %p102 = scmp.eq.s32.totalorder %s38, 1
      %p103 = por %p101, %p102
      %p105 = scmp.ne.s32.totalorder %s90, %s104
      %p106 = scmp.eq.s32.totalorder %s38, 0
      %p107 = por %p105, %p106
      %s109 = sadd.s32 %s108, 1
      %p112 = scmp.eq.s32.totalorder %s32, 1
      %p113 = scmp.ne.s32.totalorder %s108, %s110
      %p114 = scmp.eq.s32.totalorder %s32, 0
      %p115 = por %p113, %p114
      %p116 = scmp.ne.s32.totalorder %s108, %s110
      %p117 = scmp.eq.s32.totalorder %s37, 1
      %p118 = por %p116, %p117
      %p119 = scmp.ne.s32.totalorder %s110, %s111
      %p120 = scmp.eq.s32.totalorder %s37, 0
      %p121 = por %p119, %p120
      %p122 = scmp.ne.s32.totalorder %s110, %s111
      %p123 = scmp.eq.s32.totalorder %s38, 1
      %p124 = por %p122, %p123
      %p126 = scmp.ne.s32.totalorder %s111, %s125
      %p127 = scmp.eq.s32.totalorder %s38, 0
      %p128 = por %p126, %p127
      %s130 = sadd.s32 %s129, 1
      %p133 = scmp.eq.s32.totalorder %s32, 1
      %p134 = scmp.ne.s32.totalorder %s129, %s131
      %p135 = scmp.eq.s32.totalorder %s32, 0
      %p136 = por %p134, %p135
      %p137 = scmp.ne.s32.totalorder %s129, %s131
      %p138 = scmp.eq.s32.totalorder %s37, 1
      %p139 = por %p137, %p138
      %p140 = scmp.ne.s32.totalorder %s131, %s132
      %p141 = scmp.eq.s32.totalorder %s37, 0
      %p142 = por %p140, %p141
      %p143 = scmp.ne.s32.totalorder %s131, %s132
      %p144 = scmp.eq.s32.totalorder %s38, 1
      %p145 = por %p143, %p144
      %p147 = scmp.ne.s32.totalorder %s132, %s146
      %p148 = scmp.eq.s32.totalorder %s38, 0
      %p149 = por %p147, %p148
      %s151 = sadd.s32 %s150, 1
      %p154 = scmp.eq.s32.totalorder %s32, 1
      %p155 = scmp.ne.s32.totalorder %s150, %s152
      %p156 = scmp.eq.s32.totalorder %s32, 0
      %p157 = por %p155, %p156
      %p158 = scmp.ne.s32.totalorder %s150, %s152
      %p159 = scmp.eq.s32.totalorder %s37, 1
      %p160 = por %p158, %p159
      %p161 = scmp.ne.s32.totalorder %s152, %s153
      %p162 = scmp.eq.s32.totalorder %s37, 0
      %p163 = por %p161, %p162
      %p164 = scmp.ne.s32.totalorder %s152, %s153
      %p165 = scmp.eq.s32.totalorder %s38, 1
      %p166 = por %p164, %p165
      %p168 = scmp.ne.s32.totalorder %s153, %s167
      %p169 = scmp.eq.s32.totalorder %s38, 0
      %p170 = por %p168, %p169
      %s172 = sadd.s32 %s171, 1
      %p175 = scmp.eq.s32.totalorder %s32, 1
      %p176 = scmp.ne.s32.totalorder %s171, %s173
      %p177 = scmp.eq.s32.totalorder %s32, 0
      %p178 = por %p176, %p177
      %p179 = scmp.ne.s32.totalorder %s171, %s173
      %p180 = scmp.eq.s32.totalorder %s37, 1
      %p181 = por %p179, %p180
      %p182 = scmp.ne.s32.totalorder %s173, %s174
      %p183 = scmp.eq.s32.totalorder %s37, 0
      %p184 = por %p182, %p183
      %p185 = scmp.ne.s32.totalorder %s173, %s174
      %p186 = scmp.eq.s32.totalorder %s38, 1
      %p187 = por %p185, %p186
      %p189 = scmp.ne.s32.totalorder %s174, %s188
      %p190 = scmp.eq.s32.totalorder %s38, 0
      %p191 = por %p189, %p190
      %s193 = sadd.s32 %s192, 1
      %p196 = scmp.eq.s32.totalorder %s32, 1
      %p197 = scmp.ne.s32.totalorder %s192, %s194
      %p198 = scmp.eq.s32.totalorder %s32, 0
      %p199 = por %p197, %p198
      %p200 = scmp.ne.s32.totalorder %s192, %s194
      %p201 = scmp.eq.s32.totalorder %s37, 1
      %p202 = por %p200, %p201
      %p203 = scmp.ne.s32.totalorder %s194, %s195
      %p204 = scmp.eq.s32.totalorder %s37, 0
      %p205 = por %p203, %p204
      %p206 = scmp.ne.s32.totalorder %s194, %s195
      %p207 = scmp.eq.s32.totalorder %s38, 1
      %p208 = por %p206, %p207
      %p210 = scmp.ne.s32.totalorder %s195, %s209
      %p211 = scmp.eq.s32.totalorder %s38, 0
      %p212 = por %p210, %p211
      %s214 = sadd.s32 %s213, 1
      %p217 = scmp.eq.s32.totalorder %s32, 1
      %p218 = scmp.ne.s32.totalorder %s213, %s215
      %p219 = scmp.eq.s32.totalorder %s32, 0
      %p220 = por %p218, %p219
      %p221 = scmp.ne.s32.totalorder %s213, %s215
      %p222 = scmp.eq.s32.totalorder %s37, 1
      %p223 = por %p221, %p222
      %p224 = scmp.ne.s32.totalorder %s215, %s216
      %p225 = scmp.eq.s32.totalorder %s37, 0
      %p226 = por %p224, %p225
      %p227 = scmp.ne.s32.totalorder %s215, %s216
      %p228 = scmp.eq.s32.totalorder %s38, 1
      %p229 = por %p227, %p228
      %p231 = scmp.ne.s32.totalorder %s216, %s230
      %p232 = scmp.eq.s32.totalorder %s38, 0
      %p233 = por %p231, %p232
      %s235 = sadd.s32 %s234, 1
      %p238 = scmp.eq.s32.totalorder %s32, 1
      %p239 = scmp.ne.s32.totalorder %s234, %s236
      %p240 = scmp.eq.s32.totalorder %s32, 0
      %p241 = por %p239, %p240
      %p242 = scmp.ne.s32.totalorder %s234, %s236
      %p243 = scmp.eq.s32.totalorder %s37, 1
      %p244 = por %p242, %p243
      %p245 = scmp.ne.s32.totalorder %s236, %s237
      %p246 = scmp.eq.s32.totalorder %s37, 0
      %p247 = por %p245, %p246
      %p248 = scmp.ne.s32.totalorder %s236, %s237
      %p249 = scmp.eq.s32.totalorder %s38, 1
      %p250 = por %p248, %p249
      %p252 = scmp.ne.s32.totalorder %s237, %s251
      %p253 = scmp.eq.s32.totalorder %s38, 0
      %p254 = por %p252, %p253
      %s256 = sadd.s32 %s255, 1
      %p259 = scmp.eq.s32.totalorder %s32, 1
      %p260 = scmp.ne.s32.totalorder %s255, %s257
      %p261 = scmp.eq.s32.totalorder %s32, 0
      %p262 = por %p260, %p261
      %p263 = scmp.ne.s32.totalorder %s255, %s257
      %p264 = scmp.eq.s32.totalorder %s37, 1
      %p265 = por %p263, %p264
      %p266 = scmp.ne.s32.totalorder %s257, %s258
      %p267 = scmp.eq.s32.totalorder %s37, 0
      %p268 = por %p266, %p267
      %p269 = scmp.ne.s32.totalorder %s257, %s258
      %p270 = scmp.eq.s32.totalorder %s38, 1
      %p271 = por %p269, %p270
      %p273 = scmp.ne.s32.totalorder %s258, %s272
      %p274 = scmp.eq.s32.totalorder %s38, 0
      %p275 = por %p273, %p274
      %s277 = sadd.s32 %s276, 1
      %p280 = scmp.eq.s32.totalorder %s32, 1
      %p281 = scmp.ne.s32.totalorder %s276, %s278
      %p282 = scmp.eq.s32.totalorder %s32, 0
      %p283 = por %p281, %p282
      %p284 = scmp.ne.s32.totalorder %s276, %s278
      %p285 = scmp.eq.s32.totalorder %s37, 1
      %p286 = por %p284, %p285
      %p287 = scmp.ne.s32.totalorder %s278, %s279
      %p288 = scmp.eq.s32.totalorder %s37, 0
      %p289 = por %p287, %p288
      %p290 = scmp.ne.s32.totalorder %s278, %s279
      %p291 = scmp.eq.s32.totalorder %s38, 1
      %p292 = por %p290, %p291
      %p294 = scmp.ne.s32.totalorder %s279, %s293
      %p295 = scmp.eq.s32.totalorder %s38, 0
      %p296 = por %p294, %p295
      %s298 = sadd.s32 %s297, 1
      %p301 = scmp.eq.s32.totalorder %s32, 1
      %p302 = scmp.ne.s32.totalorder %s297, %s299
      %p303 = scmp.eq.s32.totalorder %s32, 0
      %p304 = por %p302, %p303
      %p305 = scmp.ne.s32.totalorder %s297, %s299
      %p306 = scmp.eq.s32.totalorder %s37, 1
      %p307 = por %p305, %p306
      %p308 = scmp.ne.s32.totalorder %s299, %s300
      %p309 = scmp.eq.s32.totalorder %s37, 0
      %p310 = por %p308, %p309
      %p311 = scmp.ne.s32.totalorder %s299, %s300
      %p312 = scmp.eq.s32.totalorder %s38, 1
      %p313 = por %p311, %p312
      %p315 = scmp.ne.s32.totalorder %s300, %s314
      %p316 = scmp.eq.s32.totalorder %s38, 0
      %p317 = por %p315, %p316
      %s319 = sadd.s32 %s318, 1
      %p322 = scmp.eq.s32.totalorder %s32, 1
      %p323 = scmp.ne.s32.totalorder %s318, %s320
      %p324 = scmp.eq.s32.totalorder %s32, 0
      %p325 = por %p323, %p324
      %p326 = scmp.ne.s32.totalorder %s318, %s320
      %p327 = scmp.eq.s32.totalorder %s37, 1
      %p328 = por %p326, %p327
      %p329 = scmp.ne.s32.totalorder %s320, %s321
      %p330 = scmp.eq.s32.totalorder %s37, 0
      %p331 = por %p329, %p330
      %p332 = scmp.ne.s32.totalorder %s320, %s321
      %p333 = scmp.eq.s32.totalorder %s38, 1
      %p334 = por %p332, %p333
      %p336 = scmp.ne.s32.totalorder %s321, %s335
      %p337 = scmp.eq.s32.totalorder %s38, 0
      %p338 = por %p336, %p337
      %s340 = sadd.s32 %s339, 1
      %p343 = scmp.eq.s32.totalorder %s32, 1
      %p344 = scmp.ne.s32.totalorder %s339, %s341
      %p345 = scmp.eq.s32.totalorder %s32, 0
      %p346 = por %p344, %p345
      %p347 = scmp.ne.s32.totalorder %s339, %s341
      %p348 = scmp.eq.s32.totalorder %s37, 1
      %p349 = por %p347, %p348
      %p350 = scmp.ne.s32.totalorder %s341, %s342
      %p351 = scmp.eq.s32.totalorder %s37, 0
      %p352 = por %p350, %p351
      %p353 = scmp.ne.s32.totalorder %s341, %s342
      %p354 = scmp.eq.s32.totalorder %s38, 1
      %p355 = por %p353, %p354
      %p357 = scmp.ne.s32.totalorder %s342, %s356
      %p358 = scmp.eq.s32.totalorder %s38, 0
      %p359 = por %p357, %p358
      %s361 = sadd.s32 %s360, 1
      %p364 = scmp.eq.s32.totalorder %s32, 1
      %p365 = scmp.ne.s32.totalorder %s360, %s362
      %p366 = scmp.eq.s32.totalorder %s32, 0
      %p367 = por %p365, %p366
      %p368 = scmp.ne.s32.totalorder %s360, %s362
      %p369 = scmp.eq.s32.totalorder %s37, 1
      %p370 = por %p368, %p369
      %p371 = scmp.ne.s32.totalorder %s362, %s363
      %p372 = scmp.eq.s32.totalorder %s37, 0
      %p373 = por %p371, %p372
      %p374 = scmp.ne.s32.totalorder %s362, %s363
      %p375 = scmp.eq.s32.totalorder %s38, 1
      %p376 = por %p374, %p375
      %p378 = scmp.ne.s32.totalorder %s363, %s377
      %p379 = scmp.eq.s32.totalorder %s38, 0
      %p380 = por %p378, %p379
      %s382 = sadd.s32 %s381, 1
      %p385 = scmp.eq.s32.totalorder %s32, 1
      %p386 = scmp.ne.s32.totalorder %s381, %s383
      %p387 = scmp.eq.s32.totalorder %s32, 0
      %p388 = por %p386, %p387
      %p389 = scmp.ne.s32.totalorder %s381, %s383
      %p390 = scmp.eq.s32.totalorder %s37, 1
      %p391 = por %p389, %p390
      %p392 = scmp.ne.s32.totalorder %s383, %s384
      %p393 = scmp.eq.s32.totalorder %s37, 0
      %p394 = por %p392, %p393
      %p395 = scmp.ne.s32.totalorder %s383, %s384
      %p396 = scmp.eq.s32.totalorder %s38, 1
      %p397 = por %p395, %p396
      %p399 = scmp.ne.s32.totalorder %s384, %s398
      %p400 = scmp.eq.s32.totalorder %s38, 0
      %p401 = por %p399, %p400
      %s402 = ssub.s32 %s32, %s39
      %p403 = scmp.eq.s32.totalorder %s402, 0
      %s405 = sadd.s32 %s404, 1
      %s406 = scalar_select %p403, %s404, %s405
      %p409 = pneg %p403
      %p410 = scmp.eq.s32.totalorder %s32, 1
      %p411 = por %p409, %p410
      %p412 = scmp.ne.s32.totalorder %s404, %s407
      %p413 = scmp.eq.s32.totalorder %s32, 0
      %p414 = por %p412, %p413
      %p415 = scmp.ne.s32.totalorder %s404, %s407
      %p416 = scmp.eq.s32.totalorder %s37, 1
      %p417 = por %p415, %p416
      %p418 = scmp.ne.s32.totalorder %s407, %s408
      %p419 = scmp.eq.s32.totalorder %s37, 0
      %p420 = por %p418, %p419
      %p421 = scmp.ne.s32.totalorder %s407, %s408
      %p422 = scmp.eq.s32.totalorder %s38, 1
      %p423 = por %p421, %p422
      %p425 = scmp.ne.s32.totalorder %s408, %s424
      %p426 = scmp.eq.s32.totalorder %s38, 0
      %p427 = por %p425, %p426
      %p428 = scmp.le.s32.totalorder 1, %s32
      %p429 = scmp.lt.s32.totalorder %s32, 3
      %p430 = pnand %p428, %p429
      %p431 = pneg %p430
      // Predicated region
      $region9: #{tpu_custom_call.1} parent=5 // pred_check
        _
      $region10: #{tpu_custom_call.1} parent=5 // pred_check_branch
        %433 = sbr.rel (%p430) target = $region12
      $region11: #{tpu_custom_call.1} parent=5 // pred_region
        %s434 = ssub.s32 %s32, 1
        // Predicated region
        $region13: #{tpu_custom_call.1} parent=11 // pred_check
          %p435 = pneg %p79
        $region14: #{tpu_custom_call.1} parent=11 // pred_check_branch
          %437 = sbr.rel (%p435) target = $region16
        $region15: #{tpu_custom_call.1} parent=11 // pred_region
          _
        $region16: #{tpu_custom_call.1} parent=11 // pred_fallthru
          _
        // Predicated region
        $region17: #{tpu_custom_call.1} parent=11 // pred_check
          %p438 = pneg %p100
        $region18: #{tpu_custom_call.1} parent=11 // pred_check_branch
          %440 = sbr.rel (%p438) target = $region20
        $region19: #{tpu_custom_call.1} parent=11 // pred_region
          _
        $region20: #{tpu_custom_call.1} parent=11 // pred_fallthru
          _
        // Predicated region
        $region21: #{tpu_custom_call.1} parent=11 // pred_check
          %p441 = pneg %p121
        $region22: #{tpu_custom_call.1} parent=11 // pred_check_branch
          %443 = sbr.rel (%p441) target = $region24
        $region23: #{tpu_custom_call.1} parent=11 // pred_region
          %s445 = ssub.s32 18432, 18432
          %446 = vsyncadd [#allocation8], %s445
          %s447 = sshll.u32 [#allocation7], 4
          %s448 = int_to_ptr.vmem [resolvable:$true] %s447
          %453 = dma.hbm_to_vmem [thread:$0]  %s3, 18432, %s448, [#allocation8], 128, 128, 8
        $region24: #{tpu_custom_call.1} parent=11 // pred_fallthru
          _
        // Predicated region
        $region25: #{tpu_custom_call.1} parent=11 // pred_check
          %p454 = pneg %p142
        $region26: #{tpu_custom_call.1} parent=11 // pred_check_branch
          %456 = sbr.rel (%p454) target = $region28
        $region27: #{tpu_custom_call.1} parent=11 // pred_region
          _
        $region28: #{tpu_custom_call.1} parent=11 // pred_fallthru
          _
        // Predicated region
        $region29: #{tpu_custom_call.1} parent=11 // pred_check
          %p457 = pneg %p163
        $region30: #{tpu_custom_call.1} parent=11 // pred_check_branch
          %459 = sbr.rel (%p457) target = $region32
        $region31: #{tpu_custom_call.1} parent=11 // pred_region
          _
        $region32: #{tpu_custom_call.1} parent=11 // pred_fallthru
          _
        // Predicated region
        $region33: #{tpu_custom_call.1} parent=11 // pred_check
          %p460 = pneg %p184
        $region34: #{tpu_custom_call.1} parent=11 // pred_check_branch
          %462 = sbr.rel (%p460) target = $region36
        $region35: #{tpu_custom_call.1} parent=11 // pred_region
          %s464 = ssub.s32 3072, 3072
          %465 = vsyncadd [#allocation8], %s464
          %s466 = sshll.u32 [#allocation9], 4
          %s467 = int_to_ptr.vmem [resolvable:$true] %s466
          %472 = dma.hbm_to_vmem [thread:$0]  %s6, 3072, %s467, [#allocation8], 192, 192, 12
        $region36: #{tpu_custom_call.1} parent=11 // pred_fallthru
          _
        // Predicated region
        $region37: #{tpu_custom_call.1} parent=11 // pred_check
          %p473 = pneg %p205
        $region38: #{tpu_custom_call.1} parent=11 // pred_check_branch
          %475 = sbr.rel (%p473) target = $region40
        $region39: #{tpu_custom_call.1} parent=11 // pred_region
          _
        $region40: #{tpu_custom_call.1} parent=11 // pred_fallthru
          _
        // Predicated region
        $region41: #{tpu_custom_call.1} parent=11 // pred_check
          %p476 = pneg %p226
        $region42: #{tpu_custom_call.1} parent=11 // pred_check_branch
          %478 = sbr.rel (%p476) target = $region44
        $region43: #{tpu_custom_call.1} parent=11 // pred_region
          %s480 = ssub.s32 9216, 9216
          %481 = vsyncadd [#allocation11], %s480
          %s482 = sshll.u32 [#allocation10], 4
          %s483 = int_to_ptr.vmem [resolvable:$true] %s482
          %488 = dma.hbm_to_vmem [thread:$0]  %s8, 9216, %s483, [#allocation11], 64, 64, 4
        $region44: #{tpu_custom_call.1} parent=11 // pred_fallthru
          _
        // Predicated region
        $region45: #{tpu_custom_call.1} parent=11 // pred_check
          %p489 = pneg %p247
        $region46: #{tpu_custom_call.1} parent=11 // pred_check_branch
          %491 = sbr.rel (%p489) target = $region48
        $region47: #{tpu_custom_call.1} parent=11 // pred_region
          _
        $region48: #{tpu_custom_call.1} parent=11 // pred_fallthru
          _
        // Predicated region
        $region49: #{tpu_custom_call.1} parent=11 // pred_check
          %p492 = pneg %p268
        $region50: #{tpu_custom_call.1} parent=11 // pred_check_branch
          %494 = sbr.rel (%p492) target = $region52
        $region51: #{tpu_custom_call.1} parent=11 // pred_region
          _
        $region52: #{tpu_custom_call.1} parent=11 // pred_fallthru
          _
        // Predicated region
        $region53: #{tpu_custom_call.1} parent=11 // pred_check
          %p495 = pneg %p289
        $region54: #{tpu_custom_call.1} parent=11 // pred_check_branch
          %497 = sbr.rel (%p495) target = $region56
        $region55: #{tpu_custom_call.1} parent=11 // pred_region
          %s499 = ssub.s32 9216, 9216
          %500 = vsyncadd [#allocation11], %s499
          %s501 = sshll.u32 [#allocation12], 4
          %s502 = int_to_ptr.vmem [resolvable:$true] %s501
          %507 = dma.hbm_to_vmem [thread:$0]  %s11, 9216, %s502, [#allocation11], 64, 64, 4
        $region56: #{tpu_custom_call.1} parent=11 // pred_fallthru
          _
        // Predicated region
        $region57: #{tpu_custom_call.1} parent=11 // pred_check
          %p508 = pneg %p310
        $region58: #{tpu_custom_call.1} parent=11 // pred_check_branch
          %510 = sbr.rel (%p508) target = $region60
        $region59: #{tpu_custom_call.1} parent=11 // pred_region
          _
        $region60: #{tpu_custom_call.1} parent=11 // pred_fallthru
          _
        // Predicated region
        $region61: #{tpu_custom_call.1} parent=11 // pred_check
          %p511 = pneg %p331
        $region62: #{tpu_custom_call.1} parent=11 // pred_check_branch
          %513 = sbr.rel (%p511) target = $region64
        $region63: #{tpu_custom_call.1} parent=11 // pred_region
          _
        $region64: #{tpu_custom_call.1} parent=11 // pred_fallthru
          _
        // Predicated region
        $region65: #{tpu_custom_call.1} parent=11 // pred_check
          %p514 = pneg %p352
        $region66: #{tpu_custom_call.1} parent=11 // pred_check_branch
          %516 = sbr.rel (%p514) target = $region68
        $region67: #{tpu_custom_call.1} parent=11 // pred_region
          _
        $region68: #{tpu_custom_call.1} parent=11 // pred_fallthru
          _
        // Predicated region
        $region69: #{tpu_custom_call.1} parent=11 // pred_check
          %p517 = pneg %p373
        $region70: #{tpu_custom_call.1} parent=11 // pred_check_branch
          %519 = sbr.rel (%p517) target = $region72
        $region71: #{tpu_custom_call.1} parent=11 // pred_region
          _
        $region72: #{tpu_custom_call.1} parent=11 // pred_fallthru
          _
        // Predicated region
        $region73: #{tpu_custom_call.1} parent=11 // pred_check
          %p520 = pneg %p394
        $region74: #{tpu_custom_call.1} parent=11 // pred_check_branch
          %522 = sbr.rel (%p520) target = $region76
        $region75: #{tpu_custom_call.1} parent=11 // pred_region
          %s524 = ssub.s32 16, 16
          %525 = vsyncadd [#allocation6], %s524
          %s527 = sshll.u32 %s16, 4
          %s528 = int_to_ptr.vmem [resolvable:$true] %s527
          %530 = dma.vmem_to_smem %s528, 16, [#allocation13], [#allocation6]
        $region76: #{tpu_custom_call.1} parent=11 // pred_fallthru
          _
      $region12: #{tpu_custom_call.1} parent=5 // pred_fallthru
        _
      %p531 = scmp.lt.s32.totalorder %s32, 2
      // Predicated region
      $region77: #{tpu_custom_call.1} parent=5 // pred_check
        %p532 = pneg %p531
      $region78: #{tpu_custom_call.1} parent=5 // pred_check_branch
        %534 = sbr.rel (%p532) target = $region80
      $region79: #{tpu_custom_call.1} parent=5 // pred_region
        // Predicated region
        $region81: #{tpu_custom_call.1} parent=79 // pred_check
          %p535 = pneg %p52
        $region82: #{tpu_custom_call.1} parent=79 // pred_check_branch
          %537 = sbr.rel (%p535) target = $region84
        $region83: #{tpu_custom_call.1} parent=79 // pred_region
          %s538 = sand.u32 %s42, 1
          %s539 = scalar_lea.sflag [#allocation4], %s538
          %s540 = sand.u32 %s42, 1
          %s541 = smul.addr %s540, 52
          %s542 = scalar_lea.vmem [#allocation3], %s541
          %s544 = ssub.s32 832, 832
          %545 = vsyncadd %s539, %s544
          %s546 = smul.addr %s32, 13
          %s547 = smul.addr %s546, 64
          %s548 = scalar_lea.hbm %s0, %s547
          %s549 = sshll.u32 %s542, 4
          %s550 = int_to_ptr.vmem [resolvable:$true] %s549
          %555 = dma.hbm_to_vmem [thread:$0]  %s548, 832, %s550, %s539, 64, 64, 4
        $region84: #{tpu_custom_call.1} parent=79 // pred_fallthru
          _
      $region80: #{tpu_custom_call.1} parent=5 // pred_fallthru
        _
      %p556 = scmp.le.s32.totalorder 1, %s32
      %p557 = scmp.lt.s32.totalorder %s32, 3
      %p558 = pnand %p556, %p557
      %p559 = pneg %p558
      // Predicated region
      $region85: #{tpu_custom_call.1} parent=5 // pred_check
        _
      $region86: #{tpu_custom_call.1} parent=5 // pred_check_branch
        %561 = sbr.rel (%p558) target = $region88
      $region87: #{tpu_custom_call.1} parent=5 // pred_region
        %s562 = ssub.s32 %s32, 1
        %s563 = sand.u32 %s45, 1
        %s564 = scalar_lea.sflag [#allocation4], %s563
        %s565 = sand.u32 %s45, 1
        %s566 = smul.addr %s565, 52
        %s567 = scalar_lea.vmem [#allocation3], %s566
        // Predicated region
        $region89: #{tpu_custom_call.1} parent=87 // pred_check
          %p568 = pneg %p58
        $region90: #{tpu_custom_call.1} parent=87 // pred_check_branch
          %570 = sbr.rel (%p568) target = $region92
        $region91: #{tpu_custom_call.1} parent=87 // pred_region
          %571 = dma.done %s564, 832
        $region92: #{tpu_custom_call.1} parent=87 // pred_fallthru
          _
        // Predicated region
        $region93: #{tpu_custom_call.1} parent=87 // pred_check
          %p572 = pneg %p121
        $region94: #{tpu_custom_call.1} parent=87 // pred_check_branch
          %574 = sbr.rel (%p572) target = $region96
        $region95: #{tpu_custom_call.1} parent=87 // pred_region
          %575 = dma.done [#allocation8], 18432
        $region96: #{tpu_custom_call.1} parent=87 // pred_fallthru
          _
        // Predicated region
        $region97: #{tpu_custom_call.1} parent=87 // pred_check
          %p576 = pneg %p184
        $region98: #{tpu_custom_call.1} parent=87 // pred_check_branch
          %578 = sbr.rel (%p576) target = $region100
        $region99: #{tpu_custom_call.1} parent=87 // pred_region
          %579 = dma.done [#allocation8], 3072
        $region100: #{tpu_custom_call.1} parent=87 // pred_fallthru
          _
        // Predicated region
        $region101: #{tpu_custom_call.1} parent=87 // pred_check
          %p580 = pneg %p226
        $region102: #{tpu_custom_call.1} parent=87 // pred_check_branch
          %582 = sbr.rel (%p580) target = $region104
        $region103: #{tpu_custom_call.1} parent=87 // pred_region
          %583 = dma.done [#allocation11], 9216
        $region104: #{tpu_custom_call.1} parent=87 // pred_fallthru
          _
        // Predicated region
        $region105: #{tpu_custom_call.1} parent=87 // pred_check
          %p584 = pneg %p289
        $region106: #{tpu_custom_call.1} parent=87 // pred_check_branch
          %586 = sbr.rel (%p584) target = $region108
        $region107: #{tpu_custom_call.1} parent=87 // pred_region
          %587 = dma.done [#allocation11], 9216
        $region108: #{tpu_custom_call.1} parent=87 // pred_fallthru
          _
        // Predicated region
        $region109: #{tpu_custom_call.1} parent=87 // pred_check
          %p588 = pneg %p394
        $region110: #{tpu_custom_call.1} parent=87 // pred_check_branch
          %590 = sbr.rel (%p588) target = $region112
        $region111: #{tpu_custom_call.1} parent=87 // pred_region
          %591 = dma.done [#allocation6], 16
        $region112: #{tpu_custom_call.1} parent=87 // pred_fallthru
          _
        %592 = sfence
        %s593 = sand.u32 %s45, 1
        %s594 = scalar_lea.sflag [#allocation4], %s593
        %s595 = sand.u32 %s45, 1
        %s596 = smul.addr %s595, 52
        %s597 = scalar_lea.vmem [#allocation3], %s596
        %p598 = pneg %p58
        %p599 = pneg %p55
        %p600 = pneg %p79
        %p601 = pneg %p76
        %p602 = pneg %p100
        %p603 = pneg %p97
        %p604 = pneg %p121
        %p605 = pneg %p118
        %p606 = pneg %p142
        %p607 = pneg %p139
        %p608 = pneg %p163
        %p609 = pneg %p160
        %p610 = pneg %p184
        %p611 = pneg %p181
        %p612 = pneg %p205
        %p613 = pneg %p202
        %p614 = pneg %p226
        %p615 = pneg %p223
        %p616 = pneg %p247
        %p617 = pneg %p244
        %p618 = pneg %p268
        %p619 = pneg %p265
        %p620 = pneg %p289
        %p621 = pneg %p286
        %p622 = pneg %p310
        %p623 = pneg %p307
        %p624 = pneg %p331
        %p625 = pneg %p328
        %p626 = pneg %p352
        %p627 = pneg %p349
        %p628 = pneg %p373
        %p629 = pneg %p370
        %p630 = pneg %p394
        %p631 = pneg %p391
        %p632 = pneg %p420
        %p633 = pneg %p417
        %s634 = sand.u32 %s407, 1
        %s635 = scalar_lea.sflag [#allocation5], %s634
        %s636 = sand.u32 %s407, 1
        %s637 = smul.addr %s636, 40
        %s638 = scalar_lea.vmem [#allocation14], %s637
        %v640 = vld [vmem:[%s1] sm:$0xff]
        %v641 = vld [vmem:[%s1 + $0x8] sm:$0xff]
        %v642 = vld [vmem:[%s1 + $0x10] sm:$0xff]
        %v643 = vld [vmem:[%s1 + $0x18] sm:$0xff]
        %v644 = vld [vmem:[%s1 + $0x20] sm:$0xff]
        %v645 = vld [vmem:[%s1 + $0x28] sm:$0xff]
        %v646 = vld [vmem:[%s1 + $0x30] sm:$0xff]
        %v647 = vld [vmem:[%s1 + $0x38] sm:$0xff]
        %v648 = vld [vmem:[%s1 + $0x40] sm:$0xff]
        %v649 = vld [vmem:[%s1 + $0x48] sm:$0xff]
        %v650 = vld [vmem:[%s567] sm:$0xf]
        %v651 = vld [vmem:[%s567 + $0x4] sm:$0xf]
        %v652 = vld [vmem:[%s567 + $0x8] sm:$0xf]
        %v653 = vld [vmem:[%s567 + $0xc] sm:$0xf]
        %v654 = vld [vmem:[%s567 + $0x10] sm:$0xf]
        %v655 = vld [vmem:[%s567 + $0x14] sm:$0xf]
        %v656 = vld [vmem:[%s567 + $0x18] sm:$0xf]
        %v657 = vld [vmem:[%s567 + $0x1c] sm:$0xf]
        %v658 = vld [vmem:[%s567 + $0x20] sm:$0xf]
        %v659 = vld [vmem:[%s567 + $0x24] sm:$0xf]
        %v660 = vld [vmem:[#allocation7] sm:$0xff]
        %v661 = vld [vmem:[#allocation7 + $0x8] sm:$0xff]
        %v662 = vld [vmem:[#allocation7 + $0x10] sm:$0xff]
        %v663 = vld [vmem:[#allocation7 + $0x18] sm:$0xff]
        %v664 = vld [vmem:[#allocation7 + $0x20] sm:$0xff]
        %v665 = vld [vmem:[#allocation7 + $0x28] sm:$0xff]
        %v666 = vld [vmem:[#allocation7 + $0x30] sm:$0xff]
        %v667 = vld [vmem:[#allocation7 + $0x38] sm:$0xff]
        %v668 = vld [vmem:[#allocation7 + $0x40] sm:$0xff]
        %v669 = vld [vmem:[#allocation7 + $0x48] sm:$0xff]
        %v670 = vld [vmem:[#allocation7 + $0x50] sm:$0xff]
        %v671 = vld [vmem:[#allocation7 + $0x58] sm:$0xff]
        %v672 = vld [vmem:[#allocation7 + $0x60] sm:$0xff]
        %v673 = vld [vmem:[#allocation7 + $0x68] sm:$0xff]
        %v674 = vld [vmem:[#allocation7 + $0x70] sm:$0xff]
        %v675 = vld [vmem:[#allocation7 + $0x78] sm:$0xff]
        %v676 = vld [vmem:[%s567 + $0x28] sm:$0x1]
        %s677 = scalar_lea.vmem [#allocation7], 128
        %v678 = vld [vmem:[%s677] sm:$0xff]
        %v679 = vld [vmem:[%s677 + $0x8] sm:$0xff]
        %v680 = vld [vmem:[%s677 + $0x10] sm:$0xff]
        %v681 = vld [vmem:[%s677 + $0x18] sm:$0xff]
        %v682 = vld [vmem:[%s677 + $0x20] sm:$0xff]
        %v683 = vld [vmem:[%s677 + $0x28] sm:$0xff]
        %v684 = vld [vmem:[%s677 + $0x30] sm:$0xff]
        %v685 = vld [vmem:[%s677 + $0x38] sm:$0xff]
        %v686 = vld [vmem:[%s677 + $0x40] sm:$0xff]
        %v687 = vld [vmem:[%s677 + $0x48] sm:$0xff]
        %v688 = vld [vmem:[%s677 + $0x50] sm:$0xff]
        %v689 = vld [vmem:[%s677 + $0x58] sm:$0xff]
        %v690 = vld [vmem:[%s677 + $0x60] sm:$0xff]
        %v691 = vld [vmem:[%s677 + $0x68] sm:$0xff]
        %v692 = vld [vmem:[%s677 + $0x70] sm:$0xff]
        %v693 = vld [vmem:[%s677 + $0x78] sm:$0xff]
        %v705 = vunpack.c.l.b16 %v650
        %v706 = vunpack.c.l.b16 %v651
        %v707 = vunpack.c.l.b16 %v652
        %v708 = vunpack.c.l.b16 %v653
        %v709 = vunpack.c.l.b16 %v654
        %v710 = vunpack.c.l.b16 %v655
        %v711 = vunpack.c.l.b16 %v656
        %v712 = vunpack.c.l.b16 %v657
        %v713 = vunpack.c.l.b16 %v658
        %v714 = vunpack.c.l.b16 %v659
        %v715 = vunpack.c.l.b16 %v676
        %v716 = vpack.c.b16 %v706, %v705
        %v717 = vpack.c.b16 %v708, %v707
        %v718 = vpack.c.b16 %v710, %v709
        %v719 = vpack.c.b16 %v712, %v711
        %v720 = vpack.c.b16 %v714, %v713
        %v721 = vpack.c.b16 %v715, %v715
        %vm722 = vsmask.f32 7424
        %v724 = vshrl.u32 %v716, 16
        %v726 = vshll.u32 %v716, 16
        %v728 = vrot.slane %v726, 1
        %v729 = vor.u32 %v724, %v728
        %v731 = vshll.u32 %v717, 16
        %v733 = vrot.slane %v731, 1
        %v734 = vsel %vm722, %v729, %v733
        %v735 = vshrl.u32 %v717, 16
        %v737 = vor.u32 %v735, %v733
        %v739 = vshll.u32 %v718, 16
        %v741 = vrot.slane %v739, 1
        %v742 = vsel %vm722, %v737, %v741
        %v743 = vshrl.u32 %v718, 16
        %v745 = vor.u32 %v743, %v741
        %v747 = vshll.u32 %v719, 16
        %v749 = vrot.slane %v747, 1
        %v750 = vsel %vm722, %v745, %v749
        %v751 = vshrl.u32 %v719, 16
        %v753 = vor.u32 %v751, %v749
        %v755 = vshll.u32 %v720, 16
        %v757 = vrot.slane %v755, 1
        %v758 = vsel %vm722, %v753, %v757
        %v759 = vshrl.u32 %v720, 16
        %v761 = vor.u32 %v759, %v757
        %v763 = vshll.u32 %v721, 16
        %v765 = vrot.slane %v763, 1
        %v766 = vsel %vm722, %v761, %v765
        %v788 = vunpack.c.l.b16 %v678
        %v789 = vunpack.c.h.b16 %v678
        %v790 = vunpack.c.l.b16 %v679
        %v791 = vunpack.c.h.b16 %v679
        %v792 = vunpack.c.l.b16 %v680
        %v793 = vunpack.c.h.b16 %v680
        %v794 = vunpack.c.l.b16 %v681
        %v795 = vunpack.c.h.b16 %v681
        %v796 = vunpack.c.l.b16 %v682
        %v797 = vunpack.c.h.b16 %v682
        %v798 = vunpack.c.l.b16 %v683
        %v799 = vunpack.c.h.b16 %v683
        %v800 = vunpack.c.l.b16 %v684
        %v801 = vunpack.c.h.b16 %v684
        %v802 = vunpack.c.l.b16 %v685
        %v803 = vunpack.c.h.b16 %v685
        %v804 = vunpack.c.l.b16 %v686
        %v805 = vunpack.c.h.b16 %v686
        %v806 = vunpack.c.l.b16 %v687
        %v807 = vunpack.c.h.b16 %v687
        %v808 = vunpack.c.l.b16 %v688
        %v809 = vunpack.c.h.b16 %v688
        %v810 = vunpack.c.l.b16 %v689
        %v811 = vunpack.c.h.b16 %v689
        %v812 = vunpack.c.l.b16 %v690
        %v813 = vunpack.c.h.b16 %v690
        %v814 = vunpack.c.l.b16 %v691
        %v815 = vunpack.c.h.b16 %v691
        %v816 = vunpack.c.l.b16 %v692
        %v817 = vunpack.c.h.b16 %v692
        %v818 = vunpack.c.l.b16 %v693
        %v819 = vunpack.c.h.b16 %v693
        %v820 = vpack.c.b16 %v790, %v788
        %v821 = vpack.c.b16 %v791, %v789
        %v822 = vpack.c.b16 %v794, %v792
        %v823 = vpack.c.b16 %v795, %v793
        %v824 = vpack.c.b16 %v798, %v796
        %v825 = vpack.c.b16 %v799, %v797
        %v826 = vpack.c.b16 %v802, %v800
        %v827 = vpack.c.b16 %v803, %v801
        %v828 = vpack.c.b16 %v806, %v804
        %v829 = vpack.c.b16 %v807, %v805
        %v830 = vpack.c.b16 %v810, %v808
        %v831 = vpack.c.b16 %v811, %v809
        %v832 = vpack.c.b16 %v814, %v812
        %v833 = vpack.c.b16 %v815, %v813
        %v834 = vpack.c.b16 %v818, %v816
        %v835 = vpack.c.b16 %v819, %v817
        %852 = vmatprep.subr.bf16.mxu0 %v821
        %853 = vmatpush1.bf16.msra.mxu0 %v820
        %854 = vmatprep.subr.bf16.mxu0 %v823
        %855 = vmatpush1.bf16.msra.mxu0 %v822
        %856 = vmatprep.subr.bf16.mxu0 %v825
        %857 = vmatpush1.bf16.msra.mxu0 %v824
        %858 = vmatprep.subr.bf16.mxu0 %v827
        %859 = vmatpush1.bf16.msra.mxu0 %v826
        %860 = vmatprep.subr.bf16.mxu0 %v829
        %861 = vmatpush1.bf16.msra.mxu0 %v828
        %862 = vmatprep.subr.bf16.mxu0 %v831
        %863 = vmatpush1.bf16.msra.mxu0 %v830
        %864 = vmatprep.subr.bf16.mxu0 %v833
        %865 = vmatpush1.bf16.msra.mxu0 %v832
        %866 = vmatprep.subr.bf16.mxu0 %v835
        %867 = vmatpush1.bf16.msra.mxu0 %v834
        %868 = vmatprep.subr.bf16.mxu0 0
        %869 = vmatpush1.bf16.msra.mxu0 0
        %870 = vmatprep.subr.bf16.mxu0 0
        %871 = vmatpush1.bf16.msra.mxu0 0
        %872 = vmatprep.subr.bf16.mxu0 0
        %873 = vmatpush1.bf16.msra.mxu0 0
        %874 = vmatprep.subr.bf16.mxu0 0
        %875 = vmatpush1.bf16.msra.mxu0 0
        %876 = vmatprep.subr.bf16.mxu0 0
        %877 = vmatpush1.bf16.msra.mxu0 0
        %878 = vmatprep.subr.bf16.mxu0 0
        %879 = vmatpush1.bf16.msra.mxu0 0
        %880 = vmatprep.subr.bf16.mxu0 0
        %881 = vmatpush1.bf16.msra.mxu0 0
        %882 = vmatprep.subr.bf16.mxu0 0
        %883 = vmatpush1.bf16.msra.mxu0 0
        %884 = vmatprep.mubr.bf16.mxu0 0
        %885 = vmatmul.mubr.bf16.gmra.mrb[0].mxu0 %v734
        %v886 = vpop.f32.mrb[0].mxu0
        %v887 = vadd.f32 0.0, %v886
        %v888 = vpop.f32.mrb[0].mxu0
        %v889 = vadd.f32 0.0, %v888
        %v890 = vpop.f32.mrb[0].mxu0
        %v891 = vadd.f32 0.0, %v890
        %v892 = vpop.f32.mrb[0].mxu0
        %v893 = vadd.f32 0.0, %v892
        %894 = vmatprep.mubr.bf16.mxu0 0
        %895 = vmatmul.mubr.bf16.gmra.mrb[0].mxu0 %v742
        %v896 = vpop.f32.mrb[0].mxu0
        %v897 = vadd.f32 0.0, %v896
        %v898 = vpop.f32.mrb[0].mxu0
        %v899 = vadd.f32 0.0, %v898
        %v900 = vpop.f32.mrb[0].mxu0
        %v901 = vadd.f32 0.0, %v900
        %v902 = vpop.f32.mrb[0].mxu0
        %v903 = vadd.f32 0.0, %v902
        %904 = vmatprep.mubr.bf16.mxu0 0
        %905 = vmatmul.mubr.bf16.gmra.mrb[0].mxu0 %v750
        %v906 = vpop.f32.mrb[0].mxu0
        %v907 = vadd.f32 0.0, %v906
        %v908 = vpop.f32.mrb[0].mxu0
        %v909 = vadd.f32 0.0, %v908
        %v910 = vpop.f32.mrb[0].mxu0
        %v911 = vadd.f32 0.0, %v910
        %v912 = vpop.f32.mrb[0].mxu0
        %v913 = vadd.f32 0.0, %v912
        %914 = vmatprep.mubr.bf16.mxu0 0
        %915 = vmatmul.mubr.bf16.gmra.mrb[0].mxu0 %v758
        %v916 = vpop.f32.mrb[0].mxu0
        %v917 = vadd.f32 0.0, %v916
        %v918 = vpop.f32.mrb[0].mxu0
        %v919 = vadd.f32 0.0, %v918
        %v920 = vpop.f32.mrb[0].mxu0
        %v921 = vadd.f32 0.0, %v920
        %v922 = vpop.f32.mrb[0].mxu0
        %v923 = vadd.f32 0.0, %v922
        %924 = vmatprep.mubr.bf16.mxu0 0
        %925 = vmatmul.mubr.bf16.gmra.mrb[0].mxu0 %v766
        %v926 = vpop.f32.mrb[0].mxu0
        %v927 = vadd.f32 0.0, %v926
        %v928 = vpop.f32.mrb[0].mxu0
        %v929 = vadd.f32 0.0, %v928
        %v930 = vpop.f32.mrb[0].mxu0
        %v931 = vadd.f32 0.0, %v930
        %v932 = vpop.f32.mrb[0].mxu0
        %v933 = vadd.f32 0.0, %v932
        %934 = vdwg.mxu0
        %v956 = vunpack.c.l.b16 %v660
        %v957 = vunpack.c.h.b16 %v660
        %v958 = vunpack.c.l.b16 %v661
        %v959 = vunpack.c.h.b16 %v661
        %v960 = vunpack.c.l.b16 %v662
        %v961 = vunpack.c.h.b16 %v662
        %v962 = vunpack.c.l.b16 %v663
        %v963 = vunpack.c.h.b16 %v663
        %v964 = vunpack.c.l.b16 %v664
        %v965 = vunpack.c.h.b16 %v664
        %v966 = vunpack.c.l.b16 %v665
        %v967 = vunpack.c.h.b16 %v665
        %v968 = vunpack.c.l.b16 %v666
        %v969 = vunpack.c.h.b16 %v666
        %v970 = vunpack.c.l.b16 %v667
        %v971 = vunpack.c.h.b16 %v667
        %v972 = vunpack.c.l.b16 %v668
        %v973 = vunpack.c.h.b16 %v668
        %v974 = vunpack.c.l.b16 %v669
        %v975 = vunpack.c.h.b16 %v669
        %v976 = vunpack.c.l.b16 %v670
        %v977 = vunpack.c.h.b16 %v670
        %v978 = vunpack.c.l.b16 %v671
        %v979 = vunpack.c.h.b16 %v671
        %v980 = vunpack.c.l.b16 %v672
        %v981 = vunpack.c.h.b16 %v672
        %v982 = vunpack.c.l.b16 %v673
        %v983 = vunpack.c.h.b16 %v673
        %v984 = vunpack.c.l.b16 %v674
        %v985 = vunpack.c.h.b16 %v674
        %v986 = vunpack.c.l.b16 %v675
        %v987 = vunpack.c.h.b16 %v675
        %v988 = vpack.c.b16 %v958, %v956
        %v989 = vpack.c.b16 %v959, %v957
        %v990 = vpack.c.b16 %v962, %v960
        %v991 = vpack.c.b16 %v963, %v961
        %v992 = vpack.c.b16 %v966, %v964
        %v993 = vpack.c.b16 %v967, %v965
        %v994 = vpack.c.b16 %v970, %v968
        %v995 = vpack.c.b16 %v971, %v969
        %v996 = vpack.c.b16 %v974, %v972
        %v997 = vpack.c.b16 %v975, %v973
        %v998 = vpack.c.b16 %v978, %v976
        %v999 = vpack.c.b16 %v979, %v977
        %v1000 = vpack.c.b16 %v982, %v980
        %v1001 = vpack.c.b16 %v983, %v981
        %v1002 = vpack.c.b16 %v986, %v984
        %v1003 = vpack.c.b16 %v987, %v985
        %1020 = vmatprep.subr.bf16.mxu0 %v989
        %1021 = vmatpush1.bf16.msra.mxu0 %v988
        %1022 = vmatprep.subr.bf16.mxu0 %v991
        %1023 = vmatpush1.bf16.msra.mxu0 %v990
        %1024 = vmatprep.subr.bf16.mxu0 %v993
        %1025 = vmatpush1.bf16.msra.mxu0 %v992
        %1026 = vmatprep.subr.bf16.mxu0 %v995
        %1027 = vmatpush1.bf16.msra.mxu0 %v994
        %1028 = vmatprep.subr.bf16.mxu0 %v997
        %1029 = vmatpush1.bf16.msra.mxu0 %v996
        %1030 = vmatprep.subr.bf16.mxu0 %v999
        %1031 = vmatpush1.bf16.msra.mxu0 %v998
        %1032 = vmatprep.subr.bf16.mxu0 %v1001
        %1033 = vmatpush1.bf16.msra.mxu0 %v1000
        %1034 = vmatprep.subr.bf16.mxu0 %v1003
        %1035 = vmatpush1.bf16.msra.mxu0 %v1002
        %1036 = vmatprep.subr.bf16.mxu0 0
        %1037 = vmatpush1.bf16.msra.mxu0 0
        %1038 = vmatprep.subr.bf16.mxu0 0
        %1039 = vmatpush1.bf16.msra.mxu0 0
        %1040 = vmatprep.subr.bf16.mxu0 0
        %1041 = vmatpush1.bf16.msra.mxu0 0
        %1042 = vmatprep.subr.bf16.mxu0 0
        %1043 = vmatpush1.bf16.msra.mxu0 0
        %1044 = vmatprep.subr.bf16.mxu0 0
        %1045 = vmatpush1.bf16.msra.mxu0 0
        %1046 = vmatprep.subr.bf16.mxu0 0
        %1047 = vmatpush1.bf16.msra.mxu0 0
        %1048 = vmatprep.subr.bf16.mxu0 0
        %1049 = vmatpush1.bf16.msra.mxu0 0
        %1050 = vmatprep.subr.bf16.mxu0 0
        %1051 = vmatpush1.bf16.msra.mxu0 0
        %1052 = vmatprep.mubr.bf16.mxu0 0
        %1053 = vmatmul.mubr.bf16.gmra.mrb[0].mxu0 %v716
        %v1054 = vpop.f32.mrb[0].mxu0
        %v1055 = vadd.f32 %v887, %v1054
        %v1056 = vpop.f32.mrb[0].mxu0
        %v1057 = vadd.f32 %v889, %v1056
        %v1058 = vpop.f32.mrb[0].mxu0
        %v1059 = vadd.f32 %v891, %v1058
        %v1060 = vpop.f32.mrb[0].mxu0
        %v1061 = vadd.f32 %v893, %v1060
        %1062 = vmatprep.mubr.bf16.mxu0 0
        %1063 = vmatmul.mubr.bf16.gmra.mrb[0].mxu0 %v717
        %v1064 = vpop.f32.mrb[0].mxu0
        %v1065 = vadd.f32 %v897, %v1064
        %v1066 = vpop.f32.mrb[0].mxu0
        %v1067 = vadd.f32 %v899, %v1066
        %v1068 = vpop.f32.mrb[0].mxu0
        %v1069 = vadd.f32 %v901, %v1068
        %v1070 = vpop.f32.mrb[0].mxu0
        %v1071 = vadd.f32 %v903, %v1070
        %1072 = vmatprep.mubr.bf16.mxu0 0
        %1073 = vmatmul.mubr.bf16.gmra.mrb[0].mxu0 %v718
        %v1074 = vpop.f32.mrb[0].mxu0
        %v1075 = vadd.f32 %v907, %v1074
        %v1076 = vpop.f32.mrb[0].mxu0
        %v1077 = vadd.f32 %v909, %v1076
        %v1078 = vpop.f32.mrb[0].mxu0
        %v1079 = vadd.f32 %v911, %v1078
        %v1080 = vpop.f32.mrb[0].mxu0
        %v1081 = vadd.f32 %v913, %v1080
        %1082 = vmatprep.mubr.bf16.mxu0 0
        %1083 = vmatmul.mubr.bf16.gmra.mrb[0].mxu0 %v719
        %v1084 = vpop.f32.mrb[0].mxu0
        %v1085 = vadd.f32 %v917, %v1084
        %v1086 = vpop.f32.mrb[0].mxu0
        %v1087 = vadd.f32 %v919, %v1086
        %v1088 = vpop.f32.mrb[0].mxu0
        %v1089 = vadd.f32 %v921, %v1088
        %v1090 = vpop.f32.mrb[0].mxu0
        %v1091 = vadd.f32 %v923, %v1090
        %1092 = vmatprep.mubr.bf16.mxu0 0
        %1093 = vmatmul.mubr.bf16.gmra.mrb[0].mxu0 %v720
        %v1094 = vpop.f32.mrb[0].mxu0
        %v1095 = vadd.f32 %v927, %v1094
        %v1096 = vpop.f32.mrb[0].mxu0
        %v1097 = vadd.f32 %v929, %v1096
        %v1098 = vpop.f32.mrb[0].mxu0
        %v1099 = vadd.f32 %v931, %v1098
        %v1100 = vpop.f32.mrb[0].mxu0
        %v1101 = vadd.f32 %v933, %v1100
        %1102 = vdwg.mxu0
        %v1103 = vld [vmem:[%s567] sm:$0xe]
        %s1104 = scalar_lea.vmem [#allocation7], 256
        %v1105 = vld [vmem:[%s1104] sm:$0xff]
        %v1106 = vld [vmem:[%s1104 + $0x8] sm:$0xff]
        %v1107 = vld [vmem:[%s1104 + $0x10] sm:$0xff]
        %v1108 = vld [vmem:[%s1104 + $0x18] sm:$0xff]
        %v1109 = vld [vmem:[%s1104 + $0x20] sm:$0xff]
        %v1110 = vld [vmem:[%s1104 + $0x28] sm:$0xff]
        %v1111 = vld [vmem:[%s1104 + $0x30] sm:$0xff]
        %v1112 = vld [vmem:[%s1104 + $0x38] sm:$0xff]
        %v1113 = vld [vmem:[%s1104 + $0x40] sm:$0xff]
        %v1114 = vld [vmem:[%s1104 + $0x48] sm:$0xff]
        %v1115 = vld [vmem:[%s1104 + $0x50] sm:$0xff]
        %v1116 = vld [vmem:[%s1104 + $0x58] sm:$0xff]
        %v1117 = vld [vmem:[%s1104 + $0x60] sm:$0xff]
        %v1118 = vld [vmem:[%s1104 + $0x68] sm:$0xff]
        %v1119 = vld [vmem:[%s1104 + $0x70] sm:$0xff]
        %v1120 = vld [vmem:[%s1104 + $0x78] sm:$0xff]
        %v1122 = vunpack.c.l.b16 %v1103
        %v1123 = vpack.c.b16 %v706, %v1122
        %vm1124 = vcmask 1046528
        %v1125 = vrot.slane %v1123, 1
        %v1126 = vrot.slane %v717, 1
        %v1127 = vsel %vm1124, %v1125, %v1126
        %v1128 = vrot.slane %v718, 1
        %v1129 = vsel %vm1124, %v1126, %v1128
        %v1130 = vrot.slane %v719, 1
        %v1131 = vsel %vm1124, %v1128, %v1130
        %v1132 = vrot.slane %v720, 1
        %v1133 = vsel %vm1124, %v1130, %v1132
        %v1134 = vrot.slane %v721, 1
        %v1135 = vsel %vm1124, %v1132, %v1134
        %v1157 = vunpack.c.l.b16 %v1105
        %v1158 = vunpack.c.h.b16 %v1105
        %v1159 = vunpack.c.l.b16 %v1106
        %v1160 = vunpack.c.h.b16 %v1106
        %v1161 = vunpack.c.l.b16 %v1107
        %v1162 = vunpack.c.h.b16 %v1107
        %v1163 = vunpack.c.l.b16 %v1108
        %v1164 = vunpack.c.h.b16 %v1108
        %v1165 = vunpack.c.l.b16 %v1109
        %v1166 = vunpack.c.h.b16 %v1109
        %v1167 = vunpack.c.l.b16 %v1110
        %v1168 = vunpack.c.h.b16 %v1110
        %v1169 = vunpack.c.l.b16 %v1111
        %v1170 = vunpack.c.h.b16 %v1111
        %v1171 = vunpack.c.l.b16 %v1112
        %v1172 = vunpack.c.h.b16 %v1112
        %v1173 = vunpack.c.l.b16 %v1113
        %v1174 = vunpack.c.h.b16 %v1113
        %v1175 = vunpack.c.l.b16 %v1114
        %v1176 = vunpack.c.h.b16 %v1114
        %v1177 = vunpack.c.l.b16 %v1115
        %v1178 = vunpack.c.h.b16 %v1115
        %v1179 = vunpack.c.l.b16 %v1116
        %v1180 = vunpack.c.h.b16 %v1116
        %v1181 = vunpack.c.l.b16 %v1117
        %v1182 = vunpack.c.h.b16 %v1117
        %v1183 = vunpack.c.l.b16 %v1118
        %v1184 = vunpack.c.h.b16 %v1118
        %v1185 = vunpack.c.l.b16 %v1119
        %v1186 = vunpack.c.h.b16 %v1119
        %v1187 = vunpack.c.l.b16 %v1120
        %v1188 = vunpack.c.h.b16 %v1120
        %v1189 = vpack.c.b16 %v1159, %v1157
        %v1190 = vpack.c.b16 %v1160, %v1158
        %v1191 = vpack.c.b16 %v1163, %v1161
        %v1192 = vpack.c.b16 %v1164, %v1162
        %v1193 = vpack.c.b16 %v1167, %v1165
        %v1194 = vpack.c.b16 %v1168, %v1166
        %v1195 = vpack.c.b16 %v1171, %v1169
        %v1196 = vpack.c.b16 %v1172, %v1170
        %v1197 = vpack.c.b16 %v1175, %v1173
        %v1198 = vpack.c.b16 %v1176, %v1174
        %v1199 = vpack.c.b16 %v1179, %v1177
        %v1200 = vpack.c.b16 %v1180, %v1178
        %v1201 = vpack.c.b16 %v1183, %v1181
        %v1202 = vpack.c.b16 %v1184, %v1182
        %v1203 = vpack.c.b16 %v1187, %v1185
        %v1204 = vpack.c.b16 %v1188, %v1186
        %1221 = vmatprep.subr.bf16.mxu0 %v1190
        %1222 = vmatpush1.bf16.msra.mxu0 %v1189
        %1223 = vmatprep.subr.bf16.mxu0 %v1192
        %1224 = vmatpush1.bf16.msra.mxu0 %v1191
        %1225 = vmatprep.subr.bf16.mxu0 %v1194
        %1226 = vmatpush1.bf16.msra.mxu0 %v1193
        %1227 = vmatprep.subr.bf16.mxu0 %v1196
        %1228 = vmatpush1.bf16.msra.mxu0 %v1195
        %1229 = vmatprep.subr.bf16.mxu0 %v1198
        %1230 = vmatpush1.bf16.msra.mxu0 %v1197
        %1231 = vmatprep.subr.bf16.mxu0 %v1200
        %1232 = vmatpush1.bf16.msra.mxu0 %v1199
        %1233 = vmatprep.subr.bf16.mxu0 %v1202
        %1234 = vmatpush1.bf16.msra.mxu0 %v1201
        %1235 = vmatprep.subr.bf16.mxu0 %v1204
        %1236 = vmatpush1.bf16.msra.mxu0 %v1203
        %1237 = vmatprep.subr.bf16.mxu0 0
        %1238 = vmatpush1.bf16.msra.mxu0 0
        %1239 = vmatprep.subr.bf16.mxu0 0
        %1240 = vmatpush1.bf16.msra.mxu0 0
        %1241 = vmatprep.subr.bf16.mxu0 0
        %1242 = vmatpush1.bf16.msra.mxu0 0
        %1243 = vmatprep.subr.bf16.mxu0 0
        %1244 = vmatpush1.bf16.msra.mxu0 0
        %1245 = vmatprep.subr.bf16.mxu0 0
        %1246 = vmatpush1.bf16.msra.mxu0 0
        %1247 = vmatprep.subr.bf16.mxu0 0
        %1248 = vmatpush1.bf16.msra.mxu0 0
        %1249 = vmatprep.subr.bf16.mxu0 0
        %1250 = vmatpush1.bf16.msra.mxu0 0
        %1251 = vmatprep.subr.bf16.mxu0 0
        %1252 = vmatpush1.bf16.msra.mxu0 0
        %1253 = vmatprep.mubr.bf16.mxu0 0
        %1254 = vmatmul.mubr.bf16.gmra.mrb[0].mxu0 %v1127
        %v1255 = vpop.f32.mrb[0].mxu0
        %v1256 = vadd.f32 0.0, %v1255
        %v1257 = vpop.f32.mrb[0].mxu0
        %v1258 = vadd.f32 0.0, %v1257
        %v1259 = vpop.f32.mrb[0].mxu0
        %v1260 = vadd.f32 0.0, %v1259
        %v1261 = vpop.f32.mrb[0].mxu0
        %v1262 = vadd.f32 0.0, %v1261
        %1263 = vmatprep.mubr.bf16.mxu0 0
        %1264 = vmatmul.mubr.bf16.gmra.mrb[0].mxu0 %v1129
        %v1265 = vpop.f32.mrb[0].mxu0
        %v1266 = vadd.f32 0.0, %v1265
        %v1267 = vpop.f32.mrb[0].mxu0
        %v1268 = vadd.f32 0.0, %v1267
        %v1269 = vpop.f32.mrb[0].mxu0
        %v1270 = vadd.f32 0.0, %v1269
        %v1271 = vpop.f32.mrb[0].mxu0
        %v1272 = vadd.f32 0.0, %v1271
        %1273 = vmatprep.mubr.bf16.mxu0 0
        %1274 = vmatmul.mubr.bf16.gmra.mrb[0].mxu0 %v1131
        %v1275 = vpop.f32.mrb[0].mxu0
        %v1276 = vadd.f32 0.0, %v1275
        %v1277 = vpop.f32.mrb[0].mxu0
        %v1278 = vadd.f32 0.0, %v1277
        %v1279 = vpop.f32.mrb[0].mxu0
        %v1280 = vadd.f32 0.0, %v1279
        %v1281 = vpop.f32.mrb[0].mxu0
        %v1282 = vadd.f32 0.0, %v1281
        %1283 = vmatprep.mubr.bf16.mxu0 0
        %1284 = vmatmul.mubr.bf16.gmra.mrb[0].mxu0 %v1133
        %v1285 = vpop.f32.mrb[0].mxu0
        %v1286 = vadd.f32 0.0, %v1285
        %v1287 = vpop.f32.mrb[0].mxu0
        %v1288 = vadd.f32 0.0, %v1287
        %v1289 = vpop.f32.mrb[0].mxu0
        %v1290 = vadd.f32 0.0, %v1289
        %v1291 = vpop.f32.mrb[0].mxu0
        %v1292 = vadd.f32 0.0, %v1291
        %1293 = vmatprep.mubr.bf16.mxu0 0
        %1294 = vmatmul.mubr.bf16.gmra.mrb[0].mxu0 %v1135
        %v1295 = vpop.f32.mrb[0].mxu0
        %v1296 = vadd.f32 0.0, %v1295
        %v1297 = vpop.f32.mrb[0].mxu0
        %v1298 = vadd.f32 0.0, %v1297
        %v1299 = vpop.f32.mrb[0].mxu0
        %v1300 = vadd.f32 0.0, %v1299
        %v1301 = vpop.f32.mrb[0].mxu0
        %v1302 = vadd.f32 0.0, %v1301
        %1303 = vdwg.mxu0
        %v1304 = vadd.f32 %v1055, %v1256
        %v1305 = vadd.f32 %v1057, %v1258
        %v1306 = vadd.f32 %v1059, %v1260
        %v1307 = vadd.f32 %v1061, %v1262
        %v1308 = vadd.f32 %v1065, %v1266
        %v1309 = vadd.f32 %v1067, %v1268
        %v1310 = vadd.f32 %v1069, %v1270
        %v1311 = vadd.f32 %v1071, %v1272
        %v1312 = vadd.f32 %v1075, %v1276
        %v1313 = vadd.f32 %v1077, %v1278
        %v1314 = vadd.f32 %v1079, %v1280
        %v1315 = vadd.f32 %v1081, %v1282
        %v1316 = vadd.f32 %v1085, %v1286
        %v1317 = vadd.f32 %v1087, %v1288
        %v1318 = vadd.f32 %v1089, %v1290
        %v1319 = vadd.f32 %v1091, %v1292
        %v1320 = vadd.f32 %v1095, %v1296
        %v1321 = vadd.f32 %v1097, %v1298
        %v1322 = vadd.f32 %v1099, %v1300
        %v1323 = vadd.f32 %v1101, %v1302
        %v1324 = vld [vmem:[%s567 + $0x4] sm:$0xe]
        %v1325 = vld [vmem:[%s567 + $0x8] sm:$0xf]
        %v1326 = vld [vmem:[%s567 + $0xc] sm:$0xf]
        %v1327 = vld [vmem:[%s567 + $0x10] sm:$0xf]
        %v1328 = vld [vmem:[%s567 + $0x14] sm:$0xf]
        %v1329 = vld [vmem:[%s567 + $0x18] sm:$0xf]
        %v1330 = vld [vmem:[%s567 + $0x1c] sm:$0xf]
        %v1331 = vld [vmem:[%s567 + $0x20] sm:$0xf]
        %v1332 = vld [vmem:[%s567 + $0x24] sm:$0xf]
        %v1333 = vld [vmem:[%s567 + $0x28] sm:$0xf]
        %v1334 = vld [vmem:[%s567 + $0x2c] sm:$0x1]
        %s1335 = scalar_lea.vmem [#allocation7], 384
        %v1336 = vld [vmem:[%s1335] sm:$0xff]
        %v1337 = vld [vmem:[%s1335 + $0x8] sm:$0xff]
        %v1338 = vld [vmem:[%s1335 + $0x10] sm:$0xff]
        %v1339 = vld [vmem:[%s1335 + $0x18] sm:$0xff]
        %v1340 = vld [vmem:[%s1335 + $0x20] sm:$0xff]
        %v1341 = vld [vmem:[%s1335 + $0x28] sm:$0xff]
        %v1342 = vld [vmem:[%s1335 + $0x30] sm:$0xff]
        %v1343 = vld [vmem:[%s1335 + $0x38] sm:$0xff]
        %v1344 = vld [vmem:[%s1335 + $0x40] sm:$0xff]
        %v1345 = vld [vmem:[%s1335 + $0x48] sm:$0xff]
        %v1346 = vld [vmem:[%s1335 + $0x50] sm:$0xff]
        %v1347 = vld [vmem:[%s1335 + $0x58] sm:$0xff]
        %v1348 = vld [vmem:[%s1335 + $0x60] sm:$0xff]
        %v1349 = vld [vmem:[%s1335 + $0x68] sm:$0xff]
        %v1350 = vld [vmem:[%s1335 + $0x70] sm:$0xff]
        %v1351 = vld [vmem:[%s1335 + $0x78] sm:$0xff]
        %v1363 = vunpack.c.l.b16 %v1324
        %v1364 = vunpack.c.l.b16 %v1325
        %v1365 = vunpack.c.l.b16 %v1326
        %v1366 = vunpack.c.l.b16 %v1327
        %v1367 = vunpack.c.l.b16 %v1328
        %v1368 = vunpack.c.l.b16 %v1329
        %v1369 = vunpack.c.l.b16 %v1330
        %v1370 = vunpack.c.l.b16 %v1331
        %v1371 = vunpack.c.l.b16 %v1332
        %v1372 = vunpack.c.l.b16 %v1333
        %v1373 = vunpack.c.l.b16 %v1334
        %v1374 = vpack.c.b16 %v1364, %v1363
        %v1375 = vpack.c.b16 %v1366, %v1365
        %v1376 = vpack.c.b16 %v1368, %v1367
        %v1377 = vpack.c.b16 %v1370, %v1369
        %v1378 = vpack.c.b16 %v1372, %v1371
        %v1379 = vpack.c.b16 %v1373, %v1373
        %v1380 = vrot.slane %v1374, 1
        %v1381 = vrot.slane %v1375, 1
        %v1382 = vsel %vm1124, %v1380, %v1381
        %v1383 = vrot.slane %v1376, 1
        %v1384 = vsel %vm1124, %v1381, %v1383
        %v1385 = vrot.slane %v1377, 1
        %v1386 = vsel %vm1124, %v1383, %v1385
        %v1387 = vrot.slane %v1378, 1
        %v1388 = vsel %vm1124, %v1385, %v1387
        %v1389 = vrot.slane %v1379, 1
        %v1390 = vsel %vm1124, %v1387, %v1389
        %v1412 = vunpack.c.l.b16 %v1336
        %v1413 = vunpack.c.h.b16 %v1336
        %v1414 = vunpack.c.l.b16 %v1337
        %v1415 = vunpack.c.h.b16 %v1337
        %v1416 = vunpack.c.l.b16 %v1338
        %v1417 = vunpack.c.h.b16 %v1338
        %v1418 = vunpack.c.l.b16 %v1339
        %v1419 = vunpack.c.h.b16 %v1339
        %v1420 = vunpack.c.l.b16 %v1340
        %v1421 = vunpack.c.h.b16 %v1340
        %v1422 = vunpack.c.l.b16 %v1341
        %v1423 = vunpack.c.h.b16 %v1341
        %v1424 = vunpack.c.l.b16 %v1342
        %v1425 = vunpack.c.h.b16 %v1342
        %v1426 = vunpack.c.l.b16 %v1343
        %v1427 = vunpack.c.h.b16 %v1343
        %v1428 = vunpack.c.l.b16 %v1344
        %v1429 = vunpack.c.h.b16 %v1344
        %v1430 = vunpack.c.l.b16 %v1345
        %v1431 = vunpack.c.h.b16 %v1345
        %v1432 = vunpack.c.l.b16 %v1346
        %v1433 = vunpack.c.h.b16 %v1346
        %v1434 = vunpack.c.l.b16 %v1347
        %v1435 = vunpack.c.h.b16 %v1347
        %v1436 = vunpack.c.l.b16 %v1348
        %v1437 = vunpack.c.h.b16 %v1348
        %v1438 = vunpack.c.l.b16 %v1349
        %v1439 = vunpack.c.h.b16 %v1349
        %v1440 = vunpack.c.l.b16 %v1350
        %v1441 = vunpack.c.h.b16 %v1350
        %v1442 = vunpack.c.l.b16 %v1351
        %v1443 = vunpack.c.h.b16 %v1351
        %v1444 = vpack.c.b16 %v1414, %v1412
        %v1445 = vpack.c.b16 %v1415, %v1413
        %v1446 = vpack.c.b16 %v1418, %v1416
        %v1447 = vpack.c.b16 %v1419, %v1417
        %v1448 = vpack.c.b16 %v1422, %v1420
        %v1449 = vpack.c.b16 %v1423, %v1421
        %v1450 = vpack.c.b16 %v1426, %v1424
        %v1451 = vpack.c.b16 %v1427, %v1425
        %v1452 = vpack.c.b16 %v1430, %v1428
        %v1453 = vpack.c.b16 %v1431, %v1429
        %v1454 = vpack.c.b16 %v1434, %v1432
        %v1455 = vpack.c.b16 %v1435, %v1433
        %v1456 = vpack.c.b16 %v1438, %v1436
        %v1457 = vpack.c.b16 %v1439, %v1437
        %v1458 = vpack.c.b16 %v1442, %v1440
        %v1459 = vpack.c.b16 %v1443, %v1441
        %1476 = vmatprep.subr.bf16.mxu0 %v1445
        %1477 = vmatpush1.bf16.msra.mxu0 %v1444
        %1478 = vmatprep.subr.bf16.mxu0 %v1447
        %1479 = vmatpush1.bf16.msra.mxu0 %v1446
        %1480 = vmatprep.subr.bf16.mxu0 %v1449
        %1481 = vmatpush1.bf16.msra.mxu0 %v1448
        %1482 = vmatprep.subr.bf16.mxu0 %v1451
        %1483 = vmatpush1.bf16.msra.mxu0 %v1450
        %1484 = vmatprep.subr.bf16.mxu0 %v1453
        %1485 = vmatpush1.bf16.msra.mxu0 %v1452
        %1486 = vmatprep.subr.bf16.mxu0 %v1455
        %1487 = vmatpush1.bf16.msra.mxu0 %v1454
        %1488 = vmatprep.subr.bf16.mxu0 %v1457
        %1489 = vmatpush1.bf16.msra.mxu0 %v1456
        %1490 = vmatprep.subr.bf16.mxu0 %v1459
        %1491 = vmatpush1.bf16.msra.mxu0 %v1458
        %1492 = vmatprep.subr.bf16.mxu0 0
        %1493 = vmatpush1.bf16.msra.mxu0 0
        %1494 = vmatprep.subr.bf16.mxu0 0
        %1495 = vmatpush1.bf16.msra.mxu0 0
        %1496 = vmatprep.subr.bf16.mxu0 0
        %1497 = vmatpush1.bf16.msra.mxu0 0
        %1498 = vmatprep.subr.bf16.mxu0 0
        %1499 = vmatpush1.bf16.msra.mxu0 0
        %1500 = vmatprep.subr.bf16.mxu0 0
        %1501 = vmatpush1.bf16.msra.mxu0 0
        %1502 = vmatprep.subr.bf16.mxu0 0
        %1503 = vmatpush1.bf16.msra.mxu0 0
        %1504 = vmatprep.subr.bf16.mxu0 0
        %1505 = vmatpush1.bf16.msra.mxu0 0
        %1506 = vmatprep.subr.bf16.mxu0 0
        %1507 = vmatpush1.bf16.msra.mxu0 0
        %1508 = vmatprep.mubr.bf16.mxu0 0
        %1509 = vmatmul.mubr.bf16.gmra.mrb[0].mxu0 %v1382
        %v1510 = vpop.f32.mrb[0].mxu0
        %v1511 = vadd.f32 0.0, %v1510
        %v1512 = vpop.f32.mrb[0].mxu0
        %v1513 = vadd.f32 0.0, %v1512
        %v1514 = vpop.f32.mrb[0].mxu0
        %v1515 = vadd.f32 0.0, %v1514
        %v1516 = vpop.f32.mrb[0].mxu0
        %v1517 = vadd.f32 0.0, %v1516
        %1518 = vmatprep.mubr.bf16.mxu0 0
        %1519 = vmatmul.mubr.bf16.gmra.mrb[0].mxu0 %v1384
        %v1520 = vpop.f32.mrb[0].mxu0
        %v1521 = vadd.f32 0.0, %v1520
        %v1522 = vpop.f32.mrb[0].mxu0
        %v1523 = vadd.f32 0.0, %v1522
        %v1524 = vpop.f32.mrb[0].mxu0
        %v1525 = vadd.f32 0.0, %v1524
        %v1526 = vpop.f32.mrb[0].mxu0
        %v1527 = vadd.f32 0.0, %v1526
        %1528 = vmatprep.mubr.bf16.mxu0 0
        %1529 = vmatmul.mubr.bf16.gmra.mrb[0].mxu0 %v1386
        %v1530 = vpop.f32.mrb[0].mxu0
        %v1531 = vadd.f32 0.0, %v1530
        %v1532 = vpop.f32.mrb[0].mxu0
        %v1533 = vadd.f32 0.0, %v1532
        %v1534 = vpop.f32.mrb[0].mxu0
        %v1535 = vadd.f32 0.0, %v1534
        %v1536 = vpop.f32.mrb[0].mxu0
        %v1537 = vadd.f32 0.0, %v1536
        %1538 = vmatprep.mubr.bf16.mxu0 0
        %1539 = vmatmul.mubr.bf16.gmra.mrb[0].mxu0 %v1388
        %v1540 = vpop.f32.mrb[0].mxu0
        %v1541 = vadd.f32 0.0, %v1540
        %v1542 = vpop.f32.mrb[0].mxu0
        %v1543 = vadd.f32 0.0, %v1542
        %v1544 = vpop.f32.mrb[0].mxu0
        %v1545 = vadd.f32 0.0, %v1544
        %v1546 = vpop.f32.mrb[0].mxu0
        %v1547 = vadd.f32 0.0, %v1546
        %1548 = vmatprep.mubr.bf16.mxu0 0
        %1549 = vmatmul.mubr.bf16.gmra.mrb[0].mxu0 %v1390
        %v1550 = vpop.f32.mrb[0].mxu0
        %v1551 = vadd.f32 0.0, %v1550
        %v1552 = vpop.f32.mrb[0].mxu0
        %v1553 = vadd.f32 0.0, %v1552
        %v1554 = vpop.f32.mrb[0].mxu0
        %v1555 = vadd.f32 0.0, %v1554
        %v1556 = vpop.f32.mrb[0].mxu0
        %v1557 = vadd.f32 0.0, %v1556
        %1558 = vdwg.mxu0
        %v1559 = vadd.f32 %v1304, %v1511
        %v1560 = vadd.f32 %v1305, %v1513
        %v1561 = vadd.f32 %v1306, %v1515
        %v1562 = vadd.f32 %v1307, %v1517
        %v1563 = vadd.f32 %v1308, %v1521
        %v1564 = vadd.f32 %v1309, %v1523
        %v1565 = vadd.f32 %v1310, %v1525
        %v1566 = vadd.f32 %v1311, %v1527
        %v1567 = vadd.f32 %v1312, %v1531
        %v1568 = vadd.f32 %v1313, %v1533
        %v1569 = vadd.f32 %v1314, %v1535
        %v1570 = vadd.f32 %v1315, %v1537
        %v1571 = vadd.f32 %v1316, %v1541
        %v1572 = vadd.f32 %v1317, %v1543
        %v1573 = vadd.f32 %v1318, %v1545
        %v1574 = vadd.f32 %v1319, %v1547
        %v1575 = vadd.f32 %v1320, %v1551
        %v1576 = vadd.f32 %v1321, %v1553
        %v1577 = vadd.f32 %v1322, %v1555
        %v1578 = vadd.f32 %v1323, %v1557
        %v1579 = vld [vmem:[%s567 + $0x2c] sm:$0x3]
        %s1580 = scalar_lea.vmem [#allocation7], 512
        %v1581 = vld [vmem:[%s1580] sm:$0xff]
        %v1582 = vld [vmem:[%s1580 + $0x8] sm:$0xff]
        %v1583 = vld [vmem:[%s1580 + $0x10] sm:$0xff]
        %v1584 = vld [vmem:[%s1580 + $0x18] sm:$0xff]
        %v1585 = vld [vmem:[%s1580 + $0x20] sm:$0xff]
        %v1586 = vld [vmem:[%s1580 + $0x28] sm:$0xff]
        %v1587 = vld [vmem:[%s1580 + $0x30] sm:$0xff]
        %v1588 = vld [vmem:[%s1580 + $0x38] sm:$0xff]
        %v1589 = vld [vmem:[%s1580 + $0x40] sm:$0xff]
        %v1590 = vld [vmem:[%s1580 + $0x48] sm:$0xff]
        %v1591 = vld [vmem:[%s1580 + $0x50] sm:$0xff]
        %v1592 = vld [vmem:[%s1580 + $0x58] sm:$0xff]
        %v1593 = vld [vmem:[%s1580 + $0x60] sm:$0xff]
        %v1594 = vld [vmem:[%s1580 + $0x68] sm:$0xff]
        %v1595 = vld [vmem:[%s1580 + $0x70] sm:$0xff]
        %v1596 = vld [vmem:[%s1580 + $0x78] sm:$0xff]
        %v1598 = vunpack.c.l.b16 %v1579
        %v1599 = vpack.c.b16 %v1598, %v1598
        %vm1600 = vsmask.f32 6400
        %v1602 = vshrl.u32 %v1374, 16
        %v1604 = vrot.slane %v1602, 1
        %v1605 = vshll.u32 %v1374, 16
        %v1607 = vrot.slane %v1605, 2
        %v1608 = vor.u32 %v1604, %v1607
        %v1610 = vshrl.u32 %v1375, 16
        %v1612 = vrot.slane %v1610, 1
        %v1613 = vshll.u32 %v1375, 16
        %v1615 = vrot.slane %v1613, 2
        %v1616 = vor.u32 %v1612, %v1615
        %v1617 = vsel %vm1600, %v1608, %v1616
        %v1619 = vshrl.u32 %v1376, 16
        %v1621 = vrot.slane %v1619, 1
        %v1622 = vshll.u32 %v1376, 16
        %v1624 = vrot.slane %v1622, 2
        %v1625 = vor.u32 %v1621, %v1624
        %v1626 = vsel %vm1600, %v1616, %v1625
        %v1628 = vshrl.u32 %v1377, 16
        %v1630 = vrot.slane %v1628, 1
        %v1631 = vshll.u32 %v1377, 16
        %v1633 = vrot.slane %v1631, 2
        %v1634 = vor.u32 %v1630, %v1633
        %v1635 = vsel %vm1600, %v1625, %v1634
        %v1637 = vshrl.u32 %v1378, 16
        %v1639 = vrot.slane %v1637, 1
        %v1640 = vshll.u32 %v1378, 16
        %v1642 = vrot.slane %v1640, 2
        %v1643 = vor.u32 %v1639, %v1642
        %v1644 = vsel %vm1600, %v1634, %v1643
        %v1646 = vshrl.u32 %v1599, 16
        %v1648 = vrot.slane %v1646, 1
        %v1649 = vshll.u32 %v1599, 16
        %v1651 = vrot.slane %v1649, 2
        %v1652 = vor.u32 %v1648, %v1651
        %v1653 = vsel %vm1600, %v1643, %v1652
        %v1675 = vunpack.c.l.b16 %v1581
        %v1676 = vunpack.c.h.b16 %v1581
        %v1677 = vunpack.c.l.b16 %v1582
        %v1678 = vunpack.c.h.b16 %v1582
        %v1679 = vunpack.c.l.b16 %v1583
        %v1680 = vunpack.c.h.b16 %v1583
        %v1681 = vunpack.c.l.b16 %v1584
        %v1682 = vunpack.c.h.b16 %v1584
        %v1683 = vunpack.c.l.b16 %v1585
        %v1684 = vunpack.c.h.b16 %v1585
        %v1685 = vunpack.c.l.b16 %v1586
        %v1686 = vunpack.c.h.b16 %v1586
        %v1687 = vunpack.c.l.b16 %v1587
        %v1688 = vunpack.c.h.b16 %v1587
        %v1689 = vunpack.c.l.b16 %v1588
        %v1690 = vunpack.c.h.b16 %v1588
        %v1691 = vunpack.c.l.b16 %v1589
        %v1692 = vunpack.c.h.b16 %v1589
        %v1693 = vunpack.c.l.b16 %v1590
        %v1694 = vunpack.c.h.b16 %v1590
        %v1695 = vunpack.c.l.b16 %v1591
        %v1696 = vunpack.c.h.b16 %v1591
        %v1697 = vunpack.c.l.b16 %v1592
        %v1698 = vunpack.c.h.b16 %v1592
        %v1699 = vunpack.c.l.b16 %v1593
        %v1700 = vunpack.c.h.b16 %v1593
        %v1701 = vunpack.c.l.b16 %v1594
        %v1702 = vunpack.c.h.b16 %v1594
        %v1703 = vunpack.c.l.b16 %v1595
        %v1704 = vunpack.c.h.b16 %v1595
        %v1705 = vunpack.c.l.b16 %v1596
        %v1706 = vunpack.c.h.b16 %v1596
        %v1707 = vpack.c.b16 %v1677, %v1675
        %v1708 = vpack.c.b16 %v1678, %v1676
        %v1709 = vpack.c.b16 %v1681, %v1679
        %v1710 = vpack.c.b16 %v1682, %v1680
        %v1711 = vpack.c.b16 %v1685, %v1683
        %v1712 = vpack.c.b16 %v1686, %v1684
        %v1713 = vpack.c.b16 %v1689, %v1687
        %v1714 = vpack.c.b16 %v1690, %v1688
        %v1715 = vpack.c.b16 %v1693, %v1691
        %v1716 = vpack.c.b16 %v1694, %v1692
        %v1717 = vpack.c.b16 %v1697, %v1695
        %v1718 = vpack.c.b16 %v1698, %v1696
        %v1719 = vpack.c.b16 %v1701, %v1699
        %v1720 = vpack.c.b16 %v1702, %v1700
        %v1721 = vpack.c.b16 %v1705, %v1703
        %v1722 = vpack.c.b16 %v1706, %v1704
        %1739 = vmatprep.subr.bf16.mxu0 %v1708
        %1740 = vmatpush1.bf16.msra.mxu0 %v1707
        %1741 = vmatprep.subr.bf16.mxu0 %v1710
        %1742 = vmatpush1.bf16.msra.mxu0 %v1709
        %1743 = vmatprep.subr.bf16.mxu0 %v1712
        %1744 = vmatpush1.bf16.msra.mxu0 %v1711
        %1745 = vmatprep.subr.bf16.mxu0 %v1714
        %1746 = vmatpush1.bf16.msra.mxu0 %v1713
        %1747 = vmatprep.subr.bf16.mxu0 %v1716
        %1748 = vmatpush1.bf16.msra.mxu0 %v1715
        %1749 = vmatprep.subr.bf16.mxu0 %v1718
        %1750 = vmatpush1.bf16.msra.mxu0 %v1717
        %1751 = vmatprep.subr.bf16.mxu0 %v1720
        %1752 = vmatpush1.bf16.msra.mxu0 %v1719
        %1753 = vmatprep.subr.bf16.mxu0 %v1722
        %1754 = vmatpush1.bf16.msra.mxu0 %v1721
        %1755 = vmatprep.subr.bf16.mxu0 0
        %1756 = vmatpush1.bf16.msra.mxu0 0
        %1757 = vmatprep.subr.bf16.mxu0 0
        %1758 = vmatpush1.bf16.msra.mxu0 0
        %1759 = vmatprep.subr.bf16.mxu0 0
        %1760 = vmatpush1.bf16.msra.mxu0 0
        %1761 = vmatprep.subr.bf16.mxu0 0
        %1762 = vmatpush1.bf16.msra.mxu0 0
        %1763 = vmatprep.subr.bf16.mxu0 0
        %1764 = vmatpush1.bf16.msra.mxu0 0
        %1765 = vmatprep.subr.bf16.mxu0 0
        %1766 = vmatpush1.bf16.msra.mxu0 0
        %1767 = vmatprep.subr.bf16.mxu0 0
        %1768 = vmatpush1.bf16.msra.mxu0 0
        %1769 = vmatprep.subr.bf16.mxu0 0
        %1770 = vmatpush1.bf16.msra.mxu0 0
        %1771 = vmatprep.mubr.bf16.mxu0 0
        %1772 = vmatmul.mubr.bf16.gmra.mrb[0].mxu0 %v1617
        %v1773 = vpop.f32.mrb[0].mxu0
        %v1774 = vadd.f32 0.0, %v1773
        %v1775 = vpop.f32.mrb[0].mxu0
        %v1776 = vadd.f32 0.0, %v1775
        %v1777 = vpop.f32.mrb[0].mxu0
        %v1778 = vadd.f32 0.0, %v1777
        %v1779 = vpop.f32.mrb[0].mxu0
        %v1780 = vadd.f32 0.0, %v1779
        %1781 = vmatprep.mubr.bf16.mxu0 0
        %1782 = vmatmul.mubr.bf16.gmra.mrb[0].mxu0 %v1626
        %v1783 = vpop.f32.mrb[0].mxu0
        %v1784 = vadd.f32 0.0, %v1783
        %v1785 = vpop.f32.mrb[0].mxu0
        %v1786 = vadd.f32 0.0, %v1785
        %v1787 = vpop.f32.mrb[0].mxu0
        %v1788 = vadd.f32 0.0, %v1787
        %v1789 = vpop.f32.mrb[0].mxu0
        %v1790 = vadd.f32 0.0, %v1789
        %1791 = vmatprep.mubr.bf16.mxu0 0
        %1792 = vmatmul.mubr.bf16.gmra.mrb[0].mxu0 %v1635
        %v1793 = vpop.f32.mrb[0].mxu0
        %v1794 = vadd.f32 0.0, %v1793
        %v1795 = vpop.f32.mrb[0].mxu0
        %v1796 = vadd.f32 0.0, %v1795
        %v1797 = vpop.f32.mrb[0].mxu0
        %v1798 = vadd.f32 0.0, %v1797
        %v1799 = vpop.f32.mrb[0].mxu0
        %v1800 = vadd.f32 0.0, %v1799
        %1801 = vmatprep.mubr.bf16.mxu0 0
        %1802 = vmatmul.mubr.bf16.gmra.mrb[0].mxu0 %v1644
        %v1803 = vpop.f32.mrb[0].mxu0
        %v1804 = vadd.f32 0.0, %v1803
        %v1805 = vpop.f32.mrb[0].mxu0
        %v1806 = vadd.f32 0.0, %v1805
        %v1807 = vpop.f32.mrb[0].mxu0
        %v1808 = vadd.f32 0.0, %v1807
        %v1809 = vpop.f32.mrb[0].mxu0
        %v1810 = vadd.f32 0.0, %v1809
        %1811 = vmatprep.mubr.bf16.mxu0 0
        %1812 = vmatmul.mubr.bf16.gmra.mrb[0].mxu0 %v1653
        %v1813 = vpop.f32.mrb[0].mxu0
        %v1814 = vadd.f32 0.0, %v1813
        %v1815 = vpop.f32.mrb[0].mxu0
        %v1816 = vadd.f32 0.0, %v1815
        %v1817 = vpop.f32.mrb[0].mxu0
        %v1818 = vadd.f32 0.0, %v1817
        %v1819 = vpop.f32.mrb[0].mxu0
        %v1820 = vadd.f32 0.0, %v1819
        %1821 = vdwg.mxu0
        %v1822 = vadd.f32 %v1559, %v1774
        %v1823 = vadd.f32 %v1560, %v1776
        %v1824 = vadd.f32 %v1561, %v1778
        %v1825 = vadd.f32 %v1562, %v1780
        %v1826 = vadd.f32 %v1563, %v1784
        %v1827 = vadd.f32 %v1564, %v1786
        %v1828 = vadd.f32 %v1565, %v1788
        %v1829 = vadd.f32 %v1566, %v1790
        %v1830 = vadd.f32 %v1567, %v1794
        %v1831 = vadd.f32 %v1568, %v1796
        %v1832 = vadd.f32 %v1569, %v1798
        %v1833 = vadd.f32 %v1570, %v1800
        %v1834 = vadd.f32 %v1571, %v1804
        %v1835 = vadd.f32 %v1572, %v1806
        %v1836 = vadd.f32 %v1573, %v1808
        %v1837 = vadd.f32 %v1574, %v1810
        %v1838 = vadd.f32 %v1575, %v1814
        %v1839 = vadd.f32 %v1576, %v1816
        %v1840 = vadd.f32 %v1577, %v1818
        %v1841 = vadd.f32 %v1578, %v1820
        %v1842 = vld [vmem:[%s567 + $0x4] sm:$0xc]
        %s1843 = scalar_lea.vmem [#allocation7], 640
        %v1844 = vld [vmem:[%s1843] sm:$0xff]
        %v1845 = vld [vmem:[%s1843 + $0x8] sm:$0xff]
        %v1846 = vld [vmem:[%s1843 + $0x10] sm:$0xff]
        %v1847 = vld [vmem:[%s1843 + $0x18] sm:$0xff]
        %v1848 = vld [vmem:[%s1843 + $0x20] sm:$0xff]
        %v1849 = vld [vmem:[%s1843 + $0x28] sm:$0xff]
        %v1850 = vld [vmem:[%s1843 + $0x30] sm:$0xff]
        %v1851 = vld [vmem:[%s1843 + $0x38] sm:$0xff]
        %v1852 = vld [vmem:[%s1843 + $0x40] sm:$0xff]
        %v1853 = vld [vmem:[%s1843 + $0x48] sm:$0xff]
        %v1854 = vld [vmem:[%s1843 + $0x50] sm:$0xff]
        %v1855 = vld [vmem:[%s1843 + $0x58] sm:$0xff]
        %v1856 = vld [vmem:[%s1843 + $0x60] sm:$0xff]
        %v1857 = vld [vmem:[%s1843 + $0x68] sm:$0xff]
        %v1858 = vld [vmem:[%s1843 + $0x70] sm:$0xff]
        %v1859 = vld [vmem:[%s1843 + $0x78] sm:$0xff]
        %v1861 = vunpack.c.l.b16 %v1842
        %v1862 = vpack.c.b16 %v1364, %v1861
        %vm1863 = vcmask 1045504
        %v1864 = vrot.slane %v1862, 2
        %v1865 = vrot.slane %v1375, 2
        %v1866 = vsel %vm1863, %v1864, %v1865
        %v1867 = vrot.slane %v1376, 2
        %v1868 = vsel %vm1863, %v1865, %v1867
        %v1869 = vrot.slane %v1377, 2
        %v1870 = vsel %vm1863, %v1867, %v1869
        %v1871 = vrot.slane %v1378, 2
        %v1872 = vsel %vm1863, %v1869, %v1871
        %v1873 = vrot.slane %v1599, 2
        %v1874 = vsel %vm1863, %v1871, %v1873
        %v1896 = vunpack.c.l.b16 %v1844
        %v1897 = vunpack.c.h.b16 %v1844
        %v1898 = vunpack.c.l.b16 %v1845
        %v1899 = vunpack.c.h.b16 %v1845
        %v1900 = vunpack.c.l.b16 %v1846
        %v1901 = vunpack.c.h.b16 %v1846
        %v1902 = vunpack.c.l.b16 %v1847
        %v1903 = vunpack.c.h.b16 %v1847
        %v1904 = vunpack.c.l.b16 %v1848
        %v1905 = vunpack.c.h.b16 %v1848
        %v1906 = vunpack.c.l.b16 %v1849
        %v1907 = vunpack.c.h.b16 %v1849
        %v1908 = vunpack.c.l.b16 %v1850
        %v1909 = vunpack.c.h.b16 %v1850
        %v1910 = vunpack.c.l.b16 %v1851
        %v1911 = vunpack.c.h.b16 %v1851
        %v1912 = vunpack.c.l.b16 %v1852
        %v1913 = vunpack.c.h.b16 %v1852
        %v1914 = vunpack.c.l.b16 %v1853
        %v1915 = vunpack.c.h.b16 %v1853
        %v1916 = vunpack.c.l.b16 %v1854
        %v1917 = vunpack.c.h.b16 %v1854
        %v1918 = vunpack.c.l.b16 %v1855
        %v1919 = vunpack.c.h.b16 %v1855
        %v1920 = vunpack.c.l.b16 %v1856
        %v1921 = vunpack.c.h.b16 %v1856
        %v1922 = vunpack.c.l.b16 %v1857
        %v1923 = vunpack.c.h.b16 %v1857
        %v1924 = vunpack.c.l.b16 %v1858
        %v1925 = vunpack.c.h.b16 %v1858
        %v1926 = vunpack.c.l.b16 %v1859
        %v1927 = vunpack.c.h.b16 %v1859
        %v1928 = vpack.c.b16 %v1898, %v1896
        %v1929 = vpack.c.b16 %v1899, %v1897
        %v1930 = vpack.c.b16 %v1902, %v1900
        %v1931 = vpack.c.b16 %v1903, %v1901
        %v1932 = vpack.c.b16 %v1906, %v1904
        %v1933 = vpack.c.b16 %v1907, %v1905
        %v1934 = vpack.c.b16 %v1910, %v1908
        %v1935 = vpack.c.b16 %v1911, %v1909
        %v1936 = vpack.c.b16 %v1914, %v1912
        %v1937 = vpack.c.b16 %v1915, %v1913
        %v1938 = vpack.c.b16 %v1918, %v1916
        %v1939 = vpack.c.b16 %v1919, %v1917
        %v1940 = vpack.c.b16 %v1922, %v1920
        %v1941 = vpack.c.b16 %v1923, %v1921
        %v1942 = vpack.c.b16 %v1926, %v1924
        %v1943 = vpack.c.b16 %v1927, %v1925
        %1960 = vmatprep.subr.bf16.mxu0 %v1929
        %1961 = vmatpush1.bf16.msra.mxu0 %v1928
        %1962 = vmatprep.subr.bf16.mxu0 %v1931
        %1963 = vmatpush1.bf16.msra.mxu0 %v1930
        %1964 = vmatprep.subr.bf16.mxu0 %v1933
        %1965 = vmatpush1.bf16.msra.mxu0 %v1932
        %1966 = vmatprep.subr.bf16.mxu0 %v1935
        %1967 = vmatpush1.bf16.msra.mxu0 %v1934
        %1968 = vmatprep.subr.bf16.mxu0 %v1937
        %1969 = vmatpush1.bf16.msra.mxu0 %v1936
        %1970 = vmatprep.subr.bf16.mxu0 %v1939
        %1971 = vmatpush1.bf16.msra.mxu0 %v1938
        %1972 = vmatprep.subr.bf16.mxu0 %v1941
        %1973 = vmatpush1.bf16.msra.mxu0 %v1940
        %1974 = vmatprep.subr.bf16.mxu0 %v1943
        %1975 = vmatpush1.bf16.msra.mxu0 %v1942
        %1976 = vmatprep.subr.bf16.mxu0 0
        %1977 = vmatpush1.bf16.msra.mxu0 0
        %1978 = vmatprep.subr.bf16.mxu0 0
        %1979 = vmatpush1.bf16.msra.mxu0 0
        %1980 = vmatprep.subr.bf16.mxu0 0
        %1981 = vmatpush1.bf16.msra.mxu0 0
        %1982 = vmatprep.subr.bf16.mxu0 0
        %1983 = vmatpush1.bf16.msra.mxu0 0
        %1984 = vmatprep.subr.bf16.mxu0 0
        %1985 = vmatpush1.bf16.msra.mxu0 0
        %1986 = vmatprep.subr.bf16.mxu0 0
        %1987 = vmatpush1.bf16.msra.mxu0 0
        %1988 = vmatprep.subr.bf16.mxu0 0
        %1989 = vmatpush1.bf16.msra.mxu0 0
        %1990 = vmatprep.subr.bf16.mxu0 0
        %1991 = vmatpush1.bf16.msra.mxu0 0
        %1992 = vmatprep.mubr.bf16.mxu0 0
        %1993 = vmatmul.mubr.bf16.gmra.mrb[0].mxu0 %v1866
        %v1994 = vpop.f32.mrb[0].mxu0
        %v1995 = vadd.f32 0.0, %v1994
        %v1996 = vpop.f32.mrb[0].mxu0
        %v1997 = vadd.f32 0.0, %v1996
        %v1998 = vpop.f32.mrb[0].mxu0
        %v1999 = vadd.f32 0.0, %v1998
        %v2000 = vpop.f32.mrb[0].mxu0
        %v2001 = vadd.f32 0.0, %v2000
        %2002 = vmatprep.mubr.bf16.mxu0 0
        %2003 = vmatmul.mubr.bf16.gmra.mrb[0].mxu0 %v1868
        %v2004 = vpop.f32.mrb[0].mxu0
        %v2005 = vadd.f32 0.0, %v2004
        %v2006 = vpop.f32.mrb[0].mxu0
        %v2007 = vadd.f32 0.0, %v2006
        %v2008 = vpop.f32.mrb[0].mxu0
        %v2009 = vadd.f32 0.0, %v2008
        %v2010 = vpop.f32.mrb[0].mxu0
        %v2011 = vadd.f32 0.0, %v2010
        %2012 = vmatprep.mubr.bf16.mxu0 0
        %2013 = vmatmul.mubr.bf16.gmra.mrb[0].mxu0 %v1870
        %v2014 = vpop.f32.mrb[0].mxu0
        %v2015 = vadd.f32 0.0, %v2014
        %v2016 = vpop.f32.mrb[0].mxu0
        %v2017 = vadd.f32 0.0, %v2016
        %v2018 = vpop.f32.mrb[0].mxu0
        %v2019 = vadd.f32 0.0, %v2018
        %v2020 = vpop.f32.mrb[0].mxu0
        %v2021 = vadd.f32 0.0, %v2020
        %2022 = vmatprep.mubr.bf16.mxu0 0
        %2023 = vmatmul.mubr.bf16.gmra.mrb[0].mxu0 %v1872
        %v2024 = vpop.f32.mrb[0].mxu0
        %v2025 = vadd.f32 0.0, %v2024
        %v2026 = vpop.f32.mrb[0].mxu0
        %v2027 = vadd.f32 0.0, %v2026
        %v2028 = vpop.f32.mrb[0].mxu0
        %v2029 = vadd.f32 0.0, %v2028
        %v2030 = vpop.f32.mrb[0].mxu0
        %v2031 = vadd.f32 0.0, %v2030
        %2032 = vmatprep.mubr.bf16.mxu0 0
        %2033 = vmatmul.mubr.bf16.gmra.mrb[0].mxu0 %v1874
        %v2034 = vpop.f32.mrb[0].mxu0
        %v2035 = vadd.f32 0.0, %v2034
        %v2036 = vpop.f32.mrb[0].mxu0
        %v2037 = vadd.f32 0.0, %v2036
        %v2038 = vpop.f32.mrb[0].mxu0
        %v2039 = vadd.f32 0.0, %v2038
        %v2040 = vpop.f32.mrb[0].mxu0
        %v2041 = vadd.f32 0.0, %v2040
        %2042 = vdwg.mxu0
        %v2043 = vadd.f32 %v1822, %v1995
        %v2044 = vadd.f32 %v1823, %v1997
        %v2045 = vadd.f32 %v1824, %v1999
        %v2046 = vadd.f32 %v1825, %v2001
        %v2047 = vadd.f32 %v1826, %v2005
        %v2048 = vadd.f32 %v1827, %v2007
        %v2049 = vadd.f32 %v1828, %v2009
        %v2050 = vadd.f32 %v1829, %v2011
        %v2051 = vadd.f32 %v1830, %v2015
        %v2052 = vadd.f32 %v1831, %v2017
        %v2053 = vadd.f32 %v1832, %v2019
        %v2054 = vadd.f32 %v1833, %v2021
        %v2055 = vadd.f32 %v1834, %v2025
        %v2056 = vadd.f32 %v1835, %v2027
        %v2057 = vadd.f32 %v1836, %v2029
        %v2058 = vadd.f32 %v1837, %v2031
        %v2059 = vadd.f32 %v1838, %v2035
        %v2060 = vadd.f32 %v1839, %v2037
        %v2061 = vadd.f32 %v1840, %v2039
        %v2062 = vadd.f32 %v1841, %v2041
        %v2063 = vld [vmem:[%s567 + $0x8] sm:$0xc]
        %v2064 = vld [vmem:[%s567 + $0xc] sm:$0xf]
        %v2065 = vld [vmem:[%s567 + $0x10] sm:$0xf]
        %v2066 = vld [vmem:[%s567 + $0x14] sm:$0xf]
        %v2067 = vld [vmem:[%s567 + $0x18] sm:$0xf]
        %v2068 = vld [vmem:[%s567 + $0x1c] sm:$0xf]
        %v2069 = vld [vmem:[%s567 + $0x20] sm:$0xf]
        %v2070 = vld [vmem:[%s567 + $0x24] sm:$0xf]
        %v2071 = vld [vmem:[%s567 + $0x28] sm:$0xf]
        %v2072 = vld [vmem:[%s567 + $0x2c] sm:$0xf]
        %v2073 = vld [vmem:[%s567 + $0x30] sm:$0x3]
        %s2074 = scalar_lea.vmem [#allocation7], 768
        %v2075 = vld [vmem:[%s2074] sm:$0xff]
        %v2076 = vld [vmem:[%s2074 + $0x8] sm:$0xff]
        %v2077 = vld [vmem:[%s2074 + $0x10] sm:$0xff]
        %v2078 = vld [vmem:[%s2074 + $0x18] sm:$0xff]
        %v2079 = vld [vmem:[%s2074 + $0x20] sm:$0xff]
        %v2080 = vld [vmem:[%s2074 + $0x28] sm:$0xff]
        %v2081 = vld [vmem:[%s2074 + $0x30] sm:$0xff]
        %v2082 = vld [vmem:[%s2074 + $0x38] sm:$0xff]
        %v2083 = vld [vmem:[%s2074 + $0x40] sm:$0xff]
        %v2084 = vld [vmem:[%s2074 + $0x48] sm:$0xff]
        %v2085 = vld [vmem:[%s2074 + $0x50] sm:$0xff]
        %v2086 = vld [vmem:[%s2074 + $0x58] sm:$0xff]
        %v2087 = vld [vmem:[%s2074 + $0x60] sm:$0xff]
        %v2088 = vld [vmem:[%s2074 + $0x68] sm:$0xff]
        %v2089 = vld [vmem:[%s2074 + $0x70] sm:$0xff]
        %v2090 = vld [vmem:[%s2074 + $0x78] sm:$0xff]
        %v2102 = vunpack.c.l.b16 %v2063
        %v2103 = vunpack.c.l.b16 %v2064
        %v2104 = vunpack.c.l.b16 %v2065
        %v2105 = vunpack.c.l.b16 %v2066
        %v2106 = vunpack.c.l.b16 %v2067
        %v2107 = vunpack.c.l.b16 %v2068
        %v2108 = vunpack.c.l.b16 %v2069
        %v2109 = vunpack.c.l.b16 %v2070
        %v2110 = vunpack.c.l.b16 %v2071
        %v2111 = vunpack.c.l.b16 %v2072
        %v2112 = vunpack.c.l.b16 %v2073
        %v2113 = vpack.c.b16 %v2103, %v2102
        %v2114 = vpack.c.b16 %v2105, %v2104
        %v2115 = vpack.c.b16 %v2107, %v2106
        %v2116 = vpack.c.b16 %v2109, %v2108
        %v2117 = vpack.c.b16 %v2111, %v2110
        %v2118 = vpack.c.b16 %v2112, %v2112
        %v2119 = vrot.slane %v2113, 2
        %v2120 = vrot.slane %v2114, 2
        %v2121 = vsel %vm1863, %v2119, %v2120
        %v2122 = vrot.slane %v2115, 2
        %v2123 = vsel %vm1863, %v2120, %v2122
        %v2124 = vrot.slane %v2116, 2
        %v2125 = vsel %vm1863, %v2122, %v2124
        %v2126 = vrot.slane %v2117, 2
        %v2127 = vsel %vm1863, %v2124, %v2126
        %v2128 = vrot.slane %v2118, 2
        %v2129 = vsel %vm1863, %v2126, %v2128
        %v2151 = vunpack.c.l.b16 %v2075
        %v2152 = vunpack.c.h.b16 %v2075
        %v2153 = vunpack.c.l.b16 %v2076
        %v2154 = vunpack.c.h.b16 %v2076
        %v2155 = vunpack.c.l.b16 %v2077
        %v2156 = vunpack.c.h.b16 %v2077
        %v2157 = vunpack.c.l.b16 %v2078
        %v2158 = vunpack.c.h.b16 %v2078
        %v2159 = vunpack.c.l.b16 %v2079
        %v2160 = vunpack.c.h.b16 %v2079
        %v2161 = vunpack.c.l.b16 %v2080
        %v2162 = vunpack.c.h.b16 %v2080
        %v2163 = vunpack.c.l.b16 %v2081
        %v2164 = vunpack.c.h.b16 %v2081
        %v2165 = vunpack.c.l.b16 %v2082
        %v2166 = vunpack.c.h.b16 %v2082
        %v2167 = vunpack.c.l.b16 %v2083
        %v2168 = vunpack.c.h.b16 %v2083
        %v2169 = vunpack.c.l.b16 %v2084
        %v2170 = vunpack.c.h.b16 %v2084
        %v2171 = vunpack.c.l.b16 %v2085
        %v2172 = vunpack.c.h.b16 %v2085
        %v2173 = vunpack.c.l.b16 %v2086
        %v2174 = vunpack.c.h.b16 %v2086
        %v2175 = vunpack.c.l.b16 %v2087
        %v2176 = vunpack.c.h.b16 %v2087
        %v2177 = vunpack.c.l.b16 %v2088
        %v2178 = vunpack.c.h.b16 %v2088
        %v2179 = vunpack.c.l.b16 %v2089
        %v2180 = vunpack.c.h.b16 %v2089
        %v2181 = vunpack.c.l.b16 %v2090
        %v2182 = vunpack.c.h.b16 %v2090
        %v2183 = vpack.c.b16 %v2153, %v2151
        %v2184 = vpack.c.b16 %v2154, %v2152
        %v2185 = vpack.c.b16 %v2157, %v2155
        %v2186 = vpack.c.b16 %v2158, %v2156
        %v2187 = vpack.c.b16 %v2161, %v2159
        %v2188 = vpack.c.b16 %v2162, %v2160
        %v2189 = vpack.c.b16 %v2165, %v2163
        %v2190 = vpack.c.b16 %v2166, %v2164
        %v2191 = vpack.c.b16 %v2169, %v2167
        %v2192 = vpack.c.b16 %v2170, %v2168
        %v2193 = vpack.c.b16 %v2173, %v2171
        %v2194 = vpack.c.b16 %v2174, %v2172
        %v2195 = vpack.c.b16 %v2177, %v2175
        %v2196 = vpack.c.b16 %v2178, %v2176
        %v2197 = vpack.c.b16 %v2181, %v2179
        %v2198 = vpack.c.b16 %v2182, %v2180
        %2215 = vmatprep.subr.bf16.mxu0 %v2184
        %2216 = vmatpush1.bf16.msra.mxu0 %v2183
        %2217 = vmatprep.subr.bf16.mxu0 %v2186
        %2218 = vmatpush1.bf16.msra.mxu0 %v2185
        %2219 = vmatprep.subr.bf16.mxu0 %v2188
        %2220 = vmatpush1.bf16.msra.mxu0 %v2187
        %2221 = vmatprep.subr.bf16.mxu0 %v2190
        %2222 = vmatpush1.bf16.msra.mxu0 %v2189
        %2223 = vmatprep.subr.bf16.mxu0 %v2192
        %2224 = vmatpush1.bf16.msra.mxu0 %v2191
        %2225 = vmatprep.subr.bf16.mxu0 %v2194
        %2226 = vmatpush1.bf16.msra.mxu0 %v2193
        %2227 = vmatprep.subr.bf16.mxu0 %v2196
        %2228 = vmatpush1.bf16.msra.mxu0 %v2195
        %2229 = vmatprep.subr.bf16.mxu0 %v2198
        %2230 = vmatpush1.bf16.msra.mxu0 %v2197
        %2231 = vmatprep.subr.bf16.mxu0 0
        %2232 = vmatpush1.bf16.msra.mxu0 0
        %2233 = vmatprep.subr.bf16.mxu0 0
        %2234 = vmatpush1.bf16.msra.mxu0 0
        %2235 = vmatprep.subr.bf16.mxu0 0
        %2236 = vmatpush1.bf16.msra.mxu0 0
        %2237 = vmatprep.subr.bf16.mxu0 0
        %2238 = vmatpush1.bf16.msra.mxu0 0
        %2239 = vmatprep.subr.bf16.mxu0 0
        %2240 = vmatpush1.bf16.msra.mxu0 0
        %2241 = vmatprep.subr.bf16.mxu0 0
        %2242 = vmatpush1.bf16.msra.mxu0 0
        %2243 = vmatprep.subr.bf16.mxu0 0
        %2244 = vmatpush1.bf16.msra.mxu0 0
        %2245 = vmatprep.subr.bf16.mxu0 0
        %2246 = vmatpush1.bf16.msra.mxu0 0
        %2247 = vmatprep.mubr.bf16.mxu0 0
        %2248 = vmatmul.mubr.bf16.gmra.mrb[0].mxu0 %v2121
        %v2249 = vpop.f32.mrb[0].mxu0
        %v2250 = vadd.f32 0.0, %v2249
        %v2251 = vpop.f32.mrb[0].mxu0
        %v2252 = vadd.f32 0.0, %v2251
        %v2253 = vpop.f32.mrb[0].mxu0
        %v2254 = vadd.f32 0.0, %v2253
        %v2255 = vpop.f32.mrb[0].mxu0
        %v2256 = vadd.f32 0.0, %v2255
        %2257 = vmatprep.mubr.bf16.mxu0 0
        %2258 = vmatmul.mubr.bf16.gmra.mrb[0].mxu0 %v2123
        %v2259 = vpop.f32.mrb[0].mxu0
        %v2260 = vadd.f32 0.0, %v2259
        %v2261 = vpop.f32.mrb[0].mxu0
        %v2262 = vadd.f32 0.0, %v2261
        %v2263 = vpop.f32.mrb[0].mxu0
        %v2264 = vadd.f32 0.0, %v2263
        %v2265 = vpop.f32.mrb[0].mxu0
        %v2266 = vadd.f32 0.0, %v2265
        %2267 = vmatprep.mubr.bf16.mxu0 0
        %2268 = vmatmul.mubr.bf16.gmra.mrb[0].mxu0 %v2125
        %v2269 = vpop.f32.mrb[0].mxu0
        %v2270 = vadd.f32 0.0, %v2269
        %v2271 = vpop.f32.mrb[0].mxu0
        %v2272 = vadd.f32 0.0, %v2271
        %v2273 = vpop.f32.mrb[0].mxu0
        %v2274 = vadd.f32 0.0, %v2273
        %v2275 = vpop.f32.mrb[0].mxu0
        %v2276 = vadd.f32 0.0, %v2275
        %2277 = vmatprep.mubr.bf16.mxu0 0
        %2278 = vmatmul.mubr.bf16.gmra.mrb[0].mxu0 %v2127
        %v2279 = vpop.f32.mrb[0].mxu0
        %v2280 = vadd.f32 0.0, %v2279
        %v2281 = vpop.f32.mrb[0].mxu0
        %v2282 = vadd.f32 0.0, %v2281
        %v2283 = vpop.f32.mrb[0].mxu0
        %v2284 = vadd.f32 0.0, %v2283
        %v2285 = vpop.f32.mrb[0].mxu0
        %v2286 = vadd.f32 0.0, %v2285
        %2287 = vmatprep.mubr.bf16.mxu0 0
        %2288 = vmatmul.mubr.bf16.gmra.mrb[0].mxu0 %v2129
        %v2289 = vpop.f32.mrb[0].mxu0
        %v2290 = vadd.f32 0.0, %v2289
        %v2291 = vpop.f32.mrb[0].mxu0
        %v2292 = vadd.f32 0.0, %v2291
        %v2293 = vpop.f32.mrb[0].mxu0
        %v2294 = vadd.f32 0.0, %v2293
        %v2295 = vpop.f32.mrb[0].mxu0
        %v2296 = vadd.f32 0.0, %v2295
        %2297 = vdwg.mxu0
        %v2298 = vadd.f32 %v2043, %v2250
        %v2299 = vadd.f32 %v2044, %v2252
        %v2300 = vadd.f32 %v2045, %v2254
        %v2301 = vadd.f32 %v2046, %v2256
        %v2302 = vadd.f32 %v2047, %v2260
        %v2303 = vadd.f32 %v2048, %v2262
        %v2304 = vadd.f32 %v2049, %v2264
        %v2305 = vadd.f32 %v2050, %v2266
        %v2306 = vadd.f32 %v2051, %v2270
        %v2307 = vadd.f32 %v2052, %v2272
        %v2308 = vadd.f32 %v2053, %v2274
        %v2309 = vadd.f32 %v2054, %v2276
        %v2310 = vadd.f32 %v2055, %v2280
        %v2311 = vadd.f32 %v2056, %v2282
        %v2312 = vadd.f32 %v2057, %v2284
        %v2313 = vadd.f32 %v2058, %v2286
        %v2314 = vadd.f32 %v2059, %v2290
        %v2315 = vadd.f32 %v2060, %v2292
        %v2316 = vadd.f32 %v2061, %v2294
        %v2317 = vadd.f32 %v2062, %v2296
        %v2318 = vld [vmem:[%s567 + $0x30] sm:$0x7]
        %s2319 = scalar_lea.vmem [#allocation7], 896
        %v2320 = vld [vmem:[%s2319] sm:$0xff]
        %v2321 = vld [vmem:[%s2319 + $0x8] sm:$0xff]
        %v2322 = vld [vmem:[%s2319 + $0x10] sm:$0xff]
        %v2323 = vld [vmem:[%s2319 + $0x18] sm:$0xff]
        %v2324 = vld [vmem:[%s2319 + $0x20] sm:$0xff]
        %v2325 = vld [vmem:[%s2319 + $0x28] sm:$0xff]
        %v2326 = vld [vmem:[%s2319 + $0x30] sm:$0xff]
        %v2327 = vld [vmem:[%s2319 + $0x38] sm:$0xff]
        %v2328 = vld [vmem:[%s2319 + $0x40] sm:$0xff]
        %v2329 = vld [vmem:[%s2319 + $0x48] sm:$0xff]
        %v2330 = vld [vmem:[%s2319 + $0x50] sm:$0xff]
        %v2331 = vld [vmem:[%s2319 + $0x58] sm:$0xff]
        %v2332 = vld [vmem:[%s2319 + $0x60] sm:$0xff]
        %v2333 = vld [vmem:[%s2319 + $0x68] sm:$0xff]
        %v2334 = vld [vmem:[%s2319 + $0x70] sm:$0xff]
        %v2335 = vld [vmem:[%s2319 + $0x78] sm:$0xff]
        %v2337 = vunpack.c.l.b16 %v2318
        %v2338 = vpack.c.b16 %v2337, %v2337
        %vm2339 = vsmask.f32 5376
        %v2341 = vshrl.u32 %v2113, 16
        %v2343 = vrot.slane %v2341, 2
        %v2344 = vshll.u32 %v2113, 16
        %v2346 = vrot.slane %v2344, 3
        %v2347 = vor.u32 %v2343, %v2346
        %v2349 = vshrl.u32 %v2114, 16
        %v2351 = vrot.slane %v2349, 2
        %v2352 = vshll.u32 %v2114, 16
        %v2354 = vrot.slane %v2352, 3
        %v2355 = vor.u32 %v2351, %v2354
        %v2356 = vsel %vm2339, %v2347, %v2355
        %v2358 = vshrl.u32 %v2115, 16
        %v2360 = vrot.slane %v2358, 2
        %v2361 = vshll.u32 %v2115, 16
        %v2363 = vrot.slane %v2361, 3
        %v2364 = vor.u32 %v2360, %v2363
        %v2365 = vsel %vm2339, %v2355, %v2364
        %v2367 = vshrl.u32 %v2116, 16
        %v2369 = vrot.slane %v2367, 2
        %v2370 = vshll.u32 %v2116, 16
        %v2372 = vrot.slane %v2370, 3
        %v2373 = vor.u32 %v2369, %v2372
        %v2374 = vsel %vm2339, %v2364, %v2373
        %v2376 = vshrl.u32 %v2117, 16
        %v2378 = vrot.slane %v2376, 2
        %v2379 = vshll.u32 %v2117, 16
        %v2381 = vrot.slane %v2379, 3
        %v2382 = vor.u32 %v2378, %v2381
        %v2383 = vsel %vm2339, %v2373, %v2382
        %v2385 = vshrl.u32 %v2338, 16
        %v2387 = vrot.slane %v2385, 2
        %v2388 = vshll.u32 %v2338, 16
        %v2390 = vrot.slane %v2388, 3
        %v2391 = vor.u32 %v2387, %v2390
        %v2392 = vsel %vm2339, %v2382, %v2391
        %v2414 = vunpack.c.l.b16 %v2320
        %v2415 = vunpack.c.h.b16 %v2320
        %v2416 = vunpack.c.l.b16 %v2321
        %v2417 = vunpack.c.h.b16 %v2321
        %v2418 = vunpack.c.l.b16 %v2322
        %v2419 = vunpack.c.h.b16 %v2322
        %v2420 = vunpack.c.l.b16 %v2323
        %v2421 = vunpack.c.h.b16 %v2323
        %v2422 = vunpack.c.l.b16 %v2324
        %v2423 = vunpack.c.h.b16 %v2324
        %v2424 = vunpack.c.l.b16 %v2325
        %v2425 = vunpack.c.h.b16 %v2325
        %v2426 = vunpack.c.l.b16 %v2326
        %v2427 = vunpack.c.h.b16 %v2326
        %v2428 = vunpack.c.l.b16 %v2327
        %v2429 = vunpack.c.h.b16 %v2327
        %v2430 = vunpack.c.l.b16 %v2328
        %v2431 = vunpack.c.h.b16 %v2328
        %v2432 = vunpack.c.l.b16 %v2329
        %v2433 = vunpack.c.h.b16 %v2329
        %v2434 = vunpack.c.l.b16 %v2330
        %v2435 = vunpack.c.h.b16 %v2330
        %v2436 = vunpack.c.l.b16 %v2331
        %v2437 = vunpack.c.h.b16 %v2331
        %v2438 = vunpack.c.l.b16 %v2332
        %v2439 = vunpack.c.h.b16 %v2332
        %v2440 = vunpack.c.l.b16 %v2333
        %v2441 = vunpack.c.h.b16 %v2333
        %v2442 = vunpack.c.l.b16 %v2334
        %v2443 = vunpack.c.h.b16 %v2334
        %v2444 = vunpack.c.l.b16 %v2335
        %v2445 = vunpack.c.h.b16 %v2335
        %v2446 = vpack.c.b16 %v2416, %v2414
        %v2447 = vpack.c.b16 %v2417, %v2415
        %v2448 = vpack.c.b16 %v2420, %v2418
        %v2449 = vpack.c.b16 %v2421, %v2419
        %v2450 = vpack.c.b16 %v2424, %v2422
        %v2451 = vpack.c.b16 %v2425, %v2423
        %v2452 = vpack.c.b16 %v2428, %v2426
        %v2453 = vpack.c.b16 %v2429, %v2427
        %v2454 = vpack.c.b16 %v2432, %v2430
        %v2455 = vpack.c.b16 %v2433, %v2431
        %v2456 = vpack.c.b16 %v2436, %v2434
        %v2457 = vpack.c.b16 %v2437, %v2435
        %v2458 = vpack.c.b16 %v2440, %v2438
        %v2459 = vpack.c.b16 %v2441, %v2439
        %v2460 = vpack.c.b16 %v2444, %v2442
        %v2461 = vpack.c.b16 %v2445, %v2443
        %2478 = vmatprep.subr.bf16.mxu0 %v2447
        %2479 = vmatpush1.bf16.msra.mxu0 %v2446
        %2480 = vmatprep.subr.bf16.mxu0 %v2449
        %2481 = vmatpush1.bf16.msra.mxu0 %v2448
        %2482 = vmatprep.subr.bf16.mxu0 %v2451
        %2483 = vmatpush1.bf16.msra.mxu0 %v2450
        %2484 = vmatprep.subr.bf16.mxu0 %v2453
        %2485 = vmatpush1.bf16.msra.mxu0 %v2452
        %2486 = vmatprep.subr.bf16.mxu0 %v2455
        %2487 = vmatpush1.bf16.msra.mxu0 %v2454
        %2488 = vmatprep.subr.bf16.mxu0 %v2457
        %2489 = vmatpush1.bf16.msra.mxu0 %v2456
        %2490 = vmatprep.subr.bf16.mxu0 %v2459
        %2491 = vmatpush1.bf16.msra.mxu0 %v2458
        %2492 = vmatprep.subr.bf16.mxu0 %v2461
        %2493 = vmatpush1.bf16.msra.mxu0 %v2460
        %2494 = vmatprep.subr.bf16.mxu0 0
        %2495 = vmatpush1.bf16.msra.mxu0 0
        %2496 = vmatprep.subr.bf16.mxu0 0
        %2497 = vmatpush1.bf16.msra.mxu0 0
        %2498 = vmatprep.subr.bf16.mxu0 0
        %2499 = vmatpush1.bf16.msra.mxu0 0
        %2500 = vmatprep.subr.bf16.mxu0 0
        %2501 = vmatpush1.bf16.msra.mxu0 0
        %2502 = vmatprep.subr.bf16.mxu0 0
        %2503 = vmatpush1.bf16.msra.mxu0 0
        %2504 = vmatprep.subr.bf16.mxu0 0
        %2505 = vmatpush1.bf16.msra.mxu0 0
        %2506 = vmatprep.subr.bf16.mxu0 0
        %2507 = vmatpush1.bf16.msra.mxu0 0
        %2508 = vmatprep.subr.bf16.mxu0 0
        %2509 = vmatpush1.bf16.msra.mxu0 0
        %2510 = vmatprep.mubr.bf16.mxu0 0
        %2511 = vmatmul.mubr.bf16.gmra.mrb[0].mxu0 %v2356
        %v2512 = vpop.f32.mrb[0].mxu0
        %v2513 = vadd.f32 0.0, %v2512
        %v2514 = vpop.f32.mrb[0].mxu0
        %v2515 = vadd.f32 0.0, %v2514
        %v2516 = vpop.f32.mrb[0].mxu0
        %v2517 = vadd.f32 0.0, %v2516
        %v2518 = vpop.f32.mrb[0].mxu0
        %v2519 = vadd.f32 0.0, %v2518
        %2520 = vmatprep.mubr.bf16.mxu0 0
        %2521 = vmatmul.mubr.bf16.gmra.mrb[0].mxu0 %v2365
        %v2522 = vpop.f32.mrb[0].mxu0
        %v2523 = vadd.f32 0.0, %v2522
        %v2524 = vpop.f32.mrb[0].mxu0
        %v2525 = vadd.f32 0.0, %v2524
        %v2526 = vpop.f32.mrb[0].mxu0
        %v2527 = vadd.f32 0.0, %v2526
        %v2528 = vpop.f32.mrb[0].mxu0
        %v2529 = vadd.f32 0.0, %v2528
        %2530 = vmatprep.mubr.bf16.mxu0 0
        %2531 = vmatmul.mubr.bf16.gmra.mrb[0].mxu0 %v2374
        %v2532 = vpop.f32.mrb[0].mxu0
        %v2533 = vadd.f32 0.0, %v2532
        %v2534 = vpop.f32.mrb[0].mxu0
        %v2535 = vadd.f32 0.0, %v2534
        %v2536 = vpop.f32.mrb[0].mxu0
        %v2537 = vadd.f32 0.0, %v2536
        %v2538 = vpop.f32.mrb[0].mxu0
        %v2539 = vadd.f32 0.0, %v2538
        %2540 = vmatprep.mubr.bf16.mxu0 0
        %2541 = vmatmul.mubr.bf16.gmra.mrb[0].mxu0 %v2383
        %v2542 = vpop.f32.mrb[0].mxu0
        %v2543 = vadd.f32 0.0, %v2542
        %v2544 = vpop.f32.mrb[0].mxu0
        %v2545 = vadd.f32 0.0, %v2544
        %v2546 = vpop.f32.mrb[0].mxu0
        %v2547 = vadd.f32 0.0, %v2546
        %v2548 = vpop.f32.mrb[0].mxu0
        %v2549 = vadd.f32 0.0, %v2548
        %2550 = vmatprep.mubr.bf16.mxu0 0
        %2551 = vmatmul.mubr.bf16.gmra.mrb[0].mxu0 %v2392
        %v2552 = vpop.f32.mrb[0].mxu0
        %v2553 = vadd.f32 0.0, %v2552
        %v2554 = vpop.f32.mrb[0].mxu0
        %v2555 = vadd.f32 0.0, %v2554
        %v2556 = vpop.f32.mrb[0].mxu0
        %v2557 = vadd.f32 0.0, %v2556
        %v2558 = vpop.f32.mrb[0].mxu0
        %v2559 = vadd.f32 0.0, %v2558
        %2560 = vdwg.mxu0
        %v2561 = vadd.f32 %v2298, %v2513
        %v2562 = vadd.f32 %v2299, %v2515
        %v2563 = vadd.f32 %v2300, %v2517
        %v2564 = vadd.f32 %v2301, %v2519
        %v2565 = vadd.f32 %v2302, %v2523
        %v2566 = vadd.f32 %v2303, %v2525
        %v2567 = vadd.f32 %v2304, %v2527
        %v2568 = vadd.f32 %v2305, %v2529
        %v2569 = vadd.f32 %v2306, %v2533
        %v2570 = vadd.f32 %v2307, %v2535
        %v2571 = vadd.f32 %v2308, %v2537
        %v2572 = vadd.f32 %v2309, %v2539
        %v2573 = vadd.f32 %v2310, %v2543
        %v2574 = vadd.f32 %v2311, %v2545
        %v2575 = vadd.f32 %v2312, %v2547
        %v2576 = vadd.f32 %v2313, %v2549
        %v2577 = vadd.f32 %v2314, %v2553
        %v2578 = vadd.f32 %v2315, %v2555
        %v2579 = vadd.f32 %v2316, %v2557
        %v2580 = vadd.f32 %v2317, %v2559
        %v2581 = vld [vmem:[%s567 + $0x8] sm:$0x8]
        %s2582 = scalar_lea.vmem [#allocation7], 1024
        %v2583 = vld [vmem:[%s2582] sm:$0xff]
        %v2584 = vld [vmem:[%s2582 + $0x8] sm:$0xff]
        %v2585 = vld [vmem:[%s2582 + $0x10] sm:$0xff]
        %v2586 = vld [vmem:[%s2582 + $0x18] sm:$0xff]
        %v2587 = vld [vmem:[%s2582 + $0x20] sm:$0xff]
        %v2588 = vld [vmem:[%s2582 + $0x28] sm:$0xff]
        %v2589 = vld [vmem:[%s2582 + $0x30] sm:$0xff]
        %v2590 = vld [vmem:[%s2582 + $0x38] sm:$0xff]
        %v2591 = vld [vmem:[%s2582 + $0x40] sm:$0xff]
        %v2592 = vld [vmem:[%s2582 + $0x48] sm:$0xff]
        %v2593 = vld [vmem:[%s2582 + $0x50] sm:$0xff]
        %v2594 = vld [vmem:[%s2582 + $0x58] sm:$0xff]
        %v2595 = vld [vmem:[%s2582 + $0x60] sm:$0xff]
        %v2596 = vld [vmem:[%s2582 + $0x68] sm:$0xff]
        %v2597 = vld [vmem:[%s2582 + $0x70] sm:$0xff]
        %v2598 = vld [vmem:[%s2582 + $0x78] sm:$0xff]
        %v2600 = vunpack.c.l.b16 %v2581
        %v2601 = vpack.c.b16 %v2103, %v2600
        %vm2602 = vcmask 1044480
        %v2603 = vrot.slane %v2601, 3
        %v2604 = vrot.slane %v2114, 3
        %v2605 = vsel %vm2602, %v2603, %v2604
        %v2606 = vrot.slane %v2115, 3
        %v2607 = vsel %vm2602, %v2604, %v2606
        %v2608 = vrot.slane %v2116, 3
        %v2609 = vsel %vm2602, %v2606, %v2608
        %v2610 = vrot.slane %v2117, 3
        %v2611 = vsel %vm2602, %v2608, %v2610
        %v2612 = vrot.slane %v2338, 3
        %v2613 = vsel %vm2602, %v2610, %v2612
        %v2635 = vunpack.c.l.b16 %v2583
        %v2636 = vunpack.c.h.b16 %v2583
        %v2637 = vunpack.c.l.b16 %v2584
        %v2638 = vunpack.c.h.b16 %v2584
        %v2639 = vunpack.c.l.b16 %v2585
        %v2640 = vunpack.c.h.b16 %v2585
        %v2641 = vunpack.c.l.b16 %v2586
        %v2642 = vunpack.c.h.b16 %v2586
        %v2643 = vunpack.c.l.b16 %v2587
        %v2644 = vunpack.c.h.b16 %v2587
        %v2645 = vunpack.c.l.b16 %v2588
        %v2646 = vunpack.c.h.b16 %v2588
        %v2647 = vunpack.c.l.b16 %v2589
        %v2648 = vunpack.c.h.b16 %v2589
        %v2649 = vunpack.c.l.b16 %v2590
        %v2650 = vunpack.c.h.b16 %v2590
        %v2651 = vunpack.c.l.b16 %v2591
        %v2652 = vunpack.c.h.b16 %v2591
        %v2653 = vunpack.c.l.b16 %v2592
        %v2654 = vunpack.c.h.b16 %v2592
        %v2655 = vunpack.c.l.b16 %v2593
        %v2656 = vunpack.c.h.b16 %v2593
        %v2657 = vunpack.c.l.b16 %v2594
        %v2658 = vunpack.c.h.b16 %v2594
        %v2659 = vunpack.c.l.b16 %v2595
        %v2660 = vunpack.c.h.b16 %v2595
        %v2661 = vunpack.c.l.b16 %v2596
        %v2662 = vunpack.c.h.b16 %v2596
        %v2663 = vunpack.c.l.b16 %v2597
        %v2664 = vunpack.c.h.b16 %v2597
        %v2665 = vunpack.c.l.b16 %v2598
        %v2666 = vunpack.c.h.b16 %v2598
        %v2667 = vpack.c.b16 %v2637, %v2635
        %v2668 = vpack.c.b16 %v2638, %v2636
        %v2669 = vpack.c.b16 %v2641, %v2639
        %v2670 = vpack.c.b16 %v2642, %v2640
        %v2671 = vpack.c.b16 %v2645, %v2643
        %v2672 = vpack.c.b16 %v2646, %v2644
        %v2673 = vpack.c.b16 %v2649, %v2647
        %v2674 = vpack.c.b16 %v2650, %v2648
        %v2675 = vpack.c.b16 %v2653, %v2651
        %v2676 = vpack.c.b16 %v2654, %v2652
        %v2677 = vpack.c.b16 %v2657, %v2655
        %v2678 = vpack.c.b16 %v2658, %v2656
        %v2679 = vpack.c.b16 %v2661, %v2659
        %v2680 = vpack.c.b16 %v2662, %v2660
        %v2681 = vpack.c.b16 %v2665, %v2663
        %v2682 = vpack.c.b16 %v2666, %v2664
        %2699 = vmatprep.subr.bf16.mxu0 %v2668
        %2700 = vmatpush1.bf16.msra.mxu0 %v2667
        %2701 = vmatprep.subr.bf16.mxu0 %v2670
        %2702 = vmatpush1.bf16.msra.mxu0 %v2669
        %2703 = vmatprep.subr.bf16.mxu0 %v2672
        %2704 = vmatpush1.bf16.msra.mxu0 %v2671
        %2705 = vmatprep.subr.bf16.mxu0 %v2674
        %2706 = vmatpush1.bf16.msra.mxu0 %v2673
        %2707 = vmatprep.subr.bf16.mxu0 %v2676
        %2708 = vmatpush1.bf16.msra.mxu0 %v2675
        %2709 = vmatprep.subr.bf16.mxu0 %v2678
        %2710 = vmatpush1.bf16.msra.mxu0 %v2677
        %2711 = vmatprep.subr.bf16.mxu0 %v2680
        %2712 = vmatpush1.bf16.msra.mxu0 %v2679
        %2713 = vmatprep.subr.bf16.mxu0 %v2682
        %2714 = vmatpush1.bf16.msra.mxu0 %v2681
        %2715 = vmatprep.subr.bf16.mxu0 0
        %2716 = vmatpush1.bf16.msra.mxu0 0
        %2717 = vmatprep.subr.bf16.mxu0 0
        %2718 = vmatpush1.bf16.msra.mxu0 0
        %2719 = vmatprep.subr.bf16.mxu0 0
        %2720 = vmatpush1.bf16.msra.mxu0 0
        %2721 = vmatprep.subr.bf16.mxu0 0
        %2722 = vmatpush1.bf16.msra.mxu0 0
        %2723 = vmatprep.subr.bf16.mxu0 0
        %2724 = vmatpush1.bf16.msra.mxu0 0
        %2725 = vmatprep.subr.bf16.mxu0 0
        %2726 = vmatpush1.bf16.msra.mxu0 0
        %2727 = vmatprep.subr.bf16.mxu0 0
        %2728 = vmatpush1.bf16.msra.mxu0 0
        %2729 = vmatprep.subr.bf16.mxu0 0
        %2730 = vmatpush1.bf16.msra.mxu0 0
        %2731 = vmatprep.mubr.bf16.mxu0 0
        %2732 = vmatmul.mubr.bf16.gmra.mrb[0].mxu0 %v2605
        %v2733 = vpop.f32.mrb[0].mxu0
        %v2734 = vadd.f32 0.0, %v2733
        %v2735 = vpop.f32.mrb[0].mxu0
        %v2736 = vadd.f32 0.0, %v2735
        %v2737 = vpop.f32.mrb[0].mxu0
        %v2738 = vadd.f32 0.0, %v2737
        %v2739 = vpop.f32.mrb[0].mxu0
        %v2740 = vadd.f32 0.0, %v2739
        %2741 = vmatprep.mubr.bf16.mxu0 0
        %2742 = vmatmul.mubr.bf16.gmra.mrb[0].mxu0 %v2607
        %v2743 = vpop.f32.mrb[0].mxu0
        %v2744 = vadd.f32 0.0, %v2743
        %v2745 = vpop.f32.mrb[0].mxu0
        %v2746 = vadd.f32 0.0, %v2745
        %v2747 = vpop.f32.mrb[0].mxu0
        %v2748 = vadd.f32 0.0, %v2747
        %v2749 = vpop.f32.mrb[0].mxu0
        %v2750 = vadd.f32 0.0, %v2749
        %2751 = vmatprep.mubr.bf16.mxu0 0
        %2752 = vmatmul.mubr.bf16.gmra.mrb[0].mxu0 %v2609
        %v2753 = vpop.f32.mrb[0].mxu0
        %v2754 = vadd.f32 0.0, %v2753
        %v2755 = vpop.f32.mrb[0].mxu0
        %v2756 = vadd.f32 0.0, %v2755
        %v2757 = vpop.f32.mrb[0].mxu0
        %v2758 = vadd.f32 0.0, %v2757
        %v2759 = vpop.f32.mrb[0].mxu0
        %v2760 = vadd.f32 0.0, %v2759
        %2761 = vmatprep.mubr.bf16.mxu0 0
        %2762 = vmatmul.mubr.bf16.gmra.mrb[0].mxu0 %v2611
        %v2763 = vpop.f32.mrb[0].mxu0
        %v2764 = vadd.f32 0.0, %v2763
        %v2765 = vpop.f32.mrb[0].mxu0
        %v2766 = vadd.f32 0.0, %v2765
        %v2767 = vpop.f32.mrb[0].mxu0
        %v2768 = vadd.f32 0.0, %v2767
        %v2769 = vpop.f32.mrb[0].mxu0
        %v2770 = vadd.f32 0.0, %v2769
        %2771 = vmatprep.mubr.bf16.mxu0 0
        %2772 = vmatmul.mubr.bf16.gmra.mrb[0].mxu0 %v2613
        %v2773 = vpop.f32.mrb[0].mxu0
        %v2774 = vadd.f32 0.0, %v2773
        %v2775 = vpop.f32.mrb[0].mxu0
        %v2776 = vadd.f32 0.0, %v2775
        %v2777 = vpop.f32.mrb[0].mxu0
        %v2778 = vadd.f32 0.0, %v2777
        %v2779 = vpop.f32.mrb[0].mxu0
        %v2780 = vadd.f32 0.0, %v2779
        %2781 = vdwg.mxu0
        %v2782 = vadd.f32 %v2561, %v2734
        %v2783 = vadd.f32 %v2562, %v2736
        %v2784 = vadd.f32 %v2563, %v2738
        %v2785 = vadd.f32 %v2564, %v2740
        %v2786 = vadd.f32 %v2565, %v2744
        %v2787 = vadd.f32 %v2566, %v2746
        %v2788 = vadd.f32 %v2567, %v2748
        %v2789 = vadd.f32 %v2568, %v2750
        %v2790 = vadd.f32 %v2569, %v2754
        %v2791 = vadd.f32 %v2570, %v2756
        %v2792 = vadd.f32 %v2571, %v2758
        %v2793 = vadd.f32 %v2572, %v2760
        %v2794 = vadd.f32 %v2573, %v2764
        %v2795 = vadd.f32 %v2574, %v2766
        %v2796 = vadd.f32 %v2575, %v2768
        %v2797 = vadd.f32 %v2576, %v2770
        %v2798 = vadd.f32 %v2577, %v2774
        %v2799 = vadd.f32 %v2578, %v2776
        %v2800 = vadd.f32 %v2579, %v2778
        %v2801 = vadd.f32 %v2580, %v2780
        %v2802 = vld [vmem:[%s4] sm:$0x3]
        %v2804 = vlaneseq
        %v2805 = vshrl.u32 %v2804, 7
        %v2806 = vsub.s32 0, %v2805
        %v2807 = vrot.slane %v2802, %v2806
        %v2808 = vlaneseq
        %v2809 = vshrl.u32 %v2808, 7
        %v2810 = vsub.s32 1, %v2809
        %v2811 = vrot.slane %v2802, %v2810
        %v2814 = vmul.f32 %v2782, %v2807
        %v2815 = vmul.f32 %v2783, %v2811
        %v2816 = vmul.f32 %v2784, %v2807
        %v2817 = vmul.f32 %v2785, %v2811
        %v2818 = vmul.f32 %v2786, %v2807
        %v2819 = vmul.f32 %v2787, %v2811
        %v2820 = vmul.f32 %v2788, %v2807
        %v2821 = vmul.f32 %v2789, %v2811
        %v2822 = vmul.f32 %v2790, %v2807
        %v2823 = vmul.f32 %v2791, %v2811
        %v2824 = vmul.f32 %v2792, %v2807
        %v2825 = vmul.f32 %v2793, %v2811
        %v2826 = vmul.f32 %v2794, %v2807
        %v2827 = vmul.f32 %v2795, %v2811
        %v2828 = vmul.f32 %v2796, %v2807
        %v2829 = vmul.f32 %v2797, %v2811
        %v2830 = vmul.f32 %v2798, %v2807
        %v2831 = vmul.f32 %v2799, %v2811
        %v2832 = vmul.f32 %v2800, %v2807
        %v2833 = vmul.f32 %v2801, %v2811
        %v2834 = vld [vmem:[%s5] sm:$0x3]
        %v2836 = vlaneseq
        %v2837 = vshrl.u32 %v2836, 7
        %v2838 = vsub.s32 0, %v2837
        %v2839 = vrot.slane %v2834, %v2838
        %v2840 = vlaneseq
        %v2841 = vshrl.u32 %v2840, 7
        %v2842 = vsub.s32 1, %v2841
        %v2843 = vrot.slane %v2834, %v2842
        %v2846 = vadd.f32 %v2814, %v2839
        %v2847 = vadd.f32 %v2815, %v2843
        %v2848 = vadd.f32 %v2816, %v2839
        %v2849 = vadd.f32 %v2817, %v2843
        %v2850 = vadd.f32 %v2818, %v2839
        %v2851 = vadd.f32 %v2819, %v2843
        %v2852 = vadd.f32 %v2820, %v2839
        %v2853 = vadd.f32 %v2821, %v2843
        %v2854 = vadd.f32 %v2822, %v2839
        %v2855 = vadd.f32 %v2823, %v2843
        %v2856 = vadd.f32 %v2824, %v2839
        %v2857 = vadd.f32 %v2825, %v2843
        %v2858 = vadd.f32 %v2826, %v2839
        %v2859 = vadd.f32 %v2827, %v2843
        %v2860 = vadd.f32 %v2828, %v2839
        %v2861 = vadd.f32 %v2829, %v2843
        %v2862 = vadd.f32 %v2830, %v2839
        %v2863 = vadd.f32 %v2831, %v2843
        %v2864 = vadd.f32 %v2832, %v2839
        %v2865 = vadd.f32 %v2833, %v2843
        %v2866 = vmax.f32 %v2846, 0.0
        %v2867 = vmax.f32 %v2847, 0.0
        %v2868 = vmax.f32 %v2848, 0.0
        %v2869 = vmax.f32 %v2849, 0.0
        %v2870 = vmax.f32 %v2850, 0.0
        %v2871 = vmax.f32 %v2851, 0.0
        %v2872 = vmax.f32 %v2852, 0.0
        %v2873 = vmax.f32 %v2853, 0.0
        %v2874 = vmax.f32 %v2854, 0.0
        %v2875 = vmax.f32 %v2855, 0.0
        %v2876 = vmax.f32 %v2856, 0.0
        %v2877 = vmax.f32 %v2857, 0.0
        %v2878 = vmax.f32 %v2858, 0.0
        %v2879 = vmax.f32 %v2859, 0.0
        %v2880 = vmax.f32 %v2860, 0.0
        %v2881 = vmax.f32 %v2861, 0.0
        %v2882 = vmax.f32 %v2862, 0.0
        %v2883 = vmax.f32 %v2863, 0.0
        %v2884 = vmax.f32 %v2864, 0.0
        %v2885 = vmax.f32 %v2865, 0.0
        %2887 = vset.pattern.permute.xlu0 0
        %2888 = vperm.xlu0 %2887, %v640
        %v2889 = vpop.permute.xlu0 %2888
        %2892 = vset.pattern.permute.xlu0 0
        %2893 = vperm.xlu0 %2892, %v641
        %v2894 = vpop.permute.xlu0 %2893
        %2897 = vset.pattern.permute.xlu0 0
        %2898 = vperm.xlu0 %2897, %v642
        %v2899 = vpop.permute.xlu0 %2898
        %2902 = vset.pattern.permute.xlu0 0
        %2903 = vperm.xlu0 %2902, %v643
        %v2904 = vpop.permute.xlu0 %2903
        %2907 = vset.pattern.permute.xlu0 0
        %2908 = vperm.xlu0 %2907, %v644
        %v2909 = vpop.permute.xlu0 %2908
        %2912 = vset.pattern.permute.xlu0 0
        %2913 = vperm.xlu0 %2912, %v645
        %v2914 = vpop.permute.xlu0 %2913
        %2917 = vset.pattern.permute.xlu0 0
        %2918 = vperm.xlu0 %2917, %v646
        %v2919 = vpop.permute.xlu0 %2918
        %2922 = vset.pattern.permute.xlu0 0
        %2923 = vperm.xlu0 %2922, %v647
        %v2924 = vpop.permute.xlu0 %2923
        %2927 = vset.pattern.permute.xlu0 0
        %2928 = vperm.xlu0 %2927, %v648
        %v2929 = vpop.permute.xlu0 %2928
        %2932 = vset.pattern.permute.xlu0 0
        %2933 = vperm.xlu0 %2932, %v649
        %v2934 = vpop.permute.xlu0 %2933
        %v2936 = vmul.f32 %v2866, %v2889
        %v2937 = vmul.f32 %v2867, %v2889
        %v2938 = vmul.f32 %v2868, %v2894
        %v2939 = vmul.f32 %v2869, %v2894
        %v2940 = vmul.f32 %v2870, %v2899
        %v2941 = vmul.f32 %v2871, %v2899
        %v2942 = vmul.f32 %v2872, %v2904
        %v2943 = vmul.f32 %v2873, %v2904
        %v2944 = vmul.f32 %v2874, %v2909
        %v2945 = vmul.f32 %v2875, %v2909
        %v2946 = vmul.f32 %v2876, %v2914
        %v2947 = vmul.f32 %v2877, %v2914
        %v2948 = vmul.f32 %v2878, %v2919
        %v2949 = vmul.f32 %v2879, %v2919
        %v2950 = vmul.f32 %v2880, %v2924
        %v2951 = vmul.f32 %v2881, %v2924
        %v2952 = vmul.f32 %v2882, %v2929
        %v2953 = vmul.f32 %v2883, %v2929
        %v2954 = vmul.f32 %v2884, %v2934
        %v2955 = vmul.f32 %v2885, %v2934
        %v2956 = vpack.c.bf16 %v2938, %v2936
        %v2957 = vpack.c.bf16 %v2942, %v2940
        %v2958 = vpack.c.bf16 %v2946, %v2944
        %v2959 = vpack.c.bf16 %v2950, %v2948
        %v2960 = vpack.c.bf16 %v2954, %v2952
        %v2961 = vld [vmem:[#allocation9] sm:$0xff]
        %v2962 = vld [vmem:[#allocation9 + $0x8] sm:$0xf]
        %v2963 = vld [vmem:[#allocation9 + $0xc] sm:$0xff]
        %v2964 = vld [vmem:[#allocation9 + $0x14] sm:$0xf]
        %v2965 = vld [vmem:[#allocation9 + $0x18] sm:$0xff]
        %v2966 = vld [vmem:[#allocation9 + $0x20] sm:$0xf]
        %v2967 = vld [vmem:[#allocation9 + $0x24] sm:$0xff]
        %v2968 = vld [vmem:[#allocation9 + $0x2c] sm:$0xf]
        %v2969 = vld [vmem:[#allocation9 + $0x30] sm:$0xff]
        %v2970 = vld [vmem:[#allocation9 + $0x38] sm:$0xf]
        %v2971 = vld [vmem:[#allocation9 + $0x3c] sm:$0xff]
        %v2972 = vld [vmem:[#allocation9 + $0x44] sm:$0xf]
        %v2973 = vld [vmem:[#allocation9 + $0x48] sm:$0xff]
        %v2974 = vld [vmem:[#allocation9 + $0x50] sm:$0xf]
        %v2975 = vld [vmem:[#allocation9 + $0x54] sm:$0xff]
        %v2976 = vld [vmem:[#allocation9 + $0x5c] sm:$0xf]
        %v2977 = vld [vmem:[#allocation9 + $0x60] sm:$0xff]
        %v2978 = vld [vmem:[#allocation9 + $0x68] sm:$0xf]
        %v2979 = vld [vmem:[#allocation9 + $0x6c] sm:$0xff]
        %v2980 = vld [vmem:[#allocation9 + $0x74] sm:$0xf]
        %v2981 = vld [vmem:[#allocation9 + $0x78] sm:$0xff]
        %v2982 = vld [vmem:[#allocation9 + $0x80] sm:$0xf]
        %v2983 = vld [vmem:[#allocation9 + $0x84] sm:$0xff]
        %v2984 = vld [vmem:[#allocation9 + $0x8c] sm:$0xf]
        %v2985 = vld [vmem:[#allocation9 + $0x90] sm:$0xff]
        %v2986 = vld [vmem:[#allocation9 + $0x98] sm:$0xf]
        %v2987 = vld [vmem:[#allocation9 + $0x9c] sm:$0xff]
        %v2988 = vld [vmem:[#allocation9 + $0xa4] sm:$0xf]
        %v2989 = vld [vmem:[#allocation9 + $0xa8] sm:$0xff]
        %v2990 = vld [vmem:[#allocation9 + $0xb0] sm:$0xf]
        %v2991 = vld [vmem:[#allocation9 + $0xb4] sm:$0xff]
        %v2992 = vld [vmem:[#allocation9 + $0xbc] sm:$0xf]
        %v2993 = vld [vmem:[%s7] sm:$0x7]
        %v2995 = vlaneseq
        %v2996 = vshrl.u32 %v2995, 7
        %v2997 = vsub.s32 0, %v2996
        %v2998 = vrot.slane %v2993, %v2997
        %v2999 = vlaneseq
        %v3000 = vshrl.u32 %v2999, 7
        %v3001 = vsub.s32 1, %v3000
        %v3002 = vrot.slane %v2993, %v3001
        %v3003 = vlaneseq
        %v3004 = vshrl.u32 %v3003, 7
        %v3005 = vsub.s32 2, %v3004
        %v3006 = vrot.slane %v2993, %v3005
        %v3042 = vunpack.c.l.b16 %v2961
        %v3043 = vunpack.c.h.b16 %v2961
        %v3044 = vunpack.c.l.b16 %v2962
        %v3045 = vunpack.c.l.b16 %v2963
        %v3046 = vunpack.c.h.b16 %v2963
        %v3047 = vunpack.c.l.b16 %v2964
        %v3048 = vunpack.c.l.b16 %v2965
        %v3049 = vunpack.c.h.b16 %v2965
        %v3050 = vunpack.c.l.b16 %v2966
        %v3051 = vunpack.c.l.b16 %v2967
        %v3052 = vunpack.c.h.b16 %v2967
        %v3053 = vunpack.c.l.b16 %v2968
        %v3054 = vunpack.c.l.b16 %v2969
        %v3055 = vunpack.c.h.b16 %v2969
        %v3056 = vunpack.c.l.b16 %v2970
        %v3057 = vunpack.c.l.b16 %v2971
        %v3058 = vunpack.c.h.b16 %v2971
        %v3059 = vunpack.c.l.b16 %v2972
        %v3060 = vunpack.c.l.b16 %v2973
        %v3061 = vunpack.c.h.b16 %v2973
        %v3062 = vunpack.c.l.b16 %v2974
        %v3063 = vunpack.c.l.b16 %v2975
        %v3064 = vunpack.c.h.b16 %v2975
        %v3065 = vunpack.c.l.b16 %v2976
        %v3066 = vunpack.c.l.b16 %v2977
        %v3067 = vunpack.c.h.b16 %v2977
        %v3068 = vunpack.c.l.b16 %v2978
        %v3069 = vunpack.c.l.b16 %v2979
        %v3070 = vunpack.c.h.b16 %v2979
        %v3071 = vunpack.c.l.b16 %v2980
        %v3072 = vunpack.c.l.b16 %v2981
        %v3073 = vunpack.c.h.b16 %v2981
        %v3074 = vunpack.c.l.b16 %v2982
        %v3075 = vunpack.c.l.b16 %v2983
        %v3076 = vunpack.c.h.b16 %v2983
        %v3077 = vunpack.c.l.b16 %v2984
        %v3078 = vunpack.c.l.b16 %v2985
        %v3079 = vunpack.c.h.b16 %v2985
        %v3080 = vunpack.c.l.b16 %v2986
        %v3081 = vunpack.c.l.b16 %v2987
        %v3082 = vunpack.c.h.b16 %v2987
        %v3083 = vunpack.c.l.b16 %v2988
        %v3084 = vunpack.c.l.b16 %v2989
        %v3085 = vunpack.c.h.b16 %v2989
        %v3086 = vunpack.c.l.b16 %v2990
        %v3087 = vunpack.c.l.b16 %v2991
        %v3088 = vunpack.c.h.b16 %v2991
        %v3089 = vunpack.c.l.b16 %v2992
        %v3090 = vpack.c.b16 %v3045, %v3042
        %v3091 = vpack.c.b16 %v3046, %v3043
        %v3092 = vpack.c.b16 %v3047, %v3044
        %v3093 = vpack.c.b16 %v3051, %v3048
        %v3094 = vpack.c.b16 %v3052, %v3049
        %v3095 = vpack.c.b16 %v3053, %v3050
        %v3096 = vpack.c.b16 %v3057, %v3054
        %v3097 = vpack.c.b16 %v3058, %v3055
        %v3098 = vpack.c.b16 %v3059, %v3056
        %v3099 = vpack.c.b16 %v3063, %v3060
        %v3100 = vpack.c.b16 %v3064, %v3061
        %v3101 = vpack.c.b16 %v3065, %v3062
        %v3102 = vpack.c.b16 %v3069, %v3066
        %v3103 = vpack.c.b16 %v3070, %v3067
        %v3104 = vpack.c.b16 %v3071, %v3068
        %v3105 = vpack.c.b16 %v3075, %v3072
        %v3106 = vpack.c.b16 %v3076, %v3073
        %v3107 = vpack.c.b16 %v3077, %v3074
        %v3108 = vpack.c.b16 %v3081, %v3078
        %v3109 = vpack.c.b16 %v3082, %v3079
        %v3110 = vpack.c.b16 %v3083, %v3080
        %v3111 = vpack.c.b16 %v3087, %v3084
        %v3112 = vpack.c.b16 %v3088, %v3085
        %v3113 = vpack.c.b16 %v3089, %v3086
        %3138 = vmatprep.subr.bf16.mxu0 %v3091
        %3139 = vmatpush1.bf16.msra.mxu0 %v3090
        %3140 = vmatprep.subr.bf16.mxu0 %v3094
        %3141 = vmatpush1.bf16.msra.mxu0 %v3093
        %3142 = vmatprep.subr.bf16.mxu0 %v3097
        %3143 = vmatpush1.bf16.msra.mxu0 %v3096
        %3144 = vmatprep.subr.bf16.mxu0 %v3100
        %3145 = vmatpush1.bf16.msra.mxu0 %v3099
        %3146 = vmatprep.subr.bf16.mxu0 %v3103
        %3147 = vmatpush1.bf16.msra.mxu0 %v3102
        %3148 = vmatprep.subr.bf16.mxu0 %v3106
        %3149 = vmatpush1.bf16.msra.mxu0 %v3105
        %3150 = vmatprep.subr.bf16.mxu0 %v3109
        %3151 = vmatpush1.bf16.msra.mxu0 %v3108
        %3152 = vmatprep.subr.bf16.mxu0 %v3112
        %3153 = vmatpush1.bf16.msra.mxu0 %v3111
        %3154 = vmatprep.subr.bf16.mxu0 0
        %3155 = vmatpush1.bf16.msra.mxu0 0
        %3156 = vmatprep.subr.bf16.mxu0 0
        %3157 = vmatpush1.bf16.msra.mxu0 0
        %3158 = vmatprep.subr.bf16.mxu0 0
        %3159 = vmatpush1.bf16.msra.mxu0 0
        %3160 = vmatprep.subr.bf16.mxu0 0
        %3161 = vmatpush1.bf16.msra.mxu0 0
        %3162 = vmatprep.subr.bf16.mxu0 0
        %3163 = vmatpush1.bf16.msra.mxu0 0
        %3164 = vmatprep.subr.bf16.mxu0 0
        %3165 = vmatpush1.bf16.msra.mxu0 0
        %3166 = vmatprep.subr.bf16.mxu0 0
        %3167 = vmatpush1.bf16.msra.mxu0 0
        %3168 = vmatprep.subr.bf16.mxu0 0
        %3169 = vmatpush1.bf16.msra.mxu0 0
        %3170 = vmatprep.mubr.bf16.mxu0 0
        %3171 = vmatmul.mubr.bf16.gmra.mrb[0].mxu0 %v2956
        %v3172 = vpop.f32.mrb[0].mxu0
        %v3173 = vadd.f32 %v2998, %v3172
        %v3174 = vpop.f32.mrb[0].mxu0
        %v3175 = vadd.f32 %v3002, %v3174
        %v3176 = vpop.f32.mrb[0].mxu0
        %v3177 = vadd.f32 %v2998, %v3176
        %v3178 = vpop.f32.mrb[0].mxu0
        %v3179 = vadd.f32 %v3002, %v3178
        %3180 = vmatprep.mubr.bf16.mxu0 0
        %3181 = vmatmul.mubr.bf16.gmra.mrb[0].mxu0 %v2957
        %v3182 = vpop.f32.mrb[0].mxu0
        %v3183 = vadd.f32 %v2998, %v3182
        %v3184 = vpop.f32.mrb[0].mxu0
        %v3185 = vadd.f32 %v3002, %v3184
        %v3186 = vpop.f32.mrb[0].mxu0
        %v3187 = vadd.f32 %v2998, %v3186
        %v3188 = vpop.f32.mrb[0].mxu0
        %v3189 = vadd.f32 %v3002, %v3188
        %3190 = vmatprep.mubr.bf16.mxu0 0
        %3191 = vmatmul.mubr.bf16.gmra.mrb[0].mxu0 %v2958
        %v3192 = vpop.f32.mrb[0].mxu0
        %v3193 = vadd.f32 %v2998, %v3192
        %v3194 = vpop.f32.mrb[0].mxu0
        %v3195 = vadd.f32 %v3002, %v3194
        %v3196 = vpop.f32.mrb[0].mxu0
        %v3197 = vadd.f32 %v2998, %v3196
        %v3198 = vpop.f32.mrb[0].mxu0
        %v3199 = vadd.f32 %v3002, %v3198
        %3200 = vmatprep.mubr.bf16.mxu0 0
        %3201 = vmatmul.mubr.bf16.gmra.mrb[0].mxu0 %v2959
        %v3202 = vpop.f32.mrb[0].mxu0
        %v3203 = vadd.f32 %v2998, %v3202
        %v3204 = vpop.f32.mrb[0].mxu0
        %v3205 = vadd.f32 %v3002, %v3204
        %v3206 = vpop.f32.mrb[0].mxu0
        %v3207 = vadd.f32 %v2998, %v3206
        %v3208 = vpop.f32.mrb[0].mxu0
        %v3209 = vadd.f32 %v3002, %v3208
        %3210 = vmatprep.mubr.bf16.mxu0 0
        %3211 = vmatmul.mubr.bf16.gmra.mrb[0].mxu0 %v2960
        %v3212 = vpop.f32.mrb[0].mxu0
        %v3213 = vadd.f32 %v2998, %v3212
        %v3214 = vpop.f32.mrb[0].mxu0
        %v3215 = vadd.f32 %v3002, %v3214
        %v3216 = vpop.f32.mrb[0].mxu0
        %v3217 = vadd.f32 %v2998, %v3216
        %v3218 = vpop.f32.mrb[0].mxu0
        %v3219 = vadd.f32 %v3002, %v3218
        %3220 = vdwg.mxu0
        %3221 = vmatprep.subr.bf16.mxu0 0
        %3222 = vmatpush1.bf16.msra.mxu0 %v3092
        %3223 = vmatprep.subr.bf16.mxu0 0
        %3224 = vmatpush1.bf16.msra.mxu0 %v3095
        %3225 = vmatprep.subr.bf16.mxu0 0
        %3226 = vmatpush1.bf16.msra.mxu0 %v3098
        %3227 = vmatprep.subr.bf16.mxu0 0
        %3228 = vmatpush1.bf16.msra.mxu0 %v3101
        %3229 = vmatprep.subr.bf16.mxu0 0
        %3230 = vmatpush1.bf16.msra.mxu0 %v3104
        %3231 = vmatprep.subr.bf16.mxu0 0
        %3232 = vmatpush1.bf16.msra.mxu0 %v3107
        %3233 = vmatprep.subr.bf16.mxu0 0
        %3234 = vmatpush1.bf16.msra.mxu0 %v3110
        %3235 = vmatprep.subr.bf16.mxu0 0
        %3236 = vmatpush1.bf16.msra.mxu0 %v3113
        %3237 = vmatprep.subr.bf16.mxu0 0
        %3238 = vmatpush1.bf16.msra.mxu0 0
        %3239 = vmatprep.subr.bf16.mxu0 0
        %3240 = vmatpush1.bf16.msra.mxu0 0
        %3241 = vmatprep.subr.bf16.mxu0 0
        %3242 = vmatpush1.bf16.msra.mxu0 0
        %3243 = vmatprep.subr.bf16.mxu0 0
        %3244 = vmatpush1.bf16.msra.mxu0 0
        %3245 = vmatprep.subr.bf16.mxu0 0
        %3246 = vmatpush1.bf16.msra.mxu0 0
        %3247 = vmatprep.subr.bf16.mxu0 0
        %3248 = vmatpush1.bf16.msra.mxu0 0
        %3249 = vmatprep.subr.bf16.mxu0 0
        %3250 = vmatpush1.bf16.msra.mxu0 0
        %3251 = vmatprep.subr.bf16.mxu0 0
        %3252 = vmatpush1.bf16.msra.mxu0 0
        %3253 = vmatprep.mubr.bf16.mxu0 0
        %3254 = vmatmul.mubr.bf16.gmra.mrb[0].mxu0 %v2956
        %v3255 = vpop.f32.mrb[0].mxu0
        %v3256 = vadd.f32 %v3006, %v3255
        %v3257 = vpop.f32.mrb[0].mxu0
        %v3258 = vpop.f32.mrb[0].mxu0
        %v3259 = vadd.f32 %v3006, %v3258
        %v3260 = vpop.f32.mrb[0].mxu0
        %3261 = vmatprep.mubr.bf16.mxu0 0
        %3262 = vmatmul.mubr.bf16.gmra.mrb[0].mxu0 %v2957
        %v3263 = vpop.f32.mrb[0].mxu0
        %v3264 = vadd.f32 %v3006, %v3263
        %v3265 = vpop.f32.mrb[0].mxu0
        %v3266 = vpop.f32.mrb[0].mxu0
        %v3267 = vadd.f32 %v3006, %v3266
        %v3268 = vpop.f32.mrb[0].mxu0
        %3269 = vmatprep.mubr.bf16.mxu0 0
        %3270 = vmatmul.mubr.bf16.gmra.mrb[0].mxu0 %v2958
        %v3271 = vpop.f32.mrb[0].mxu0
        %v3272 = vadd.f32 %v3006, %v3271
        %v3273 = vpop.f32.mrb[0].mxu0
        %v3274 = vpop.f32.mrb[0].mxu0
        %v3275 = vadd.f32 %v3006, %v3274
        %v3276 = vpop.f32.mrb[0].mxu0
        %3277 = vmatprep.mubr.bf16.mxu0 0
        %3278 = vmatmul.mubr.bf16.gmra.mrb[0].mxu0 %v2959
        %v3279 = vpop.f32.mrb[0].mxu0
        %v3280 = vadd.f32 %v3006, %v3279
        %v3281 = vpop.f32.mrb[0].mxu0
        %v3282 = vpop.f32.mrb[0].mxu0
        %v3283 = vadd.f32 %v3006, %v3282
        %v3284 = vpop.f32.mrb[0].mxu0
        %3285 = vmatprep.mubr.bf16.mxu0 0
        %3286 = vmatmul.mubr.bf16.gmra.mrb[0].mxu0 %v2960
        %v3287 = vpop.f32.mrb[0].mxu0
        %v3288 = vadd.f32 %v3006, %v3287
        %v3289 = vpop.f32.mrb[0].mxu0
        %v3290 = vpop.f32.mrb[0].mxu0
        %v3291 = vadd.f32 %v3006, %v3290
        %v3292 = vpop.f32.mrb[0].mxu0
        %3293 = vdwg.mxu0
        %v3294 = vpack.c.bf16 %v3177, %v3173
        %v3295 = vpack.c.bf16 %v3187, %v3183
        %v3296 = vpack.c.bf16 %v3197, %v3193
        %v3297 = vpack.c.bf16 %v3207, %v3203
        %v3298 = vpack.c.bf16 %v3217, %v3213
        %v3299 = vpack.c.bf16 %v3179, %v3175
        %v3300 = vpack.c.bf16 %v3189, %v3185
        %v3301 = vpack.c.bf16 %v3199, %v3195
        %v3302 = vpack.c.bf16 %v3209, %v3205
        %v3303 = vpack.c.bf16 %v3219, %v3215
        %v3304 = vpack.c.bf16 %v3259, %v3256
        %v3305 = vpack.c.bf16 %v3267, %v3264
        %v3306 = vpack.c.bf16 %v3275, %v3272
        %v3307 = vpack.c.bf16 %v3283, %v3280
        %v3308 = vpack.c.bf16 %v3291, %v3288
        %v3309 = vld [vmem:[%s2] sm:$0x1]
        %v3311 = vlaneseq
        %v3312 = vshrl.u32 %v3311, 7
        %v3313 = vsub.s32 0, %v3312
        %v3314 = vrot.slane %v3309, %v3313
        %3316 = vmatprep.subr.bf16.mxu0 0
        %3317 = vmatpush1.bf16.xpose.msra.mxu0 %v3299
        %3318 = vmatprep.subr.bf16.mxu0 0
        %3319 = vmatpush1.bf16.xpose.msra.mxu0 %v3300
        %3320 = vmatprep.subr.bf16.mxu0 0
        %3321 = vmatpush1.bf16.xpose.msra.mxu0 %v3301
        %3322 = vmatprep.subr.bf16.mxu0 0
        %3323 = vmatpush1.bf16.xpose.msra.mxu0 %v3302
        %3324 = vmatprep.subr.bf16.mxu0 0
        %3325 = vmatpush1.bf16.xpose.msra.mxu0 %v3303
        %3326 = vmatprep.subr.bf16.mxu0 0
        %3327 = vmatpush1.bf16.xpose.msra.mxu0 0
        %3328 = vmatprep.subr.bf16.mxu0 0
        %3329 = vmatpush1.bf16.xpose.msra.mxu0 0
        %3330 = vmatprep.subr.bf16.mxu0 0
        %3331 = vmatpush1.bf16.xpose.msra.mxu0 0
        %3332 = vmatprep.subr.bf16.mxu0 0
        %3333 = vmatpush1.bf16.xpose.msra.mxu0 0
        %3334 = vmatprep.subr.bf16.mxu0 0
        %3335 = vmatpush1.bf16.xpose.msra.mxu0 0
        %3336 = vmatprep.subr.bf16.mxu0 0
        %3337 = vmatpush1.bf16.xpose.msra.mxu0 0
        %3338 = vmatprep.subr.bf16.mxu0 0
        %3339 = vmatpush1.bf16.xpose.msra.mxu0 0
        %3340 = vmatprep.subr.bf16.mxu0 0
        %3341 = vmatpush1.bf16.xpose.msra.mxu0 0
        %3342 = vmatprep.subr.bf16.mxu0 0
        %3343 = vmatpush1.bf16.xpose.msra.mxu0 0
        %3344 = vmatprep.subr.bf16.mxu0 0
        %3345 = vmatpush1.bf16.xpose.msra.mxu0 0
        %3346 = vmatprep.subr.bf16.mxu0 0
        %3347 = vmatpush1.bf16.xpose.msra.mxu0 0
        %3348 = vmatprep.mubr.bf16.mxu0 0
        %3349 = vmatmul.mubr.bf16.gmra.mrb[0].mxu0 %v3294
        %v3350 = vpop.f32.mrb[0].mxu0
        %v3351 = vadd.f32 %v3314, %v3350
        %v3352 = vpop.f32.mrb[0].mxu0
        %v3353 = vpop.f32.mrb[0].mxu0
        %v3354 = vadd.f32 %v3314, %v3353
        %v3355 = vpop.f32.mrb[0].mxu0
        %3356 = vmatprep.mubr.bf16.mxu0 0
        %3357 = vmatmul.mubr.bf16.gmra.mrb[0].mxu0 %v3295
        %v3358 = vpop.f32.mrb[0].mxu0
        %v3359 = vadd.f32 %v3314, %v3358
        %v3360 = vpop.f32.mrb[0].mxu0
        %v3361 = vpop.f32.mrb[0].mxu0
        %v3362 = vadd.f32 %v3314, %v3361
        %v3363 = vpop.f32.mrb[0].mxu0
        %3364 = vmatprep.mubr.bf16.mxu0 0
        %3365 = vmatmul.mubr.bf16.gmra.mrb[0].mxu0 %v3296
        %v3366 = vpop.f32.mrb[0].mxu0
        %v3367 = vadd.f32 %v3314, %v3366
        %v3368 = vpop.f32.mrb[0].mxu0
        %v3369 = vpop.f32.mrb[0].mxu0
        %v3370 = vadd.f32 %v3314, %v3369
        %v3371 = vpop.f32.mrb[0].mxu0
        %3372 = vmatprep.mubr.bf16.mxu0 0
        %3373 = vmatmul.mubr.bf16.gmra.mrb[0].mxu0 %v3297
        %v3374 = vpop.f32.mrb[0].mxu0
        %v3375 = vadd.f32 %v3314, %v3374
        %v3376 = vpop.f32.mrb[0].mxu0
        %v3377 = vpop.f32.mrb[0].mxu0
        %v3378 = vadd.f32 %v3314, %v3377
        %v3379 = vpop.f32.mrb[0].mxu0
        %3380 = vmatprep.mubr.bf16.mxu0 0
        %3381 = vmatmul.mubr.bf16.gmra.mrb[0].mxu0 %v3298
        %v3382 = vpop.f32.mrb[0].mxu0
        %v3383 = vadd.f32 %v3314, %v3382
        %v3384 = vpop.f32.mrb[0].mxu0
        %v3385 = vpop.f32.mrb[0].mxu0
        %v3386 = vadd.f32 %v3314, %v3385
        %v3387 = vpop.f32.mrb[0].mxu0
        %3388 = vdwg.mxu0
        %vm3389 = vcmask 654336
        %v3390 = vsel %vm3389, %v3351, -inf
        %3391 = vmax.xlane.f32.xlu0 %v3390
        %v3392 = vpop.xlane.xlu0 %3391
        %v3393 = vsel %vm3389, %v3354, -inf
        %3394 = vmax.xlane.f32.xlu0 %v3393
        %v3395 = vpop.xlane.xlu0 %3394
        %v3396 = vsel %vm3389, %v3359, -inf
        %3397 = vmax.xlane.f32.xlu0 %v3396
        %v3398 = vpop.xlane.xlu0 %3397
        %v3399 = vsel %vm3389, %v3362, -inf
        %3400 = vmax.xlane.f32.xlu0 %v3399
        %v3401 = vpop.xlane.xlu0 %3400
        %v3402 = vsel %vm3389, %v3367, -inf
        %3403 = vmax.xlane.f32.xlu0 %v3402
        %v3404 = vpop.xlane.xlu0 %3403
        %v3405 = vsel %vm3389, %v3370, -inf
        %3406 = vmax.xlane.f32.xlu0 %v3405
        %v3407 = vpop.xlane.xlu0 %3406
        %v3408 = vsel %vm3389, %v3375, -inf
        %3409 = vmax.xlane.f32.xlu0 %v3408
        %v3410 = vpop.xlane.xlu0 %3409
        %v3411 = vsel %vm3389, %v3378, -inf
        %3412 = vmax.xlane.f32.xlu0 %v3411
        %v3413 = vpop.xlane.xlu0 %3412
        %v3414 = vsel %vm3389, %v3383, -inf
        %3415 = vmax.xlane.f32.xlu0 %v3414
        %v3416 = vpop.xlane.xlu0 %3415
        %v3417 = vsel %vm3389, %v3386, -inf
        %3418 = vmax.xlane.f32.xlu0 %v3417
        %v3419 = vpop.xlane.xlu0 %3418
        %v3420 = vsub.f32 %v3351, %v3392
        %v3421 = vsub.f32 %v3354, %v3395
        %v3422 = vsub.f32 %v3359, %v3398
        %v3423 = vsub.f32 %v3362, %v3401
        %v3424 = vsub.f32 %v3367, %v3404
        %v3425 = vsub.f32 %v3370, %v3407
        %v3426 = vsub.f32 %v3375, %v3410
        %v3427 = vsub.f32 %v3378, %v3413
        %v3428 = vsub.f32 %v3383, %v3416
        %v3429 = vsub.f32 %v3386, %v3419
        %v3430 = vmul.f32 %v3420, 1.442695
        %v3431 = vpow.pop %v3430
        %v3432 = vmul.f32 %v3421, 1.442695
        %v3433 = vpow.pop %v3432
        %v3434 = vmul.f32 %v3422, 1.442695
        %v3435 = vpow.pop %v3434
        %v3436 = vmul.f32 %v3423, 1.442695
        %v3437 = vpow.pop %v3436
        %v3438 = vmul.f32 %v3424, 1.442695
        %v3439 = vpow.pop %v3438
        %v3440 = vmul.f32 %v3425, 1.442695
        %v3441 = vpow.pop %v3440
        %v3442 = vmul.f32 %v3426, 1.442695
        %v3443 = vpow.pop %v3442
        %v3444 = vmul.f32 %v3427, 1.442695
        %v3445 = vpow.pop %v3444
        %v3446 = vmul.f32 %v3428, 1.442695
        %v3447 = vpow.pop %v3446
        %v3448 = vmul.f32 %v3429, 1.442695
        %v3449 = vpow.pop %v3448
        %v3450 = vsel %vm3389, %v3431, 0.0
        %3451 = vadd.xlane.f32.xlu0 %v3450
        %v3452 = vpop.xlane.xlu0 %3451
        %v3453 = vsel %vm3389, %v3433, 0.0
        %3454 = vadd.xlane.f32.xlu0 %v3453
        %v3455 = vpop.xlane.xlu0 %3454
        %v3456 = vsel %vm3389, %v3435, 0.0
        %3457 = vadd.xlane.f32.xlu0 %v3456
        %v3458 = vpop.xlane.xlu0 %3457
        %v3459 = vsel %vm3389, %v3437, 0.0
        %3460 = vadd.xlane.f32.xlu0 %v3459
        %v3461 = vpop.xlane.xlu0 %3460
        %v3462 = vsel %vm3389, %v3439, 0.0
        %3463 = vadd.xlane.f32.xlu0 %v3462
        %v3464 = vpop.xlane.xlu0 %3463
        %v3465 = vsel %vm3389, %v3441, 0.0
        %3466 = vadd.xlane.f32.xlu0 %v3465
        %v3467 = vpop.xlane.xlu0 %3466
        %v3468 = vsel %vm3389, %v3443, 0.0
        %3469 = vadd.xlane.f32.xlu0 %v3468
        %v3470 = vpop.xlane.xlu0 %3469
        %v3471 = vsel %vm3389, %v3445, 0.0
        %3472 = vadd.xlane.f32.xlu0 %v3471
        %v3473 = vpop.xlane.xlu0 %3472
        %v3474 = vsel %vm3389, %v3447, 0.0
        %3475 = vadd.xlane.f32.xlu0 %v3474
        %v3476 = vpop.xlane.xlu0 %3475
        %v3477 = vsel %vm3389, %v3449, 0.0
        %3478 = vadd.xlane.f32.xlu0 %v3477
        %v3479 = vpop.xlane.xlu0 %3478
        %v3480 = vrcp.pop %v3452
        %v3481 = vrcp.pop %v3455
        %v3482 = vrcp.pop %v3458
        %v3483 = vrcp.pop %v3461
        %v3484 = vrcp.pop %v3464
        %v3485 = vrcp.pop %v3467
        %v3486 = vrcp.pop %v3470
        %v3487 = vrcp.pop %v3473
        %v3488 = vrcp.pop %v3476
        %v3489 = vrcp.pop %v3479
        %v3490 = vmul.f32 %v3431, %v3480
        %v3491 = vmul.f32 %v3433, %v3481
        %v3492 = vmul.f32 %v3435, %v3482
        %v3493 = vmul.f32 %v3437, %v3483
        %v3494 = vmul.f32 %v3439, %v3484
        %v3495 = vmul.f32 %v3441, %v3485
        %v3496 = vmul.f32 %v3443, %v3486
        %v3497 = vmul.f32 %v3445, %v3487
        %v3498 = vmul.f32 %v3447, %v3488
        %v3499 = vmul.f32 %v3449, %v3489
        %v3500 = vpack.c.bf16 %v3491, %v3490
        %v3501 = vpack.c.bf16 %v3493, %v3492
        %v3502 = vpack.c.bf16 %v3495, %v3494
        %v3503 = vpack.c.bf16 %v3497, %v3496
        %v3504 = vpack.c.bf16 %v3499, %v3498
        %v3506 = vsel %vm3389, %v3500, 0
        %v3509 = vsel %vm3389, %v3501, 0
        %v3512 = vsel %vm3389, %v3502, 0
        %v3515 = vsel %vm3389, %v3503, 0
        %v3518 = vsel %vm3389, %v3504, 0
        %3520 = vmatprep.subr.bf16.mxu0 0
        %3521 = vmatpush1.bf16.msra.mxu0 %v3304
        %3522 = vmatprep.subr.bf16.mxu0 0
        %3523 = vmatpush1.bf16.msra.mxu0 %v3305
        %3524 = vmatprep.subr.bf16.mxu0 0
        %3525 = vmatpush1.bf16.msra.mxu0 %v3306
        %3526 = vmatprep.subr.bf16.mxu0 0
        %3527 = vmatpush1.bf16.msra.mxu0 %v3307
        %3528 = vmatprep.subr.bf16.mxu0 0
        %3529 = vmatpush1.bf16.msra.mxu0 %v3308
        %3530 = vmatprep.subr.bf16.mxu0 0
        %3531 = vmatpush1.bf16.msra.mxu0 0
        %3532 = vmatprep.subr.bf16.mxu0 0
        %3533 = vmatpush1.bf16.msra.mxu0 0
        %3534 = vmatprep.subr.bf16.mxu0 0
        %3535 = vmatpush1.bf16.msra.mxu0 0
        %3536 = vmatprep.subr.bf16.mxu0 0
        %3537 = vmatpush1.bf16.msra.mxu0 0
        %3538 = vmatprep.subr.bf16.mxu0 0
        %3539 = vmatpush1.bf16.msra.mxu0 0
        %3540 = vmatprep.subr.bf16.mxu0 0
        %3541 = vmatpush1.bf16.msra.mxu0 0
        %3542 = vmatprep.subr.bf16.mxu0 0
        %3543 = vmatpush1.bf16.msra.mxu0 0
        %3544 = vmatprep.subr.bf16.mxu0 0
        %3545 = vmatpush1.bf16.msra.mxu0 0
        %3546 = vmatprep.subr.bf16.mxu0 0
        %3547 = vmatpush1.bf16.msra.mxu0 0
        %3548 = vmatprep.subr.bf16.mxu0 0
        %3549 = vmatpush1.bf16.msra.mxu0 0
        %3550 = vmatprep.subr.bf16.mxu0 0
        %3551 = vmatpush1.bf16.msra.mxu0 0
        %3552 = vmatprep.mubr.bf16.mxu0 0
        %3553 = vmatmul.mubr.bf16.gmra.mrb[0].mxu0 %v3506
        %v3554 = vpop.f32.mrb[0].mxu0
        %v3555 = vadd.f32 0.0, %v3554
        %v3556 = vpop.f32.mrb[0].mxu0
        %v3557 = vpop.f32.mrb[0].mxu0
        %v3558 = vadd.f32 0.0, %v3557
        %v3559 = vpop.f32.mrb[0].mxu0
        %3560 = vmatprep.mubr.bf16.mxu0 0
        %3561 = vmatmul.mubr.bf16.gmra.mrb[0].mxu0 %v3509
        %v3562 = vpop.f32.mrb[0].mxu0
        %v3563 = vadd.f32 0.0, %v3562
        %v3564 = vpop.f32.mrb[0].mxu0
        %v3565 = vpop.f32.mrb[0].mxu0
        %v3566 = vadd.f32 0.0, %v3565
        %v3567 = vpop.f32.mrb[0].mxu0
        %3568 = vmatprep.mubr.bf16.mxu0 0
        %3569 = vmatmul.mubr.bf16.gmra.mrb[0].mxu0 %v3512
        %v3570 = vpop.f32.mrb[0].mxu0
        %v3571 = vadd.f32 0.0, %v3570
        %v3572 = vpop.f32.mrb[0].mxu0
        %v3573 = vpop.f32.mrb[0].mxu0
        %v3574 = vadd.f32 0.0, %v3573
        %v3575 = vpop.f32.mrb[0].mxu0
        %3576 = vmatprep.mubr.bf16.mxu0 0
        %3577 = vmatmul.mubr.bf16.gmra.mrb[0].mxu0 %v3515
        %v3578 = vpop.f32.mrb[0].mxu0
        %v3579 = vadd.f32 0.0, %v3578
        %v3580 = vpop.f32.mrb[0].mxu0
        %v3581 = vpop.f32.mrb[0].mxu0
        %v3582 = vadd.f32 0.0, %v3581
        %v3583 = vpop.f32.mrb[0].mxu0
        %3584 = vmatprep.mubr.bf16.mxu0 0
        %3585 = vmatmul.mubr.bf16.gmra.mrb[0].mxu0 %v3518
        %v3586 = vpop.f32.mrb[0].mxu0
        %v3587 = vadd.f32 0.0, %v3586
        %v3588 = vpop.f32.mrb[0].mxu0
        %v3589 = vpop.f32.mrb[0].mxu0
        %v3590 = vadd.f32 0.0, %v3589
        %v3591 = vpop.f32.mrb[0].mxu0
        %3592 = vdwg.mxu0
        %s3593 = sld [smem:[#allocation13]]
        %v3594 = vstv %s3593
        %v3595 = vmul.f32 %v3594, %v3555
        %v3596 = vmul.f32 %v3594, %v3558
        %v3597 = vmul.f32 %v3594, %v3563
        %v3598 = vmul.f32 %v3594, %v3566
        %v3599 = vmul.f32 %v3594, %v3571
        %v3600 = vmul.f32 %v3594, %v3574
        %v3601 = vmul.f32 %v3594, %v3579
        %v3602 = vmul.f32 %v3594, %v3582
        %v3603 = vmul.f32 %v3594, %v3587
        %v3604 = vmul.f32 %v3594, %v3590
        %v3605 = vadd.f32 %v3595, %v2936
        %v3606 = vadd.f32 %v3596, %v2938
        %v3607 = vadd.f32 %v3597, %v2940
        %v3608 = vadd.f32 %v3598, %v2942
        %v3609 = vadd.f32 %v3599, %v2944
        %v3610 = vadd.f32 %v3600, %v2946
        %v3611 = vadd.f32 %v3601, %v2948
        %v3612 = vadd.f32 %v3602, %v2950
        %v3613 = vadd.f32 %v3603, %v2952
        %v3614 = vadd.f32 %v3604, %v2954
        %v3615 = vmul.f32 %v3605, %v2889
        %v3616 = vmul.f32 %v3606, %v2894
        %v3617 = vmul.f32 %v3607, %v2899
        %v3618 = vmul.f32 %v3608, %v2904
        %v3619 = vmul.f32 %v3609, %v2909
        %v3620 = vmul.f32 %v3610, %v2914
        %v3621 = vmul.f32 %v3611, %v2919
        %v3622 = vmul.f32 %v3612, %v2924
        %v3623 = vmul.f32 %v3613, %v2929
        %v3624 = vmul.f32 %v3614, %v2934
        %v3625 = vpack.c.bf16 %v2939, %v2937
        %v3626 = vpack.c.bf16 %v2943, %v2941
        %v3627 = vpack.c.bf16 %v2947, %v2945
        %v3628 = vpack.c.bf16 %v2951, %v2949
        %v3629 = vpack.c.bf16 %v2955, %v2953
        %3630 = vxpose.xlu0.c.b16.start [1/8] %v3625, 128
        %3631 = vxpose.xlu0.c.b16.cont [2/8] %v3626, 128
        %3632 = vxpose.xlu0.c.b16.cont [3/8] %v3627, 128
        %3633 = vxpose.xlu0.c.b16.cont [4/8] %v3628, 128
        %3634 = vxpose.xlu0.c.b16.cont [5/8] %v3629, 128
        %3635 = vxpose.xlu0.c.b16.cont [6/8] 0, 128
        %3636 = vxpose.xlu0.c.b16.cont [7/8] 0, 128
        %3637 = vxpose.xlu0.c.b16.end [8/8] 0, 128
        %v3638 = vpop.trf.xlu0
        %v3639 = vpop.trf.xlu0
        %v3640 = vpop.trf.xlu0
        %v3641 = vpop.trf.xlu0
        %v3642 = vpop.trf.xlu0
        %v3643 = vpop.trf.xlu0
        %v3644 = vpop.trf.xlu0
        %v3645 = vpop.trf.xlu0
        %v3647 = vsel %vm3389, %v3638, 0
        %v3650 = vsel %vm3389, %v3639, 0
        %v3653 = vsel %vm3389, %v3640, 0
        %v3656 = vsel %vm3389, %v3641, 0
        %v3659 = vsel %vm3389, %v3642, 0
        %v3662 = vsel %vm3389, %v3643, 0
        %v3665 = vsel %vm3389, %v3644, 0
        %v3668 = vsel %vm3389, %v3645, 0
        %3670 = vmatprep.subr.bf16.mxu0 0
        %3671 = vmatpush1.bf16.msra.mxu0 %v3625
        %3672 = vmatprep.subr.bf16.mxu0 0
        %3673 = vmatpush1.bf16.msra.mxu0 %v3626
        %3674 = vmatprep.subr.bf16.mxu0 0
        %3675 = vmatpush1.bf16.msra.mxu0 %v3627
        %3676 = vmatprep.subr.bf16.mxu0 0
        %3677 = vmatpush1.bf16.msra.mxu0 %v3628
        %3678 = vmatprep.subr.bf16.mxu0 0
        %3679 = vmatpush1.bf16.msra.mxu0 %v3629
        %3680 = vmatprep.subr.bf16.mxu0 0
        %3681 = vmatpush1.bf16.msra.mxu0 0
        %3682 = vmatprep.subr.bf16.mxu0 0
        %3683 = vmatpush1.bf16.msra.mxu0 0
        %3684 = vmatprep.subr.bf16.mxu0 0
        %3685 = vmatpush1.bf16.msra.mxu0 0
        %3686 = vmatprep.subr.bf16.mxu0 0
        %3687 = vmatpush1.bf16.msra.mxu0 0
        %3688 = vmatprep.subr.bf16.mxu0 0
        %3689 = vmatpush1.bf16.msra.mxu0 0
        %3690 = vmatprep.subr.bf16.mxu0 0
        %3691 = vmatpush1.bf16.msra.mxu0 0
        %3692 = vmatprep.subr.bf16.mxu0 0
        %3693 = vmatpush1.bf16.msra.mxu0 0
        %3694 = vmatprep.subr.bf16.mxu0 0
        %3695 = vmatpush1.bf16.msra.mxu0 0
        %3696 = vmatprep.subr.bf16.mxu0 0
        %3697 = vmatpush1.bf16.msra.mxu0 0
        %3698 = vmatprep.subr.bf16.mxu0 0
        %3699 = vmatpush1.bf16.msra.mxu0 0
        %3700 = vmatprep.subr.bf16.mxu0 0
        %3701 = vmatpush1.bf16.msra.mxu0 0
        %3702 = vmatprep.mubr.bf16.mxu0 0
        %3703 = vmatmul.mubr.bf16.gmra.mrb[0].mxu0 %v3647
        %v3704 = vpop.f32.mrb[0].mxu0
        %v3705 = vadd.f32 0.0, %v3704
        %v3706 = vpop.f32.mrb[0].mxu0
        %v3707 = vpop.f32.mrb[0].mxu0
        %v3708 = vadd.f32 0.0, %v3707
        %v3709 = vpop.f32.mrb[0].mxu0
        %3710 = vmatprep.mubr.bf16.mxu0 0
        %3711 = vmatmul.mubr.bf16.gmra.mrb[0].mxu0 %v3650
        %v3712 = vpop.f32.mrb[0].mxu0
        %v3713 = vadd.f32 0.0, %v3712
        %v3714 = vpop.f32.mrb[0].mxu0
        %v3715 = vpop.f32.mrb[0].mxu0
        %v3716 = vadd.f32 0.0, %v3715
        %v3717 = vpop.f32.mrb[0].mxu0
        %3718 = vmatprep.mubr.bf16.mxu0 0
        %3719 = vmatmul.mubr.bf16.gmra.mrb[0].mxu0 %v3653
        %v3720 = vpop.f32.mrb[0].mxu0
        %v3721 = vadd.f32 0.0, %v3720
        %v3722 = vpop.f32.mrb[0].mxu0
        %v3723 = vpop.f32.mrb[0].mxu0
        %v3724 = vadd.f32 0.0, %v3723
        %v3725 = vpop.f32.mrb[0].mxu0
        %3726 = vmatprep.mubr.bf16.mxu0 0
        %3727 = vmatmul.mubr.bf16.gmra.mrb[0].mxu0 %v3656
        %v3728 = vpop.f32.mrb[0].mxu0
        %v3729 = vadd.f32 0.0, %v3728
        %v3730 = vpop.f32.mrb[0].mxu0
        %v3731 = vpop.f32.mrb[0].mxu0
        %v3732 = vadd.f32 0.0, %v3731
        %v3733 = vpop.f32.mrb[0].mxu0
        %3734 = vmatprep.mubr.bf16.mxu0 0
        %3735 = vmatmul.mubr.bf16.gmra.mrb[0].mxu0 %v3659
        %v3736 = vpop.f32.mrb[0].mxu0
        %v3737 = vadd.f32 0.0, %v3736
        %v3738 = vpop.f32.mrb[0].mxu0
        %v3739 = vpop.f32.mrb[0].mxu0
        %v3740 = vadd.f32 0.0, %v3739
        %v3741 = vpop.f32.mrb[0].mxu0
        %3742 = vmatprep.mubr.bf16.mxu0 0
        %3743 = vmatmul.mubr.bf16.gmra.mrb[0].mxu0 %v3662
        %v3744 = vpop.f32.mrb[0].mxu0
        %v3745 = vadd.f32 0.0, %v3744
        %v3746 = vpop.f32.mrb[0].mxu0
        %v3747 = vpop.f32.mrb[0].mxu0
        %v3748 = vadd.f32 0.0, %v3747
        %v3749 = vpop.f32.mrb[0].mxu0
        %3750 = vmatprep.mubr.bf16.mxu0 0
        %3751 = vmatmul.mubr.bf16.gmra.mrb[0].mxu0 %v3665
        %v3752 = vpop.f32.mrb[0].mxu0
        %v3753 = vadd.f32 0.0, %v3752
        %v3754 = vpop.f32.mrb[0].mxu0
        %v3755 = vpop.f32.mrb[0].mxu0
        %v3756 = vadd.f32 0.0, %v3755
        %v3757 = vpop.f32.mrb[0].mxu0
        %3758 = vmatprep.mubr.bf16.mxu0 0
        %3759 = vmatmul.mubr.bf16.gmra.mrb[0].mxu0 %v3668
        %v3760 = vpop.f32.mrb[0].mxu0
        %v3761 = vadd.f32 0.0, %v3760
        %v3762 = vpop.f32.mrb[0].mxu0
        %v3763 = vpop.f32.mrb[0].mxu0
        %v3764 = vadd.f32 0.0, %v3763
        %v3765 = vpop.f32.mrb[0].mxu0
        %3766 = vdwg.mxu0
        %v3767 = vsub.f32 0.0, %v3705
        %v3768 = vsub.f32 0.0, %v3708
        %v3769 = vsub.f32 0.0, %v3713
        %v3770 = vsub.f32 0.0, %v3716
        %v3771 = vsub.f32 0.0, %v3721
        %v3772 = vsub.f32 0.0, %v3724
        %v3773 = vsub.f32 0.0, %v3729
        %v3774 = vsub.f32 0.0, %v3732
        %v3775 = vsub.f32 0.0, %v3737
        %v3776 = vsub.f32 0.0, %v3740
        %v3777 = vsub.f32 0.0, %v3745
        %v3778 = vsub.f32 0.0, %v3748
        %v3779 = vsub.f32 0.0, %v3753
        %v3780 = vsub.f32 0.0, %v3756
        %v3781 = vsub.f32 0.0, %v3761
        %v3782 = vsub.f32 0.0, %v3764
        %v3783 = vlaneseq
        %v3784 = vand.u32 %v3783, 127
        %vm3785 = vcmp.lt.s32.totalorder %v3784, 16
        %v3786 = vsel %vm3785, %v3767, -1e+30
        %v3787 = vsel %vm3785, %v3768, -1e+30
        %v3788 = vsel %vm3785, %v3769, -1e+30
        %v3789 = vsel %vm3785, %v3770, -1e+30
        %v3790 = vsel %vm3785, %v3771, -1e+30
        %v3791 = vsel %vm3785, %v3772, -1e+30
        %v3792 = vsel %vm3785, %v3773, -1e+30
        %v3793 = vsel %vm3785, %v3774, -1e+30
        %v3794 = vsel %vm3785, %v3775, -1e+30
        %v3795 = vsel %vm3785, %v3776, -1e+30
        %v3796 = vsel %vm3785, %v3777, -1e+30
        %v3797 = vsel %vm3785, %v3778, -1e+30
        %v3798 = vsel %vm3785, %v3779, -1e+30
        %v3799 = vsel %vm3785, %v3780, -1e+30
        %v3800 = vsel %vm3785, %v3781, -1e+30
        %v3801 = vsel %vm3785, %v3782, -1e+30
        %3802 = vmax.xlane.f32.xlu0 %v3786
        %v3803 = vpop.xlane.xlu0 %3802
        %3804 = vmax.xlane.f32.xlu0 %v3787
        %v3805 = vpop.xlane.xlu0 %3804
        %3806 = vmax.xlane.f32.xlu0 %v3788
        %v3807 = vpop.xlane.xlu0 %3806
        %3808 = vmax.xlane.f32.xlu0 %v3789
        %v3809 = vpop.xlane.xlu0 %3808
        %3810 = vmax.xlane.f32.xlu0 %v3790
        %v3811 = vpop.xlane.xlu0 %3810
        %3812 = vmax.xlane.f32.xlu0 %v3791
        %v3813 = vpop.xlane.xlu0 %3812
        %3814 = vmax.xlane.f32.xlu0 %v3792
        %v3815 = vpop.xlane.xlu0 %3814
        %3816 = vmax.xlane.f32.xlu0 %v3793
        %v3817 = vpop.xlane.xlu0 %3816
        %3818 = vmax.xlane.f32.xlu0 %v3794
        %v3819 = vpop.xlane.xlu0 %3818
        %3820 = vmax.xlane.f32.xlu0 %v3795
        %v3821 = vpop.xlane.xlu0 %3820
        %3822 = vmax.xlane.f32.xlu0 %v3796
        %v3823 = vpop.xlane.xlu0 %3822
        %3824 = vmax.xlane.f32.xlu0 %v3797
        %v3825 = vpop.xlane.xlu0 %3824
        %3826 = vmax.xlane.f32.xlu0 %v3798
        %v3827 = vpop.xlane.xlu0 %3826
        %3828 = vmax.xlane.f32.xlu0 %v3799
        %v3829 = vpop.xlane.xlu0 %3828
        %3830 = vmax.xlane.f32.xlu0 %v3800
        %v3831 = vpop.xlane.xlu0 %3830
        %3832 = vmax.xlane.f32.xlu0 %v3801
        %v3833 = vpop.xlane.xlu0 %3832
        %v3834 = vsub.f32 %v3786, %v3803
        %v3835 = vsub.f32 %v3787, %v3805
        %v3836 = vsub.f32 %v3788, %v3807
        %v3837 = vsub.f32 %v3789, %v3809
        %v3838 = vsub.f32 %v3790, %v3811
        %v3839 = vsub.f32 %v3791, %v3813
        %v3840 = vsub.f32 %v3792, %v3815
        %v3841 = vsub.f32 %v3793, %v3817
        %v3842 = vsub.f32 %v3794, %v3819
        %v3843 = vsub.f32 %v3795, %v3821
        %v3844 = vsub.f32 %v3796, %v3823
        %v3845 = vsub.f32 %v3797, %v3825
        %v3846 = vsub.f32 %v3798, %v3827
        %v3847 = vsub.f32 %v3799, %v3829
        %v3848 = vsub.f32 %v3800, %v3831
        %v3849 = vsub.f32 %v3801, %v3833
        %v3850 = vmul.f32 %v3834, 1.442695
        %v3851 = vpow.pop %v3850
        %v3852 = vmul.f32 %v3835, 1.442695
        %v3853 = vpow.pop %v3852
        %v3854 = vmul.f32 %v3836, 1.442695
        %v3855 = vpow.pop %v3854
        %v3856 = vmul.f32 %v3837, 1.442695
        %v3857 = vpow.pop %v3856
        %v3858 = vmul.f32 %v3838, 1.442695
        %v3859 = vpow.pop %v3858
        %v3860 = vmul.f32 %v3839, 1.442695
        %v3861 = vpow.pop %v3860
        %v3862 = vmul.f32 %v3840, 1.442695
        %v3863 = vpow.pop %v3862
        %v3864 = vmul.f32 %v3841, 1.442695
        %v3865 = vpow.pop %v3864
        %v3866 = vmul.f32 %v3842, 1.442695
        %v3867 = vpow.pop %v3866
        %v3868 = vmul.f32 %v3843, 1.442695
        %v3869 = vpow.pop %v3868
        %v3870 = vmul.f32 %v3844, 1.442695
        %v3871 = vpow.pop %v3870
        %v3872 = vmul.f32 %v3845, 1.442695
        %v3873 = vpow.pop %v3872
        %v3874 = vmul.f32 %v3846, 1.442695
        %v3875 = vpow.pop %v3874
        %v3876 = vmul.f32 %v3847, 1.442695
        %v3877 = vpow.pop %v3876
        %v3878 = vmul.f32 %v3848, 1.442695
        %v3879 = vpow.pop %v3878
        %v3880 = vmul.f32 %v3849, 1.442695
        %v3881 = vpow.pop %v3880
        %3882 = vadd.xlane.f32.xlu0 %v3851
        %v3883 = vpop.xlane.xlu0 %3882
        %3884 = vadd.xlane.f32.xlu0 %v3853
        %v3885 = vpop.xlane.xlu0 %3884
        %3886 = vadd.xlane.f32.xlu0 %v3855
        %v3887 = vpop.xlane.xlu0 %3886
        %3888 = vadd.xlane.f32.xlu0 %v3857
        %v3889 = vpop.xlane.xlu0 %3888
        %3890 = vadd.xlane.f32.xlu0 %v3859
        %v3891 = vpop.xlane.xlu0 %3890
        %3892 = vadd.xlane.f32.xlu0 %v3861
        %v3893 = vpop.xlane.xlu0 %3892
        %3894 = vadd.xlane.f32.xlu0 %v3863
        %v3895 = vpop.xlane.xlu0 %3894
        %3896 = vadd.xlane.f32.xlu0 %v3865
        %v3897 = vpop.xlane.xlu0 %3896
        %3898 = vadd.xlane.f32.xlu0 %v3867
        %v3899 = vpop.xlane.xlu0 %3898
        %3900 = vadd.xlane.f32.xlu0 %v3869
        %v3901 = vpop.xlane.xlu0 %3900
        %3902 = vadd.xlane.f32.xlu0 %v3871
        %v3903 = vpop.xlane.xlu0 %3902
        %3904 = vadd.xlane.f32.xlu0 %v3873
        %v3905 = vpop.xlane.xlu0 %3904
        %3906 = vadd.xlane.f32.xlu0 %v3875
        %v3907 = vpop.xlane.xlu0 %3906
        %3908 = vadd.xlane.f32.xlu0 %v3877
        %v3909 = vpop.xlane.xlu0 %3908
        %3910 = vadd.xlane.f32.xlu0 %v3879
        %v3911 = vpop.xlane.xlu0 %3910
        %3912 = vadd.xlane.f32.xlu0 %v3881
        %v3913 = vpop.xlane.xlu0 %3912
        %v3914 = vrcp.pop %v3883
        %v3915 = vrcp.pop %v3885
        %v3916 = vrcp.pop %v3887
        %v3917 = vrcp.pop %v3889
        %v3918 = vrcp.pop %v3891
        %v3919 = vrcp.pop %v3893
        %v3920 = vrcp.pop %v3895
        %v3921 = vrcp.pop %v3897
        %v3922 = vrcp.pop %v3899
        %v3923 = vrcp.pop %v3901
        %v3924 = vrcp.pop %v3903
        %v3925 = vrcp.pop %v3905
        %v3926 = vrcp.pop %v3907
        %v3927 = vrcp.pop %v3909
        %v3928 = vrcp.pop %v3911
        %v3929 = vrcp.pop %v3913
        %v3930 = vmul.f32 %v3851, %v3914
        %v3931 = vmul.f32 %v3853, %v3915
        %v3932 = vmul.f32 %v3855, %v3916
        %v3933 = vmul.f32 %v3857, %v3917
        %v3934 = vmul.f32 %v3859, %v3918
        %v3935 = vmul.f32 %v3861, %v3919
        %v3936 = vmul.f32 %v3863, %v3920
        %v3937 = vmul.f32 %v3865, %v3921
        %v3938 = vmul.f32 %v3867, %v3922
        %v3939 = vmul.f32 %v3869, %v3923
        %v3940 = vmul.f32 %v3871, %v3924
        %v3941 = vmul.f32 %v3873, %v3925
        %v3942 = vmul.f32 %v3875, %v3926
        %v3943 = vmul.f32 %v3877, %v3927
        %v3944 = vmul.f32 %v3879, %v3928
        %v3945 = vmul.f32 %v3881, %v3929
        %v3946 = vpack.c.bf16 %v3931, %v3930
        %v3947 = vpack.c.bf16 %v3933, %v3932
        %v3948 = vpack.c.bf16 %v3935, %v3934
        %v3949 = vpack.c.bf16 %v3937, %v3936
        %v3950 = vpack.c.bf16 %v3939, %v3938
        %v3951 = vpack.c.bf16 %v3941, %v3940
        %v3952 = vpack.c.bf16 %v3943, %v3942
        %v3953 = vpack.c.bf16 %v3945, %v3944
        %3954 = vmatprep.subr.bf16.mxu0 0
        %3955 = vmatpush1.bf16.xpose.msra.mxu0 %v3946
        %3956 = vmatprep.subr.bf16.mxu0 0
        %3957 = vmatpush1.bf16.xpose.msra.mxu0 %v3947
        %3958 = vmatprep.subr.bf16.mxu0 0
        %3959 = vmatpush1.bf16.xpose.msra.mxu0 %v3948
        %3960 = vmatprep.subr.bf16.mxu0 0
        %3961 = vmatpush1.bf16.xpose.msra.mxu0 %v3949
        %3962 = vmatprep.subr.bf16.mxu0 0
        %3963 = vmatpush1.bf16.xpose.msra.mxu0 %v3950
        %3964 = vmatprep.subr.bf16.mxu0 0
        %3965 = vmatpush1.bf16.xpose.msra.mxu0 %v3951
        %3966 = vmatprep.subr.bf16.mxu0 0
        %3967 = vmatpush1.bf16.xpose.msra.mxu0 %v3952
        %3968 = vmatprep.subr.bf16.mxu0 0
        %3969 = vmatpush1.bf16.xpose.msra.mxu0 %v3953
        %3970 = vmatprep.subr.bf16.mxu0 0
        %3971 = vmatpush1.bf16.xpose.msra.mxu0 0
        %3972 = vmatprep.subr.bf16.mxu0 0
        %3973 = vmatpush1.bf16.xpose.msra.mxu0 0
        %3974 = vmatprep.subr.bf16.mxu0 0
        %3975 = vmatpush1.bf16.xpose.msra.mxu0 0
        %3976 = vmatprep.subr.bf16.mxu0 0
        %3977 = vmatpush1.bf16.xpose.msra.mxu0 0
        %3978 = vmatprep.subr.bf16.mxu0 0
        %3979 = vmatpush1.bf16.xpose.msra.mxu0 0
        %3980 = vmatprep.subr.bf16.mxu0 0
        %3981 = vmatpush1.bf16.xpose.msra.mxu0 0
        %3982 = vmatprep.subr.bf16.mxu0 0
        %3983 = vmatpush1.bf16.xpose.msra.mxu0 0
        %3984 = vmatprep.subr.bf16.mxu0 0
        %3985 = vmatpush1.bf16.xpose.msra.mxu0 0
        %3986 = vmatprep.mubr.bf16.mxu0 0
        %3987 = vmatmul.mubr.bf16.gmra.mrb[0].mxu0 %v3625
        %v3988 = vpop.f32.mrb[0].mxu0
        %v3989 = vadd.f32 0.0, %v3988
        %v3990 = vpop.f32.mrb[0].mxu0
        %v3991 = vpop.f32.mrb[0].mxu0
        %v3992 = vadd.f32 0.0, %v3991
        %v3993 = vpop.f32.mrb[0].mxu0
        %3994 = vmatprep.mubr.bf16.mxu0 0
        %3995 = vmatmul.mubr.bf16.gmra.mrb[0].mxu0 %v3626
        %v3996 = vpop.f32.mrb[0].mxu0
        %v3997 = vadd.f32 0.0, %v3996
        %v3998 = vpop.f32.mrb[0].mxu0
        %v3999 = vpop.f32.mrb[0].mxu0
        %v4000 = vadd.f32 0.0, %v3999
        %v4001 = vpop.f32.mrb[0].mxu0
        %4002 = vmatprep.mubr.bf16.mxu0 0
        %4003 = vmatmul.mubr.bf16.gmra.mrb[0].mxu0 %v3627
        %v4004 = vpop.f32.mrb[0].mxu0
        %v4005 = vadd.f32 0.0, %v4004
        %v4006 = vpop.f32.mrb[0].mxu0
        %v4007 = vpop.f32.mrb[0].mxu0
        %v4008 = vadd.f32 0.0, %v4007
        %v4009 = vpop.f32.mrb[0].mxu0
        %4010 = vmatprep.mubr.bf16.mxu0 0
        %4011 = vmatmul.mubr.bf16.gmra.mrb[0].mxu0 %v3628
        %v4012 = vpop.f32.mrb[0].mxu0
        %v4013 = vadd.f32 0.0, %v4012
        %v4014 = vpop.f32.mrb[0].mxu0
        %v4015 = vpop.f32.mrb[0].mxu0
        %v4016 = vadd.f32 0.0, %v4015
        %v4017 = vpop.f32.mrb[0].mxu0
        %4018 = vmatprep.mubr.bf16.mxu0 0
        %4019 = vmatmul.mubr.bf16.gmra.mrb[0].mxu0 %v3629
        %v4020 = vpop.f32.mrb[0].mxu0
        %v4021 = vadd.f32 0.0, %v4020
        %v4022 = vpop.f32.mrb[0].mxu0
        %v4023 = vpop.f32.mrb[0].mxu0
        %v4024 = vadd.f32 0.0, %v4023
        %v4025 = vpop.f32.mrb[0].mxu0
        %4026 = vdwg.mxu0
        %s4027 = sld [smem:[#allocation13 + $0x1]]
        %v4028 = vstv %s4027
        %v4029 = vmul.f32 %v4028, %v3989
        %v4030 = vmul.f32 %v4028, %v3992
        %v4031 = vmul.f32 %v4028, %v3997
        %v4032 = vmul.f32 %v4028, %v4000
        %v4033 = vmul.f32 %v4028, %v4005
        %v4034 = vmul.f32 %v4028, %v4008
        %v4035 = vmul.f32 %v4028, %v4013
        %v4036 = vmul.f32 %v4028, %v4016
        %v4037 = vmul.f32 %v4028, %v4021
        %v4038 = vmul.f32 %v4028, %v4024
        %v4039 = vadd.f32 %v4029, %v2937
        %v4040 = vadd.f32 %v4030, %v2939
        %v4041 = vadd.f32 %v4031, %v2941
        %v4042 = vadd.f32 %v4032, %v2943
        %v4043 = vadd.f32 %v4033, %v2945
        %v4044 = vadd.f32 %v4034, %v2947
        %v4045 = vadd.f32 %v4035, %v2949
        %v4046 = vadd.f32 %v4036, %v2951
        %v4047 = vadd.f32 %v4037, %v2953
        %v4048 = vadd.f32 %v4038, %v2955
        %v4049 = vmul.f32 %v4039, %v2889
        %v4050 = vmul.f32 %v4040, %v2894
        %v4051 = vmul.f32 %v4041, %v2899
        %v4052 = vmul.f32 %v4042, %v2904
        %v4053 = vmul.f32 %v4043, %v2909
        %v4054 = vmul.f32 %v4044, %v2914
        %v4055 = vmul.f32 %v4045, %v2919
        %v4056 = vmul.f32 %v4046, %v2924
        %v4057 = vmul.f32 %v4047, %v2929
        %v4058 = vmul.f32 %v4048, %v2934
        %4059 = vst [vmem:[#allocation2] sm:$0xff] 0
        %4060 = vst [vmem:[#allocation2 + $0x8] sm:$0xff] 0
        %4061 = vst [vmem:[#allocation2 + $0x10] sm:$0xff] 0
        %4062 = vst [vmem:[#allocation2 + $0x18] sm:$0xff] 0
        %4063 = vst [vmem:[#allocation2 + $0x20] sm:$0xff] 0
        %4064 = vst [vmem:[#allocation2 + $0x28] sm:$0xff] 0
        %4065 = vst [vmem:[#allocation2 + $0x30] sm:$0xff] 0
        %4066 = vst [vmem:[#allocation2 + $0x38] sm:$0xff] 0
        %4067 = vst [vmem:[#allocation2 + $0x40] sm:$0xff] 0
        %4068 = vst [vmem:[#allocation2 + $0x48] sm:$0xff] 0
        %4069 = vst [vmem:[#allocation2 + $0x50] sm:$0xff] 0
        %4070 = vst [vmem:[#allocation2 + $0x58] sm:$0xff] 0
        %4071 = vst [vmem:[#allocation2 + $0x60] sm:$0xff] 0
        %v4072 = vpack.c.bf16 %v3616, %v3615
        %v4073 = vpack.c.bf16 %v3618, %v3617
        %v4074 = vpack.c.bf16 %v3620, %v3619
        %v4075 = vpack.c.bf16 %v3622, %v3621
        %v4076 = vpack.c.bf16 %v3624, %v3623
        %v4082 = vunpack.c.l.b16 %v4072
        %v4083 = vunpack.c.h.b16 %v4072
        %v4084 = vunpack.c.l.b16 %v4073
        %v4085 = vunpack.c.h.b16 %v4073
        %v4086 = vunpack.c.l.b16 %v4074
        %v4087 = vunpack.c.h.b16 %v4074
        %v4088 = vunpack.c.l.b16 %v4075
        %v4089 = vunpack.c.h.b16 %v4075
        %v4090 = vunpack.c.l.b16 %v4076
        %v4091 = vunpack.c.h.b16 %v4076
        %v4092 = vpack.c.b16 %v4082, %v4082
        %v4093 = vpack.c.b16 %v4083, %v4083
        %v4094 = vpack.c.b16 %v4084, %v4084
        %v4095 = vpack.c.b16 %v4085, %v4085
        %v4096 = vpack.c.b16 %v4086, %v4086
        %v4097 = vpack.c.b16 %v4087, %v4087
        %v4098 = vpack.c.b16 %v4088, %v4088
        %v4099 = vpack.c.b16 %v4089, %v4089
        %v4100 = vpack.c.b16 %v4090, %v4090
        %v4101 = vpack.c.b16 %v4091, %v4091
        %vm4102 = vsmask.f32 1280
        %vm4103 = vsmask.f32 5392
        %vm4104 = vmor %vm4102, %vm4103
        %v4106 = vshrl.u32 %v4092, 16
        %v4108 = vrot.slane %v4106, 6
        %v4109 = vshll.u32 %v4092, 16
        %v4111 = vrot.slane %v4109, 7
        %v4112 = vor.u32 %v4108, %v4111
        %v4113 = vrot.slane %v4112, 4
        %v4115 = vshrl.u32 %v4093, 16
        %v4117 = vrot.slane %v4115, 6
        %v4118 = vshll.u32 %v4093, 16
        %v4120 = vrot.slane %v4118, 7
        %v4121 = vor.u32 %v4117, %v4120
        %v4122 = vsel %vm4104, %v4113, %v4121
        %v4123 = vrot.slane %v4121, 4
        %v4125 = vshrl.u32 %v4094, 16
        %v4127 = vrot.slane %v4125, 6
        %v4128 = vshll.u32 %v4094, 16
        %v4130 = vrot.slane %v4128, 7
        %v4131 = vor.u32 %v4127, %v4130
        %v4132 = vsel %vm4104, %v4123, %v4131
        %v4133 = vrot.slane %v4131, 4
        %v4135 = vshrl.u32 %v4095, 16
        %v4137 = vrot.slane %v4135, 6
        %v4138 = vshll.u32 %v4095, 16
        %v4140 = vrot.slane %v4138, 7
        %v4141 = vor.u32 %v4137, %v4140
        %v4142 = vsel %vm4104, %v4133, %v4141
        %v4143 = vrot.slane %v4141, 4
        %v4145 = vshrl.u32 %v4096, 16
        %v4147 = vrot.slane %v4145, 6
        %v4148 = vshll.u32 %v4096, 16
        %v4150 = vrot.slane %v4148, 7
        %v4151 = vor.u32 %v4147, %v4150
        %v4152 = vsel %vm4104, %v4143, %v4151
        %v4153 = vrot.slane %v4151, 4
        %v4155 = vshrl.u32 %v4097, 16
        %v4157 = vrot.slane %v4155, 6
        %v4158 = vshll.u32 %v4097, 16
        %v4160 = vrot.slane %v4158, 7
        %v4161 = vor.u32 %v4157, %v4160
        %v4162 = vsel %vm4104, %v4153, %v4161
        %v4163 = vrot.slane %v4161, 4
        %v4165 = vshrl.u32 %v4098, 16
        %v4167 = vrot.slane %v4165, 6
        %v4168 = vshll.u32 %v4098, 16
        %v4170 = vrot.slane %v4168, 7
        %v4171 = vor.u32 %v4167, %v4170
        %v4172 = vsel %vm4104, %v4163, %v4171
        %v4173 = vrot.slane %v4171, 4
        %v4175 = vshrl.u32 %v4099, 16
        %v4177 = vrot.slane %v4175, 6
        %v4178 = vshll.u32 %v4099, 16
        %v4180 = vrot.slane %v4178, 7
        %v4181 = vor.u32 %v4177, %v4180
        %v4182 = vsel %vm4104, %v4173, %v4181
        %v4183 = vrot.slane %v4181, 4
        %v4185 = vshrl.u32 %v4100, 16
        %v4187 = vrot.slane %v4185, 6
        %v4188 = vshll.u32 %v4100, 16
        %v4190 = vrot.slane %v4188, 7
        %v4191 = vor.u32 %v4187, %v4190
        %v4192 = vsel %vm4104, %v4183, %v4191
        %v4193 = vrot.slane %v4191, 4
        %v4195 = vshrl.u32 %v4101, 16
        %v4197 = vrot.slane %v4195, 6
        %v4198 = vshll.u32 %v4101, 16
        %v4200 = vrot.slane %v4198, 7
        %v4201 = vor.u32 %v4197, %v4200
        %v4202 = vsel %vm4104, %v4193, %v4201
        %v4203 = vrot.slane %v4201, 4
        %vm4215 = vcmask 1043457
        %vm4216 = vsmask.f32 7942
        %vm4217 = vmand %vm4215, %vm4216
        %v4218 = vld [vmem:[#allocation2 + $0x8] sm:$0xe]
        %v4219 = vsel %vm4217, %v4112, %v4218
        %4220 = vst [vmem:[#allocation2 + $0x8] sm:$0xe] %v4219
        %4221 = vst [vmem:[#allocation2 + $0x10] sm:$0xf] %v4122
        %4222 = vst [vmem:[#allocation2 + $0x18] sm:$0xf] %v4132
        %4223 = vst [vmem:[#allocation2 + $0x20] sm:$0xf] %v4142
        %4224 = vst [vmem:[#allocation2 + $0x28] sm:$0xf] %v4152
        %4225 = vst [vmem:[#allocation2 + $0x30] sm:$0xf] %v4162
        %4226 = vst [vmem:[#allocation2 + $0x38] sm:$0xf] %v4172
        %4227 = vst [vmem:[#allocation2 + $0x40] sm:$0xf] %v4182
        %4228 = vst [vmem:[#allocation2 + $0x48] sm:$0xf] %v4192
        %4229 = vst [vmem:[#allocation2 + $0x50] sm:$0xf] %v4202
        %vm4230 = vcmask 1041408
        %vm4231 = vmand %vm4230, %vm4102
        %v4232 = vld [vmem:[#allocation2 + $0x58] sm:$0x3]
        %v4233 = vsel %vm4231, %v4203, %v4232
        %4234 = vst [vmem:[#allocation2 + $0x58] sm:$0x3] %v4233
        %v4235 = vpack.c.bf16 %v4050, %v4049
        %v4236 = vpack.c.bf16 %v4052, %v4051
        %v4237 = vpack.c.bf16 %v4054, %v4053
        %v4238 = vpack.c.bf16 %v4056, %v4055
        %v4239 = vpack.c.bf16 %v4058, %v4057
        %v4245 = vunpack.c.l.b16 %v4235
        %v4246 = vunpack.c.h.b16 %v4235
        %v4247 = vunpack.c.l.b16 %v4236
        %v4248 = vunpack.c.h.b16 %v4236
        %v4249 = vunpack.c.l.b16 %v4237
        %v4250 = vunpack.c.h.b16 %v4237
        %v4251 = vunpack.c.l.b16 %v4238
        %v4252 = vunpack.c.h.b16 %v4238
        %v4253 = vunpack.c.l.b16 %v4239
        %v4254 = vunpack.c.h.b16 %v4239
        %v4255 = vpack.c.b16 %v4245, %v4245
        %v4256 = vpack.c.b16 %v4246, %v4246
        %v4257 = vpack.c.b16 %v4247, %v4247
        %v4258 = vpack.c.b16 %v4248, %v4248
        %v4259 = vpack.c.b16 %v4249, %v4249
        %v4260 = vpack.c.b16 %v4250, %v4250
        %v4261 = vpack.c.b16 %v4251, %v4251
        %v4262 = vpack.c.b16 %v4252, %v4252
        %v4263 = vpack.c.b16 %v4253, %v4253
        %v4264 = vpack.c.b16 %v4254, %v4254
        %v4266 = vshrl.u32 %v4255, 16
        %v4268 = vrot.slane %v4266, 6
        %v4269 = vshll.u32 %v4255, 16
        %v4271 = vrot.slane %v4269, 7
        %v4272 = vor.u32 %v4268, %v4271
        %v4273 = vrot.slane %v4272, 4
        %v4275 = vshrl.u32 %v4256, 16
        %v4277 = vrot.slane %v4275, 6
        %v4278 = vshll.u32 %v4256, 16
        %v4280 = vrot.slane %v4278, 7
        %v4281 = vor.u32 %v4277, %v4280
        %v4282 = vsel %vm4104, %v4273, %v4281
        %v4283 = vrot.slane %v4281, 4
        %v4285 = vshrl.u32 %v4257, 16
        %v4287 = vrot.slane %v4285, 6
        %v4288 = vshll.u32 %v4257, 16
        %v4290 = vrot.slane %v4288, 7
        %v4291 = vor.u32 %v4287, %v4290
        %v4292 = vsel %vm4104, %v4283, %v4291
        %v4293 = vrot.slane %v4291, 4
        %v4295 = vshrl.u32 %v4258, 16
        %v4297 = vrot.slane %v4295, 6
        %v4298 = vshll.u32 %v4258, 16
        %v4300 = vrot.slane %v4298, 7
        %v4301 = vor.u32 %v4297, %v4300
        %v4302 = vsel %vm4104, %v4293, %v4301
        %v4303 = vrot.slane %v4301, 4
        %v4305 = vshrl.u32 %v4259, 16
        %v4307 = vrot.slane %v4305, 6
        %v4308 = vshll.u32 %v4259, 16
        %v4310 = vrot.slane %v4308, 7
        %v4311 = vor.u32 %v4307, %v4310
        %v4312 = vsel %vm4104, %v4303, %v4311
        %v4313 = vrot.slane %v4311, 4
        %v4315 = vshrl.u32 %v4260, 16
        %v4317 = vrot.slane %v4315, 6
        %v4318 = vshll.u32 %v4260, 16
        %v4320 = vrot.slane %v4318, 7
        %v4321 = vor.u32 %v4317, %v4320
        %v4322 = vsel %vm4104, %v4313, %v4321
        %v4323 = vrot.slane %v4321, 4
        %v4325 = vshrl.u32 %v4261, 16
        %v4327 = vrot.slane %v4325, 6
        %v4328 = vshll.u32 %v4261, 16
        %v4330 = vrot.slane %v4328, 7
        %v4331 = vor.u32 %v4327, %v4330
        %v4332 = vsel %vm4104, %v4323, %v4331
        %v4333 = vrot.slane %v4331, 4
        %v4335 = vshrl.u32 %v4262, 16
        %v4337 = vrot.slane %v4335, 6
        %v4338 = vshll.u32 %v4262, 16
        %v4340 = vrot.slane %v4338, 7
        %v4341 = vor.u32 %v4337, %v4340
        %v4342 = vsel %vm4104, %v4333, %v4341
        %v4343 = vrot.slane %v4341, 4
        %v4345 = vshrl.u32 %v4263, 16
        %v4347 = vrot.slane %v4345, 6
        %v4348 = vshll.u32 %v4263, 16
        %v4350 = vrot.slane %v4348, 7
        %v4351 = vor.u32 %v4347, %v4350
        %v4352 = vsel %vm4104, %v4343, %v4351
        %v4353 = vrot.slane %v4351, 4
        %v4355 = vshrl.u32 %v4264, 16
        %v4357 = vrot.slane %v4355, 6
        %v4358 = vshll.u32 %v4264, 16
        %v4360 = vrot.slane %v4358, 7
        %v4361 = vor.u32 %v4357, %v4360
        %v4362 = vsel %vm4104, %v4353, %v4361
        %v4363 = vrot.slane %v4361, 4
        %v4375 = vld [vmem:[#allocation2 + $0xc] sm:$0xe]
        %v4376 = vsel %vm4217, %v4272, %v4375
        %4377 = vst [vmem:[#allocation2 + $0xc] sm:$0xe] %v4376
        %4378 = vst [vmem:[#allocation2 + $0x14] sm:$0xf] %v4282
        %4379 = vst [vmem:[#allocation2 + $0x1c] sm:$0xf] %v4292
        %4380 = vst [vmem:[#allocation2 + $0x24] sm:$0xf] %v4302
        %4381 = vst [vmem:[#allocation2 + $0x2c] sm:$0xf] %v4312
        %4382 = vst [vmem:[#allocation2 + $0x34] sm:$0xf] %v4322
        %4383 = vst [vmem:[#allocation2 + $0x3c] sm:$0xf] %v4332
        %4384 = vst [vmem:[#allocation2 + $0x44] sm:$0xf] %v4342
        %4385 = vst [vmem:[#allocation2 + $0x4c] sm:$0xf] %v4352
        %4386 = vst [vmem:[#allocation2 + $0x54] sm:$0xf] %v4362
        %v4387 = vld [vmem:[#allocation2 + $0x5c] sm:$0x3]
        %v4388 = vsel %vm4231, %v4363, %v4387
        %4389 = vst [vmem:[#allocation2 + $0x5c] sm:$0x3] %v4388
        %v4390 = vld [vmem:[#allocation2] sm:$0xff]
        %v4391 = vld [vmem:[#allocation2 + $0x8] sm:$0xff]
        %v4392 = vld [vmem:[#allocation2 + $0x10] sm:$0xff]
        %v4393 = vld [vmem:[#allocation2 + $0x18] sm:$0xff]
        %v4394 = vld [vmem:[#allocation2 + $0x20] sm:$0xff]
        %v4395 = vld [vmem:[#allocation2 + $0x28] sm:$0xff]
        %v4396 = vld [vmem:[#allocation2 + $0x30] sm:$0xff]
        %v4397 = vld [vmem:[#allocation2 + $0x38] sm:$0xff]
        %v4398 = vld [vmem:[#allocation2 + $0x40] sm:$0xff]
        %v4399 = vld [vmem:[#allocation2 + $0x48] sm:$0xff]
        %v4400 = vld [vmem:[#allocation10] sm:$0xf]
        %v4401 = vld [vmem:[#allocation10 + $0x4] sm:$0xf]
        %v4402 = vld [vmem:[#allocation10 + $0x8] sm:$0xf]
        %v4403 = vld [vmem:[#allocation10 + $0xc] sm:$0xf]
        %v4404 = vld [vmem:[#allocation10 + $0x10] sm:$0xf]
        %v4405 = vld [vmem:[#allocation10 + $0x14] sm:$0xf]
        %v4406 = vld [vmem:[#allocation10 + $0x18] sm:$0xf]
        %v4407 = vld [vmem:[#allocation10 + $0x1c] sm:$0xf]
        %v4408 = vld [vmem:[#allocation10 + $0x20] sm:$0xf]
        %v4409 = vld [vmem:[#allocation10 + $0x24] sm:$0xf]
        %v4410 = vld [vmem:[#allocation10 + $0x28] sm:$0xf]
        %v4411 = vld [vmem:[#allocation10 + $0x2c] sm:$0xf]
        %v4412 = vld [vmem:[#allocation10 + $0x30] sm:$0xf]
        %v4413 = vld [vmem:[#allocation10 + $0x34] sm:$0xf]
        %v4414 = vld [vmem:[#allocation10 + $0x38] sm:$0xf]
        %v4415 = vld [vmem:[#allocation10 + $0x3c] sm:$0xf]
        %v4416 = vld [vmem:[#allocation12] sm:$0xf]
        %v4417 = vld [vmem:[#allocation12 + $0x4] sm:$0xf]
        %v4418 = vld [vmem:[#allocation12 + $0x8] sm:$0xf]
        %v4419 = vld [vmem:[#allocation12 + $0xc] sm:$0xf]
        %v4420 = vld [vmem:[#allocation12 + $0x10] sm:$0xf]
        %v4421 = vld [vmem:[#allocation12 + $0x14] sm:$0xf]
        %v4422 = vld [vmem:[#allocation12 + $0x18] sm:$0xf]
        %v4423 = vld [vmem:[#allocation12 + $0x1c] sm:$0xf]
        %v4424 = vld [vmem:[#allocation12 + $0x20] sm:$0xf]
        %v4425 = vld [vmem:[#allocation12 + $0x24] sm:$0xf]
        %v4426 = vld [vmem:[#allocation12 + $0x28] sm:$0xf]
        %v4427 = vld [vmem:[#allocation12 + $0x2c] sm:$0xf]
        %v4428 = vld [vmem:[#allocation12 + $0x30] sm:$0xf]
        %v4429 = vld [vmem:[#allocation12 + $0x34] sm:$0xf]
        %v4430 = vld [vmem:[#allocation12 + $0x38] sm:$0xf]
        %v4431 = vld [vmem:[#allocation12 + $0x3c] sm:$0xf]
        %v4432 = vld [vmem:[#allocation2 + $0x50] sm:$0x11]
        %s4433 = scalar_lea.vmem [#allocation10], 64
        %v4434 = vld [vmem:[%s4433] sm:$0xf]
        %v4435 = vld [vmem:[%s4433 + $0x4] sm:$0xf]
        %v4436 = vld [vmem:[%s4433 + $0x8] sm:$0xf]
        %v4437 = vld [vmem:[%s4433 + $0xc] sm:$0xf]
        %v4438 = vld [vmem:[%s4433 + $0x10] sm:$0xf]
        %v4439 = vld [vmem:[%s4433 + $0x14] sm:$0xf]
        %v4440 = vld [vmem:[%s4433 + $0x18] sm:$0xf]
        %v4441 = vld [vmem:[%s4433 + $0x1c] sm:$0xf]
        %v4442 = vld [vmem:[%s4433 + $0x20] sm:$0xf]
        %v4443 = vld [vmem:[%s4433 + $0x24] sm:$0xf]
        %v4444 = vld [vmem:[%s4433 + $0x28] sm:$0xf]
        %v4445 = vld [vmem:[%s4433 + $0x2c] sm:$0xf]
        %v4446 = vld [vmem:[%s4433 + $0x30] sm:$0xf]
        %v4447 = vld [vmem:[%s4433 + $0x34] sm:$0xf]
        %v4448 = vld [vmem:[%s4433 + $0x38] sm:$0xf]
        %v4449 = vld [vmem:[%s4433 + $0x3c] sm:$0xf]
        %v4461 = vunpack.c.l.b16 %v4390
        %v4462 = vunpack.c.l.b16 %v4391
        %v4463 = vunpack.c.l.b16 %v4392
        %v4464 = vunpack.c.l.b16 %v4393
        %v4465 = vunpack.c.l.b16 %v4394
        %v4466 = vunpack.c.l.b16 %v4395
        %v4467 = vunpack.c.l.b16 %v4396
        %v4468 = vunpack.c.l.b16 %v4397
        %v4469 = vunpack.c.l.b16 %v4398
        %v4470 = vunpack.c.l.b16 %v4399
        %v4471 = vunpack.c.l.b16 %v4432
        %v4472 = vpack.c.b16 %v4462, %v4461
        %v4473 = vpack.c.b16 %v4464, %v4463
        %v4474 = vpack.c.b16 %v4466, %v4465
        %v4475 = vpack.c.b16 %v4468, %v4467
        %v4476 = vpack.c.b16 %v4470, %v4469
        %v4477 = vpack.c.b16 %v4471, %v4471
        %v4479 = vshrl.u32 %v4472, 16
        %v4481 = vshll.u32 %v4472, 16
        %v4483 = vrot.slane %v4481, 1
        %v4484 = vor.u32 %v4479, %v4483
        %v4486 = vshll.u32 %v4473, 16
        %v4488 = vrot.slane %v4486, 1
        %v4489 = vsel %vm722, %v4484, %v4488
        %v4490 = vshrl.u32 %v4473, 16
        %v4492 = vor.u32 %v4490, %v4488
        %v4494 = vshll.u32 %v4474, 16
        %v4496 = vrot.slane %v4494, 1
        %v4497 = vsel %vm722, %v4492, %v4496
        %v4498 = vshrl.u32 %v4474, 16
        %v4500 = vor.u32 %v4498, %v4496
        %v4502 = vshll.u32 %v4475, 16
        %v4504 = vrot.slane %v4502, 1
        %v4505 = vsel %vm722, %v4500, %v4504
        %v4506 = vshrl.u32 %v4475, 16
        %v4508 = vor.u32 %v4506, %v4504
        %v4510 = vshll.u32 %v4476, 16
        %v4512 = vrot.slane %v4510, 1
        %v4513 = vsel %vm722, %v4508, %v4512
        %v4514 = vshrl.u32 %v4476, 16
        %v4516 = vor.u32 %v4514, %v4512
        %v4518 = vshll.u32 %v4477, 16
        %v4520 = vrot.slane %v4518, 1
        %v4521 = vsel %vm722, %v4516, %v4520
        %v4543 = vunpack.c.l.b16 %v4434
        %v4544 = vunpack.c.l.b16 %v4435
        %v4545 = vunpack.c.l.b16 %v4436
        %v4546 = vunpack.c.l.b16 %v4437
        %v4547 = vunpack.c.l.b16 %v4438
        %v4548 = vunpack.c.l.b16 %v4439
        %v4549 = vunpack.c.l.b16 %v4440
        %v4550 = vunpack.c.l.b16 %v4441
        %v4551 = vunpack.c.l.b16 %v4442
        %v4552 = vunpack.c.l.b16 %v4443
        %v4553 = vunpack.c.l.b16 %v4444
        %v4554 = vunpack.c.l.b16 %v4445
        %v4555 = vunpack.c.l.b16 %v4446
        %v4556 = vunpack.c.l.b16 %v4447
        %v4557 = vunpack.c.l.b16 %v4448
        %v4558 = vunpack.c.l.b16 %v4449
        %v4559 = vpack.c.b16 %v4544, %v4543
        %v4560 = vpack.c.b16 %v4546, %v4545
        %v4561 = vpack.c.b16 %v4548, %v4547
        %v4562 = vpack.c.b16 %v4550, %v4549
        %v4563 = vpack.c.b16 %v4552, %v4551
        %v4564 = vpack.c.b16 %v4554, %v4553
        %v4565 = vpack.c.b16 %v4556, %v4555
        %v4566 = vpack.c.b16 %v4558, %v4557
        %4575 = vmatprep.subr.bf16.mxu0 0
        %4576 = vmatpush1.bf16.msra.mxu0 %v4559
        %4577 = vmatprep.subr.bf16.mxu0 0
        %4578 = vmatpush1.bf16.msra.mxu0 %v4560
        %4579 = vmatprep.subr.bf16.mxu0 0
        %4580 = vmatpush1.bf16.msra.mxu0 %v4561
        %4581 = vmatprep.subr.bf16.mxu0 0
        %4582 = vmatpush1.bf16.msra.mxu0 %v4562
        %4583 = vmatprep.subr.bf16.mxu0 0
        %4584 = vmatpush1.bf16.msra.mxu0 %v4563
        %4585 = vmatprep.subr.bf16.mxu0 0
        %4586 = vmatpush1.bf16.msra.mxu0 %v4564
        %4587 = vmatprep.subr.bf16.mxu0 0
        %4588 = vmatpush1.bf16.msra.mxu0 %v4565
        %4589 = vmatprep.subr.bf16.mxu0 0
        %4590 = vmatpush1.bf16.msra.mxu0 %v4566
        %4591 = vmatprep.subr.bf16.mxu0 0
        %4592 = vmatpush1.bf16.msra.mxu0 0
        %4593 = vmatprep.subr.bf16.mxu0 0
        %4594 = vmatpush1.bf16.msra.mxu0 0
        %4595 = vmatprep.subr.bf16.mxu0 0
        %4596 = vmatpush1.bf16.msra.mxu0 0
        %4597 = vmatprep.subr.bf16.mxu0 0
        %4598 = vmatpush1.bf16.msra.mxu0 0
        %4599 = vmatprep.subr.bf16.mxu0 0
        %4600 = vmatpush1.bf16.msra.mxu0 0
        %4601 = vmatprep.subr.bf16.mxu0 0
        %4602 = vmatpush1.bf16.msra.mxu0 0
        %4603 = vmatprep.subr.bf16.mxu0 0
        %4604 = vmatpush1.bf16.msra.mxu0 0
        %4605 = vmatprep.subr.bf16.mxu0 0
        %4606 = vmatpush1.bf16.msra.mxu0 0
        %4607 = vmatprep.mubr.bf16.mxu0 0
        %4608 = vmatmul.mubr.bf16.gmra.mrb[0].mxu0 %v4489
        %v4609 = vpop.f32.mrb[0].mxu0
        %v4610 = vadd.f32 0.0, %v4609
        %v4611 = vpop.f32.mrb[0].mxu0
        %v4612 = vpop.f32.mrb[0].mxu0
        %v4613 = vadd.f32 0.0, %v4612
        %v4614 = vpop.f32.mrb[0].mxu0
        %4615 = vmatprep.mubr.bf16.mxu0 0
        %4616 = vmatmul.mubr.bf16.gmra.mrb[0].mxu0 %v4497
        %v4617 = vpop.f32.mrb[0].mxu0
        %v4618 = vadd.f32 0.0, %v4617
        %v4619 = vpop.f32.mrb[0].mxu0
        %v4620 = vpop.f32.mrb[0].mxu0
        %v4621 = vadd.f32 0.0, %v4620
        %v4622 = vpop.f32.mrb[0].mxu0
        %4623 = vmatprep.mubr.bf16.mxu0 0
        %4624 = vmatmul.mubr.bf16.gmra.mrb[0].mxu0 %v4505
        %v4625 = vpop.f32.mrb[0].mxu0
        %v4626 = vadd.f32 0.0, %v4625
        %v4627 = vpop.f32.mrb[0].mxu0
        %v4628 = vpop.f32.mrb[0].mxu0
        %v4629 = vadd.f32 0.0, %v4628
        %v4630 = vpop.f32.mrb[0].mxu0
        %4631 = vmatprep.mubr.bf16.mxu0 0
        %4632 = vmatmul.mubr.bf16.gmra.mrb[0].mxu0 %v4513
        %v4633 = vpop.f32.mrb[0].mxu0
        %v4634 = vadd.f32 0.0, %v4633
        %v4635 = vpop.f32.mrb[0].mxu0
        %v4636 = vpop.f32.mrb[0].mxu0
        %v4637 = vadd.f32 0.0, %v4636
        %v4638 = vpop.f32.mrb[0].mxu0
        %4639 = vmatprep.mubr.bf16.mxu0 0
        %4640 = vmatmul.mubr.bf16.gmra.mrb[0].mxu0 %v4521
        %v4641 = vpop.f32.mrb[0].mxu0
        %v4642 = vadd.f32 0.0, %v4641
        %v4643 = vpop.f32.mrb[0].mxu0
        %v4644 = vpop.f32.mrb[0].mxu0
        %v4645 = vadd.f32 0.0, %v4644
        %v4646 = vpop.f32.mrb[0].mxu0
        %4647 = vdwg.mxu0
        %v4669 = vunpack.c.l.b16 %v4400
        %v4670 = vunpack.c.l.b16 %v4401
        %v4671 = vunpack.c.l.b16 %v4402
        %v4672 = vunpack.c.l.b16 %v4403
        %v4673 = vunpack.c.l.b16 %v4404
        %v4674 = vunpack.c.l.b16 %v4405
        %v4675 = vunpack.c.l.b16 %v4406
        %v4676 = vunpack.c.l.b16 %v4407
        %v4677 = vunpack.c.l.b16 %v4408
        %v4678 = vunpack.c.l.b16 %v4409
        %v4679 = vunpack.c.l.b16 %v4410
        %v4680 = vunpack.c.l.b16 %v4411
        %v4681 = vunpack.c.l.b16 %v4412
        %v4682 = vunpack.c.l.b16 %v4413
        %v4683 = vunpack.c.l.b16 %v4414
        %v4684 = vunpack.c.l.b16 %v4415
        %v4685 = vpack.c.b16 %v4670, %v4669
        %v4686 = vpack.c.b16 %v4672, %v4671
        %v4687 = vpack.c.b16 %v4674, %v4673
        %v4688 = vpack.c.b16 %v4676, %v4675
        %v4689 = vpack.c.b16 %v4678, %v4677
        %v4690 = vpack.c.b16 %v4680, %v4679
        %v4691 = vpack.c.b16 %v4682, %v4681
        %v4692 = vpack.c.b16 %v4684, %v4683
        %4701 = vmatprep.subr.bf16.mxu0 0
        %4702 = vmatpush1.bf16.msra.mxu0 %v4685
        %4703 = vmatprep.subr.bf16.mxu0 0
        %4704 = vmatpush1.bf16.msra.mxu0 %v4686
        %4705 = vmatprep.subr.bf16.mxu0 0
        %4706 = vmatpush1.bf16.msra.mxu0 %v4687
        %4707 = vmatprep.subr.bf16.mxu0 0
        %4708 = vmatpush1.bf16.msra.mxu0 %v4688
        %4709 = vmatprep.subr.bf16.mxu0 0
        %4710 = vmatpush1.bf16.msra.mxu0 %v4689
        %4711 = vmatprep.subr.bf16.mxu0 0
        %4712 = vmatpush1.bf16.msra.mxu0 %v4690
        %4713 = vmatprep.subr.bf16.mxu0 0
        %4714 = vmatpush1.bf16.msra.mxu0 %v4691
        %4715 = vmatprep.subr.bf16.mxu0 0
        %4716 = vmatpush1.bf16.msra.mxu0 %v4692
        %4717 = vmatprep.subr.bf16.mxu0 0
        %4718 = vmatpush1.bf16.msra.mxu0 0
        %4719 = vmatprep.subr.bf16.mxu0 0
        %4720 = vmatpush1.bf16.msra.mxu0 0
        %4721 = vmatprep.subr.bf16.mxu0 0
        %4722 = vmatpush1.bf16.msra.mxu0 0
        %4723 = vmatprep.subr.bf16.mxu0 0
        %4724 = vmatpush1.bf16.msra.mxu0 0
        %4725 = vmatprep.subr.bf16.mxu0 0
        %4726 = vmatpush1.bf16.msra.mxu0 0
        %4727 = vmatprep.subr.bf16.mxu0 0
        %4728 = vmatpush1.bf16.msra.mxu0 0
        %4729 = vmatprep.subr.bf16.mxu0 0
        %4730 = vmatpush1.bf16.msra.mxu0 0
        %4731 = vmatprep.subr.bf16.mxu0 0
        %4732 = vmatpush1.bf16.msra.mxu0 0
        %4733 = vmatprep.mubr.bf16.mxu0 0
        %4734 = vmatmul.mubr.bf16.gmra.mrb[0].mxu0 %v4472
        %v4735 = vpop.f32.mrb[0].mxu0
        %v4736 = vadd.f32 %v4610, %v4735
        %v4737 = vpop.f32.mrb[0].mxu0
        %v4738 = vpop.f32.mrb[0].mxu0
        %v4739 = vadd.f32 %v4613, %v4738
        %v4740 = vpop.f32.mrb[0].mxu0
        %4741 = vmatprep.mubr.bf16.mxu0 0
        %4742 = vmatmul.mubr.bf16.gmra.mrb[0].mxu0 %v4473
        %v4743 = vpop.f32.mrb[0].mxu0
        %v4744 = vadd.f32 %v4618, %v4743
        %v4745 = vpop.f32.mrb[0].mxu0
        %v4746 = vpop.f32.mrb[0].mxu0
        %v4747 = vadd.f32 %v4621, %v4746
        %v4748 = vpop.f32.mrb[0].mxu0
        %4749 = vmatprep.mubr.bf16.mxu0 0
        %4750 = vmatmul.mubr.bf16.gmra.mrb[0].mxu0 %v4474
        %v4751 = vpop.f32.mrb[0].mxu0
        %v4752 = vadd.f32 %v4626, %v4751
        %v4753 = vpop.f32.mrb[0].mxu0
        %v4754 = vpop.f32.mrb[0].mxu0
        %v4755 = vadd.f32 %v4629, %v4754
        %v4756 = vpop.f32.mrb[0].mxu0
        %4757 = vmatprep.mubr.bf16.mxu0 0
        %4758 = vmatmul.mubr.bf16.gmra.mrb[0].mxu0 %v4475
        %v4759 = vpop.f32.mrb[0].mxu0
        %v4760 = vadd.f32 %v4634, %v4759
        %v4761 = vpop.f32.mrb[0].mxu0
        %v4762 = vpop.f32.mrb[0].mxu0
        %v4763 = vadd.f32 %v4637, %v4762
        %v4764 = vpop.f32.mrb[0].mxu0
        %4765 = vmatprep.mubr.bf16.mxu0 0
        %4766 = vmatmul.mubr.bf16.gmra.mrb[0].mxu0 %v4476
        %v4767 = vpop.f32.mrb[0].mxu0
        %v4768 = vadd.f32 %v4642, %v4767
        %v4769 = vpop.f32.mrb[0].mxu0
        %v4770 = vpop.f32.mrb[0].mxu0
        %v4771 = vadd.f32 %v4645, %v4770
        %v4772 = vpop.f32.mrb[0].mxu0
        %4773 = vdwg.mxu0
        %s4774 = scalar_lea.vmem [#allocation12], 64
        %v4775 = vld [vmem:[%s4774] sm:$0xf]
        %v4776 = vld [vmem:[%s4774 + $0x4] sm:$0xf]
        %v4777 = vld [vmem:[%s4774 + $0x8] sm:$0xf]
        %v4778 = vld [vmem:[%s4774 + $0xc] sm:$0xf]
        %v4779 = vld [vmem:[%s4774 + $0x10] sm:$0xf]
        %v4780 = vld [vmem:[%s4774 + $0x14] sm:$0xf]
        %v4781 = vld [vmem:[%s4774 + $0x18] sm:$0xf]
        %v4782 = vld [vmem:[%s4774 + $0x1c] sm:$0xf]
        %v4783 = vld [vmem:[%s4774 + $0x20] sm:$0xf]
        %v4784 = vld [vmem:[%s4774 + $0x24] sm:$0xf]
        %v4785 = vld [vmem:[%s4774 + $0x28] sm:$0xf]
        %v4786 = vld [vmem:[%s4774 + $0x2c] sm:$0xf]
        %v4787 = vld [vmem:[%s4774 + $0x30] sm:$0xf]
        %v4788 = vld [vmem:[%s4774 + $0x34] sm:$0xf]
        %v4789 = vld [vmem:[%s4774 + $0x38] sm:$0xf]
        %v4790 = vld [vmem:[%s4774 + $0x3c] sm:$0xf]
        %v4791 = vunpack.c.h.b16 %v4390
        %v4792 = vunpack.c.h.b16 %v4391
        %v4793 = vunpack.c.h.b16 %v4392
        %v4794 = vunpack.c.h.b16 %v4393
        %v4795 = vunpack.c.h.b16 %v4394
        %v4796 = vunpack.c.h.b16 %v4395
        %v4797 = vunpack.c.h.b16 %v4396
        %v4798 = vunpack.c.h.b16 %v4397
        %v4799 = vunpack.c.h.b16 %v4398
        %v4800 = vunpack.c.h.b16 %v4399
        %v4801 = vunpack.c.h.b16 %v4432
        %v4802 = vpack.c.b16 %v4792, %v4791
        %v4803 = vpack.c.b16 %v4794, %v4793
        %v4804 = vpack.c.b16 %v4796, %v4795
        %v4805 = vpack.c.b16 %v4798, %v4797
        %v4806 = vpack.c.b16 %v4800, %v4799
        %v4807 = vpack.c.b16 %v4801, %v4801
        %v4809 = vshrl.u32 %v4802, 16
        %v4811 = vshll.u32 %v4802, 16
        %v4813 = vrot.slane %v4811, 1
        %v4814 = vor.u32 %v4809, %v4813
        %v4816 = vshll.u32 %v4803, 16
        %v4818 = vrot.slane %v4816, 1
        %v4819 = vsel %vm722, %v4814, %v4818
        %v4820 = vshrl.u32 %v4803, 16
        %v4822 = vor.u32 %v4820, %v4818
        %v4824 = vshll.u32 %v4804, 16
        %v4826 = vrot.slane %v4824, 1
        %v4827 = vsel %vm722, %v4822, %v4826
        %v4828 = vshrl.u32 %v4804, 16
        %v4830 = vor.u32 %v4828, %v4826
        %v4832 = vshll.u32 %v4805, 16
        %v4834 = vrot.slane %v4832, 1
        %v4835 = vsel %vm722, %v4830, %v4834
        %v4836 = vshrl.u32 %v4805, 16
        %v4838 = vor.u32 %v4836, %v4834
        %v4840 = vshll.u32 %v4806, 16
        %v4842 = vrot.slane %v4840, 1
        %v4843 = vsel %vm722, %v4838, %v4842
        %v4844 = vshrl.u32 %v4806, 16
        %v4846 = vor.u32 %v4844, %v4842
        %v4848 = vshll.u32 %v4807, 16
        %v4850 = vrot.slane %v4848, 1
        %v4851 = vsel %vm722, %v4846, %v4850
        %v4873 = vunpack.c.l.b16 %v4775
        %v4874 = vunpack.c.l.b16 %v4776
        %v4875 = vunpack.c.l.b16 %v4777
        %v4876 = vunpack.c.l.b16 %v4778
        %v4877 = vunpack.c.l.b16 %v4779
        %v4878 = vunpack.c.l.b16 %v4780
        %v4879 = vunpack.c.l.b16 %v4781
        %v4880 = vunpack.c.l.b16 %v4782
        %v4881 = vunpack.c.l.b16 %v4783
        %v4882 = vunpack.c.l.b16 %v4784
        %v4883 = vunpack.c.l.b16 %v4785
        %v4884 = vunpack.c.l.b16 %v4786
        %v4885 = vunpack.c.l.b16 %v4787
        %v4886 = vunpack.c.l.b16 %v4788
        %v4887 = vunpack.c.l.b16 %v4789
        %v4888 = vunpack.c.l.b16 %v4790
        %v4889 = vpack.c.b16 %v4874, %v4873
        %v4890 = vpack.c.b16 %v4876, %v4875
        %v4891 = vpack.c.b16 %v4878, %v4877
        %v4892 = vpack.c.b16 %v4880, %v4879
        %v4893 = vpack.c.b16 %v4882, %v4881
        %v4894 = vpack.c.b16 %v4884, %v4883
        %v4895 = vpack.c.b16 %v4886, %v4885
        %v4896 = vpack.c.b16 %v4888, %v4887
        %4905 = vmatprep.subr.bf16.mxu0 0
        %4906 = vmatpush1.bf16.msra.mxu0 %v4889
        %4907 = vmatprep.subr.bf16.mxu0 0
        %4908 = vmatpush1.bf16.msra.mxu0 %v4890
        %4909 = vmatprep.subr.bf16.mxu0 0
        %4910 = vmatpush1.bf16.msra.mxu0 %v4891
        %4911 = vmatprep.subr.bf16.mxu0 0
        %4912 = vmatpush1.bf16.msra.mxu0 %v4892
        %4913 = vmatprep.subr.bf16.mxu0 0
        %4914 = vmatpush1.bf16.msra.mxu0 %v4893
        %4915 = vmatprep.subr.bf16.mxu0 0
        %4916 = vmatpush1.bf16.msra.mxu0 %v4894
        %4917 = vmatprep.subr.bf16.mxu0 0
        %4918 = vmatpush1.bf16.msra.mxu0 %v4895
        %4919 = vmatprep.subr.bf16.mxu0 0
        %4920 = vmatpush1.bf16.msra.mxu0 %v4896
        %4921 = vmatprep.subr.bf16.mxu0 0
        %4922 = vmatpush1.bf16.msra.mxu0 0
        %4923 = vmatprep.subr.bf16.mxu0 0
        %4924 = vmatpush1.bf16.msra.mxu0 0
        %4925 = vmatprep.subr.bf16.mxu0 0
        %4926 = vmatpush1.bf16.msra.mxu0 0
        %4927 = vmatprep.subr.bf16.mxu0 0
        %4928 = vmatpush1.bf16.msra.mxu0 0
        %4929 = vmatprep.subr.bf16.mxu0 0
        %4930 = vmatpush1.bf16.msra.mxu0 0
        %4931 = vmatprep.subr.bf16.mxu0 0
        %4932 = vmatpush1.bf16.msra.mxu0 0
        %4933 = vmatprep.subr.bf16.mxu0 0
        %4934 = vmatpush1.bf16.msra.mxu0 0
        %4935 = vmatprep.subr.bf16.mxu0 0
        %4936 = vmatpush1.bf16.msra.mxu0 0
        %4937 = vmatprep.mubr.bf16.mxu0 0
        %4938 = vmatmul.mubr.bf16.gmra.mrb[0].mxu0 %v4819
        %v4939 = vpop.f32.mrb[0].mxu0
        %v4940 = vadd.f32 0.0, %v4939
        %v4941 = vpop.f32.mrb[0].mxu0
        %v4942 = vpop.f32.mrb[0].mxu0
        %v4943 = vadd.f32 0.0, %v4942
        %v4944 = vpop.f32.mrb[0].mxu0
        %4945 = vmatprep.mubr.bf16.mxu0 0
        %4946 = vmatmul.mubr.bf16.gmra.mrb[0].mxu0 %v4827
        %v4947 = vpop.f32.mrb[0].mxu0
        %v4948 = vadd.f32 0.0, %v4947
        %v4949 = vpop.f32.mrb[0].mxu0
        %v4950 = vpop.f32.mrb[0].mxu0
        %v4951 = vadd.f32 0.0, %v4950
        %v4952 = vpop.f32.mrb[0].mxu0
        %4953 = vmatprep.mubr.bf16.mxu0 0
        %4954 = vmatmul.mubr.bf16.gmra.mrb[0].mxu0 %v4835
        %v4955 = vpop.f32.mrb[0].mxu0
        %v4956 = vadd.f32 0.0, %v4955
        %v4957 = vpop.f32.mrb[0].mxu0
        %v4958 = vpop.f32.mrb[0].mxu0
        %v4959 = vadd.f32 0.0, %v4958
        %v4960 = vpop.f32.mrb[0].mxu0
        %4961 = vmatprep.mubr.bf16.mxu0 0
        %4962 = vmatmul.mubr.bf16.gmra.mrb[0].mxu0 %v4843
        %v4963 = vpop.f32.mrb[0].mxu0
        %v4964 = vadd.f32 0.0, %v4963
        %v4965 = vpop.f32.mrb[0].mxu0
        %v4966 = vpop.f32.mrb[0].mxu0
        %v4967 = vadd.f32 0.0, %v4966
        %v4968 = vpop.f32.mrb[0].mxu0
        %4969 = vmatprep.mubr.bf16.mxu0 0
        %4970 = vmatmul.mubr.bf16.gmra.mrb[0].mxu0 %v4851
        %v4971 = vpop.f32.mrb[0].mxu0
        %v4972 = vadd.f32 0.0, %v4971
        %v4973 = vpop.f32.mrb[0].mxu0
        %v4974 = vpop.f32.mrb[0].mxu0
        %v4975 = vadd.f32 0.0, %v4974
        %v4976 = vpop.f32.mrb[0].mxu0
        %4977 = vdwg.mxu0
        %v4999 = vunpack.c.l.b16 %v4416
        %v5000 = vunpack.c.l.b16 %v4417
        %v5001 = vunpack.c.l.b16 %v4418
        %v5002 = vunpack.c.l.b16 %v4419
        %v5003 = vunpack.c.l.b16 %v4420
        %v5004 = vunpack.c.l.b16 %v4421
        %v5005 = vunpack.c.l.b16 %v4422
        %v5006 = vunpack.c.l.b16 %v4423
        %v5007 = vunpack.c.l.b16 %v4424
        %v5008 = vunpack.c.l.b16 %v4425
        %v5009 = vunpack.c.l.b16 %v4426
        %v5010 = vunpack.c.l.b16 %v4427
        %v5011 = vunpack.c.l.b16 %v4428
        %v5012 = vunpack.c.l.b16 %v4429
        %v5013 = vunpack.c.l.b16 %v4430
        %v5014 = vunpack.c.l.b16 %v4431
        %v5015 = vpack.c.b16 %v5000, %v4999
        %v5016 = vpack.c.b16 %v5002, %v5001
        %v5017 = vpack.c.b16 %v5004, %v5003
        %v5018 = vpack.c.b16 %v5006, %v5005
        %v5019 = vpack.c.b16 %v5008, %v5007
        %v5020 = vpack.c.b16 %v5010, %v5009
        %v5021 = vpack.c.b16 %v5012, %v5011
        %v5022 = vpack.c.b16 %v5014, %v5013
        %5031 = vmatprep.subr.bf16.mxu0 0
        %5032 = vmatpush1.bf16.msra.mxu0 %v5015
        %5033 = vmatprep.subr.bf16.mxu0 0
        %5034 = vmatpush1.bf16.msra.mxu0 %v5016
        %5035 = vmatprep.subr.bf16.mxu0 0
        %5036 = vmatpush1.bf16.msra.mxu0 %v5017
        %5037 = vmatprep.subr.bf16.mxu0 0
        %5038 = vmatpush1.bf16.msra.mxu0 %v5018
        %5039 = vmatprep.subr.bf16.mxu0 0
        %5040 = vmatpush1.bf16.msra.mxu0 %v5019
        %5041 = vmatprep.subr.bf16.mxu0 0
        %5042 = vmatpush1.bf16.msra.mxu0 %v5020
        %5043 = vmatprep.subr.bf16.mxu0 0
        %5044 = vmatpush1.bf16.msra.mxu0 %v5021
        %5045 = vmatprep.subr.bf16.mxu0 0
        %5046 = vmatpush1.bf16.msra.mxu0 %v5022
        %5047 = vmatprep.subr.bf16.mxu0 0
        %5048 = vmatpush1.bf16.msra.mxu0 0
        %5049 = vmatprep.subr.bf16.mxu0 0
        %5050 = vmatpush1.bf16.msra.mxu0 0
        %5051 = vmatprep.subr.bf16.mxu0 0
        %5052 = vmatpush1.bf16.msra.mxu0 0
        %5053 = vmatprep.subr.bf16.mxu0 0
        %5054 = vmatpush1.bf16.msra.mxu0 0
        %5055 = vmatprep.subr.bf16.mxu0 0
        %5056 = vmatpush1.bf16.msra.mxu0 0
        %5057 = vmatprep.subr.bf16.mxu0 0
        %5058 = vmatpush1.bf16.msra.mxu0 0
        %5059 = vmatprep.subr.bf16.mxu0 0
        %5060 = vmatpush1.bf16.msra.mxu0 0
        %5061 = vmatprep.subr.bf16.mxu0 0
        %5062 = vmatpush1.bf16.msra.mxu0 0
        %5063 = vmatprep.mubr.bf16.mxu0 0
        %5064 = vmatmul.mubr.bf16.gmra.mrb[0].mxu0 %v4802
        %v5065 = vpop.f32.mrb[0].mxu0
        %v5066 = vadd.f32 %v4940, %v5065
        %v5067 = vpop.f32.mrb[0].mxu0
        %v5068 = vpop.f32.mrb[0].mxu0
        %v5069 = vadd.f32 %v4943, %v5068
        %v5070 = vpop.f32.mrb[0].mxu0
        %5071 = vmatprep.mubr.bf16.mxu0 0
        %5072 = vmatmul.mubr.bf16.gmra.mrb[0].mxu0 %v4803
        %v5073 = vpop.f32.mrb[0].mxu0
        %v5074 = vadd.f32 %v4948, %v5073
        %v5075 = vpop.f32.mrb[0].mxu0
        %v5076 = vpop.f32.mrb[0].mxu0
        %v5077 = vadd.f32 %v4951, %v5076
        %v5078 = vpop.f32.mrb[0].mxu0
        %5079 = vmatprep.mubr.bf16.mxu0 0
        %5080 = vmatmul.mubr.bf16.gmra.mrb[0].mxu0 %v4804
        %v5081 = vpop.f32.mrb[0].mxu0
        %v5082 = vadd.f32 %v4956, %v5081
        %v5083 = vpop.f32.mrb[0].mxu0
        %v5084 = vpop.f32.mrb[0].mxu0
        %v5085 = vadd.f32 %v4959, %v5084
        %v5086 = vpop.f32.mrb[0].mxu0
        %5087 = vmatprep.mubr.bf16.mxu0 0
        %5088 = vmatmul.mubr.bf16.gmra.mrb[0].mxu0 %v4805
        %v5089 = vpop.f32.mrb[0].mxu0
        %v5090 = vadd.f32 %v4964, %v5089
        %v5091 = vpop.f32.mrb[0].mxu0
        %v5092 = vpop.f32.mrb[0].mxu0
        %v5093 = vadd.f32 %v4967, %v5092
        %v5094 = vpop.f32.mrb[0].mxu0
        %5095 = vmatprep.mubr.bf16.mxu0 0
        %5096 = vmatmul.mubr.bf16.gmra.mrb[0].mxu0 %v4806
        %v5097 = vpop.f32.mrb[0].mxu0
        %v5098 = vadd.f32 %v4972, %v5097
        %v5099 = vpop.f32.mrb[0].mxu0
        %v5100 = vpop.f32.mrb[0].mxu0
        %v5101 = vadd.f32 %v4975, %v5100
        %v5102 = vpop.f32.mrb[0].mxu0
        %5103 = vdwg.mxu0
        %v5104 = vld [vmem:[#allocation2] sm:$0xee]
        %s5105 = scalar_lea.vmem [#allocation10], 128
        %v5106 = vld [vmem:[%s5105] sm:$0xf]
        %v5107 = vld [vmem:[%s5105 + $0x4] sm:$0xf]
        %v5108 = vld [vmem:[%s5105 + $0x8] sm:$0xf]
        %v5109 = vld [vmem:[%s5105 + $0xc] sm:$0xf]
        %v5110 = vld [vmem:[%s5105 + $0x10] sm:$0xf]
        %v5111 = vld [vmem:[%s5105 + $0x14] sm:$0xf]
        %v5112 = vld [vmem:[%s5105 + $0x18] sm:$0xf]
        %v5113 = vld [vmem:[%s5105 + $0x1c] sm:$0xf]
        %v5114 = vld [vmem:[%s5105 + $0x20] sm:$0xf]
        %v5115 = vld [vmem:[%s5105 + $0x24] sm:$0xf]
        %v5116 = vld [vmem:[%s5105 + $0x28] sm:$0xf]
        %v5117 = vld [vmem:[%s5105 + $0x2c] sm:$0xf]
        %v5118 = vld [vmem:[%s5105 + $0x30] sm:$0xf]
        %v5119 = vld [vmem:[%s5105 + $0x34] sm:$0xf]
        %v5120 = vld [vmem:[%s5105 + $0x38] sm:$0xf]
        %v5121 = vld [vmem:[%s5105 + $0x3c] sm:$0xf]
        %v5123 = vunpack.c.l.b16 %v5104
        %v5124 = vpack.c.b16 %v4462, %v5123
        %v5125 = vrot.slane %v5124, 1
        %v5126 = vrot.slane %v4473, 1
        %v5127 = vsel %vm1124, %v5125, %v5126
        %v5128 = vrot.slane %v4474, 1
        %v5129 = vsel %vm1124, %v5126, %v5128
        %v5130 = vrot.slane %v4475, 1
        %v5131 = vsel %vm1124, %v5128, %v5130
        %v5132 = vrot.slane %v4476, 1
        %v5133 = vsel %vm1124, %v5130, %v5132
        %v5134 = vrot.slane %v4477, 1
        %v5135 = vsel %vm1124, %v5132, %v5134
        %v5157 = vunpack.c.l.b16 %v5106
        %v5158 = vunpack.c.l.b16 %v5107
        %v5159 = vunpack.c.l.b16 %v5108
        %v5160 = vunpack.c.l.b16 %v5109
        %v5161 = vunpack.c.l.b16 %v5110
        %v5162 = vunpack.c.l.b16 %v5111
        %v5163 = vunpack.c.l.b16 %v5112
        %v5164 = vunpack.c.l.b16 %v5113
        %v5165 = vunpack.c.l.b16 %v5114
        %v5166 = vunpack.c.l.b16 %v5115
        %v5167 = vunpack.c.l.b16 %v5116
        %v5168 = vunpack.c.l.b16 %v5117
        %v5169 = vunpack.c.l.b16 %v5118
        %v5170 = vunpack.c.l.b16 %v5119
        %v5171 = vunpack.c.l.b16 %v5120
        %v5172 = vunpack.c.l.b16 %v5121
        %v5173 = vpack.c.b16 %v5158, %v5157
        %v5174 = vpack.c.b16 %v5160, %v5159
        %v5175 = vpack.c.b16 %v5162, %v5161
        %v5176 = vpack.c.b16 %v5164, %v5163
        %v5177 = vpack.c.b16 %v5166, %v5165
        %v5178 = vpack.c.b16 %v5168, %v5167
        %v5179 = vpack.c.b16 %v5170, %v5169
        %v5180 = vpack.c.b16 %v5172, %v5171
        %5189 = vmatprep.subr.bf16.mxu0 0
        %5190 = vmatpush1.bf16.msra.mxu0 %v5173
        %5191 = vmatprep.subr.bf16.mxu0 0
        %5192 = vmatpush1.bf16.msra.mxu0 %v5174
        %5193 = vmatprep.subr.bf16.mxu0 0
        %5194 = vmatpush1.bf16.msra.mxu0 %v5175
        %5195 = vmatprep.subr.bf16.mxu0 0
        %5196 = vmatpush1.bf16.msra.mxu0 %v5176
        %5197 = vmatprep.subr.bf16.mxu0 0
        %5198 = vmatpush1.bf16.msra.mxu0 %v5177
        %5199 = vmatprep.subr.bf16.mxu0 0
        %5200 = vmatpush1.bf16.msra.mxu0 %v5178
        %5201 = vmatprep.subr.bf16.mxu0 0
        %5202 = vmatpush1.bf16.msra.mxu0 %v5179
        %5203 = vmatprep.subr.bf16.mxu0 0
        %5204 = vmatpush1.bf16.msra.mxu0 %v5180
        %5205 = vmatprep.subr.bf16.mxu0 0
        %5206 = vmatpush1.bf16.msra.mxu0 0
        %5207 = vmatprep.subr.bf16.mxu0 0
        %5208 = vmatpush1.bf16.msra.mxu0 0
        %5209 = vmatprep.subr.bf16.mxu0 0
        %5210 = vmatpush1.bf16.msra.mxu0 0
        %5211 = vmatprep.subr.bf16.mxu0 0
        %5212 = vmatpush1.bf16.msra.mxu0 0
        %5213 = vmatprep.subr.bf16.mxu0 0
        %5214 = vmatpush1.bf16.msra.mxu0 0
        %5215 = vmatprep.subr.bf16.mxu0 0
        %5216 = vmatpush1.bf16.msra.mxu0 0
        %5217 = vmatprep.subr.bf16.mxu0 0
        %5218 = vmatpush1.bf16.msra.mxu0 0
        %5219 = vmatprep.subr.bf16.mxu0 0
        %5220 = vmatpush1.bf16.msra.mxu0 0
        %5221 = vmatprep.mubr.bf16.mxu0 0
        %5222 = vmatmul.mubr.bf16.gmra.mrb[0].mxu0 %v5127
        %v5223 = vpop.f32.mrb[0].mxu0
        %v5224 = vadd.f32 0.0, %v5223
        %v5225 = vpop.f32.mrb[0].mxu0
        %v5226 = vpop.f32.mrb[0].mxu0
        %v5227 = vadd.f32 0.0, %v5226
        %v5228 = vpop.f32.mrb[0].mxu0
        %5229 = vmatprep.mubr.bf16.mxu0 0
        %5230 = vmatmul.mubr.bf16.gmra.mrb[0].mxu0 %v5129
        %v5231 = vpop.f32.mrb[0].mxu0
        %v5232 = vadd.f32 0.0, %v5231
        %v5233 = vpop.f32.mrb[0].mxu0
        %v5234 = vpop.f32.mrb[0].mxu0
        %v5235 = vadd.f32 0.0, %v5234
        %v5236 = vpop.f32.mrb[0].mxu0
        %5237 = vmatprep.mubr.bf16.mxu0 0
        %5238 = vmatmul.mubr.bf16.gmra.mrb[0].mxu0 %v5131
        %v5239 = vpop.f32.mrb[0].mxu0
        %v5240 = vadd.f32 0.0, %v5239
        %v5241 = vpop.f32.mrb[0].mxu0
        %v5242 = vpop.f32.mrb[0].mxu0
        %v5243 = vadd.f32 0.0, %v5242
        %v5244 = vpop.f32.mrb[0].mxu0
        %5245 = vmatprep.mubr.bf16.mxu0 0
        %5246 = vmatmul.mubr.bf16.gmra.mrb[0].mxu0 %v5133
        %v5247 = vpop.f32.mrb[0].mxu0
        %v5248 = vadd.f32 0.0, %v5247
        %v5249 = vpop.f32.mrb[0].mxu0
        %v5250 = vpop.f32.mrb[0].mxu0
        %v5251 = vadd.f32 0.0, %v5250
        %v5252 = vpop.f32.mrb[0].mxu0
        %5253 = vmatprep.mubr.bf16.mxu0 0
        %5254 = vmatmul.mubr.bf16.gmra.mrb[0].mxu0 %v5135
        %v5255 = vpop.f32.mrb[0].mxu0
        %v5256 = vadd.f32 0.0, %v5255
        %v5257 = vpop.f32.mrb[0].mxu0
        %v5258 = vpop.f32.mrb[0].mxu0
        %v5259 = vadd.f32 0.0, %v5258
        %v5260 = vpop.f32.mrb[0].mxu0
        %5261 = vdwg.mxu0
        %v5262 = vadd.f32 %v4736, %v5224
        %v5263 = vadd.f32 %v4739, %v5227
        %v5264 = vadd.f32 %v4744, %v5232
        %v5265 = vadd.f32 %v4747, %v5235
        %v5266 = vadd.f32 %v4752, %v5240
        %v5267 = vadd.f32 %v4755, %v5243
        %v5268 = vadd.f32 %v4760, %v5248
        %v5269 = vadd.f32 %v4763, %v5251
        %v5270 = vadd.f32 %v4768, %v5256
        %v5271 = vadd.f32 %v4771, %v5259
        %s5272 = scalar_lea.vmem [#allocation12], 128
        %v5273 = vld [vmem:[%s5272] sm:$0xf]
        %v5274 = vld [vmem:[%s5272 + $0x4] sm:$0xf]
        %v5275 = vld [vmem:[%s5272 + $0x8] sm:$0xf]
        %v5276 = vld [vmem:[%s5272 + $0xc] sm:$0xf]
        %v5277 = vld [vmem:[%s5272 + $0x10] sm:$0xf]
        %v5278 = vld [vmem:[%s5272 + $0x14] sm:$0xf]
        %v5279 = vld [vmem:[%s5272 + $0x18] sm:$0xf]
        %v5280 = vld [vmem:[%s5272 + $0x1c] sm:$0xf]
        %v5281 = vld [vmem:[%s5272 + $0x20] sm:$0xf]
        %v5282 = vld [vmem:[%s5272 + $0x24] sm:$0xf]
        %v5283 = vld [vmem:[%s5272 + $0x28] sm:$0xf]
        %v5284 = vld [vmem:[%s5272 + $0x2c] sm:$0xf]
        %v5285 = vld [vmem:[%s5272 + $0x30] sm:$0xf]
        %v5286 = vld [vmem:[%s5272 + $0x34] sm:$0xf]
        %v5287 = vld [vmem:[%s5272 + $0x38] sm:$0xf]
        %v5288 = vld [vmem:[%s5272 + $0x3c] sm:$0xf]
        %v5289 = vunpack.c.h.b16 %v5104
        %v5290 = vpack.c.b16 %v4792, %v5289
        %v5291 = vrot.slane %v5290, 1
        %v5292 = vrot.slane %v4803, 1
        %v5293 = vsel %vm1124, %v5291, %v5292
        %v5294 = vrot.slane %v4804, 1
        %v5295 = vsel %vm1124, %v5292, %v5294
        %v5296 = vrot.slane %v4805, 1
        %v5297 = vsel %vm1124, %v5294, %v5296
        %v5298 = vrot.slane %v4806, 1
        %v5299 = vsel %vm1124, %v5296, %v5298
        %v5300 = vrot.slane %v4807, 1
        %v5301 = vsel %vm1124, %v5298, %v5300
        %v5323 = vunpack.c.l.b16 %v5273
        %v5324 = vunpack.c.l.b16 %v5274
        %v5325 = vunpack.c.l.b16 %v5275
        %v5326 = vunpack.c.l.b16 %v5276
        %v5327 = vunpack.c.l.b16 %v5277
        %v5328 = vunpack.c.l.b16 %v5278
        %v5329 = vunpack.c.l.b16 %v5279
        %v5330 = vunpack.c.l.b16 %v5280
        %v5331 = vunpack.c.l.b16 %v5281
        %v5332 = vunpack.c.l.b16 %v5282
        %v5333 = vunpack.c.l.b16 %v5283
        %v5334 = vunpack.c.l.b16 %v5284
        %v5335 = vunpack.c.l.b16 %v5285
        %v5336 = vunpack.c.l.b16 %v5286
        %v5337 = vunpack.c.l.b16 %v5287
        %v5338 = vunpack.c.l.b16 %v5288
        %v5339 = vpack.c.b16 %v5324, %v5323
        %v5340 = vpack.c.b16 %v5326, %v5325
        %v5341 = vpack.c.b16 %v5328, %v5327
        %v5342 = vpack.c.b16 %v5330, %v5329
        %v5343 = vpack.c.b16 %v5332, %v5331
        %v5344 = vpack.c.b16 %v5334, %v5333
        %v5345 = vpack.c.b16 %v5336, %v5335
        %v5346 = vpack.c.b16 %v5338, %v5337
        %5355 = vmatprep.subr.bf16.mxu0 0
        %5356 = vmatpush1.bf16.msra.mxu0 %v5339
        %5357 = vmatprep.subr.bf16.mxu0 0
        %5358 = vmatpush1.bf16.msra.mxu0 %v5340
        %5359 = vmatprep.subr.bf16.mxu0 0
        %5360 = vmatpush1.bf16.msra.mxu0 %v5341
        %5361 = vmatprep.subr.bf16.mxu0 0
        %5362 = vmatpush1.bf16.msra.mxu0 %v5342
        %5363 = vmatprep.subr.bf16.mxu0 0
        %5364 = vmatpush1.bf16.msra.mxu0 %v5343
        %5365 = vmatprep.subr.bf16.mxu0 0
        %5366 = vmatpush1.bf16.msra.mxu0 %v5344
        %5367 = vmatprep.subr.bf16.mxu0 0
        %5368 = vmatpush1.bf16.msra.mxu0 %v5345
        %5369 = vmatprep.subr.bf16.mxu0 0
        %5370 = vmatpush1.bf16.msra.mxu0 %v5346
        %5371 = vmatprep.subr.bf16.mxu0 0
        %5372 = vmatpush1.bf16.msra.mxu0 0
        %5373 = vmatprep.subr.bf16.mxu0 0
        %5374 = vmatpush1.bf16.msra.mxu0 0
        %5375 = vmatprep.subr.bf16.mxu0 0
        %5376 = vmatpush1.bf16.msra.mxu0 0
        %5377 = vmatprep.subr.bf16.mxu0 0
        %5378 = vmatpush1.bf16.msra.mxu0 0
        %5379 = vmatprep.subr.bf16.mxu0 0
        %5380 = vmatpush1.bf16.msra.mxu0 0
        %5381 = vmatprep.subr.bf16.mxu0 0
        %5382 = vmatpush1.bf16.msra.mxu0 0
        %5383 = vmatprep.subr.bf16.mxu0 0
        %5384 = vmatpush1.bf16.msra.mxu0 0
        %5385 = vmatprep.subr.bf16.mxu0 0
        %5386 = vmatpush1.bf16.msra.mxu0 0
        %5387 = vmatprep.mubr.bf16.mxu0 0
        %5388 = vmatmul.mubr.bf16.gmra.mrb[0].mxu0 %v5293
        %v5389 = vpop.f32.mrb[0].mxu0
        %v5390 = vadd.f32 0.0, %v5389
        %v5391 = vpop.f32.mrb[0].mxu0
        %v5392 = vpop.f32.mrb[0].mxu0
        %v5393 = vadd.f32 0.0, %v5392
        %v5394 = vpop.f32.mrb[0].mxu0
        %5395 = vmatprep.mubr.bf16.mxu0 0
        %5396 = vmatmul.mubr.bf16.gmra.mrb[0].mxu0 %v5295
        %v5397 = vpop.f32.mrb[0].mxu0
        %v5398 = vadd.f32 0.0, %v5397
        %v5399 = vpop.f32.mrb[0].mxu0
        %v5400 = vpop.f32.mrb[0].mxu0
        %v5401 = vadd.f32 0.0, %v5400
        %v5402 = vpop.f32.mrb[0].mxu0
        %5403 = vmatprep.mubr.bf16.mxu0 0
        %5404 = vmatmul.mubr.bf16.gmra.mrb[0].mxu0 %v5297
        %v5405 = vpop.f32.mrb[0].mxu0
        %v5406 = vadd.f32 0.0, %v5405
        %v5407 = vpop.f32.mrb[0].mxu0
        %v5408 = vpop.f32.mrb[0].mxu0
        %v5409 = vadd.f32 0.0, %v5408
        %v5410 = vpop.f32.mrb[0].mxu0
        %5411 = vmatprep.mubr.bf16.mxu0 0
        %5412 = vmatmul.mubr.bf16.gmra.mrb[0].mxu0 %v5299
        %v5413 = vpop.f32.mrb[0].mxu0
        %v5414 = vadd.f32 0.0, %v5413
        %v5415 = vpop.f32.mrb[0].mxu0
        %v5416 = vpop.f32.mrb[0].mxu0
        %v5417 = vadd.f32 0.0, %v5416
        %v5418 = vpop.f32.mrb[0].mxu0
        %5419 = vmatprep.mubr.bf16.mxu0 0
        %5420 = vmatmul.mubr.bf16.gmra.mrb[0].mxu0 %v5301
        %v5421 = vpop.f32.mrb[0].mxu0
        %v5422 = vadd.f32 0.0, %v5421
        %v5423 = vpop.f32.mrb[0].mxu0
        %v5424 = vpop.f32.mrb[0].mxu0
        %v5425 = vadd.f32 0.0, %v5424
        %v5426 = vpop.f32.mrb[0].mxu0
        %5427 = vdwg.mxu0
        %v5428 = vadd.f32 %v5066, %v5390
        %v5429 = vadd.f32 %v5069, %v5393
        %v5430 = vadd.f32 %v5074, %v5398
        %v5431 = vadd.f32 %v5077, %v5401
        %v5432 = vadd.f32 %v5082, %v5406
        %v5433 = vadd.f32 %v5085, %v5409
        %v5434 = vadd.f32 %v5090, %v5414
        %v5435 = vadd.f32 %v5093, %v5417
        %v5436 = vadd.f32 %v5098, %v5422
        %v5437 = vadd.f32 %v5101, %v5425
        %v5438 = vld [vmem:[#allocation2 + $0x8] sm:$0xee]
        %v5439 = vld [vmem:[#allocation2 + $0x10] sm:$0xff]
        %v5440 = vld [vmem:[#allocation2 + $0x18] sm:$0xff]
        %v5441 = vld [vmem:[#allocation2 + $0x20] sm:$0xff]
        %v5442 = vld [vmem:[#allocation2 + $0x28] sm:$0xff]
        %v5443 = vld [vmem:[#allocation2 + $0x30] sm:$0xff]
        %v5444 = vld [vmem:[#allocation2 + $0x38] sm:$0xff]
        %v5445 = vld [vmem:[#allocation2 + $0x40] sm:$0xff]
        %v5446 = vld [vmem:[#allocation2 + $0x48] sm:$0xff]
        %v5447 = vld [vmem:[#allocation2 + $0x50] sm:$0xff]
        %v5448 = vld [vmem:[#allocation2 + $0x58] sm:$0x11]
        %s5449 = scalar_lea.vmem [#allocation10], 192
        %v5450 = vld [vmem:[%s5449] sm:$0xf]
        %v5451 = vld [vmem:[%s5449 + $0x4] sm:$0xf]
        %v5452 = vld [vmem:[%s5449 + $0x8] sm:$0xf]
        %v5453 = vld [vmem:[%s5449 + $0xc] sm:$0xf]
        %v5454 = vld [vmem:[%s5449 + $0x10] sm:$0xf]
        %v5455 = vld [vmem:[%s5449 + $0x14] sm:$0xf]
        %v5456 = vld [vmem:[%s5449 + $0x18] sm:$0xf]
        %v5457 = vld [vmem:[%s5449 + $0x1c] sm:$0xf]
        %v5458 = vld [vmem:[%s5449 + $0x20] sm:$0xf]
        %v5459 = vld [vmem:[%s5449 + $0x24] sm:$0xf]
        %v5460 = vld [vmem:[%s5449 + $0x28] sm:$0xf]
        %v5461 = vld [vmem:[%s5449 + $0x2c] sm:$0xf]
        %v5462 = vld [vmem:[%s5449 + $0x30] sm:$0xf]
        %v5463 = vld [vmem:[%s5449 + $0x34] sm:$0xf]
        %v5464 = vld [vmem:[%s5449 + $0x38] sm:$0xf]
        %v5465 = vld [vmem:[%s5449 + $0x3c] sm:$0xf]
        %v5477 = vunpack.c.l.b16 %v5438
        %v5478 = vunpack.c.l.b16 %v5439
        %v5479 = vunpack.c.l.b16 %v5440
        %v5480 = vunpack.c.l.b16 %v5441
        %v5481 = vunpack.c.l.b16 %v5442
        %v5482 = vunpack.c.l.b16 %v5443
        %v5483 = vunpack.c.l.b16 %v5444
        %v5484 = vunpack.c.l.b16 %v5445
        %v5485 = vunpack.c.l.b16 %v5446
        %v5486 = vunpack.c.l.b16 %v5447
        %v5487 = vunpack.c.l.b16 %v5448
        %v5488 = vpack.c.b16 %v5478, %v5477
        %v5489 = vpack.c.b16 %v5480, %v5479
        %v5490 = vpack.c.b16 %v5482, %v5481
        %v5491 = vpack.c.b16 %v5484, %v5483
        %v5492 = vpack.c.b16 %v5486, %v5485
        %v5493 = vpack.c.b16 %v5487, %v5487
        %v5494 = vrot.slane %v5488, 1
        %v5495 = vrot.slane %v5489, 1
        %v5496 = vsel %vm1124, %v5494, %v5495
        %v5497 = vrot.slane %v5490, 1
        %v5498 = vsel %vm1124, %v5495, %v5497
        %v5499 = vrot.slane %v5491, 1
        %v5500 = vsel %vm1124, %v5497, %v5499
        %v5501 = vrot.slane %v5492, 1
        %v5502 = vsel %vm1124, %v5499, %v5501
        %v5503 = vrot.slane %v5493, 1
        %v5504 = vsel %vm1124, %v5501, %v5503
        %v5526 = vunpack.c.l.b16 %v5450
        %v5527 = vunpack.c.l.b16 %v5451
        %v5528 = vunpack.c.l.b16 %v5452
        %v5529 = vunpack.c.l.b16 %v5453
        %v5530 = vunpack.c.l.b16 %v5454
        %v5531 = vunpack.c.l.b16 %v5455
        %v5532 = vunpack.c.l.b16 %v5456
        %v5533 = vunpack.c.l.b16 %v5457
        %v5534 = vunpack.c.l.b16 %v5458
        %v5535 = vunpack.c.l.b16 %v5459
        %v5536 = vunpack.c.l.b16 %v5460
        %v5537 = vunpack.c.l.b16 %v5461
        %v5538 = vunpack.c.l.b16 %v5462
        %v5539 = vunpack.c.l.b16 %v5463
        %v5540 = vunpack.c.l.b16 %v5464
        %v5541 = vunpack.c.l.b16 %v5465
        %v5542 = vpack.c.b16 %v5527, %v5526
        %v5543 = vpack.c.b16 %v5529, %v5528
        %v5544 = vpack.c.b16 %v5531, %v5530
        %v5545 = vpack.c.b16 %v5533, %v5532
        %v5546 = vpack.c.b16 %v5535, %v5534
        %v5547 = vpack.c.b16 %v5537, %v5536
        %v5548 = vpack.c.b16 %v5539, %v5538
        %v5549 = vpack.c.b16 %v5541, %v5540
        %5558 = vmatprep.subr.bf16.mxu0 0
        %5559 = vmatpush1.bf16.msra.mxu0 %v5542
        %5560 = vmatprep.subr.bf16.mxu0 0
        %5561 = vmatpush1.bf16.msra.mxu0 %v5543
        %5562 = vmatprep.subr.bf16.mxu0 0
        %5563 = vmatpush1.bf16.msra.mxu0 %v5544
        %5564 = vmatprep.subr.bf16.mxu0 0
        %5565 = vmatpush1.bf16.msra.mxu0 %v5545
        %5566 = vmatprep.subr.bf16.mxu0 0
        %5567 = vmatpush1.bf16.msra.mxu0 %v5546
        %5568 = vmatprep.subr.bf16.mxu0 0
        %5569 = vmatpush1.bf16.msra.mxu0 %v5547
        %5570 = vmatprep.subr.bf16.mxu0 0
        %5571 = vmatpush1.bf16.msra.mxu0 %v5548
        %5572 = vmatprep.subr.bf16.mxu0 0
        %5573 = vmatpush1.bf16.msra.mxu0 %v5549
        %5574 = vmatprep.subr.bf16.mxu0 0
        %5575 = vmatpush1.bf16.msra.mxu0 0
        %5576 = vmatprep.subr.bf16.mxu0 0
        %5577 = vmatpush1.bf16.msra.mxu0 0
        %5578 = vmatprep.subr.bf16.mxu0 0
        %5579 = vmatpush1.bf16.msra.mxu0 0
        %5580 = vmatprep.subr.bf16.mxu0 0
        %5581 = vmatpush1.bf16.msra.mxu0 0
        %5582 = vmatprep.subr.bf16.mxu0 0
        %5583 = vmatpush1.bf16.msra.mxu0 0
        %5584 = vmatprep.subr.bf16.mxu0 0
        %5585 = vmatpush1.bf16.msra.mxu0 0
        %5586 = vmatprep.subr.bf16.mxu0 0
        %5587 = vmatpush1.bf16.msra.mxu0 0
        %5588 = vmatprep.subr.bf16.mxu0 0
        %5589 = vmatpush1.bf16.msra.mxu0 0
        %5590 = vmatprep.mubr.bf16.mxu0 0
        %5591 = vmatmul.mubr.bf16.gmra.mrb[0].mxu0 %v5496
        %v5592 = vpop.f32.mrb[0].mxu0
        %v5593 = vadd.f32 0.0, %v5592
        %v5594 = vpop.f32.mrb[0].mxu0
        %v5595 = vpop.f32.mrb[0].mxu0
        %v5596 = vadd.f32 0.0, %v5595
        %v5597 = vpop.f32.mrb[0].mxu0
        %5598 = vmatprep.mubr.bf16.mxu0 0
        %5599 = vmatmul.mubr.bf16.gmra.mrb[0].mxu0 %v5498
        %v5600 = vpop.f32.mrb[0].mxu0
        %v5601 = vadd.f32 0.0, %v5600
        %v5602 = vpop.f32.mrb[0].mxu0
        %v5603 = vpop.f32.mrb[0].mxu0
        %v5604 = vadd.f32 0.0, %v5603
        %v5605 = vpop.f32.mrb[0].mxu0
        %5606 = vmatprep.mubr.bf16.mxu0 0
        %5607 = vmatmul.mubr.bf16.gmra.mrb[0].mxu0 %v5500
        %v5608 = vpop.f32.mrb[0].mxu0
        %v5609 = vadd.f32 0.0, %v5608
        %v5610 = vpop.f32.mrb[0].mxu0
        %v5611 = vpop.f32.mrb[0].mxu0
        %v5612 = vadd.f32 0.0, %v5611
        %v5613 = vpop.f32.mrb[0].mxu0
        %5614 = vmatprep.mubr.bf16.mxu0 0
        %5615 = vmatmul.mubr.bf16.gmra.mrb[0].mxu0 %v5502
        %v5616 = vpop.f32.mrb[0].mxu0
        %v5617 = vadd.f32 0.0, %v5616
        %v5618 = vpop.f32.mrb[0].mxu0
        %v5619 = vpop.f32.mrb[0].mxu0
        %v5620 = vadd.f32 0.0, %v5619
        %v5621 = vpop.f32.mrb[0].mxu0
        %5622 = vmatprep.mubr.bf16.mxu0 0
        %5623 = vmatmul.mubr.bf16.gmra.mrb[0].mxu0 %v5504
        %v5624 = vpop.f32.mrb[0].mxu0
        %v5625 = vadd.f32 0.0, %v5624
        %v5626 = vpop.f32.mrb[0].mxu0
        %v5627 = vpop.f32.mrb[0].mxu0
        %v5628 = vadd.f32 0.0, %v5627
        %v5629 = vpop.f32.mrb[0].mxu0
        %5630 = vdwg.mxu0
        %v5631 = vadd.f32 %v5262, %v5593
        %v5632 = vadd.f32 %v5263, %v5596
        %v5633 = vadd.f32 %v5264, %v5601
        %v5634 = vadd.f32 %v5265, %v5604
        %v5635 = vadd.f32 %v5266, %v5609
        %v5636 = vadd.f32 %v5267, %v5612
        %v5637 = vadd.f32 %v5268, %v5617
        %v5638 = vadd.f32 %v5269, %v5620
        %v5639 = vadd.f32 %v5270, %v5625
        %v5640 = vadd.f32 %v5271, %v5628
        %s5641 = scalar_lea.vmem [#allocation12], 192
        %v5642 = vld [vmem:[%s5641] sm:$0xf]
        %v5643 = vld [vmem:[%s5641 + $0x4] sm:$0xf]
        %v5644 = vld [vmem:[%s5641 + $0x8] sm:$0xf]
        %v5645 = vld [vmem:[%s5641 + $0xc] sm:$0xf]
        %v5646 = vld [vmem:[%s5641 + $0x10] sm:$0xf]
        %v5647 = vld [vmem:[%s5641 + $0x14] sm:$0xf]
        %v5648 = vld [vmem:[%s5641 + $0x18] sm:$0xf]
        %v5649 = vld [vmem:[%s5641 + $0x1c] sm:$0xf]
        %v5650 = vld [vmem:[%s5641 + $0x20] sm:$0xf]
        %v5651 = vld [vmem:[%s5641 + $0x24] sm:$0xf]
        %v5652 = vld [vmem:[%s5641 + $0x28] sm:$0xf]
        %v5653 = vld [vmem:[%s5641 + $0x2c] sm:$0xf]
        %v5654 = vld [vmem:[%s5641 + $0x30] sm:$0xf]
        %v5655 = vld [vmem:[%s5641 + $0x34] sm:$0xf]
        %v5656 = vld [vmem:[%s5641 + $0x38] sm:$0xf]
        %v5657 = vld [vmem:[%s5641 + $0x3c] sm:$0xf]
        %v5658 = vunpack.c.h.b16 %v5438
        %v5659 = vunpack.c.h.b16 %v5439
        %v5660 = vunpack.c.h.b16 %v5440
        %v5661 = vunpack.c.h.b16 %v5441
        %v5662 = vunpack.c.h.b16 %v5442
        %v5663 = vunpack.c.h.b16 %v5443
        %v5664 = vunpack.c.h.b16 %v5444
        %v5665 = vunpack.c.h.b16 %v5445
        %v5666 = vunpack.c.h.b16 %v5446
        %v5667 = vunpack.c.h.b16 %v5447
        %v5668 = vunpack.c.h.b16 %v5448
        %v5669 = vpack.c.b16 %v5659, %v5658
        %v5670 = vpack.c.b16 %v5661, %v5660
        %v5671 = vpack.c.b16 %v5663, %v5662
        %v5672 = vpack.c.b16 %v5665, %v5664
        %v5673 = vpack.c.b16 %v5667, %v5666
        %v5674 = vpack.c.b16 %v5668, %v5668
        %v5675 = vrot.slane %v5669, 1
        %v5676 = vrot.slane %v5670, 1
        %v5677 = vsel %vm1124, %v5675, %v5676
        %v5678 = vrot.slane %v5671, 1
        %v5679 = vsel %vm1124, %v5676, %v5678
        %v5680 = vrot.slane %v5672, 1
        %v5681 = vsel %vm1124, %v5678, %v5680
        %v5682 = vrot.slane %v5673, 1
        %v5683 = vsel %vm1124, %v5680, %v5682
        %v5684 = vrot.slane %v5674, 1
        %v5685 = vsel %vm1124, %v5682, %v5684
        %v5707 = vunpack.c.l.b16 %v5642
        %v5708 = vunpack.c.l.b16 %v5643
        %v5709 = vunpack.c.l.b16 %v5644
        %v5710 = vunpack.c.l.b16 %v5645
        %v5711 = vunpack.c.l.b16 %v5646
        %v5712 = vunpack.c.l.b16 %v5647
        %v5713 = vunpack.c.l.b16 %v5648
        %v5714 = vunpack.c.l.b16 %v5649
        %v5715 = vunpack.c.l.b16 %v5650
        %v5716 = vunpack.c.l.b16 %v5651
        %v5717 = vunpack.c.l.b16 %v5652
        %v5718 = vunpack.c.l.b16 %v5653
        %v5719 = vunpack.c.l.b16 %v5654
        %v5720 = vunpack.c.l.b16 %v5655
        %v5721 = vunpack.c.l.b16 %v5656
        %v5722 = vunpack.c.l.b16 %v5657
        %v5723 = vpack.c.b16 %v5708, %v5707
        %v5724 = vpack.c.b16 %v5710, %v5709
        %v5725 = vpack.c.b16 %v5712, %v5711
        %v5726 = vpack.c.b16 %v5714, %v5713
        %v5727 = vpack.c.b16 %v5716, %v5715
        %v5728 = vpack.c.b16 %v5718, %v5717
        %v5729 = vpack.c.b16 %v5720, %v5719
        %v5730 = vpack.c.b16 %v5722, %v5721
        %5739 = vmatprep.subr.bf16.mxu0 0
        %5740 = vmatpush1.bf16.msra.mxu0 %v5723
        %5741 = vmatprep.subr.bf16.mxu0 0
        %5742 = vmatpush1.bf16.msra.mxu0 %v5724
        %5743 = vmatprep.subr.bf16.mxu0 0
        %5744 = vmatpush1.bf16.msra.mxu0 %v5725
        %5745 = vmatprep.subr.bf16.mxu0 0
        %5746 = vmatpush1.bf16.msra.mxu0 %v5726
        %5747 = vmatprep.subr.bf16.mxu0 0
        %5748 = vmatpush1.bf16.msra.mxu0 %v5727
        %5749 = vmatprep.subr.bf16.mxu0 0
        %5750 = vmatpush1.bf16.msra.mxu0 %v5728
        %5751 = vmatprep.subr.bf16.mxu0 0
        %5752 = vmatpush1.bf16.msra.mxu0 %v5729
        %5753 = vmatprep.subr.bf16.mxu0 0
        %5754 = vmatpush1.bf16.msra.mxu0 %v5730
        %5755 = vmatprep.subr.bf16.mxu0 0
        %5756 = vmatpush1.bf16.msra.mxu0 0
        %5757 = vmatprep.subr.bf16.mxu0 0
        %5758 = vmatpush1.bf16.msra.mxu0 0
        %5759 = vmatprep.subr.bf16.mxu0 0
        %5760 = vmatpush1.bf16.msra.mxu0 0
        %5761 = vmatprep.subr.bf16.mxu0 0
        %5762 = vmatpush1.bf16.msra.mxu0 0
        %5763 = vmatprep.subr.bf16.mxu0 0
        %5764 = vmatpush1.bf16.msra.mxu0 0
        %5765 = vmatprep.subr.bf16.mxu0 0
        %5766 = vmatpush1.bf16.msra.mxu0 0
        %5767 = vmatprep.subr.bf16.mxu0 0
        %5768 = vmatpush1.bf16.msra.mxu0 0
        %5769 = vmatprep.subr.bf16.mxu0 0
        %5770 = vmatpush1.bf16.msra.mxu0 0
        %5771 = vmatprep.mubr.bf16.mxu0 0
        %5772 = vmatmul.mubr.bf16.gmra.mrb[0].mxu0 %v5677
        %v5773 = vpop.f32.mrb[0].mxu0
        %v5774 = vadd.f32 0.0, %v5773
        %v5775 = vpop.f32.mrb[0].mxu0
        %v5776 = vpop.f32.mrb[0].mxu0
        %v5777 = vadd.f32 0.0, %v5776
        %v5778 = vpop.f32.mrb[0].mxu0
        %5779 = vmatprep.mubr.bf16.mxu0 0
        %5780 = vmatmul.mubr.bf16.gmra.mrb[0].mxu0 %v5679
        %v5781 = vpop.f32.mrb[0].mxu0
        %v5782 = vadd.f32 0.0, %v5781
        %v5783 = vpop.f32.mrb[0].mxu0
        %v5784 = vpop.f32.mrb[0].mxu0
        %v5785 = vadd.f32 0.0, %v5784
        %v5786 = vpop.f32.mrb[0].mxu0
        %5787 = vmatprep.mubr.bf16.mxu0 0
        %5788 = vmatmul.mubr.bf16.gmra.mrb[0].mxu0 %v5681
        %v5789 = vpop.f32.mrb[0].mxu0
        %v5790 = vadd.f32 0.0, %v5789
        %v5791 = vpop.f32.mrb[0].mxu0
        %v5792 = vpop.f32.mrb[0].mxu0
        %v5793 = vadd.f32 0.0, %v5792
        %v5794 = vpop.f32.mrb[0].mxu0
        %5795 = vmatprep.mubr.bf16.mxu0 0
        %5796 = vmatmul.mubr.bf16.gmra.mrb[0].mxu0 %v5683
        %v5797 = vpop.f32.mrb[0].mxu0
        %v5798 = vadd.f32 0.0, %v5797
        %v5799 = vpop.f32.mrb[0].mxu0
        %v5800 = vpop.f32.mrb[0].mxu0
        %v5801 = vadd.f32 0.0, %v5800
        %v5802 = vpop.f32.mrb[0].mxu0
        %5803 = vmatprep.mubr.bf16.mxu0 0
        %5804 = vmatmul.mubr.bf16.gmra.mrb[0].mxu0 %v5685
        %v5805 = vpop.f32.mrb[0].mxu0
        %v5806 = vadd.f32 0.0, %v5805
        %v5807 = vpop.f32.mrb[0].mxu0
        %v5808 = vpop.f32.mrb[0].mxu0
        %v5809 = vadd.f32 0.0, %v5808
        %v5810 = vpop.f32.mrb[0].mxu0
        %5811 = vdwg.mxu0
        %v5812 = vadd.f32 %v5428, %v5774
        %v5813 = vadd.f32 %v5429, %v5777
        %v5814 = vadd.f32 %v5430, %v5782
        %v5815 = vadd.f32 %v5431, %v5785
        %v5816 = vadd.f32 %v5432, %v5790
        %v5817 = vadd.f32 %v5433, %v5793
        %v5818 = vadd.f32 %v5434, %v5798
        %v5819 = vadd.f32 %v5435, %v5801
        %v5820 = vadd.f32 %v5436, %v5806
        %v5821 = vadd.f32 %v5437, %v5809
        %v5822 = vld [vmem:[#allocation2 + $0x58] sm:$0x33]
        %s5823 = scalar_lea.vmem [#allocation10], 256
        %v5824 = vld [vmem:[%s5823] sm:$0xf]
        %v5825 = vld [vmem:[%s5823 + $0x4] sm:$0xf]
        %v5826 = vld [vmem:[%s5823 + $0x8] sm:$0xf]
        %v5827 = vld [vmem:[%s5823 + $0xc] sm:$0xf]
        %v5828 = vld [vmem:[%s5823 + $0x10] sm:$0xf]
        %v5829 = vld [vmem:[%s5823 + $0x14] sm:$0xf]
        %v5830 = vld [vmem:[%s5823 + $0x18] sm:$0xf]
        %v5831 = vld [vmem:[%s5823 + $0x1c] sm:$0xf]
        %v5832 = vld [vmem:[%s5823 + $0x20] sm:$0xf]
        %v5833 = vld [vmem:[%s5823 + $0x24] sm:$0xf]
        %v5834 = vld [vmem:[%s5823 + $0x28] sm:$0xf]
        %v5835 = vld [vmem:[%s5823 + $0x2c] sm:$0xf]
        %v5836 = vld [vmem:[%s5823 + $0x30] sm:$0xf]
        %v5837 = vld [vmem:[%s5823 + $0x34] sm:$0xf]
        %v5838 = vld [vmem:[%s5823 + $0x38] sm:$0xf]
        %v5839 = vld [vmem:[%s5823 + $0x3c] sm:$0xf]
        %v5841 = vunpack.c.l.b16 %v5822
        %v5842 = vpack.c.b16 %v5841, %v5841
        %v5844 = vshrl.u32 %v5488, 16
        %v5846 = vrot.slane %v5844, 1
        %v5847 = vshll.u32 %v5488, 16
        %v5849 = vrot.slane %v5847, 2
        %v5850 = vor.u32 %v5846, %v5849
        %v5852 = vshrl.u32 %v5489, 16
        %v5854 = vrot.slane %v5852, 1
        %v5855 = vshll.u32 %v5489, 16
        %v5857 = vrot.slane %v5855, 2
        %v5858 = vor.u32 %v5854, %v5857
        %v5859 = vsel %vm1600, %v5850, %v5858
        %v5861 = vshrl.u32 %v5490, 16
        %v5863 = vrot.slane %v5861, 1
        %v5864 = vshll.u32 %v5490, 16
        %v5866 = vrot.slane %v5864, 2
        %v5867 = vor.u32 %v5863, %v5866
        %v5868 = vsel %vm1600, %v5858, %v5867
        %v5870 = vshrl.u32 %v5491, 16
        %v5872 = vrot.slane %v5870, 1
        %v5873 = vshll.u32 %v5491, 16
        %v5875 = vrot.slane %v5873, 2
        %v5876 = vor.u32 %v5872, %v5875
        %v5877 = vsel %vm1600, %v5867, %v5876
        %v5879 = vshrl.u32 %v5492, 16
        %v5881 = vrot.slane %v5879, 1
        %v5882 = vshll.u32 %v5492, 16
        %v5884 = vrot.slane %v5882, 2
        %v5885 = vor.u32 %v5881, %v5884
        %v5886 = vsel %vm1600, %v5876, %v5885
        %v5888 = vshrl.u32 %v5842, 16
        %v5890 = vrot.slane %v5888, 1
        %v5891 = vshll.u32 %v5842, 16
        %v5893 = vrot.slane %v5891, 2
        %v5894 = vor.u32 %v5890, %v5893
        %v5895 = vsel %vm1600, %v5885, %v5894
        %v5917 = vunpack.c.l.b16 %v5824
        %v5918 = vunpack.c.l.b16 %v5825
        %v5919 = vunpack.c.l.b16 %v5826
        %v5920 = vunpack.c.l.b16 %v5827
        %v5921 = vunpack.c.l.b16 %v5828
        %v5922 = vunpack.c.l.b16 %v5829
        %v5923 = vunpack.c.l.b16 %v5830
        %v5924 = vunpack.c.l.b16 %v5831
        %v5925 = vunpack.c.l.b16 %v5832
        %v5926 = vunpack.c.l.b16 %v5833
        %v5927 = vunpack.c.l.b16 %v5834
        %v5928 = vunpack.c.l.b16 %v5835
        %v5929 = vunpack.c.l.b16 %v5836
        %v5930 = vunpack.c.l.b16 %v5837
        %v5931 = vunpack.c.l.b16 %v5838
        %v5932 = vunpack.c.l.b16 %v5839
        %v5933 = vpack.c.b16 %v5918, %v5917
        %v5934 = vpack.c.b16 %v5920, %v5919
        %v5935 = vpack.c.b16 %v5922, %v5921
        %v5936 = vpack.c.b16 %v5924, %v5923
        %v5937 = vpack.c.b16 %v5926, %v5925
        %v5938 = vpack.c.b16 %v5928, %v5927
        %v5939 = vpack.c.b16 %v5930, %v5929
        %v5940 = vpack.c.b16 %v5932, %v5931
        %5949 = vmatprep.subr.bf16.mxu0 0
        %5950 = vmatpush1.bf16.msra.mxu0 %v5933
        %5951 = vmatprep.subr.bf16.mxu0 0
        %5952 = vmatpush1.bf16.msra.mxu0 %v5934
        %5953 = vmatprep.subr.bf16.mxu0 0
        %5954 = vmatpush1.bf16.msra.mxu0 %v5935
        %5955 = vmatprep.subr.bf16.mxu0 0
        %5956 = vmatpush1.bf16.msra.mxu0 %v5936
        %5957 = vmatprep.subr.bf16.mxu0 0
        %5958 = vmatpush1.bf16.msra.mxu0 %v5937
        %5959 = vmatprep.subr.bf16.mxu0 0
        %5960 = vmatpush1.bf16.msra.mxu0 %v5938
        %5961 = vmatprep.subr.bf16.mxu0 0
        %5962 = vmatpush1.bf16.msra.mxu0 %v5939
        %5963 = vmatprep.subr.bf16.mxu0 0
        %5964 = vmatpush1.bf16.msra.mxu0 %v5940
        %5965 = vmatprep.subr.bf16.mxu0 0
        %5966 = vmatpush1.bf16.msra.mxu0 0
        %5967 = vmatprep.subr.bf16.mxu0 0
        %5968 = vmatpush1.bf16.msra.mxu0 0
        %5969 = vmatprep.subr.bf16.mxu0 0
        %5970 = vmatpush1.bf16.msra.mxu0 0
        %5971 = vmatprep.subr.bf16.mxu0 0
        %5972 = vmatpush1.bf16.msra.mxu0 0
        %5973 = vmatprep.subr.bf16.mxu0 0
        %5974 = vmatpush1.bf16.msra.mxu0 0
        %5975 = vmatprep.subr.bf16.mxu0 0
        %5976 = vmatpush1.bf16.msra.mxu0 0
        %5977 = vmatprep.subr.bf16.mxu0 0
        %5978 = vmatpush1.bf16.msra.mxu0 0
        %5979 = vmatprep.subr.bf16.mxu0 0
        %5980 = vmatpush1.bf16.msra.mxu0 0
        %5981 = vmatprep.mubr.bf16.mxu0 0
        %5982 = vmatmul.mubr.bf16.gmra.mrb[0].mxu0 %v5859
        %v5983 = vpop.f32.mrb[0].mxu0
        %v5984 = vadd.f32 0.0, %v5983
        %v5985 = vpop.f32.mrb[0].mxu0
        %v5986 = vpop.f32.mrb[0].mxu0
        %v5987 = vadd.f32 0.0, %v5986
        %v5988 = vpop.f32.mrb[0].mxu0
        %5989 = vmatprep.mubr.bf16.mxu0 0
        %5990 = vmatmul.mubr.bf16.gmra.mrb[0].mxu0 %v5868
        %v5991 = vpop.f32.mrb[0].mxu0
        %v5992 = vadd.f32 0.0, %v5991
        %v5993 = vpop.f32.mrb[0].mxu0
        %v5994 = vpop.f32.mrb[0].mxu0
        %v5995 = vadd.f32 0.0, %v5994
        %v5996 = vpop.f32.mrb[0].mxu0
        %5997 = vmatprep.mubr.bf16.mxu0 0
        %5998 = vmatmul.mubr.bf16.gmra.mrb[0].mxu0 %v5877
        %v5999 = vpop.f32.mrb[0].mxu0
        %v6000 = vadd.f32 0.0, %v5999
        %v6001 = vpop.f32.mrb[0].mxu0
        %v6002 = vpop.f32.mrb[0].mxu0
        %v6003 = vadd.f32 0.0, %v6002
        %v6004 = vpop.f32.mrb[0].mxu0
        %6005 = vmatprep.mubr.bf16.mxu0 0
        %6006 = vmatmul.mubr.bf16.gmra.mrb[0].mxu0 %v5886
        %v6007 = vpop.f32.mrb[0].mxu0
        %v6008 = vadd.f32 0.0, %v6007
        %v6009 = vpop.f32.mrb[0].mxu0
        %v6010 = vpop.f32.mrb[0].mxu0
        %v6011 = vadd.f32 0.0, %v6010
        %v6012 = vpop.f32.mrb[0].mxu0
        %6013 = vmatprep.mubr.bf16.mxu0 0
        %6014 = vmatmul.mubr.bf16.gmra.mrb[0].mxu0 %v5895
        %v6015 = vpop.f32.mrb[0].mxu0
        %v6016 = vadd.f32 0.0, %v6015
        %v6017 = vpop.f32.mrb[0].mxu0
        %v6018 = vpop.f32.mrb[0].mxu0
        %v6019 = vadd.f32 0.0, %v6018
        %v6020 = vpop.f32.mrb[0].mxu0
        %6021 = vdwg.mxu0
        %v6022 = vadd.f32 %v5631, %v5984
        %v6023 = vadd.f32 %v5632, %v5987
        %v6024 = vadd.f32 %v5633, %v5992
        %v6025 = vadd.f32 %v5634, %v5995
        %v6026 = vadd.f32 %v5635, %v6000
        %v6027 = vadd.f32 %v5636, %v6003
        %v6028 = vadd.f32 %v5637, %v6008
        %v6029 = vadd.f32 %v5638, %v6011
        %v6030 = vadd.f32 %v5639, %v6016
        %v6031 = vadd.f32 %v5640, %v6019
        %s6032 = scalar_lea.vmem [#allocation12], 256
        %v6033 = vld [vmem:[%s6032] sm:$0xf]
        %v6034 = vld [vmem:[%s6032 + $0x4] sm:$0xf]
        %v6035 = vld [vmem:[%s6032 + $0x8] sm:$0xf]
        %v6036 = vld [vmem:[%s6032 + $0xc] sm:$0xf]
        %v6037 = vld [vmem:[%s6032 + $0x10] sm:$0xf]
        %v6038 = vld [vmem:[%s6032 + $0x14] sm:$0xf]
        %v6039 = vld [vmem:[%s6032 + $0x18] sm:$0xf]
        %v6040 = vld [vmem:[%s6032 + $0x1c] sm:$0xf]
        %v6041 = vld [vmem:[%s6032 + $0x20] sm:$0xf]
        %v6042 = vld [vmem:[%s6032 + $0x24] sm:$0xf]
        %v6043 = vld [vmem:[%s6032 + $0x28] sm:$0xf]
        %v6044 = vld [vmem:[%s6032 + $0x2c] sm:$0xf]
        %v6045 = vld [vmem:[%s6032 + $0x30] sm:$0xf]
        %v6046 = vld [vmem:[%s6032 + $0x34] sm:$0xf]
        %v6047 = vld [vmem:[%s6032 + $0x38] sm:$0xf]
        %v6048 = vld [vmem:[%s6032 + $0x3c] sm:$0xf]
        %v6049 = vunpack.c.h.b16 %v5822
        %v6050 = vpack.c.b16 %v6049, %v6049
        %v6052 = vshrl.u32 %v5669, 16
        %v6054 = vrot.slane %v6052, 1
        %v6055 = vshll.u32 %v5669, 16
        %v6057 = vrot.slane %v6055, 2
        %v6058 = vor.u32 %v6054, %v6057
        %v6060 = vshrl.u32 %v5670, 16
        %v6062 = vrot.slane %v6060, 1
        %v6063 = vshll.u32 %v5670, 16
        %v6065 = vrot.slane %v6063, 2
        %v6066 = vor.u32 %v6062, %v6065
        %v6067 = vsel %vm1600, %v6058, %v6066
        %v6069 = vshrl.u32 %v5671, 16
        %v6071 = vrot.slane %v6069, 1
        %v6072 = vshll.u32 %v5671, 16
        %v6074 = vrot.slane %v6072, 2
        %v6075 = vor.u32 %v6071, %v6074
        %v6076 = vsel %vm1600, %v6066, %v6075
        %v6078 = vshrl.u32 %v5672, 16
        %v6080 = vrot.slane %v6078, 1
        %v6081 = vshll.u32 %v5672, 16
        %v6083 = vrot.slane %v6081, 2
        %v6084 = vor.u32 %v6080, %v6083
        %v6085 = vsel %vm1600, %v6075, %v6084
        %v6087 = vshrl.u32 %v5673, 16
        %v6089 = vrot.slane %v6087, 1
        %v6090 = vshll.u32 %v5673, 16
        %v6092 = vrot.slane %v6090, 2
        %v6093 = vor.u32 %v6089, %v6092
        %v6094 = vsel %vm1600, %v6084, %v6093
        %v6096 = vshrl.u32 %v6050, 16
        %v6098 = vrot.slane %v6096, 1
        %v6099 = vshll.u32 %v6050, 16
        %v6101 = vrot.slane %v6099, 2
        %v6102 = vor.u32 %v6098, %v6101
        %v6103 = vsel %vm1600, %v6093, %v6102
        %v6125 = vunpack.c.l.b16 %v6033
        %v6126 = vunpack.c.l.b16 %v6034
        %v6127 = vunpack.c.l.b16 %v6035
        %v6128 = vunpack.c.l.b16 %v6036
        %v6129 = vunpack.c.l.b16 %v6037
        %v6130 = vunpack.c.l.b16 %v6038
        %v6131 = vunpack.c.l.b16 %v6039
        %v6132 = vunpack.c.l.b16 %v6040
        %v6133 = vunpack.c.l.b16 %v6041
        %v6134 = vunpack.c.l.b16 %v6042
        %v6135 = vunpack.c.l.b16 %v6043
        %v6136 = vunpack.c.l.b16 %v6044
        %v6137 = vunpack.c.l.b16 %v6045
        %v6138 = vunpack.c.l.b16 %v6046
        %v6139 = vunpack.c.l.b16 %v6047
        %v6140 = vunpack.c.l.b16 %v6048
        %v6141 = vpack.c.b16 %v6126, %v6125
        %v6142 = vpack.c.b16 %v6128, %v6127
        %v6143 = vpack.c.b16 %v6130, %v6129
        %v6144 = vpack.c.b16 %v6132, %v6131
        %v6145 = vpack.c.b16 %v6134, %v6133
        %v6146 = vpack.c.b16 %v6136, %v6135
        %v6147 = vpack.c.b16 %v6138, %v6137
        %v6148 = vpack.c.b16 %v6140, %v6139
        %6157 = vmatprep.subr.bf16.mxu0 0
        %6158 = vmatpush1.bf16.msra.mxu0 %v6141
        %6159 = vmatprep.subr.bf16.mxu0 0
        %6160 = vmatpush1.bf16.msra.mxu0 %v6142
        %6161 = vmatprep.subr.bf16.mxu0 0
        %6162 = vmatpush1.bf16.msra.mxu0 %v6143
        %6163 = vmatprep.subr.bf16.mxu0 0
        %6164 = vmatpush1.bf16.msra.mxu0 %v6144
        %6165 = vmatprep.subr.bf16.mxu0 0
        %6166 = vmatpush1.bf16.msra.mxu0 %v6145
        %6167 = vmatprep.subr.bf16.mxu0 0
        %6168 = vmatpush1.bf16.msra.mxu0 %v6146
        %6169 = vmatprep.subr.bf16.mxu0 0
        %6170 = vmatpush1.bf16.msra.mxu0 %v6147
        %6171 = vmatprep.subr.bf16.mxu0 0
        %6172 = vmatpush1.bf16.msra.mxu0 %v6148
        %6173 = vmatprep.subr.bf16.mxu0 0
        %6174 = vmatpush1.bf16.msra.mxu0 0
        %6175 = vmatprep.subr.bf16.mxu0 0
        %6176 = vmatpush1.bf16.msra.mxu0 0
        %6177 = vmatprep.subr.bf16.mxu0 0
        %6178 = vmatpush1.bf16.msra.mxu0 0
        %6179 = vmatprep.subr.bf16.mxu0 0
        %6180 = vmatpush1.bf16.msra.mxu0 0
        %6181 = vmatprep.subr.bf16.mxu0 0
        %6182 = vmatpush1.bf16.msra.mxu0 0
        %6183 = vmatprep.subr.bf16.mxu0 0
        %6184 = vmatpush1.bf16.msra.mxu0 0
        %6185 = vmatprep.subr.bf16.mxu0 0
        %6186 = vmatpush1.bf16.msra.mxu0 0
        %6187 = vmatprep.subr.bf16.mxu0 0
        %6188 = vmatpush1.bf16.msra.mxu0 0
        %6189 = vmatprep.mubr.bf16.mxu0 0
        %6190 = vmatmul.mubr.bf16.gmra.mrb[0].mxu0 %v6067
        %v6191 = vpop.f32.mrb[0].mxu0
        %v6192 = vadd.f32 0.0, %v6191
        %v6193 = vpop.f32.mrb[0].mxu0
        %v6194 = vpop.f32.mrb[0].mxu0
        %v6195 = vadd.f32 0.0, %v6194
        %v6196 = vpop.f32.mrb[0].mxu0
        %6197 = vmatprep.mubr.bf16.mxu0 0
        %6198 = vmatmul.mubr.bf16.gmra.mrb[0].mxu0 %v6076
        %v6199 = vpop.f32.mrb[0].mxu0
        %v6200 = vadd.f32 0.0, %v6199
        %v6201 = vpop.f32.mrb[0].mxu0
        %v6202 = vpop.f32.mrb[0].mxu0
        %v6203 = vadd.f32 0.0, %v6202
        %v6204 = vpop.f32.mrb[0].mxu0
        %6205 = vmatprep.mubr.bf16.mxu0 0
        %6206 = vmatmul.mubr.bf16.gmra.mrb[0].mxu0 %v6085
        %v6207 = vpop.f32.mrb[0].mxu0
        %v6208 = vadd.f32 0.0, %v6207
        %v6209 = vpop.f32.mrb[0].mxu0
        %v6210 = vpop.f32.mrb[0].mxu0
        %v6211 = vadd.f32 0.0, %v6210
        %v6212 = vpop.f32.mrb[0].mxu0
        %6213 = vmatprep.mubr.bf16.mxu0 0
        %6214 = vmatmul.mubr.bf16.gmra.mrb[0].mxu0 %v6094
        %v6215 = vpop.f32.mrb[0].mxu0
        %v6216 = vadd.f32 0.0, %v6215
        %v6217 = vpop.f32.mrb[0].mxu0
        %v6218 = vpop.f32.mrb[0].mxu0
        %v6219 = vadd.f32 0.0, %v6218
        %v6220 = vpop.f32.mrb[0].mxu0
        %6221 = vmatprep.mubr.bf16.mxu0 0
        %6222 = vmatmul.mubr.bf16.gmra.mrb[0].mxu0 %v6103
        %v6223 = vpop.f32.mrb[0].mxu0
        %v6224 = vadd.f32 0.0, %v6223
        %v6225 = vpop.f32.mrb[0].mxu0
        %v6226 = vpop.f32.mrb[0].mxu0
        %v6227 = vadd.f32 0.0, %v6226
        %v6228 = vpop.f32.mrb[0].mxu0
        %6229 = vdwg.mxu0
        %v6230 = vadd.f32 %v5812, %v6192
        %v6231 = vadd.f32 %v5813, %v6195
        %v6232 = vadd.f32 %v5814, %v6200
        %v6233 = vadd.f32 %v5815, %v6203
        %v6234 = vadd.f32 %v5816, %v6208
        %v6235 = vadd.f32 %v5817, %v6211
        %v6236 = vadd.f32 %v5818, %v6216
        %v6237 = vadd.f32 %v5819, %v6219
        %v6238 = vadd.f32 %v5820, %v6224
        %v6239 = vadd.f32 %v5821, %v6227
        %v6240 = vld [vmem:[#allocation2 + $0x8] sm:$0xcc]
        %s6241 = scalar_lea.vmem [#allocation10], 320
        %v6242 = vld [vmem:[%s6241] sm:$0xf]
        %v6243 = vld [vmem:[%s6241 + $0x4] sm:$0xf]
        %v6244 = vld [vmem:[%s6241 + $0x8] sm:$0xf]
        %v6245 = vld [vmem:[%s6241 + $0xc] sm:$0xf]
        %v6246 = vld [vmem:[%s6241 + $0x10] sm:$0xf]
        %v6247 = vld [vmem:[%s6241 + $0x14] sm:$0xf]
        %v6248 = vld [vmem:[%s6241 + $0x18] sm:$0xf]
        %v6249 = vld [vmem:[%s6241 + $0x1c] sm:$0xf]
        %v6250 = vld [vmem:[%s6241 + $0x20] sm:$0xf]
        %v6251 = vld [vmem:[%s6241 + $0x24] sm:$0xf]
        %v6252 = vld [vmem:[%s6241 + $0x28] sm:$0xf]
        %v6253 = vld [vmem:[%s6241 + $0x2c] sm:$0xf]
        %v6254 = vld [vmem:[%s6241 + $0x30] sm:$0xf]
        %v6255 = vld [vmem:[%s6241 + $0x34] sm:$0xf]
        %v6256 = vld [vmem:[%s6241 + $0x38] sm:$0xf]
        %v6257 = vld [vmem:[%s6241 + $0x3c] sm:$0xf]
        %v6259 = vunpack.c.l.b16 %v6240
        %v6260 = vpack.c.b16 %v5478, %v6259
        %v6261 = vrot.slane %v6260, 2
        %v6262 = vrot.slane %v5489, 2
        %v6263 = vsel %vm1863, %v6261, %v6262
        %v6264 = vrot.slane %v5490, 2
        %v6265 = vsel %vm1863, %v6262, %v6264
        %v6266 = vrot.slane %v5491, 2
        %v6267 = vsel %vm1863, %v6264, %v6266
        %v6268 = vrot.slane %v5492, 2
        %v6269 = vsel %vm1863, %v6266, %v6268
        %v6270 = vrot.slane %v5842, 2
        %v6271 = vsel %vm1863, %v6268, %v6270
        %v6293 = vunpack.c.l.b16 %v6242
        %v6294 = vunpack.c.l.b16 %v6243
        %v6295 = vunpack.c.l.b16 %v6244
        %v6296 = vunpack.c.l.b16 %v6245
        %v6297 = vunpack.c.l.b16 %v6246
        %v6298 = vunpack.c.l.b16 %v6247
        %v6299 = vunpack.c.l.b16 %v6248
        %v6300 = vunpack.c.l.b16 %v6249
        %v6301 = vunpack.c.l.b16 %v6250
        %v6302 = vunpack.c.l.b16 %v6251
        %v6303 = vunpack.c.l.b16 %v6252
        %v6304 = vunpack.c.l.b16 %v6253
        %v6305 = vunpack.c.l.b16 %v6254
        %v6306 = vunpack.c.l.b16 %v6255
        %v6307 = vunpack.c.l.b16 %v6256
        %v6308 = vunpack.c.l.b16 %v6257
        %v6309 = vpack.c.b16 %v6294, %v6293
        %v6310 = vpack.c.b16 %v6296, %v6295
        %v6311 = vpack.c.b16 %v6298, %v6297
        %v6312 = vpack.c.b16 %v6300, %v6299
        %v6313 = vpack.c.b16 %v6302, %v6301
        %v6314 = vpack.c.b16 %v6304, %v6303
        %v6315 = vpack.c.b16 %v6306, %v6305
        %v6316 = vpack.c.b16 %v6308, %v6307
        %6325 = vmatprep.subr.bf16.mxu0 0
        %6326 = vmatpush1.bf16.msra.mxu0 %v6309
        %6327 = vmatprep.subr.bf16.mxu0 0
        %6328 = vmatpush1.bf16.msra.mxu0 %v6310
        %6329 = vmatprep.subr.bf16.mxu0 0
        %6330 = vmatpush1.bf16.msra.mxu0 %v6311
        %6331 = vmatprep.subr.bf16.mxu0 0
        %6332 = vmatpush1.bf16.msra.mxu0 %v6312
        %6333 = vmatprep.subr.bf16.mxu0 0
        %6334 = vmatpush1.bf16.msra.mxu0 %v6313
        %6335 = vmatprep.subr.bf16.mxu0 0
        %6336 = vmatpush1.bf16.msra.mxu0 %v6314
        %6337 = vmatprep.subr.bf16.mxu0 0
        %6338 = vmatpush1.bf16.msra.mxu0 %v6315
        %6339 = vmatprep.subr.bf16.mxu0 0
        %6340 = vmatpush1.bf16.msra.mxu0 %v6316
        %6341 = vmatprep.subr.bf16.mxu0 0
        %6342 = vmatpush1.bf16.msra.mxu0 0
        %6343 = vmatprep.subr.bf16.mxu0 0
        %6344 = vmatpush1.bf16.msra.mxu0 0
        %6345 = vmatprep.subr.bf16.mxu0 0
        %6346 = vmatpush1.bf16.msra.mxu0 0
        %6347 = vmatprep.subr.bf16.mxu0 0
        %6348 = vmatpush1.bf16.msra.mxu0 0
        %6349 = vmatprep.subr.bf16.mxu0 0
        %6350 = vmatpush1.bf16.msra.mxu0 0
        %6351 = vmatprep.subr.bf16.mxu0 0
        %6352 = vmatpush1.bf16.msra.mxu0 0
        %6353 = vmatprep.subr.bf16.mxu0 0
        %6354 = vmatpush1.bf16.msra.mxu0 0
        %6355 = vmatprep.subr.bf16.mxu0 0
        %6356 = vmatpush1.bf16.msra.mxu0 0
        %6357 = vmatprep.mubr.bf16.mxu0 0
        %6358 = vmatmul.mubr.bf16.gmra.mrb[0].mxu0 %v6263
        %v6359 = vpop.f32.mrb[0].mxu0
        %v6360 = vadd.f32 0.0, %v6359
        %v6361 = vpop.f32.mrb[0].mxu0
        %v6362 = vpop.f32.mrb[0].mxu0
        %v6363 = vadd.f32 0.0, %v6362
        %v6364 = vpop.f32.mrb[0].mxu0
        %6365 = vmatprep.mubr.bf16.mxu0 0
        %6366 = vmatmul.mubr.bf16.gmra.mrb[0].mxu0 %v6265
        %v6367 = vpop.f32.mrb[0].mxu0
        %v6368 = vadd.f32 0.0, %v6367
        %v6369 = vpop.f32.mrb[0].mxu0
        %v6370 = vpop.f32.mrb[0].mxu0
        %v6371 = vadd.f32 0.0, %v6370
        %v6372 = vpop.f32.mrb[0].mxu0
        %6373 = vmatprep.mubr.bf16.mxu0 0
        %6374 = vmatmul.mubr.bf16.gmra.mrb[0].mxu0 %v6267
        %v6375 = vpop.f32.mrb[0].mxu0
        %v6376 = vadd.f32 0.0, %v6375
        %v6377 = vpop.f32.mrb[0].mxu0
        %v6378 = vpop.f32.mrb[0].mxu0
        %v6379 = vadd.f32 0.0, %v6378
        %v6380 = vpop.f32.mrb[0].mxu0
        %6381 = vmatprep.mubr.bf16.mxu0 0
        %6382 = vmatmul.mubr.bf16.gmra.mrb[0].mxu0 %v6269
        %v6383 = vpop.f32.mrb[0].mxu0
        %v6384 = vadd.f32 0.0, %v6383
        %v6385 = vpop.f32.mrb[0].mxu0
        %v6386 = vpop.f32.mrb[0].mxu0
        %v6387 = vadd.f32 0.0, %v6386
        %v6388 = vpop.f32.mrb[0].mxu0
        %6389 = vmatprep.mubr.bf16.mxu0 0
        %6390 = vmatmul.mubr.bf16.gmra.mrb[0].mxu0 %v6271
        %v6391 = vpop.f32.mrb[0].mxu0
        %v6392 = vadd.f32 0.0, %v6391
        %v6393 = vpop.f32.mrb[0].mxu0
        %v6394 = vpop.f32.mrb[0].mxu0
        %v6395 = vadd.f32 0.0, %v6394
        %v6396 = vpop.f32.mrb[0].mxu0
        %6397 = vdwg.mxu0
        %v6398 = vadd.f32 %v6022, %v6360
        %v6399 = vadd.f32 %v6023, %v6363
        %v6400 = vadd.f32 %v6024, %v6368
        %v6401 = vadd.f32 %v6025, %v6371
        %v6402 = vadd.f32 %v6026, %v6376
        %v6403 = vadd.f32 %v6027, %v6379
        %v6404 = vadd.f32 %v6028, %v6384
        %v6405 = vadd.f32 %v6029, %v6387
        %v6406 = vadd.f32 %v6030, %v6392
        %v6407 = vadd.f32 %v6031, %v6395
        %s6408 = scalar_lea.vmem [#allocation12], 320
        %v6409 = vld [vmem:[%s6408] sm:$0xf]
        %v6410 = vld [vmem:[%s6408 + $0x4] sm:$0xf]
        %v6411 = vld [vmem:[%s6408 + $0x8] sm:$0xf]
        %v6412 = vld [vmem:[%s6408 + $0xc] sm:$0xf]
        %v6413 = vld [vmem:[%s6408 + $0x10] sm:$0xf]
        %v6414 = vld [vmem:[%s6408 + $0x14] sm:$0xf]
        %v6415 = vld [vmem:[%s6408 + $0x18] sm:$0xf]
        %v6416 = vld [vmem:[%s6408 + $0x1c] sm:$0xf]
        %v6417 = vld [vmem:[%s6408 + $0x20] sm:$0xf]
        %v6418 = vld [vmem:[%s6408 + $0x24] sm:$0xf]
        %v6419 = vld [vmem:[%s6408 + $0x28] sm:$0xf]
        %v6420 = vld [vmem:[%s6408 + $0x2c] sm:$0xf]
        %v6421 = vld [vmem:[%s6408 + $0x30] sm:$0xf]
        %v6422 = vld [vmem:[%s6408 + $0x34] sm:$0xf]
        %v6423 = vld [vmem:[%s6408 + $0x38] sm:$0xf]
        %v6424 = vld [vmem:[%s6408 + $0x3c] sm:$0xf]
        %v6425 = vunpack.c.h.b16 %v6240
        %v6426 = vpack.c.b16 %v5659, %v6425
        %v6427 = vrot.slane %v6426, 2
        %v6428 = vrot.slane %v5670, 2
        %v6429 = vsel %vm1863, %v6427, %v6428
        %v6430 = vrot.slane %v5671, 2
        %v6431 = vsel %vm1863, %v6428, %v6430
        %v6432 = vrot.slane %v5672, 2
        %v6433 = vsel %vm1863, %v6430, %v6432
        %v6434 = vrot.slane %v5673, 2
        %v6435 = vsel %vm1863, %v6432, %v6434
        %v6436 = vrot.slane %v6050, 2
        %v6437 = vsel %vm1863, %v6434, %v6436
        %v6459 = vunpack.c.l.b16 %v6409
        %v6460 = vunpack.c.l.b16 %v6410
        %v6461 = vunpack.c.l.b16 %v6411
        %v6462 = vunpack.c.l.b16 %v6412
        %v6463 = vunpack.c.l.b16 %v6413
        %v6464 = vunpack.c.l.b16 %v6414
        %v6465 = vunpack.c.l.b16 %v6415
        %v6466 = vunpack.c.l.b16 %v6416
        %v6467 = vunpack.c.l.b16 %v6417
        %v6468 = vunpack.c.l.b16 %v6418
        %v6469 = vunpack.c.l.b16 %v6419
        %v6470 = vunpack.c.l.b16 %v6420
        %v6471 = vunpack.c.l.b16 %v6421
        %v6472 = vunpack.c.l.b16 %v6422
        %v6473 = vunpack.c.l.b16 %v6423
        %v6474 = vunpack.c.l.b16 %v6424
        %v6475 = vpack.c.b16 %v6460, %v6459
        %v6476 = vpack.c.b16 %v6462, %v6461
        %v6477 = vpack.c.b16 %v6464, %v6463
        %v6478 = vpack.c.b16 %v6466, %v6465
        %v6479 = vpack.c.b16 %v6468, %v6467
        %v6480 = vpack.c.b16 %v6470, %v6469
        %v6481 = vpack.c.b16 %v6472, %v6471
        %v6482 = vpack.c.b16 %v6474, %v6473
        %6491 = vmatprep.subr.bf16.mxu0 0
        %6492 = vmatpush1.bf16.msra.mxu0 %v6475
        %6493 = vmatprep.subr.bf16.mxu0 0
        %6494 = vmatpush1.bf16.msra.mxu0 %v6476
        %6495 = vmatprep.subr.bf16.mxu0 0
        %6496 = vmatpush1.bf16.msra.mxu0 %v6477
        %6497 = vmatprep.subr.bf16.mxu0 0
        %6498 = vmatpush1.bf16.msra.mxu0 %v6478
        %6499 = vmatprep.subr.bf16.mxu0 0
        %6500 = vmatpush1.bf16.msra.mxu0 %v6479
        %6501 = vmatprep.subr.bf16.mxu0 0
        %6502 = vmatpush1.bf16.msra.mxu0 %v6480
        %6503 = vmatprep.subr.bf16.mxu0 0
        %6504 = vmatpush1.bf16.msra.mxu0 %v6481
        %6505 = vmatprep.subr.bf16.mxu0 0
        %6506 = vmatpush1.bf16.msra.mxu0 %v6482
        %6507 = vmatprep.subr.bf16.mxu0 0
        %6508 = vmatpush1.bf16.msra.mxu0 0
        %6509 = vmatprep.subr.bf16.mxu0 0
        %6510 = vmatpush1.bf16.msra.mxu0 0
        %6511 = vmatprep.subr.bf16.mxu0 0
        %6512 = vmatpush1.bf16.msra.mxu0 0
        %6513 = vmatprep.subr.bf16.mxu0 0
        %6514 = vmatpush1.bf16.msra.mxu0 0
        %6515 = vmatprep.subr.bf16.mxu0 0
        %6516 = vmatpush1.bf16.msra.mxu0 0
        %6517 = vmatprep.subr.bf16.mxu0 0
        %6518 = vmatpush1.bf16.msra.mxu0 0
        %6519 = vmatprep.subr.bf16.mxu0 0
        %6520 = vmatpush1.bf16.msra.mxu0 0
        %6521 = vmatprep.subr.bf16.mxu0 0
        %6522 = vmatpush1.bf16.msra.mxu0 0
        %6523 = vmatprep.mubr.bf16.mxu0 0
        %6524 = vmatmul.mubr.bf16.gmra.mrb[0].mxu0 %v6429
        %v6525 = vpop.f32.mrb[0].mxu0
        %v6526 = vadd.f32 0.0, %v6525
        %v6527 = vpop.f32.mrb[0].mxu0
        %v6528 = vpop.f32.mrb[0].mxu0
        %v6529 = vadd.f32 0.0, %v6528
        %v6530 = vpop.f32.mrb[0].mxu0
        %6531 = vmatprep.mubr.bf16.mxu0 0
        %6532 = vmatmul.mubr.bf16.gmra.mrb[0].mxu0 %v6431
        %v6533 = vpop.f32.mrb[0].mxu0
        %v6534 = vadd.f32 0.0, %v6533
        %v6535 = vpop.f32.mrb[0].mxu0
        %v6536 = vpop.f32.mrb[0].mxu0
        %v6537 = vadd.f32 0.0, %v6536
        %v6538 = vpop.f32.mrb[0].mxu0
        %6539 = vmatprep.mubr.bf16.mxu0 0
        %6540 = vmatmul.mubr.bf16.gmra.mrb[0].mxu0 %v6433
        %v6541 = vpop.f32.mrb[0].mxu0
        %v6542 = vadd.f32 0.0, %v6541
        %v6543 = vpop.f32.mrb[0].mxu0
        %v6544 = vpop.f32.mrb[0].mxu0
        %v6545 = vadd.f32 0.0, %v6544
        %v6546 = vpop.f32.mrb[0].mxu0
        %6547 = vmatprep.mubr.bf16.mxu0 0
        %6548 = vmatmul.mubr.bf16.gmra.mrb[0].mxu0 %v6435
        %v6549 = vpop.f32.mrb[0].mxu0
        %v6550 = vadd.f32 0.0, %v6549
        %v6551 = vpop.f32.mrb[0].mxu0
        %v6552 = vpop.f32.mrb[0].mxu0
        %v6553 = vadd.f32 0.0, %v6552
        %v6554 = vpop.f32.mrb[0].mxu0
        %6555 = vmatprep.mubr.bf16.mxu0 0
        %6556 = vmatmul.mubr.bf16.gmra.mrb[0].mxu0 %v6437
        %v6557 = vpop.f32.mrb[0].mxu0
        %v6558 = vadd.f32 0.0, %v6557
        %v6559 = vpop.f32.mrb[0].mxu0
        %v6560 = vpop.f32.mrb[0].mxu0
        %v6561 = vadd.f32 0.0, %v6560
        %v6562 = vpop.f32.mrb[0].mxu0
        %6563 = vdwg.mxu0
        %v6564 = vadd.f32 %v6230, %v6526
        %v6565 = vadd.f32 %v6231, %v6529
        %v6566 = vadd.f32 %v6232, %v6534
        %v6567 = vadd.f32 %v6233, %v6537
        %v6568 = vadd.f32 %v6234, %v6542
        %v6569 = vadd.f32 %v6235, %v6545
        %v6570 = vadd.f32 %v6236, %v6550
        %v6571 = vadd.f32 %v6237, %v6553
        %v6572 = vadd.f32 %v6238, %v6558
        %v6573 = vadd.f32 %v6239, %v6561
        %v6574 = vld [vmem:[#allocation2 + $0x10] sm:$0xcc]
        %v6575 = vld [vmem:[#allocation2 + $0x18] sm:$0xff]
        %v6576 = vld [vmem:[#allocation2 + $0x20] sm:$0xff]
        %v6577 = vld [vmem:[#allocation2 + $0x28] sm:$0xff]
        %v6578 = vld [vmem:[#allocation2 + $0x30] sm:$0xff]
        %v6579 = vld [vmem:[#allocation2 + $0x38] sm:$0xff]
        %v6580 = vld [vmem:[#allocation2 + $0x40] sm:$0xff]
        %v6581 = vld [vmem:[#allocation2 + $0x48] sm:$0xff]
        %v6582 = vld [vmem:[#allocation2 + $0x50] sm:$0xff]
        %v6583 = vld [vmem:[#allocation2 + $0x58] sm:$0xff]
        %v6584 = vld [vmem:[#allocation2 + $0x60] sm:$0x33]
        %s6585 = scalar_lea.vmem [#allocation10], 384
        %v6586 = vld [vmem:[%s6585] sm:$0xf]
        %v6587 = vld [vmem:[%s6585 + $0x4] sm:$0xf]
        %v6588 = vld [vmem:[%s6585 + $0x8] sm:$0xf]
        %v6589 = vld [vmem:[%s6585 + $0xc] sm:$0xf]
        %v6590 = vld [vmem:[%s6585 + $0x10] sm:$0xf]
        %v6591 = vld [vmem:[%s6585 + $0x14] sm:$0xf]
        %v6592 = vld [vmem:[%s6585 + $0x18] sm:$0xf]
        %v6593 = vld [vmem:[%s6585 + $0x1c] sm:$0xf]
        %v6594 = vld [vmem:[%s6585 + $0x20] sm:$0xf]
        %v6595 = vld [vmem:[%s6585 + $0x24] sm:$0xf]
        %v6596 = vld [vmem:[%s6585 + $0x28] sm:$0xf]
        %v6597 = vld [vmem:[%s6585 + $0x2c] sm:$0xf]
        %v6598 = vld [vmem:[%s6585 + $0x30] sm:$0xf]
        %v6599 = vld [vmem:[%s6585 + $0x34] sm:$0xf]
        %v6600 = vld [vmem:[%s6585 + $0x38] sm:$0xf]
        %v6601 = vld [vmem:[%s6585 + $0x3c] sm:$0xf]
        %v6613 = vunpack.c.l.b16 %v6574
        %v6614 = vunpack.c.l.b16 %v6575
        %v6615 = vunpack.c.l.b16 %v6576
        %v6616 = vunpack.c.l.b16 %v6577
        %v6617 = vunpack.c.l.b16 %v6578
        %v6618 = vunpack.c.l.b16 %v6579
        %v6619 = vunpack.c.l.b16 %v6580
        %v6620 = vunpack.c.l.b16 %v6581
        %v6621 = vunpack.c.l.b16 %v6582
        %v6622 = vunpack.c.l.b16 %v6583
        %v6623 = vunpack.c.l.b16 %v6584
        %v6624 = vpack.c.b16 %v6614, %v6613
        %v6625 = vpack.c.b16 %v6616, %v6615
        %v6626 = vpack.c.b16 %v6618, %v6617
        %v6627 = vpack.c.b16 %v6620, %v6619
        %v6628 = vpack.c.b16 %v6622, %v6621
        %v6629 = vpack.c.b16 %v6623, %v6623
        %v6630 = vrot.slane %v6624, 2
        %v6631 = vrot.slane %v6625, 2
        %v6632 = vsel %vm1863, %v6630, %v6631
        %v6633 = vrot.slane %v6626, 2
        %v6634 = vsel %vm1863, %v6631, %v6633
        %v6635 = vrot.slane %v6627, 2
        %v6636 = vsel %vm1863, %v6633, %v6635
        %v6637 = vrot.slane %v6628, 2
        %v6638 = vsel %vm1863, %v6635, %v6637
        %v6639 = vrot.slane %v6629, 2
        %v6640 = vsel %vm1863, %v6637, %v6639
        %v6662 = vunpack.c.l.b16 %v6586
        %v6663 = vunpack.c.l.b16 %v6587
        %v6664 = vunpack.c.l.b16 %v6588
        %v6665 = vunpack.c.l.b16 %v6589
        %v6666 = vunpack.c.l.b16 %v6590
        %v6667 = vunpack.c.l.b16 %v6591
        %v6668 = vunpack.c.l.b16 %v6592
        %v6669 = vunpack.c.l.b16 %v6593
        %v6670 = vunpack.c.l.b16 %v6594
        %v6671 = vunpack.c.l.b16 %v6595
        %v6672 = vunpack.c.l.b16 %v6596
        %v6673 = vunpack.c.l.b16 %v6597
        %v6674 = vunpack.c.l.b16 %v6598
        %v6675 = vunpack.c.l.b16 %v6599
        %v6676 = vunpack.c.l.b16 %v6600
        %v6677 = vunpack.c.l.b16 %v6601
        %v6678 = vpack.c.b16 %v6663, %v6662
        %v6679 = vpack.c.b16 %v6665, %v6664
        %v6680 = vpack.c.b16 %v6667, %v6666
        %v6681 = vpack.c.b16 %v6669, %v6668
        %v6682 = vpack.c.b16 %v6671, %v6670
        %v6683 = vpack.c.b16 %v6673, %v6672
        %v6684 = vpack.c.b16 %v6675, %v6674
        %v6685 = vpack.c.b16 %v6677, %v6676
        %6694 = vmatprep.subr.bf16.mxu0 0
        %6695 = vmatpush1.bf16.msra.mxu0 %v6678
        %6696 = vmatprep.subr.bf16.mxu0 0
        %6697 = vmatpush1.bf16.msra.mxu0 %v6679
        %6698 = vmatprep.subr.bf16.mxu0 0
        %6699 = vmatpush1.bf16.msra.mxu0 %v6680
        %6700 = vmatprep.subr.bf16.mxu0 0
        %6701 = vmatpush1.bf16.msra.mxu0 %v6681
        %6702 = vmatprep.subr.bf16.mxu0 0
        %6703 = vmatpush1.bf16.msra.mxu0 %v6682
        %6704 = vmatprep.subr.bf16.mxu0 0
        %6705 = vmatpush1.bf16.msra.mxu0 %v6683
        %6706 = vmatprep.subr.bf16.mxu0 0
        %6707 = vmatpush1.bf16.msra.mxu0 %v6684
        %6708 = vmatprep.subr.bf16.mxu0 0
        %6709 = vmatpush1.bf16.msra.mxu0 %v6685
        %6710 = vmatprep.subr.bf16.mxu0 0
        %6711 = vmatpush1.bf16.msra.mxu0 0
        %6712 = vmatprep.subr.bf16.mxu0 0
        %6713 = vmatpush1.bf16.msra.mxu0 0
        %6714 = vmatprep.subr.bf16.mxu0 0
        %6715 = vmatpush1.bf16.msra.mxu0 0
        %6716 = vmatprep.subr.bf16.mxu0 0
        %6717 = vmatpush1.bf16.msra.mxu0 0
        %6718 = vmatprep.subr.bf16.mxu0 0
        %6719 = vmatpush1.bf16.msra.mxu0 0
        %6720 = vmatprep.subr.bf16.mxu0 0
        %6721 = vmatpush1.bf16.msra.mxu0 0
        %6722 = vmatprep.subr.bf16.mxu0 0
        %6723 = vmatpush1.bf16.msra.mxu0 0
        %6724 = vmatprep.subr.bf16.mxu0 0
        %6725 = vmatpush1.bf16.msra.mxu0 0
        %6726 = vmatprep.mubr.bf16.mxu0 0
        %6727 = vmatmul.mubr.bf16.gmra.mrb[0].mxu0 %v6632
        %v6728 = vpop.f32.mrb[0].mxu0
        %v6729 = vadd.f32 0.0, %v6728
        %v6730 = vpop.f32.mrb[0].mxu0
        %v6731 = vpop.f32.mrb[0].mxu0
        %v6732 = vadd.f32 0.0, %v6731
        %v6733 = vpop.f32.mrb[0].mxu0
        %6734 = vmatprep.mubr.bf16.mxu0 0
        %6735 = vmatmul.mubr.bf16.gmra.mrb[0].mxu0 %v6634
        %v6736 = vpop.f32.mrb[0].mxu0
        %v6737 = vadd.f32 0.0, %v6736
        %v6738 = vpop.f32.mrb[0].mxu0
        %v6739 = vpop.f32.mrb[0].mxu0
        %v6740 = vadd.f32 0.0, %v6739
        %v6741 = vpop.f32.mrb[0].mxu0
        %6742 = vmatprep.mubr.bf16.mxu0 0
        %6743 = vmatmul.mubr.bf16.gmra.mrb[0].mxu0 %v6636
        %v6744 = vpop.f32.mrb[0].mxu0
        %v6745 = vadd.f32 0.0, %v6744
        %v6746 = vpop.f32.mrb[0].mxu0
        %v6747 = vpop.f32.mrb[0].mxu0
        %v6748 = vadd.f32 0.0, %v6747
        %v6749 = vpop.f32.mrb[0].mxu0
        %6750 = vmatprep.mubr.bf16.mxu0 0
        %6751 = vmatmul.mubr.bf16.gmra.mrb[0].mxu0 %v6638
        %v6752 = vpop.f32.mrb[0].mxu0
        %v6753 = vadd.f32 0.0, %v6752
        %v6754 = vpop.f32.mrb[0].mxu0
        %v6755 = vpop.f32.mrb[0].mxu0
        %v6756 = vadd.f32 0.0, %v6755
        %v6757 = vpop.f32.mrb[0].mxu0
        %6758 = vmatprep.mubr.bf16.mxu0 0
        %6759 = vmatmul.mubr.bf16.gmra.mrb[0].mxu0 %v6640
        %v6760 = vpop.f32.mrb[0].mxu0
        %v6761 = vadd.f32 0.0, %v6760
        %v6762 = vpop.f32.mrb[0].mxu0
        %v6763 = vpop.f32.mrb[0].mxu0
        %v6764 = vadd.f32 0.0, %v6763
        %v6765 = vpop.f32.mrb[0].mxu0
        %6766 = vdwg.mxu0
        %v6767 = vadd.f32 %v6398, %v6729
        %v6768 = vadd.f32 %v6399, %v6732
        %v6769 = vadd.f32 %v6400, %v6737
        %v6770 = vadd.f32 %v6401, %v6740
        %v6771 = vadd.f32 %v6402, %v6745
        %v6772 = vadd.f32 %v6403, %v6748
        %v6773 = vadd.f32 %v6404, %v6753
        %v6774 = vadd.f32 %v6405, %v6756
        %v6775 = vadd.f32 %v6406, %v6761
        %v6776 = vadd.f32 %v6407, %v6764
        %s6777 = scalar_lea.vmem [#allocation12], 384
        %v6778 = vld [vmem:[%s6777] sm:$0xf]
        %v6779 = vld [vmem:[%s6777 + $0x4] sm:$0xf]
        %v6780 = vld [vmem:[%s6777 + $0x8] sm:$0xf]
        %v6781 = vld [vmem:[%s6777 + $0xc] sm:$0xf]
        %v6782 = vld [vmem:[%s6777 + $0x10] sm:$0xf]
        %v6783 = vld [vmem:[%s6777 + $0x14] sm:$0xf]
        %v6784 = vld [vmem:[%s6777 + $0x18] sm:$0xf]
        %v6785 = vld [vmem:[%s6777 + $0x1c] sm:$0xf]
        %v6786 = vld [vmem:[%s6777 + $0x20] sm:$0xf]
        %v6787 = vld [vmem:[%s6777 + $0x24] sm:$0xf]
        %v6788 = vld [vmem:[%s6777 + $0x28] sm:$0xf]
        %v6789 = vld [vmem:[%s6777 + $0x2c] sm:$0xf]
        %v6790 = vld [vmem:[%s6777 + $0x30] sm:$0xf]
        %v6791 = vld [vmem:[%s6777 + $0x34] sm:$0xf]
        %v6792 = vld [vmem:[%s6777 + $0x38] sm:$0xf]
        %v6793 = vld [vmem:[%s6777 + $0x3c] sm:$0xf]
        %v6794 = vunpack.c.h.b16 %v6574
        %v6795 = vunpack.c.h.b16 %v6575
        %v6796 = vunpack.c.h.b16 %v6576
        %v6797 = vunpack.c.h.b16 %v6577
        %v6798 = vunpack.c.h.b16 %v6578
        %v6799 = vunpack.c.h.b16 %v6579
        %v6800 = vunpack.c.h.b16 %v6580
        %v6801 = vunpack.c.h.b16 %v6581
        %v6802 = vunpack.c.h.b16 %v6582
        %v6803 = vunpack.c.h.b16 %v6583
        %v6804 = vunpack.c.h.b16 %v6584
        %v6805 = vpack.c.b16 %v6795, %v6794
        %v6806 = vpack.c.b16 %v6797, %v6796
        %v6807 = vpack.c.b16 %v6799, %v6798
        %v6808 = vpack.c.b16 %v6801, %v6800
        %v6809 = vpack.c.b16 %v6803, %v6802
        %v6810 = vpack.c.b16 %v6804, %v6804
        %v6811 = vrot.slane %v6805, 2
        %v6812 = vrot.slane %v6806, 2
        %v6813 = vsel %vm1863, %v6811, %v6812
        %v6814 = vrot.slane %v6807, 2
        %v6815 = vsel %vm1863, %v6812, %v6814
        %v6816 = vrot.slane %v6808, 2
        %v6817 = vsel %vm1863, %v6814, %v6816
        %v6818 = vrot.slane %v6809, 2
        %v6819 = vsel %vm1863, %v6816, %v6818
        %v6820 = vrot.slane %v6810, 2
        %v6821 = vsel %vm1863, %v6818, %v6820
        %v6843 = vunpack.c.l.b16 %v6778
        %v6844 = vunpack.c.l.b16 %v6779
        %v6845 = vunpack.c.l.b16 %v6780
        %v6846 = vunpack.c.l.b16 %v6781
        %v6847 = vunpack.c.l.b16 %v6782
        %v6848 = vunpack.c.l.b16 %v6783
        %v6849 = vunpack.c.l.b16 %v6784
        %v6850 = vunpack.c.l.b16 %v6785
        %v6851 = vunpack.c.l.b16 %v6786
        %v6852 = vunpack.c.l.b16 %v6787
        %v6853 = vunpack.c.l.b16 %v6788
        %v6854 = vunpack.c.l.b16 %v6789
        %v6855 = vunpack.c.l.b16 %v6790
        %v6856 = vunpack.c.l.b16 %v6791
        %v6857 = vunpack.c.l.b16 %v6792
        %v6858 = vunpack.c.l.b16 %v6793
        %v6859 = vpack.c.b16 %v6844, %v6843
        %v6860 = vpack.c.b16 %v6846, %v6845
        %v6861 = vpack.c.b16 %v6848, %v6847
        %v6862 = vpack.c.b16 %v6850, %v6849
        %v6863 = vpack.c.b16 %v6852, %v6851
        %v6864 = vpack.c.b16 %v6854, %v6853
        %v6865 = vpack.c.b16 %v6856, %v6855
        %v6866 = vpack.c.b16 %v6858, %v6857
        %6875 = vmatprep.subr.bf16.mxu0 0
        %6876 = vmatpush1.bf16.msra.mxu0 %v6859
        %6877 = vmatprep.subr.bf16.mxu0 0
        %6878 = vmatpush1.bf16.msra.mxu0 %v6860
        %6879 = vmatprep.subr.bf16.mxu0 0
        %6880 = vmatpush1.bf16.msra.mxu0 %v6861
        %6881 = vmatprep.subr.bf16.mxu0 0
        %6882 = vmatpush1.bf16.msra.mxu0 %v6862
        %6883 = vmatprep.subr.bf16.mxu0 0
        %6884 = vmatpush1.bf16.msra.mxu0 %v6863
        %6885 = vmatprep.subr.bf16.mxu0 0
        %6886 = vmatpush1.bf16.msra.mxu0 %v6864
        %6887 = vmatprep.subr.bf16.mxu0 0
        %6888 = vmatpush1.bf16.msra.mxu0 %v6865
        %6889 = vmatprep.subr.bf16.mxu0 0
        %6890 = vmatpush1.bf16.msra.mxu0 %v6866
        %6891 = vmatprep.subr.bf16.mxu0 0
        %6892 = vmatpush1.bf16.msra.mxu0 0
        %6893 = vmatprep.subr.bf16.mxu0 0
        %6894 = vmatpush1.bf16.msra.mxu0 0
        %6895 = vmatprep.subr.bf16.mxu0 0
        %6896 = vmatpush1.bf16.msra.mxu0 0
        %6897 = vmatprep.subr.bf16.mxu0 0
        %6898 = vmatpush1.bf16.msra.mxu0 0
        %6899 = vmatprep.subr.bf16.mxu0 0
        %6900 = vmatpush1.bf16.msra.mxu0 0
        %6901 = vmatprep.subr.bf16.mxu0 0
        %6902 = vmatpush1.bf16.msra.mxu0 0
        %6903 = vmatprep.subr.bf16.mxu0 0
        %6904 = vmatpush1.bf16.msra.mxu0 0
        %6905 = vmatprep.subr.bf16.mxu0 0
        %6906 = vmatpush1.bf16.msra.mxu0 0
        %6907 = vmatprep.mubr.bf16.mxu0 0
        %6908 = vmatmul.mubr.bf16.gmra.mrb[0].mxu0 %v6813
        %v6909 = vpop.f32.mrb[0].mxu0
        %v6910 = vadd.f32 0.0, %v6909
        %v6911 = vpop.f32.mrb[0].mxu0
        %v6912 = vpop.f32.mrb[0].mxu0
        %v6913 = vadd.f32 0.0, %v6912
        %v6914 = vpop.f32.mrb[0].mxu0
        %6915 = vmatprep.mubr.bf16.mxu0 0
        %6916 = vmatmul.mubr.bf16.gmra.mrb[0].mxu0 %v6815
        %v6917 = vpop.f32.mrb[0].mxu0
        %v6918 = vadd.f32 0.0, %v6917
        %v6919 = vpop.f32.mrb[0].mxu0
        %v6920 = vpop.f32.mrb[0].mxu0
        %v6921 = vadd.f32 0.0, %v6920
        %v6922 = vpop.f32.mrb[0].mxu0
        %6923 = vmatprep.mubr.bf16.mxu0 0
        %6924 = vmatmul.mubr.bf16.gmra.mrb[0].mxu0 %v6817
        %v6925 = vpop.f32.mrb[0].mxu0
        %v6926 = vadd.f32 0.0, %v6925
        %v6927 = vpop.f32.mrb[0].mxu0
        %v6928 = vpop.f32.mrb[0].mxu0
        %v6929 = vadd.f32 0.0, %v6928
        %v6930 = vpop.f32.mrb[0].mxu0
        %6931 = vmatprep.mubr.bf16.mxu0 0
        %6932 = vmatmul.mubr.bf16.gmra.mrb[0].mxu0 %v6819
        %v6933 = vpop.f32.mrb[0].mxu0
        %v6934 = vadd.f32 0.0, %v6933
        %v6935 = vpop.f32.mrb[0].mxu0
        %v6936 = vpop.f32.mrb[0].mxu0
        %v6937 = vadd.f32 0.0, %v6936
        %v6938 = vpop.f32.mrb[0].mxu0
        %6939 = vmatprep.mubr.bf16.mxu0 0
        %6940 = vmatmul.mubr.bf16.gmra.mrb[0].mxu0 %v6821
        %v6941 = vpop.f32.mrb[0].mxu0
        %v6942 = vadd.f32 0.0, %v6941
        %v6943 = vpop.f32.mrb[0].mxu0
        %v6944 = vpop.f32.mrb[0].mxu0
        %v6945 = vadd.f32 0.0, %v6944
        %v6946 = vpop.f32.mrb[0].mxu0
        %6947 = vdwg.mxu0
        %v6948 = vadd.f32 %v6564, %v6910
        %v6949 = vadd.f32 %v6565, %v6913
        %v6950 = vadd.f32 %v6566, %v6918
        %v6951 = vadd.f32 %v6567, %v6921
        %v6952 = vadd.f32 %v6568, %v6926
        %v6953 = vadd.f32 %v6569, %v6929
        %v6954 = vadd.f32 %v6570, %v6934
        %v6955 = vadd.f32 %v6571, %v6937
        %v6956 = vadd.f32 %v6572, %v6942
        %v6957 = vadd.f32 %v6573, %v6945
        %v6958 = vld [vmem:[#allocation2 + $0x60] sm:$0x77]
        %s6959 = scalar_lea.vmem [#allocation10], 448
        %v6960 = vld [vmem:[%s6959] sm:$0xf]
        %v6961 = vld [vmem:[%s6959 + $0x4] sm:$0xf]
        %v6962 = vld [vmem:[%s6959 + $0x8] sm:$0xf]
        %v6963 = vld [vmem:[%s6959 + $0xc] sm:$0xf]
        %v6964 = vld [vmem:[%s6959 + $0x10] sm:$0xf]
        %v6965 = vld [vmem:[%s6959 + $0x14] sm:$0xf]
        %v6966 = vld [vmem:[%s6959 + $0x18] sm:$0xf]
        %v6967 = vld [vmem:[%s6959 + $0x1c] sm:$0xf]
        %v6968 = vld [vmem:[%s6959 + $0x20] sm:$0xf]
        %v6969 = vld [vmem:[%s6959 + $0x24] sm:$0xf]
        %v6970 = vld [vmem:[%s6959 + $0x28] sm:$0xf]
        %v6971 = vld [vmem:[%s6959 + $0x2c] sm:$0xf]
        %v6972 = vld [vmem:[%s6959 + $0x30] sm:$0xf]
        %v6973 = vld [vmem:[%s6959 + $0x34] sm:$0xf]
        %v6974 = vld [vmem:[%s6959 + $0x38] sm:$0xf]
        %v6975 = vld [vmem:[%s6959 + $0x3c] sm:$0xf]
        %v6977 = vunpack.c.l.b16 %v6958
        %v6978 = vpack.c.b16 %v6977, %v6977
        %v6980 = vshrl.u32 %v6624, 16
        %v6982 = vrot.slane %v6980, 2
        %v6983 = vshll.u32 %v6624, 16
        %v6985 = vrot.slane %v6983, 3
        %v6986 = vor.u32 %v6982, %v6985
        %v6988 = vshrl.u32 %v6625, 16
        %v6990 = vrot.slane %v6988, 2
        %v6991 = vshll.u32 %v6625, 16
        %v6993 = vrot.slane %v6991, 3
        %v6994 = vor.u32 %v6990, %v6993
        %v6995 = vsel %vm2339, %v6986, %v6994
        %v6997 = vshrl.u32 %v6626, 16
        %v6999 = vrot.slane %v6997, 2
        %v7000 = vshll.u32 %v6626, 16
        %v7002 = vrot.slane %v7000, 3
        %v7003 = vor.u32 %v6999, %v7002
        %v7004 = vsel %vm2339, %v6994, %v7003
        %v7006 = vshrl.u32 %v6627, 16
        %v7008 = vrot.slane %v7006, 2
        %v7009 = vshll.u32 %v6627, 16
        %v7011 = vrot.slane %v7009, 3
        %v7012 = vor.u32 %v7008, %v7011
        %v7013 = vsel %vm2339, %v7003, %v7012
        %v7015 = vshrl.u32 %v6628, 16
        %v7017 = vrot.slane %v7015, 2
        %v7018 = vshll.u32 %v6628, 16
        %v7020 = vrot.slane %v7018, 3
        %v7021 = vor.u32 %v7017, %v7020
        %v7022 = vsel %vm2339, %v7012, %v7021
        %v7024 = vshrl.u32 %v6978, 16
        %v7026 = vrot.slane %v7024, 2
        %v7027 = vshll.u32 %v6978, 16
        %v7029 = vrot.slane %v7027, 3
        %v7030 = vor.u32 %v7026, %v7029
        %v7031 = vsel %vm2339, %v7021, %v7030
        %v7053 = vunpack.c.l.b16 %v6960
        %v7054 = vunpack.c.l.b16 %v6961
        %v7055 = vunpack.c.l.b16 %v6962
        %v7056 = vunpack.c.l.b16 %v6963
        %v7057 = vunpack.c.l.b16 %v6964
        %v7058 = vunpack.c.l.b16 %v6965
        %v7059 = vunpack.c.l.b16 %v6966
        %v7060 = vunpack.c.l.b16 %v6967
        %v7061 = vunpack.c.l.b16 %v6968
        %v7062 = vunpack.c.l.b16 %v6969
        %v7063 = vunpack.c.l.b16 %v6970
        %v7064 = vunpack.c.l.b16 %v6971
        %v7065 = vunpack.c.l.b16 %v6972
        %v7066 = vunpack.c.l.b16 %v6973
        %v7067 = vunpack.c.l.b16 %v6974
        %v7068 = vunpack.c.l.b16 %v6975
        %v7069 = vpack.c.b16 %v7054, %v7053
        %v7070 = vpack.c.b16 %v7056, %v7055
        %v7071 = vpack.c.b16 %v7058, %v7057
        %v7072 = vpack.c.b16 %v7060, %v7059
        %v7073 = vpack.c.b16 %v7062, %v7061
        %v7074 = vpack.c.b16 %v7064, %v7063
        %v7075 = vpack.c.b16 %v7066, %v7065
        %v7076 = vpack.c.b16 %v7068, %v7067
        %7085 = vmatprep.subr.bf16.mxu0 0
        %7086 = vmatpush1.bf16.msra.mxu0 %v7069
        %7087 = vmatprep.subr.bf16.mxu0 0
        %7088 = vmatpush1.bf16.msra.mxu0 %v7070
        %7089 = vmatprep.subr.bf16.mxu0 0
        %7090 = vmatpush1.bf16.msra.mxu0 %v7071
        %7091 = vmatprep.subr.bf16.mxu0 0
        %7092 = vmatpush1.bf16.msra.mxu0 %v7072
        %7093 = vmatprep.subr.bf16.mxu0 0
        %7094 = vmatpush1.bf16.msra.mxu0 %v7073
        %7095 = vmatprep.subr.bf16.mxu0 0
        %7096 = vmatpush1.bf16.msra.mxu0 %v7074
        %7097 = vmatprep.subr.bf16.mxu0 0
        %7098 = vmatpush1.bf16.msra.mxu0 %v7075
        %7099 = vmatprep.subr.bf16.mxu0 0
        %7100 = vmatpush1.bf16.msra.mxu0 %v7076
        %7101 = vmatprep.subr.bf16.mxu0 0
        %7102 = vmatpush1.bf16.msra.mxu0 0
        %7103 = vmatprep.subr.bf16.mxu0 0
        %7104 = vmatpush1.bf16.msra.mxu0 0
        %7105 = vmatprep.subr.bf16.mxu0 0
        %7106 = vmatpush1.bf16.msra.mxu0 0
        %7107 = vmatprep.subr.bf16.mxu0 0
        %7108 = vmatpush1.bf16.msra.mxu0 0
        %7109 = vmatprep.subr.bf16.mxu0 0
        %7110 = vmatpush1.bf16.msra.mxu0 0
        %7111 = vmatprep.subr.bf16.mxu0 0
        %7112 = vmatpush1.bf16.msra.mxu0 0
        %7113 = vmatprep.subr.bf16.mxu0 0
        %7114 = vmatpush1.bf16.msra.mxu0 0
        %7115 = vmatprep.subr.bf16.mxu0 0
        %7116 = vmatpush1.bf16.msra.mxu0 0
        %7117 = vmatprep.mubr.bf16.mxu0 0
        %7118 = vmatmul.mubr.bf16.gmra.mrb[0].mxu0 %v6995
        %v7119 = vpop.f32.mrb[0].mxu0
        %v7120 = vadd.f32 0.0, %v7119
        %v7121 = vpop.f32.mrb[0].mxu0
        %v7122 = vpop.f32.mrb[0].mxu0
        %v7123 = vadd.f32 0.0, %v7122
        %v7124 = vpop.f32.mrb[0].mxu0
        %7125 = vmatprep.mubr.bf16.mxu0 0
        %7126 = vmatmul.mubr.bf16.gmra.mrb[0].mxu0 %v7004
        %v7127 = vpop.f32.mrb[0].mxu0
        %v7128 = vadd.f32 0.0, %v7127
        %v7129 = vpop.f32.mrb[0].mxu0
        %v7130 = vpop.f32.mrb[0].mxu0
        %v7131 = vadd.f32 0.0, %v7130
        %v7132 = vpop.f32.mrb[0].mxu0
        %7133 = vmatprep.mubr.bf16.mxu0 0
        %7134 = vmatmul.mubr.bf16.gmra.mrb[0].mxu0 %v7013
        %v7135 = vpop.f32.mrb[0].mxu0
        %v7136 = vadd.f32 0.0, %v7135
        %v7137 = vpop.f32.mrb[0].mxu0
        %v7138 = vpop.f32.mrb[0].mxu0
        %v7139 = vadd.f32 0.0, %v7138
        %v7140 = vpop.f32.mrb[0].mxu0
        %7141 = vmatprep.mubr.bf16.mxu0 0
        %7142 = vmatmul.mubr.bf16.gmra.mrb[0].mxu0 %v7022
        %v7143 = vpop.f32.mrb[0].mxu0
        %v7144 = vadd.f32 0.0, %v7143
        %v7145 = vpop.f32.mrb[0].mxu0
        %v7146 = vpop.f32.mrb[0].mxu0
        %v7147 = vadd.f32 0.0, %v7146
        %v7148 = vpop.f32.mrb[0].mxu0
        %7149 = vmatprep.mubr.bf16.mxu0 0
        %7150 = vmatmul.mubr.bf16.gmra.mrb[0].mxu0 %v7031
        %v7151 = vpop.f32.mrb[0].mxu0
        %v7152 = vadd.f32 0.0, %v7151
        %v7153 = vpop.f32.mrb[0].mxu0
        %v7154 = vpop.f32.mrb[0].mxu0
        %v7155 = vadd.f32 0.0, %v7154
        %v7156 = vpop.f32.mrb[0].mxu0
        %7157 = vdwg.mxu0
        %v7158 = vadd.f32 %v6767, %v7120
        %v7159 = vadd.f32 %v6768, %v7123
        %v7160 = vadd.f32 %v6769, %v7128
        %v7161 = vadd.f32 %v6770, %v7131
        %v7162 = vadd.f32 %v6771, %v7136
        %v7163 = vadd.f32 %v6772, %v7139
        %v7164 = vadd.f32 %v6773, %v7144
        %v7165 = vadd.f32 %v6774, %v7147
        %v7166 = vadd.f32 %v6775, %v7152
        %v7167 = vadd.f32 %v6776, %v7155
        %s7168 = scalar_lea.vmem [#allocation12], 448
        %v7169 = vld [vmem:[%s7168] sm:$0xf]
        %v7170 = vld [vmem:[%s7168 + $0x4] sm:$0xf]
        %v7171 = vld [vmem:[%s7168 + $0x8] sm:$0xf]
        %v7172 = vld [vmem:[%s7168 + $0xc] sm:$0xf]
        %v7173 = vld [vmem:[%s7168 + $0x10] sm:$0xf]
        %v7174 = vld [vmem:[%s7168 + $0x14] sm:$0xf]
        %v7175 = vld [vmem:[%s7168 + $0x18] sm:$0xf]
        %v7176 = vld [vmem:[%s7168 + $0x1c] sm:$0xf]
        %v7177 = vld [vmem:[%s7168 + $0x20] sm:$0xf]
        %v7178 = vld [vmem:[%s7168 + $0x24] sm:$0xf]
        %v7179 = vld [vmem:[%s7168 + $0x28] sm:$0xf]
        %v7180 = vld [vmem:[%s7168 + $0x2c] sm:$0xf]
        %v7181 = vld [vmem:[%s7168 + $0x30] sm:$0xf]
        %v7182 = vld [vmem:[%s7168 + $0x34] sm:$0xf]
        %v7183 = vld [vmem:[%s7168 + $0x38] sm:$0xf]
        %v7184 = vld [vmem:[%s7168 + $0x3c] sm:$0xf]
        %v7185 = vunpack.c.h.b16 %v6958
        %v7186 = vpack.c.b16 %v7185, %v7185
        %v7188 = vshrl.u32 %v6805, 16
        %v7190 = vrot.slane %v7188, 2
        %v7191 = vshll.u32 %v6805, 16
        %v7193 = vrot.slane %v7191, 3
        %v7194 = vor.u32 %v7190, %v7193
        %v7196 = vshrl.u32 %v6806, 16
        %v7198 = vrot.slane %v7196, 2
        %v7199 = vshll.u32 %v6806, 16
        %v7201 = vrot.slane %v7199, 3
        %v7202 = vor.u32 %v7198, %v7201
        %v7203 = vsel %vm2339, %v7194, %v7202
        %v7205 = vshrl.u32 %v6807, 16
        %v7207 = vrot.slane %v7205, 2
        %v7208 = vshll.u32 %v6807, 16
        %v7210 = vrot.slane %v7208, 3
        %v7211 = vor.u32 %v7207, %v7210
        %v7212 = vsel %vm2339, %v7202, %v7211
        %v7214 = vshrl.u32 %v6808, 16
        %v7216 = vrot.slane %v7214, 2
        %v7217 = vshll.u32 %v6808, 16
        %v7219 = vrot.slane %v7217, 3
        %v7220 = vor.u32 %v7216, %v7219
        %v7221 = vsel %vm2339, %v7211, %v7220
        %v7223 = vshrl.u32 %v6809, 16
        %v7225 = vrot.slane %v7223, 2
        %v7226 = vshll.u32 %v6809, 16
        %v7228 = vrot.slane %v7226, 3
        %v7229 = vor.u32 %v7225, %v7228
        %v7230 = vsel %vm2339, %v7220, %v7229
        %v7232 = vshrl.u32 %v7186, 16
        %v7234 = vrot.slane %v7232, 2
        %v7235 = vshll.u32 %v7186, 16
        %v7237 = vrot.slane %v7235, 3
        %v7238 = vor.u32 %v7234, %v7237
        %v7239 = vsel %vm2339, %v7229, %v7238
        %v7261 = vunpack.c.l.b16 %v7169
        %v7262 = vunpack.c.l.b16 %v7170
        %v7263 = vunpack.c.l.b16 %v7171
        %v7264 = vunpack.c.l.b16 %v7172
        %v7265 = vunpack.c.l.b16 %v7173
        %v7266 = vunpack.c.l.b16 %v7174
        %v7267 = vunpack.c.l.b16 %v7175
        %v7268 = vunpack.c.l.b16 %v7176
        %v7269 = vunpack.c.l.b16 %v7177
        %v7270 = vunpack.c.l.b16 %v7178
        %v7271 = vunpack.c.l.b16 %v7179
        %v7272 = vunpack.c.l.b16 %v7180
        %v7273 = vunpack.c.l.b16 %v7181
        %v7274 = vunpack.c.l.b16 %v7182
        %v7275 = vunpack.c.l.b16 %v7183
        %v7276 = vunpack.c.l.b16 %v7184
        %v7277 = vpack.c.b16 %v7262, %v7261
        %v7278 = vpack.c.b16 %v7264, %v7263
        %v7279 = vpack.c.b16 %v7266, %v7265
        %v7280 = vpack.c.b16 %v7268, %v7267
        %v7281 = vpack.c.b16 %v7270, %v7269
        %v7282 = vpack.c.b16 %v7272, %v7271
        %v7283 = vpack.c.b16 %v7274, %v7273
        %v7284 = vpack.c.b16 %v7276, %v7275
        %7293 = vmatprep.subr.bf16.mxu0 0
        %7294 = vmatpush1.bf16.msra.mxu0 %v7277
        %7295 = vmatprep.subr.bf16.mxu0 0
        %7296 = vmatpush1.bf16.msra.mxu0 %v7278
        %7297 = vmatprep.subr.bf16.mxu0 0
        %7298 = vmatpush1.bf16.msra.mxu0 %v7279
        %7299 = vmatprep.subr.bf16.mxu0 0
        %7300 = vmatpush1.bf16.msra.mxu0 %v7280
        %7301 = vmatprep.subr.bf16.mxu0 0
        %7302 = vmatpush1.bf16.msra.mxu0 %v7281
        %7303 = vmatprep.subr.bf16.mxu0 0
        %7304 = vmatpush1.bf16.msra.mxu0 %v7282
        %7305 = vmatprep.subr.bf16.mxu0 0
        %7306 = vmatpush1.bf16.msra.mxu0 %v7283
        %7307 = vmatprep.subr.bf16.mxu0 0
        %7308 = vmatpush1.bf16.msra.mxu0 %v7284
        %7309 = vmatprep.subr.bf16.mxu0 0
        %7310 = vmatpush1.bf16.msra.mxu0 0
        %7311 = vmatprep.subr.bf16.mxu0 0
        %7312 = vmatpush1.bf16.msra.mxu0 0
        %7313 = vmatprep.subr.bf16.mxu0 0
        %7314 = vmatpush1.bf16.msra.mxu0 0
        %7315 = vmatprep.subr.bf16.mxu0 0
        %7316 = vmatpush1.bf16.msra.mxu0 0
        %7317 = vmatprep.subr.bf16.mxu0 0
        %7318 = vmatpush1.bf16.msra.mxu0 0
        %7319 = vmatprep.subr.bf16.mxu0 0
        %7320 = vmatpush1.bf16.msra.mxu0 0
        %7321 = vmatprep.subr.bf16.mxu0 0
        %7322 = vmatpush1.bf16.msra.mxu0 0
        %7323 = vmatprep.subr.bf16.mxu0 0
        %7324 = vmatpush1.bf16.msra.mxu0 0
        %7325 = vmatprep.mubr.bf16.mxu0 0
        %7326 = vmatmul.mubr.bf16.gmra.mrb[0].mxu0 %v7203
        %v7327 = vpop.f32.mrb[0].mxu0
        %v7328 = vadd.f32 0.0, %v7327
        %v7329 = vpop.f32.mrb[0].mxu0
        %v7330 = vpop.f32.mrb[0].mxu0
        %v7331 = vadd.f32 0.0, %v7330
        %v7332 = vpop.f32.mrb[0].mxu0
        %7333 = vmatprep.mubr.bf16.mxu0 0
        %7334 = vmatmul.mubr.bf16.gmra.mrb[0].mxu0 %v7212
        %v7335 = vpop.f32.mrb[0].mxu0
        %v7336 = vadd.f32 0.0, %v7335
        %v7337 = vpop.f32.mrb[0].mxu0
        %v7338 = vpop.f32.mrb[0].mxu0
        %v7339 = vadd.f32 0.0, %v7338
        %v7340 = vpop.f32.mrb[0].mxu0
        %7341 = vmatprep.mubr.bf16.mxu0 0
        %7342 = vmatmul.mubr.bf16.gmra.mrb[0].mxu0 %v7221
        %v7343 = vpop.f32.mrb[0].mxu0
        %v7344 = vadd.f32 0.0, %v7343
        %v7345 = vpop.f32.mrb[0].mxu0
        %v7346 = vpop.f32.mrb[0].mxu0
        %v7347 = vadd.f32 0.0, %v7346
        %v7348 = vpop.f32.mrb[0].mxu0
        %7349 = vmatprep.mubr.bf16.mxu0 0
        %7350 = vmatmul.mubr.bf16.gmra.mrb[0].mxu0 %v7230
        %v7351 = vpop.f32.mrb[0].mxu0
        %v7352 = vadd.f32 0.0, %v7351
        %v7353 = vpop.f32.mrb[0].mxu0
        %v7354 = vpop.f32.mrb[0].mxu0
        %v7355 = vadd.f32 0.0, %v7354
        %v7356 = vpop.f32.mrb[0].mxu0
        %7357 = vmatprep.mubr.bf16.mxu0 0
        %7358 = vmatmul.mubr.bf16.gmra.mrb[0].mxu0 %v7239
        %v7359 = vpop.f32.mrb[0].mxu0
        %v7360 = vadd.f32 0.0, %v7359
        %v7361 = vpop.f32.mrb[0].mxu0
        %v7362 = vpop.f32.mrb[0].mxu0
        %v7363 = vadd.f32 0.0, %v7362
        %v7364 = vpop.f32.mrb[0].mxu0
        %7365 = vdwg.mxu0
        %v7366 = vadd.f32 %v6948, %v7328
        %v7367 = vadd.f32 %v6949, %v7331
        %v7368 = vadd.f32 %v6950, %v7336
        %v7369 = vadd.f32 %v6951, %v7339
        %v7370 = vadd.f32 %v6952, %v7344
        %v7371 = vadd.f32 %v6953, %v7347
        %v7372 = vadd.f32 %v6954, %v7352
        %v7373 = vadd.f32 %v6955, %v7355
        %v7374 = vadd.f32 %v6956, %v7360
        %v7375 = vadd.f32 %v6957, %v7363
        %v7376 = vld [vmem:[#allocation2 + $0x10] sm:$0x88]
        %s7377 = scalar_lea.vmem [#allocation10], 512
        %v7378 = vld [vmem:[%s7377] sm:$0xf]
        %v7379 = vld [vmem:[%s7377 + $0x4] sm:$0xf]
        %v7380 = vld [vmem:[%s7377 + $0x8] sm:$0xf]
        %v7381 = vld [vmem:[%s7377 + $0xc] sm:$0xf]
        %v7382 = vld [vmem:[%s7377 + $0x10] sm:$0xf]
        %v7383 = vld [vmem:[%s7377 + $0x14] sm:$0xf]
        %v7384 = vld [vmem:[%s7377 + $0x18] sm:$0xf]
        %v7385 = vld [vmem:[%s7377 + $0x1c] sm:$0xf]
        %v7386 = vld [vmem:[%s7377 + $0x20] sm:$0xf]
        %v7387 = vld [vmem:[%s7377 + $0x24] sm:$0xf]
        %v7388 = vld [vmem:[%s7377 + $0x28] sm:$0xf]
        %v7389 = vld [vmem:[%s7377 + $0x2c] sm:$0xf]
        %v7390 = vld [vmem:[%s7377 + $0x30] sm:$0xf]
        %v7391 = vld [vmem:[%s7377 + $0x34] sm:$0xf]
        %v7392 = vld [vmem:[%s7377 + $0x38] sm:$0xf]
        %v7393 = vld [vmem:[%s7377 + $0x3c] sm:$0xf]
        %v7395 = vunpack.c.l.b16 %v7376
        %v7396 = vpack.c.b16 %v6614, %v7395
        %v7397 = vrot.slane %v7396, 3
        %v7398 = vrot.slane %v6625, 3
        %v7399 = vsel %vm2602, %v7397, %v7398
        %v7400 = vrot.slane %v6626, 3
        %v7401 = vsel %vm2602, %v7398, %v7400
        %v7402 = vrot.slane %v6627, 3
        %v7403 = vsel %vm2602, %v7400, %v7402
        %v7404 = vrot.slane %v6628, 3
        %v7405 = vsel %vm2602, %v7402, %v7404
        %v7406 = vrot.slane %v6978, 3
        %v7407 = vsel %vm2602, %v7404, %v7406
        %v7429 = vunpack.c.l.b16 %v7378
        %v7430 = vunpack.c.l.b16 %v7379
        %v7431 = vunpack.c.l.b16 %v7380
        %v7432 = vunpack.c.l.b16 %v7381
        %v7433 = vunpack.c.l.b16 %v7382
        %v7434 = vunpack.c.l.b16 %v7383
        %v7435 = vunpack.c.l.b16 %v7384
        %v7436 = vunpack.c.l.b16 %v7385
        %v7437 = vunpack.c.l.b16 %v7386
        %v7438 = vunpack.c.l.b16 %v7387
        %v7439 = vunpack.c.l.b16 %v7388
        %v7440 = vunpack.c.l.b16 %v7389
        %v7441 = vunpack.c.l.b16 %v7390
        %v7442 = vunpack.c.l.b16 %v7391
        %v7443 = vunpack.c.l.b16 %v7392
        %v7444 = vunpack.c.l.b16 %v7393
        %v7445 = vpack.c.b16 %v7430, %v7429
        %v7446 = vpack.c.b16 %v7432, %v7431
        %v7447 = vpack.c.b16 %v7434, %v7433
        %v7448 = vpack.c.b16 %v7436, %v7435
        %v7449 = vpack.c.b16 %v7438, %v7437
        %v7450 = vpack.c.b16 %v7440, %v7439
        %v7451 = vpack.c.b16 %v7442, %v7441
        %v7452 = vpack.c.b16 %v7444, %v7443
        %7461 = vmatprep.subr.bf16.mxu0 0
        %7462 = vmatpush1.bf16.msra.mxu0 %v7445
        %7463 = vmatprep.subr.bf16.mxu0 0
        %7464 = vmatpush1.bf16.msra.mxu0 %v7446
        %7465 = vmatprep.subr.bf16.mxu0 0
        %7466 = vmatpush1.bf16.msra.mxu0 %v7447
        %7467 = vmatprep.subr.bf16.mxu0 0
        %7468 = vmatpush1.bf16.msra.mxu0 %v7448
        %7469 = vmatprep.subr.bf16.mxu0 0
        %7470 = vmatpush1.bf16.msra.mxu0 %v7449
        %7471 = vmatprep.subr.bf16.mxu0 0
        %7472 = vmatpush1.bf16.msra.mxu0 %v7450
        %7473 = vmatprep.subr.bf16.mxu0 0
        %7474 = vmatpush1.bf16.msra.mxu0 %v7451
        %7475 = vmatprep.subr.bf16.mxu0 0
        %7476 = vmatpush1.bf16.msra.mxu0 %v7452
        %7477 = vmatprep.subr.bf16.mxu0 0
        %7478 = vmatpush1.bf16.msra.mxu0 0
        %7479 = vmatprep.subr.bf16.mxu0 0
        %7480 = vmatpush1.bf16.msra.mxu0 0
        %7481 = vmatprep.subr.bf16.mxu0 0
        %7482 = vmatpush1.bf16.msra.mxu0 0
        %7483 = vmatprep.subr.bf16.mxu0 0
        %7484 = vmatpush1.bf16.msra.mxu0 0
        %7485 = vmatprep.subr.bf16.mxu0 0
        %7486 = vmatpush1.bf16.msra.mxu0 0
        %7487 = vmatprep.subr.bf16.mxu0 0
        %7488 = vmatpush1.bf16.msra.mxu0 0
        %7489 = vmatprep.subr.bf16.mxu0 0
        %7490 = vmatpush1.bf16.msra.mxu0 0
        %7491 = vmatprep.subr.bf16.mxu0 0
        %7492 = vmatpush1.bf16.msra.mxu0 0
        %7493 = vmatprep.mubr.bf16.mxu0 0
        %7494 = vmatmul.mubr.bf16.gmra.mrb[0].mxu0 %v7399
        %v7495 = vpop.f32.mrb[0].mxu0
        %v7496 = vadd.f32 0.0, %v7495
        %v7497 = vpop.f32.mrb[0].mxu0
        %v7498 = vpop.f32.mrb[0].mxu0
        %v7499 = vadd.f32 0.0, %v7498
        %v7500 = vpop.f32.mrb[0].mxu0
        %7501 = vmatprep.mubr.bf16.mxu0 0
        %7502 = vmatmul.mubr.bf16.gmra.mrb[0].mxu0 %v7401
        %v7503 = vpop.f32.mrb[0].mxu0
        %v7504 = vadd.f32 0.0, %v7503
        %v7505 = vpop.f32.mrb[0].mxu0
        %v7506 = vpop.f32.mrb[0].mxu0
        %v7507 = vadd.f32 0.0, %v7506
        %v7508 = vpop.f32.mrb[0].mxu0
        %7509 = vmatprep.mubr.bf16.mxu0 0
        %7510 = vmatmul.mubr.bf16.gmra.mrb[0].mxu0 %v7403
        %v7511 = vpop.f32.mrb[0].mxu0
        %v7512 = vadd.f32 0.0, %v7511
        %v7513 = vpop.f32.mrb[0].mxu0
        %v7514 = vpop.f32.mrb[0].mxu0
        %v7515 = vadd.f32 0.0, %v7514
        %v7516 = vpop.f32.mrb[0].mxu0
        %7517 = vmatprep.mubr.bf16.mxu0 0
        %7518 = vmatmul.mubr.bf16.gmra.mrb[0].mxu0 %v7405
        %v7519 = vpop.f32.mrb[0].mxu0
        %v7520 = vadd.f32 0.0, %v7519
        %v7521 = vpop.f32.mrb[0].mxu0
        %v7522 = vpop.f32.mrb[0].mxu0
        %v7523 = vadd.f32 0.0, %v7522
        %v7524 = vpop.f32.mrb[0].mxu0
        %7525 = vmatprep.mubr.bf16.mxu0 0
        %7526 = vmatmul.mubr.bf16.gmra.mrb[0].mxu0 %v7407
        %v7527 = vpop.f32.mrb[0].mxu0
        %v7528 = vadd.f32 0.0, %v7527
        %v7529 = vpop.f32.mrb[0].mxu0
        %v7530 = vpop.f32.mrb[0].mxu0
        %v7531 = vadd.f32 0.0, %v7530
        %v7532 = vpop.f32.mrb[0].mxu0
        %7533 = vdwg.mxu0
        %v7534 = vadd.f32 %v7158, %v7496
        %v7535 = vadd.f32 %v7159, %v7499
        %v7536 = vadd.f32 %v7160, %v7504
        %v7537 = vadd.f32 %v7161, %v7507
        %v7538 = vadd.f32 %v7162, %v7512
        %v7539 = vadd.f32 %v7163, %v7515
        %v7540 = vadd.f32 %v7164, %v7520
        %v7541 = vadd.f32 %v7165, %v7523
        %v7542 = vadd.f32 %v7166, %v7528
        %v7543 = vadd.f32 %v7167, %v7531
        %s7544 = scalar_lea.vmem [#allocation12], 512
        %v7545 = vld [vmem:[%s7544] sm:$0xf]
        %v7546 = vld [vmem:[%s7544 + $0x4] sm:$0xf]
        %v7547 = vld [vmem:[%s7544 + $0x8] sm:$0xf]
        %v7548 = vld [vmem:[%s7544 + $0xc] sm:$0xf]
        %v7549 = vld [vmem:[%s7544 + $0x10] sm:$0xf]
        %v7550 = vld [vmem:[%s7544 + $0x14] sm:$0xf]
        %v7551 = vld [vmem:[%s7544 + $0x18] sm:$0xf]
        %v7552 = vld [vmem:[%s7544 + $0x1c] sm:$0xf]
        %v7553 = vld [vmem:[%s7544 + $0x20] sm:$0xf]
        %v7554 = vld [vmem:[%s7544 + $0x24] sm:$0xf]
        %v7555 = vld [vmem:[%s7544 + $0x28] sm:$0xf]
        %v7556 = vld [vmem:[%s7544 + $0x2c] sm:$0xf]
        %v7557 = vld [vmem:[%s7544 + $0x30] sm:$0xf]
        %v7558 = vld [vmem:[%s7544 + $0x34] sm:$0xf]
        %v7559 = vld [vmem:[%s7544 + $0x38] sm:$0xf]
        %v7560 = vld [vmem:[%s7544 + $0x3c] sm:$0xf]
        %v7561 = vunpack.c.h.b16 %v7376
        %v7562 = vpack.c.b16 %v6795, %v7561
        %v7563 = vrot.slane %v7562, 3
        %v7564 = vrot.slane %v6806, 3
        %v7565 = vsel %vm2602, %v7563, %v7564
        %v7566 = vrot.slane %v6807, 3
        %v7567 = vsel %vm2602, %v7564, %v7566
        %v7568 = vrot.slane %v6808, 3
        %v7569 = vsel %vm2602, %v7566, %v7568
        %v7570 = vrot.slane %v6809, 3
        %v7571 = vsel %vm2602, %v7568, %v7570
        %v7572 = vrot.slane %v7186, 3
        %v7573 = vsel %vm2602, %v7570, %v7572
        %v7595 = vunpack.c.l.b16 %v7545
        %v7596 = vunpack.c.l.b16 %v7546
        %v7597 = vunpack.c.l.b16 %v7547
        %v7598 = vunpack.c.l.b16 %v7548
        %v7599 = vunpack.c.l.b16 %v7549
        %v7600 = vunpack.c.l.b16 %v7550
        %v7601 = vunpack.c.l.b16 %v7551
        %v7602 = vunpack.c.l.b16 %v7552
        %v7603 = vunpack.c.l.b16 %v7553
        %v7604 = vunpack.c.l.b16 %v7554
        %v7605 = vunpack.c.l.b16 %v7555
        %v7606 = vunpack.c.l.b16 %v7556
        %v7607 = vunpack.c.l.b16 %v7557
        %v7608 = vunpack.c.l.b16 %v7558
        %v7609 = vunpack.c.l.b16 %v7559
        %v7610 = vunpack.c.l.b16 %v7560
        %v7611 = vpack.c.b16 %v7596, %v7595
        %v7612 = vpack.c.b16 %v7598, %v7597
        %v7613 = vpack.c.b16 %v7600, %v7599
        %v7614 = vpack.c.b16 %v7602, %v7601
        %v7615 = vpack.c.b16 %v7604, %v7603
        %v7616 = vpack.c.b16 %v7606, %v7605
        %v7617 = vpack.c.b16 %v7608, %v7607
        %v7618 = vpack.c.b16 %v7610, %v7609
        %7627 = vmatprep.subr.bf16.mxu0 0
        %7628 = vmatpush1.bf16.msra.mxu0 %v7611
        %7629 = vmatprep.subr.bf16.mxu0 0
        %7630 = vmatpush1.bf16.msra.mxu0 %v7612
        %7631 = vmatprep.subr.bf16.mxu0 0
        %7632 = vmatpush1.bf16.msra.mxu0 %v7613
        %7633 = vmatprep.subr.bf16.mxu0 0
        %7634 = vmatpush1.bf16.msra.mxu0 %v7614
        %7635 = vmatprep.subr.bf16.mxu0 0
        %7636 = vmatpush1.bf16.msra.mxu0 %v7615
        %7637 = vmatprep.subr.bf16.mxu0 0
        %7638 = vmatpush1.bf16.msra.mxu0 %v7616
        %7639 = vmatprep.subr.bf16.mxu0 0
        %7640 = vmatpush1.bf16.msra.mxu0 %v7617
        %7641 = vmatprep.subr.bf16.mxu0 0
        %7642 = vmatpush1.bf16.msra.mxu0 %v7618
        %7643 = vmatprep.subr.bf16.mxu0 0
        %7644 = vmatpush1.bf16.msra.mxu0 0
        %7645 = vmatprep.subr.bf16.mxu0 0
        %7646 = vmatpush1.bf16.msra.mxu0 0
        %7647 = vmatprep.subr.bf16.mxu0 0
        %7648 = vmatpush1.bf16.msra.mxu0 0
        %7649 = vmatprep.subr.bf16.mxu0 0
        %7650 = vmatpush1.bf16.msra.mxu0 0
        %7651 = vmatprep.subr.bf16.mxu0 0
        %7652 = vmatpush1.bf16.msra.mxu0 0
        %7653 = vmatprep.subr.bf16.mxu0 0
        %7654 = vmatpush1.bf16.msra.mxu0 0
        %7655 = vmatprep.subr.bf16.mxu0 0
        %7656 = vmatpush1.bf16.msra.mxu0 0
        %7657 = vmatprep.subr.bf16.mxu0 0
        %7658 = vmatpush1.bf16.msra.mxu0 0
        %7659 = vmatprep.mubr.bf16.mxu0 0
        %7660 = vmatmul.mubr.bf16.gmra.mrb[0].mxu0 %v7565
        %v7661 = vpop.f32.mrb[0].mxu0
        %v7662 = vadd.f32 0.0, %v7661
        %v7663 = vpop.f32.mrb[0].mxu0
        %v7664 = vpop.f32.mrb[0].mxu0
        %v7665 = vadd.f32 0.0, %v7664
        %v7666 = vpop.f32.mrb[0].mxu0
        %7667 = vmatprep.mubr.bf16.mxu0 0
        %7668 = vmatmul.mubr.bf16.gmra.mrb[0].mxu0 %v7567
        %v7669 = vpop.f32.mrb[0].mxu0
        %v7670 = vadd.f32 0.0, %v7669
        %v7671 = vpop.f32.mrb[0].mxu0
        %v7672 = vpop.f32.mrb[0].mxu0
        %v7673 = vadd.f32 0.0, %v7672
        %v7674 = vpop.f32.mrb[0].mxu0
        %7675 = vmatprep.mubr.bf16.mxu0 0
        %7676 = vmatmul.mubr.bf16.gmra.mrb[0].mxu0 %v7569
        %v7677 = vpop.f32.mrb[0].mxu0
        %v7678 = vadd.f32 0.0, %v7677
        %v7679 = vpop.f32.mrb[0].mxu0
        %v7680 = vpop.f32.mrb[0].mxu0
        %v7681 = vadd.f32 0.0, %v7680
        %v7682 = vpop.f32.mrb[0].mxu0
        %7683 = vmatprep.mubr.bf16.mxu0 0
        %7684 = vmatmul.mubr.bf16.gmra.mrb[0].mxu0 %v7571
        %v7685 = vpop.f32.mrb[0].mxu0
        %v7686 = vadd.f32 0.0, %v7685
        %v7687 = vpop.f32.mrb[0].mxu0
        %v7688 = vpop.f32.mrb[0].mxu0
        %v7689 = vadd.f32 0.0, %v7688
        %v7690 = vpop.f32.mrb[0].mxu0
        %7691 = vmatprep.mubr.bf16.mxu0 0
        %7692 = vmatmul.mubr.bf16.gmra.mrb[0].mxu0 %v7573
        %v7693 = vpop.f32.mrb[0].mxu0
        %v7694 = vadd.f32 0.0, %v7693
        %v7695 = vpop.f32.mrb[0].mxu0
        %v7696 = vpop.f32.mrb[0].mxu0
        %v7697 = vadd.f32 0.0, %v7696
        %v7698 = vpop.f32.mrb[0].mxu0
        %7699 = vdwg.mxu0
        %v7700 = vadd.f32 %v7366, %v7662
        %v7701 = vadd.f32 %v7367, %v7665
        %v7702 = vadd.f32 %v7368, %v7670
        %v7703 = vadd.f32 %v7369, %v7673
        %v7704 = vadd.f32 %v7370, %v7678
        %v7705 = vadd.f32 %v7371, %v7681
        %v7706 = vadd.f32 %v7372, %v7686
        %v7707 = vadd.f32 %v7373, %v7689
        %v7708 = vadd.f32 %v7374, %v7694
        %v7709 = vadd.f32 %v7375, %v7697
        %v7710 = vld [vmem:[%s9] sm:$0x1]
        %v7712 = vlaneseq
        %v7713 = vshrl.u32 %v7712, 7
        %v7714 = vsub.s32 0, %v7713
        %v7715 = vrot.slane %v7710, %v7714
        %v7717 = vmul.f32 %v7534, %v7715
        %v7718 = vmul.f32 %v7535, %v7715
        %v7719 = vmul.f32 %v7536, %v7715
        %v7720 = vmul.f32 %v7537, %v7715
        %v7721 = vmul.f32 %v7538, %v7715
        %v7722 = vmul.f32 %v7539, %v7715
        %v7723 = vmul.f32 %v7540, %v7715
        %v7724 = vmul.f32 %v7541, %v7715
        %v7725 = vmul.f32 %v7542, %v7715
        %v7726 = vmul.f32 %v7543, %v7715
        %v7727 = vld [vmem:[%s10] sm:$0x1]
        %v7729 = vlaneseq
        %v7730 = vshrl.u32 %v7729, 7
        %v7731 = vsub.s32 0, %v7730
        %v7732 = vrot.slane %v7727, %v7731
        %v7734 = vadd.f32 %v7717, %v7732
        %v7735 = vadd.f32 %v7718, %v7732
        %v7736 = vadd.f32 %v7719, %v7732
        %v7737 = vadd.f32 %v7720, %v7732
        %v7738 = vadd.f32 %v7721, %v7732
        %v7739 = vadd.f32 %v7722, %v7732
        %v7740 = vadd.f32 %v7723, %v7732
        %v7741 = vadd.f32 %v7724, %v7732
        %v7742 = vadd.f32 %v7725, %v7732
        %v7743 = vadd.f32 %v7726, %v7732
        %v7744 = vmax.f32 %v7734, 0.0
        %v7745 = vmax.f32 %v7735, 0.0
        %v7746 = vmax.f32 %v7736, 0.0
        %v7747 = vmax.f32 %v7737, 0.0
        %v7748 = vmax.f32 %v7738, 0.0
        %v7749 = vmax.f32 %v7739, 0.0
        %v7750 = vmax.f32 %v7740, 0.0
        %v7751 = vmax.f32 %v7741, 0.0
        %v7752 = vmax.f32 %v7742, 0.0
        %v7753 = vmax.f32 %v7743, 0.0
        %v7754 = vld [vmem:[%s12] sm:$0x1]
        %v7756 = vlaneseq
        %v7757 = vshrl.u32 %v7756, 7
        %v7758 = vsub.s32 0, %v7757
        %v7759 = vrot.slane %v7754, %v7758
        %v7761 = vmul.f32 %v7700, %v7759
        %v7762 = vmul.f32 %v7701, %v7759
        %v7763 = vmul.f32 %v7702, %v7759
        %v7764 = vmul.f32 %v7703, %v7759
        %v7765 = vmul.f32 %v7704, %v7759
        %v7766 = vmul.f32 %v7705, %v7759
        %v7767 = vmul.f32 %v7706, %v7759
        %v7768 = vmul.f32 %v7707, %v7759
        %v7769 = vmul.f32 %v7708, %v7759
        %v7770 = vmul.f32 %v7709, %v7759
        %v7771 = vld [vmem:[%s13] sm:$0x1]
        %v7773 = vlaneseq
        %v7774 = vshrl.u32 %v7773, 7
        %v7775 = vsub.s32 0, %v7774
        %v7776 = vrot.slane %v7771, %v7775
        %v7778 = vadd.f32 %v7761, %v7776
        %v7779 = vadd.f32 %v7762, %v7776
        %v7780 = vadd.f32 %v7763, %v7776
        %v7781 = vadd.f32 %v7764, %v7776
        %v7782 = vadd.f32 %v7765, %v7776
        %v7783 = vadd.f32 %v7766, %v7776
        %v7784 = vadd.f32 %v7767, %v7776
        %v7785 = vadd.f32 %v7768, %v7776
        %v7786 = vadd.f32 %v7769, %v7776
        %v7787 = vadd.f32 %v7770, %v7776
        %v7788 = vmax.f32 %v7778, 0.0
        %v7789 = vmax.f32 %v7779, 0.0
        %v7790 = vmax.f32 %v7780, 0.0
        %v7791 = vmax.f32 %v7781, 0.0
        %v7792 = vmax.f32 %v7782, 0.0
        %v7793 = vmax.f32 %v7783, 0.0
        %v7794 = vmax.f32 %v7784, 0.0
        %v7795 = vmax.f32 %v7785, 0.0
        %v7796 = vmax.f32 %v7786, 0.0
        %v7797 = vmax.f32 %v7787, 0.0
        %v7798 = vadd.f32 %v7744, %v7788
        %v7799 = vadd.f32 %v7745, %v7789
        %v7800 = vadd.f32 %v7746, %v7790
        %v7801 = vadd.f32 %v7747, %v7791
        %v7802 = vadd.f32 %v7748, %v7792
        %v7803 = vadd.f32 %v7749, %v7793
        %v7804 = vadd.f32 %v7750, %v7794
        %v7805 = vadd.f32 %v7751, %v7795
        %v7806 = vadd.f32 %v7752, %v7796
        %v7807 = vadd.f32 %v7753, %v7797
        %v7808 = vpack.c.bf16 %v7799, %v7798
        %v7809 = vpack.c.bf16 %v7801, %v7800
        %v7810 = vpack.c.bf16 %v7803, %v7802
        %v7811 = vpack.c.bf16 %v7805, %v7804
        %v7812 = vpack.c.bf16 %v7807, %v7806
        %v7813 = vld [vmem:[%s14] sm:$0xf]
        %v7814 = vld [vmem:[%s14 + $0x4] sm:$0xf]
        %v7815 = vld [vmem:[%s14 + $0x8] sm:$0xf]
        %v7816 = vld [vmem:[%s14 + $0xc] sm:$0xf]
        %v7817 = vld [vmem:[%s14 + $0x10] sm:$0xf]
        %v7818 = vld [vmem:[%s14 + $0x14] sm:$0xf]
        %v7819 = vld [vmem:[%s14 + $0x18] sm:$0xf]
        %v7820 = vld [vmem:[%s14 + $0x1c] sm:$0xf]
        %v7821 = vld [vmem:[%s14 + $0x20] sm:$0xf]
        %v7822 = vld [vmem:[%s14 + $0x24] sm:$0xf]
        %v7823 = vld [vmem:[%s14 + $0x28] sm:$0xf]
        %v7824 = vld [vmem:[%s14 + $0x2c] sm:$0xf]
        %v7825 = vld [vmem:[%s14 + $0x30] sm:$0xf]
        %v7826 = vld [vmem:[%s14 + $0x34] sm:$0xf]
        %v7827 = vld [vmem:[%s14 + $0x38] sm:$0xf]
        %v7828 = vld [vmem:[%s14 + $0x3c] sm:$0xf]
        %v7829 = vld [vmem:[%s15] sm:$0x1]
        %v7831 = vlaneseq
        %v7832 = vshrl.u32 %v7831, 7
        %v7833 = vsub.s32 0, %v7832
        %v7834 = vrot.slane %v7829, %v7833
        %v7852 = vunpack.c.l.b16 %v7813
        %v7853 = vunpack.c.l.b16 %v7814
        %v7854 = vunpack.c.l.b16 %v7815
        %v7855 = vunpack.c.l.b16 %v7816
        %v7856 = vunpack.c.l.b16 %v7817
        %v7857 = vunpack.c.l.b16 %v7818
        %v7858 = vunpack.c.l.b16 %v7819
        %v7859 = vunpack.c.l.b16 %v7820
        %v7860 = vunpack.c.l.b16 %v7821
        %v7861 = vunpack.c.l.b16 %v7822
        %v7862 = vunpack.c.l.b16 %v7823
        %v7863 = vunpack.c.l.b16 %v7824
        %v7864 = vunpack.c.l.b16 %v7825
        %v7865 = vunpack.c.l.b16 %v7826
        %v7866 = vunpack.c.l.b16 %v7827
        %v7867 = vunpack.c.l.b16 %v7828
        %v7868 = vpack.c.b16 %v7853, %v7852
        %v7869 = vpack.c.b16 %v7855, %v7854
        %v7870 = vpack.c.b16 %v7857, %v7856
        %v7871 = vpack.c.b16 %v7859, %v7858
        %v7872 = vpack.c.b16 %v7861, %v7860
        %v7873 = vpack.c.b16 %v7863, %v7862
        %v7874 = vpack.c.b16 %v7865, %v7864
        %v7875 = vpack.c.b16 %v7867, %v7866
        %7884 = vmatprep.subr.bf16.mxu0 0
        %7885 = vmatpush1.bf16.msra.mxu0 %v7868
        %7886 = vmatprep.subr.bf16.mxu0 0
        %7887 = vmatpush1.bf16.msra.mxu0 %v7869
        %7888 = vmatprep.subr.bf16.mxu0 0
        %7889 = vmatpush1.bf16.msra.mxu0 %v7870
        %7890 = vmatprep.subr.bf16.mxu0 0
        %7891 = vmatpush1.bf16.msra.mxu0 %v7871
        %7892 = vmatprep.subr.bf16.mxu0 0
        %7893 = vmatpush1.bf16.msra.mxu0 %v7872
        %7894 = vmatprep.subr.bf16.mxu0 0
        %7895 = vmatpush1.bf16.msra.mxu0 %v7873
        %7896 = vmatprep.subr.bf16.mxu0 0
        %7897 = vmatpush1.bf16.msra.mxu0 %v7874
        %7898 = vmatprep.subr.bf16.mxu0 0
        %7899 = vmatpush1.bf16.msra.mxu0 %v7875
        %7900 = vmatprep.subr.bf16.mxu0 0
        %7901 = vmatpush1.bf16.msra.mxu0 0
        %7902 = vmatprep.subr.bf16.mxu0 0
        %7903 = vmatpush1.bf16.msra.mxu0 0
        %7904 = vmatprep.subr.bf16.mxu0 0
        %7905 = vmatpush1.bf16.msra.mxu0 0
        %7906 = vmatprep.subr.bf16.mxu0 0
        %7907 = vmatpush1.bf16.msra.mxu0 0
        %7908 = vmatprep.subr.bf16.mxu0 0
        %7909 = vmatpush1.bf16.msra.mxu0 0
        %7910 = vmatprep.subr.bf16.mxu0 0
        %7911 = vmatpush1.bf16.msra.mxu0 0
        %7912 = vmatprep.subr.bf16.mxu0 0
        %7913 = vmatpush1.bf16.msra.mxu0 0
        %7914 = vmatprep.subr.bf16.mxu0 0
        %7915 = vmatpush1.bf16.msra.mxu0 0
        %7916 = vmatprep.mubr.bf16.mxu0 0
        %7917 = vmatmul.mubr.bf16.gmra.mrb[0].mxu0 %v7808
        %v7918 = vpop.f32.mrb[0].mxu0
        %v7919 = vadd.f32 %v7834, %v7918
        %v7920 = vpop.f32.mrb[0].mxu0
        %v7921 = vpop.f32.mrb[0].mxu0
        %v7922 = vadd.f32 %v7834, %v7921
        %v7923 = vpop.f32.mrb[0].mxu0
        %7924 = vmatprep.mubr.bf16.mxu0 0
        %7925 = vmatmul.mubr.bf16.gmra.mrb[0].mxu0 %v7809
        %v7926 = vpop.f32.mrb[0].mxu0
        %v7927 = vadd.f32 %v7834, %v7926
        %v7928 = vpop.f32.mrb[0].mxu0
        %v7929 = vpop.f32.mrb[0].mxu0
        %v7930 = vadd.f32 %v7834, %v7929
        %v7931 = vpop.f32.mrb[0].mxu0
        %7932 = vmatprep.mubr.bf16.mxu0 0
        %7933 = vmatmul.mubr.bf16.gmra.mrb[0].mxu0 %v7810
        %v7934 = vpop.f32.mrb[0].mxu0
        %v7935 = vadd.f32 %v7834, %v7934
        %v7936 = vpop.f32.mrb[0].mxu0
        %v7937 = vpop.f32.mrb[0].mxu0
        %v7938 = vadd.f32 %v7834, %v7937
        %v7939 = vpop.f32.mrb[0].mxu0
        %7940 = vmatprep.mubr.bf16.mxu0 0
        %7941 = vmatmul.mubr.bf16.gmra.mrb[0].mxu0 %v7811
        %v7942 = vpop.f32.mrb[0].mxu0
        %v7943 = vadd.f32 %v7834, %v7942
        %v7944 = vpop.f32.mrb[0].mxu0
        %v7945 = vpop.f32.mrb[0].mxu0
        %v7946 = vadd.f32 %v7834, %v7945
        %v7947 = vpop.f32.mrb[0].mxu0
        %7948 = vmatprep.mubr.bf16.mxu0 0
        %7949 = vmatmul.mubr.bf16.gmra.mrb[0].mxu0 %v7812
        %v7950 = vpop.f32.mrb[0].mxu0
        %v7951 = vadd.f32 %v7834, %v7950
        %v7952 = vpop.f32.mrb[0].mxu0
        %v7953 = vpop.f32.mrb[0].mxu0
        %v7954 = vadd.f32 %v7834, %v7953
        %v7955 = vpop.f32.mrb[0].mxu0
        %7956 = vdwg.mxu0
        %v7957 = vpack.c.bf16 %v7922, %v7919
        %v7958 = vpack.c.bf16 %v7930, %v7927
        %v7959 = vpack.c.bf16 %v7938, %v7935
        %v7960 = vpack.c.bf16 %v7946, %v7943
        %v7961 = vpack.c.bf16 %v7954, %v7951
        %v7967 = vunpack.c.l.b16 %v7957
        %v7968 = vunpack.c.h.b16 %v7957
        %v7969 = vunpack.c.l.b16 %v7958
        %v7970 = vunpack.c.h.b16 %v7958
        %v7971 = vunpack.c.l.b16 %v7959
        %v7972 = vunpack.c.h.b16 %v7959
        %v7973 = vunpack.c.l.b16 %v7960
        %v7974 = vunpack.c.h.b16 %v7960
        %v7975 = vunpack.c.l.b16 %v7961
        %v7976 = vunpack.c.h.b16 %v7961
        %v7977 = vpack.c.b16 %v7967, %v7967
        %v7978 = vpack.c.b16 %v7968, %v7968
        %v7979 = vpack.c.b16 %v7969, %v7969
        %v7980 = vpack.c.b16 %v7970, %v7970
        %v7981 = vpack.c.b16 %v7971, %v7971
        %v7982 = vpack.c.b16 %v7972, %v7972
        %v7983 = vpack.c.b16 %v7973, %v7973
        %v7984 = vpack.c.b16 %v7974, %v7974
        %v7985 = vpack.c.b16 %v7975, %v7975
        %v7986 = vpack.c.b16 %v7976, %v7976
        %7997 = vst [vmem:[%s638] sm:$0xf] %v7977
        %7998 = vst [vmem:[%s638 + $0x4] sm:$0xf] %v7978
        %7999 = vst [vmem:[%s638 + $0x8] sm:$0xf] %v7979
        %8000 = vst [vmem:[%s638 + $0xc] sm:$0xf] %v7980
        %8001 = vst [vmem:[%s638 + $0x10] sm:$0xf] %v7981
        %8002 = vst [vmem:[%s638 + $0x14] sm:$0xf] %v7982
        %8003 = vst [vmem:[%s638 + $0x18] sm:$0xf] %v7983
        %8004 = vst [vmem:[%s638 + $0x1c] sm:$0xf] %v7984
        %8005 = vst [vmem:[%s638 + $0x20] sm:$0xf] %v7985
        %8006 = vst [vmem:[%s638 + $0x24] sm:$0xf] %v7986
        %s8007 = sand.u32 %s407, 1
        %s8008 = scalar_lea.sflag [#allocation5], %s8007
        %s8009 = sand.u32 %s407, 1
        %s8010 = smul.addr %s8009, 40
        %s8011 = scalar_lea.vmem [#allocation14], %s8010
        // Predicated region
        $region113: #{tpu_custom_call.1} parent=87 // pred_check
          %p8012 = pneg %p417
        $region114: #{tpu_custom_call.1} parent=87 // pred_check_branch
          %8014 = sbr.rel (%p8012) target = $region116
        $region115: #{tpu_custom_call.1} parent=87 // pred_region
          %s8016 = ssub.s32 640, 640
          %8017 = vsyncadd %s8008, %s8016
          %s8018 = smul.addr %s37, 10
          %s8019 = smul.addr %s8018, 64
          %s8020 = scalar_lea.hbm %s17, %s8019
          %s8021 = sshll.u32 %s8011, 4
          %s8022 = int_to_ptr.vmem [resolvable:$true] %s8021
          %8027 = dma.vmem_to_hbm [thread:$0]  %s8022, 640, %s8020, %s8008, 64, 64, 4
        $region116: #{tpu_custom_call.1} parent=87 // pred_fallthru
          _
      $region88: #{tpu_custom_call.1} parent=5 // pred_fallthru
        _
      %p8028 = scmp.le.s32.totalorder 2, %s32
      // Predicated region
      $region117: #{tpu_custom_call.1} parent=5 // pred_check
        %p8029 = pneg %p8028
      $region118: #{tpu_custom_call.1} parent=5 // pred_check_branch
        %8031 = sbr.rel (%p8029) target = $region120
      $region119: #{tpu_custom_call.1} parent=5 // pred_region
        %s8032 = ssub.s32 %s32, 2
        // Predicated region
        $region121: #{tpu_custom_call.1} parent=119 // pred_check
          %p8033 = pneg %p423
        $region122: #{tpu_custom_call.1} parent=119 // pred_check_branch
          %8035 = sbr.rel (%p8033) target = $region124
        $region123: #{tpu_custom_call.1} parent=119 // pred_region
          %s8036 = sand.u32 %s408, 1
          %s8037 = scalar_lea.sflag [#allocation5], %s8036
          %s8038 = sand.u32 %s408, 1
          %s8039 = smul.addr %s8038, 40
          %s8040 = scalar_lea.vmem [#allocation14], %s8039
          %8041 = dma.done %s8037, 640
        $region124: #{tpu_custom_call.1} parent=119 // pred_fallthru
          _
      $region120: #{tpu_custom_call.1} parent=5 // pred_fallthru
        _
    $region6: #{tpu_custom_call.1} parent=1 // loop_footer
      %s36 = sadd.s32 1, %s32
    $region7: #{tpu_custom_call.1} parent=1 // loop_footer_branch
      %31 = sbr.rel target = $region3
    $region8: #{tpu_custom_call.1} parent=1 // loop_exit
      _
    %8042 = vsyncpa [#allocation4], 1
    %s8043 = scalar_lea.sflag [#allocation4], 1
    %8044 = vsyncpa %s8043, 1
    %8045 = vsyncpa [#allocation8], 1
    %8046 = vsyncpa [#allocation11], 1
    %8047 = vsyncpa [#allocation5], 1
    %s8048 = scalar_lea.sflag [#allocation5], 1
    %8049 = vsyncpa %s8048, 1
    %8050 = vsyncpa [#allocation6], 1
    %s8051 = scalar_lea.sflag [#allocation6], 1
    %8052 = vsyncpa %s8051, 1

</llo_original>
